<compile_context>
chip_gen: v6e
topology: v6e:2x2x1
jax: 0.10.0
libtpu: 0.0.40
codegen_flags: <defaults>
</compile_context>

<pallas_src>
import math
from functools import partial

import jax
import jax.numpy as jnp
from jax import lax
from jax.experimental import pallas as pl
from jax.experimental.pallas import tpu as pltpu

# ----------------------- config (mirrors RPNStructure.__init__) -----------------------
SIZES = ((8.0, 16.0),)                 # one feature level
ASPECT_RATIOS = ((0.5, 1.0, 2.0),)     # self.aspect_ratios = len(sizes) * aspect_ratios
PRE_NMS_TOP_N = {"training": 256, "testing": 128}
POST_NMS_TOP_N = {"training": 64, "testing": 32}
NMS_THRESH = 0.7
SCORE_THRESH = 0.0
MIN_BOX_SIZE = 0.001
BBOX_XFORM_CLIP = math.log(1000.0 / 16.0)   # BoxCoder default
TRAINING = False


# ====================== kernel 1: fused shared conv + RPN head ======================

def _make_backbone_head_kernel(H, W):
    """Fused: shared 3x3 conv + ReLU -> head 3x3 conv + ReLU -> packed 1x1 (cls|reg).

    Activations live in a row-flattened layout with stride (W+2) per image row (junk
    columns at w in {W, W+1}); each 3x3 tap is then a contiguous sublane-offset slice,
    so no im2col tensor is ever built in HBM and `feat` stays in VMEM.
    """
    WP = W + 2
    LOUT = H * WP                      # rows of the flat conv output (incl. junk cols)

    def conv3x3(src_ref, w9, b):
        # src_ref: flat zero-padded activations (>= LOUT + 2*WP + 2 rows), channels on lanes
        # w9: (9, Cin, Cout) tap weights, b: (1, Cout)
        acc = jnp.zeros((LOUT, w9.shape[-1]), jnp.float32)
        for dy in range(3):
            for dx in range(3):
                tap = src_ref[pl.ds(dy * WP + dx, LOUT), :]
                acc = acc + jnp.dot(tap, w9[dy * 3 + dx],
                                    preferred_element_type=jnp.float32)
        return acc + b

    def kernel(x_ref, wsh_ref, bsh_ref, whc_ref, bhc_ref, wp_ref, bp_ref,
               out_ref, fpad_ref):
        # mask selecting real pixels (w < W) within each stride-(W+2) flat row
        ridx = lax.broadcasted_iota(jnp.int32, (LOUT, 1), 0)
        interior = (ridx % WP) < W

        # shared network: 3x3 conv + ReLU (Cin -> Cin)
        feat = jnp.maximum(conv3x3(x_ref, wsh_ref[...], bsh_ref[...]), 0.0)
        feat = jnp.where(interior, feat, 0.0)      # junk cols become the zero padding

        # zero-padded copy of feat (kept in VMEM) for the head's 3x3 conv
        fpad_ref[...] = jnp.zeros_like(fpad_ref)
        fpad_ref[pl.ds(WP + 1, LOUT), :] = feat

        # RPN head: 3x3 conv + ReLU, then one packed 1x1 projection (cls | reg)
        h = jnp.maximum(conv3x3(fpad_ref, whc_ref[...], bhc_ref[...]), 0.0)
        out_ref[...] = (jnp.dot(h, wp_ref[...], preferred_element_type=jnp.float32)
                        + bp_ref[...])

    return kernel


def rpn_backbone_head(x_nhwc, params):
    B, H, W, Cin = x_nhwc.shape
    Cout = params["w_hc"].shape[-1]
    A5 = params["w_cls"].shape[-1] + params["w_reg"].shape[-1]
    WP = W + 2
    LIN = (H + 3) * WP                 # +1 top pad, +2 bottom pad (slice-length safety)
    LOUT = H * WP

    # zero-pad once (1x traffic) and flatten rows; channels stay on lanes
    xflat = jnp.pad(x_nhwc, ((0, 0), (1, 2), (1, 1), (0, 0))).reshape(B, LIN, Cin)
    w_proj = jnp.concatenate([params["w_cls"], params["w_reg"]], axis=1)   # (Cout, 5A)
    b_proj = jnp.concatenate([params["b_cls"], params["b_reg"]], axis=1)   # (1, 5A)

    # TODO(synk): for large feature maps, tile LOUT (with a (2*WP+2)-row halo) instead of
    # one whole-image block per grid step, and size vmem_limit_bytes per generation.
    out = pl.pallas_call(
        _make_backbone_head_kernel(H, W),
        out_shape=jax.ShapeDtypeStruct((B, LOUT, A5), jnp.float32),
        grid=(B,),
        in_specs=[
            pl.BlockSpec((None, LIN, Cin), lambda b: (b, 0, 0)),
            pl.BlockSpec((9, Cin, Cin), lambda b: (0, 0, 0)),
            pl.BlockSpec((1, Cin), lambda b: (0, 0)),
            pl.BlockSpec((9, Cin, Cout), lambda b: (0, 0, 0)),
            pl.BlockSpec((1, Cout), lambda b: (0, 0)),
            pl.BlockSpec((Cout, A5), lambda b: (0, 0)),
            pl.BlockSpec((1, A5), lambda b: (0, 0)),
        ],
        out_specs=pl.BlockSpec((None, LOUT, A5), lambda b: (b, 0, 0)),
        scratch_shapes=[pltpu.VMEM((LIN, Cin), jnp.float32)],
        compiler_params=pltpu.CompilerParams(dimension_semantics=("parallel",)),
    )(xflat, params["w_sh"], params["b_sh"], params["w_hc"], params["b_hc"],
      w_proj, b_proj)

    # drop the junk columns -> (B, H, W, A + 4A)
    return out.reshape(B, H, WP, A5)[:, :, :W, :]


# ============ kernel 2: fused decode + clip + sigmoid + validity + IoU + NMS ============

def _decode_clip(ax1, ay1, ax2, ay2, dx, dy, dw, dh, img_h, img_w):
    """BoxCoder.decode (weights 1,1,1,1) followed by clip_boxes_to_image."""
    w = ax2 - ax1
    h = ay2 - ay1
    cx = ax1 + 0.5 * w
    cy = ay1 + 0.5 * h
    dw = jnp.minimum(dw, BBOX_XFORM_CLIP)
    dh = jnp.minimum(dh, BBOX_XFORM_CLIP)
    pcx = dx * w + cx
    pcy = dy * h + cy
    pw = jnp.exp(dw) * w
    ph = jnp.exp(dh) * h
    x1 = jnp.clip(pcx - 0.5 * pw, 0.0, img_w)
    y1 = jnp.clip(pcy - 0.5 * ph, 0.0, img_h)
    x2 = jnp.clip(pcx + 0.5 * pw, 0.0, img_w)
    y2 = jnp.clip(pcy + 0.5 * ph, 0.0, img_h)
    return x1, y1, x2, y2


def _make_postproc_kernel(img_h, img_w, K):
    def kernel(d4k_ref, a4k_ref, dk4_ref, ak4_ref, logit_ref,
               boxes_ref, probs_ref, keep_ref, iou_scr):
        # ---- decode + clip, row layout: each coordinate is a (1, K) lane vector ----
        a = a4k_ref[...]
        d = d4k_ref[...]
        x1r, y1r, x2r, y2r = _decode_clip(a[0:1], a[1:2], a[2:3], a[3:4],
                                          d[0:1], d[1:2], d[2:3], d[3:4],
                                          img_h, img_w)
        boxes_ref[...] = jnp.concatenate([x1r, y1r, x2r, y2r], axis=0)   # dense (4,K) store

        prob = jax.nn.sigmoid(logit_ref[...])                            # (1, K)
        probs_ref[...] = prob
        valid = (((x2r - x1r) >= MIN_BOX_SIZE) & ((y2r - y1r) >= MIN_BOX_SIZE)
                 & (prob >= SCORE_THRESH))

        # column operands recomputed from the (K, 4) copy to avoid an in-kernel transpose
        ac = ak4_ref[...]
        dc = dk4_ref[...]
        x1c, y1c, x2c, y2c = _decode_clip(ac[:, 0:1], ac[:, 1:2], ac[:, 2:3], ac[:, 3:4],
                                          dc[:, 0:1], dc[:, 1:2], dc[:, 2:3], dc[:, 3:4],
                                          img_h, img_w)

        # ---- pairwise IoU (K, K), kept in VMEM scratch only (never hits HBM) ----
        area_r = (x2r - x1r) * (y2r - y1r)
        area_c = (x2c - x1c) * (y2c - y1c)
        iw = jnp.maximum(jnp.minimum(x2c, x2r) - jnp.maximum(x1c, x1r), 0.0)
        ih = jnp.maximum(jnp.minimum(y2c, y2r) - jnp.maximum(y1c, y1r), 0.0)
        inter = iw * ih
        union = area_c + area_r - inter
        iou_scr[...] = jnp.where(union > 0.0, inter / union, 0.0)

        # ---- greedy NMS suppression over score-sorted boxes (single anchor level) ----
        lane = lax.broadcasted_iota(jnp.int32, (1, K), 1)

        def body(i, keep):
            row = iou_scr[pl.ds(i, 1), :]                                # (1, K)
            keep_i = jnp.max(jnp.where(lane == i, keep, 0.0), axis=1, keepdims=True)
            suppress = (keep_i > 0.5) & (row > NMS_THRESH) & (lane > i)
            return jnp.where(suppress, 0.0, keep)

        keep_ref[...] = lax.fori_loop(0, K, body, valid.astype(jnp.float32))

    return kernel


def rpn_postprocess(deltas_k4, anchors_k4, logits, img_h, img_w):
    B, K, _ = deltas_k4.shape
    deltas_4k = jnp.transpose(deltas_k4, (0, 2, 1))      # (B, 4, K), coords on sublanes
    anchors_4k = jnp.transpose(anchors_k4, (0, 2, 1))
    boxes_4k, probs, keep = pl.pallas_call(
        _make_postproc_kernel(float(img_h), float(img_w), K),
        out_shape=(jax.ShapeDtypeStruct((B, 4, K), jnp.float32),
                   jax.ShapeDtypeStruct((B, 1, K), jnp.float32),
                   jax.ShapeDtypeStruct((B, 1, K), jnp.float32)),
        grid=(B,),
        in_specs=[
            pl.BlockSpec((None, 4, K), lambda b: (b, 0, 0)),
            pl.BlockSpec((None, 4, K), lambda b: (b, 0, 0)),
            pl.BlockSpec((None, K, 4), lambda b: (b, 0, 0)),
            pl.BlockSpec((None, K, 4), lambda b: (b, 0, 0)),
            pl.BlockSpec((None, 1, K), lambda b: (b, 0, 0)),
        ],
        out_specs=(pl.BlockSpec((None, 4, K), lambda b: (b, 0, 0)),
                   pl.BlockSpec((None, 1, K), lambda b: (b, 0, 0)),
                   pl.BlockSpec((None, 1, K), lambda b: (b, 0, 0))),
        scratch_shapes=[pltpu.VMEM((K, K), jnp.float32)],
        compiler_params=pltpu.CompilerParams(dimension_semantics=("parallel",)),
    )(deltas_4k, anchors_4k, deltas_k4, anchors_k4, logits.reshape(B, 1, K))
    return (jnp.transpose(boxes_4k, (0, 2, 1)),          # (B, K, 4) clipped boxes
            probs.reshape(B, K),
            keep.reshape(B, K) > 0.5)


# ============================ plain-JAX glue pieces ============================

def _base_anchors(sizes, aspect_ratios):
    scales = jnp.asarray(sizes, jnp.float32)
    ars = jnp.asarray(aspect_ratios, jnp.float32)
    h_ratios = jnp.sqrt(ars)
    w_ratios = 1.0 / h_ratios
    ws = (w_ratios[:, None] * scales[None, :]).reshape(-1)
    hs = (h_ratios[:, None] * scales[None, :]).reshape(-1)
    base = jnp.stack([-ws, -hs, ws, hs], axis=1) / 2.0
    return jnp.round(base)                                  # (A, 4)


def _grid_anchors(feat_h, feat_w, stride_h, stride_w, base):
    shifts_x = jnp.arange(feat_w, dtype=jnp.float32) * stride_w
    shifts_y = jnp.arange(feat_h, dtype=jnp.float32) * stride_h
    sy, sx = jnp.meshgrid(shifts_y, shifts_x, indexing="ij")
    shifts = jnp.stack([sx.reshape(-1), sy.reshape(-1), sx.reshape(-1), sy.reshape(-1)], axis=1)
    return (shifts[:, None, :] + base[None, :, :]).reshape(-1, 4)   # (H*W*A, 4)


def _select_after_nms(keep, post_nms):
    """Compact the kept (score-sorted) boxes into fixed-size slots."""
    # TODO(synk): this cumsum/scatter compaction (variable-length output packing) stays in
    # plain JAX; decode/clip/IoU/NMS-suppression already run inside the Pallas kernel.
    K = keep.shape[0]
    idx = jnp.arange(K, dtype=jnp.int32)
    rank = jnp.cumsum(keep.astype(jnp.int32)) - 1
    slot = jnp.where(keep & (rank < post_nms), rank, post_nms)
    src = jnp.full((post_nms + 1,), -1, jnp.int32).at[slot].set(idx)[:post_nms]
    sel_ok = src >= 0
    n_kept = jnp.minimum(jnp.sum(keep.astype(jnp.int32)), post_nms)
    return jnp.clip(src, 0, K - 1), sel_ok, n_kept


# ================================ full forward ================================

def rpn_forward(images_nchw, params):
    B, Cin, H, W = images_nchw.shape
    x = jnp.transpose(images_nchw, (0, 2, 3, 1)).astype(jnp.float32)   # NCHW -> NHWC
    A = params["w_cls"].shape[-1]

    # 1-2. fused shared conv + RPN head (single Pallas kernel; feat never leaves VMEM)
    packed = rpn_backbone_head(x, params)                    # (B, H, W, A + 4A)
    cls = packed[..., :A].reshape(B, H * W * A)              # (B, N) objectness logits
    reg = packed[..., A:].reshape(B, H * W * A, 4)           # (B, N, 4) box deltas

    # 3. anchors (single level; (H, W, A) ordering matches torchvision)
    feat_h, feat_w = H, W
    base = _base_anchors(SIZES[0], ASPECT_RATIOS[0])
    anchors = _grid_anchors(feat_h, feat_w, H // feat_h, W // feat_w, base)   # (N, 4)

    # 4-6. filter_proposals (eval): top-k FIRST, then decode/clip/sigmoid/NMS on survivors
    mode = "training" if TRAINING else "testing"
    pre_n = min(PRE_NMS_TOP_N[mode], H * W * A)
    post_n = POST_NMS_TOP_N[mode]

    top_vals, top_idx = lax.top_k(cls, pre_n)                # (B, K), sorted descending
    bidx = jnp.arange(B)[:, None]
    deltas_top = reg[bidx, top_idx]                          # (B, K, 4)
    anchors_top = anchors[top_idx]                           # (B, K, 4)

    boxes, probs, keep = rpn_postprocess(deltas_top, anchors_top, top_vals, H, W)
    src, sel_ok, n_kept = jax.vmap(partial(_select_after_nms, post_nms=post_n))(keep)
    final_boxes = jnp.where(sel_ok[:, :, None], boxes[bidx, src], 0.0)
    final_scores = jnp.where(sel_ok, probs[bidx, src], 0.0)

    losses = {}
    # TODO(synk): training branch (assign_targets_to_anchors / Matcher / fg_bg_sampler /
    # compute_loss) needs dynamic nonzero + random sampling; eval forward only.
    return final_boxes, final_scores, n_kept, losses


def init_params(key, cin, cout, num_anchors):
    ks = jax.random.split(key, 4)
    return {
        "w_sh": 0.01 * jax.random.normal(ks[0], (9, cin, cin), jnp.float32),
        "b_sh": jnp.zeros((1, cin), jnp.float32),
        "w_hc": 0.01 * jax.random.normal(ks[1], (9, cin, cout), jnp.float32),
        "b_hc": jnp.zeros((1, cout), jnp.float32),
        "w_cls": 0.01 * jax.random.normal(ks[2], (cout, num_anchors), jnp.float32),
        "b_cls": jnp.zeros((1, num_anchors), jnp.float32),
        "w_reg": 0.01 * jax.random.normal(ks[3], (cout, 4 * num_anchors), jnp.float32),
        "b_reg": jnp.zeros((1, 4 * num_anchors), jnp.float32),
    }


if __name__ == "__main__":
    B, Cin, H, W = 2, 4, 16, 16
    Cout = 8
    A = len(SIZES[0]) * len(ASPECT_RATIOS[0])          # anchors per location = 6

    key = jax.random.PRNGKey(0)
    k_param, k_img = jax.random.split(key)
    params = init_params(k_param, Cin, Cout, A)
    images = jax.random.normal(k_img, (B, Cin, H, W), jnp.float32)     # NCHW like PyTorch

    fwd = jax.jit(rpn_forward)
    final_boxes, final_scores, n_kept, losses = fwd(images, params)
    jax.block_until_ready((final_boxes, final_scores, n_kept))

    assert final_boxes.shape == (B, POST_NMS_TOP_N["testing"], 4)
    assert final_scores.shape == (B, POST_NMS_TOP_N["testing"])
    assert losses == {}
    print("KERNEL_OK")
</pallas_src>

<mosaic_0001>
module attributes {stable_mosaic.version = 11 : i64} {
  func.func @kernel(%arg0: i32, %arg1: memref<1x342x4xf32, #tpu.memory_space<vmem>>, %arg2: memref<9x4x4xf32, #tpu.memory_space<vmem>>, %arg3: memref<1x4xf32, #tpu.memory_space<vmem>>, %arg4: memref<9x4x8xf32, #tpu.memory_space<vmem>>, %arg5: memref<1x8xf32, #tpu.memory_space<vmem>>, %arg6: memref<8x30xf32, #tpu.memory_space<vmem>>, %arg7: memref<1x30xf32, #tpu.memory_space<vmem>>, %arg8: memref<1x288x30xf32, #tpu.memory_space<vmem>>, %arg9: memref<342x4xf32, #tpu.memory_space<vmem>>) attributes {dimension_semantics = [#tpu.dimension_semantics<parallel>], iteration_bounds = array<i64: 2>, scalar_prefetch = 0 : i64, scratch_operands = 1 : i64, tpu.core_type = #tpu.core_type<tc>, window_params = [{transform_indices = @transform_0, window_bounds = array<i64: 1, 342, 4>}, {pipeline_mode = #tpu.pipeline_mode<synchronous>, transform_indices = @transform_1, window_bounds = array<i64: 9, 4, 4>}, {pipeline_mode = #tpu.pipeline_mode<synchronous>, transform_indices = @transform_2, window_bounds = array<i64: 1, 4>}, {pipeline_mode = #tpu.pipeline_mode<synchronous>, transform_indices = @transform_3, window_bounds = array<i64: 9, 4, 8>}, {pipeline_mode = #tpu.pipeline_mode<synchronous>, transform_indices = @transform_4, window_bounds = array<i64: 1, 8>}, {pipeline_mode = #tpu.pipeline_mode<synchronous>, transform_indices = @transform_5, window_bounds = array<i64: 8, 30>}, {pipeline_mode = #tpu.pipeline_mode<synchronous>, transform_indices = @transform_6, window_bounds = array<i64: 1, 30>}, {transform_indices = @transform_7, window_bounds = array<i64: 1, 288, 30>}]} {
    %0 = tpu.iota {dimensions = array<i32: 0>} : vector<288x1xi32>
    %c18_i32 = arith.constant 18 : i32
    %c0_i32 = arith.constant 0 : i32
    %1 = arith.cmpi eq, %c18_i32, %c0_i32 : i32
    %c1_i32 = arith.constant 1 : i32
    %2 = arith.select %1, %c1_i32, %c18_i32 : i32
    %3 = vector.broadcast %2 : i32 to vector<288x1xi32>
    %4 = arith.remsi %0, %3 : vector<288x1xi32>
    %c0_i32_0 = arith.constant 0 : i32
    %5 = vector.broadcast %c0_i32_0 : i32 to vector<288x1xi32>
    %6 = arith.cmpi ne, %4, %5 : vector<288x1xi32>
    %c0_i32_1 = arith.constant 0 : i32
    %7 = vector.broadcast %c0_i32_1 : i32 to vector<288x1xi32>
    %8 = arith.cmpi slt, %4, %7 : vector<288x1xi32>
    %c0_i32_2 = arith.constant 0 : i32
    %9 = arith.cmpi slt, %2, %c0_i32_2 : i32
    %10 = vector.broadcast %9 : i1 to vector<288x1xi1>
    %11 = vector.broadcast %10 : vector<288x1xi1> to vector<288x1xi1>
    %12 = arith.xori %8, %11 : vector<288x1xi1>
    %13 = arith.andi %12, %6 : vector<288x1xi1>
    %14 = vector.broadcast %2 : i32 to vector<288x1xi32>
    %15 = arith.addi %4, %14 : vector<288x1xi32>
    %16 = arith.select %13, %15, %4 : vector<288x1xi1>, vector<288x1xi32>
    %c16_i32 = arith.constant 16 : i32
    %17 = vector.broadcast %c16_i32 : i32 to vector<288x1xi32>
    %18 = arith.cmpi slt, %16, %17 : vector<288x1xi32>
    %c0 = arith.constant 0 : index
    %c0_3 = arith.constant 0 : index
    %c0_4 = arith.constant 0 : index
    %19 = vector.load %arg2[%c0, %c0_3, %c0_4] : memref<9x4x4xf32, #tpu.memory_space<vmem>>, vector<9x4x4xf32>
    %c0_5 = arith.constant 0 : index
    %c0_6 = arith.constant 0 : index
    %20 = vector.load %arg3[%c0_5, %c0_6] : memref<1x4xf32, #tpu.memory_space<vmem>>, vector<1x4xf32>
    %cst = arith.constant 0.000000e+00 : f32
    %21 = vector.broadcast %cst : f32 to vector<288x4xf32>
    %c0_7 = arith.constant 0 : index
    %c0_8 = arith.constant 0 : index
    %c0_9 = arith.constant 0 : index
    %22 = vector.load %arg1[%c0_7, %c0_8, %c0_9] : memref<1x342x4xf32, #tpu.memory_space<vmem>>, vector<1x288x4xf32>
    %23 = vector.shape_cast %22 : vector<1x288x4xf32> to vector<288x4xf32>
    %24 = vector.extract_strided_slice %19 {offsets = [0, 0, 0], sizes = [1, 4, 4], strides = [1, 1, 1]} : vector<9x4x4xf32> to vector<1x4x4xf32>
    %25 = vector.shape_cast %24 : vector<1x4x4xf32> to vector<4x4xf32>
    %cst_10 = arith.constant dense<0.000000e+00> : vector<288x4xf32>
    %26 = tpu.matmul %23, %25, %cst_10 {dimension_numbers = #tpu.dot_dimension_numbers<[1], [0], [0], [1], [0, 0, 1, 1], [], []>} : vector<288x4xf32>, vector<4x4xf32>, vector<288x4xf32> -> vector<288x4xf32>
    %27 = arith.addf %21, %26 : vector<288x4xf32>
    %c0_11 = arith.constant 0 : index
    %c1 = arith.constant 1 : index
    %c0_12 = arith.constant 0 : index
    %28 = vector.load %arg1[%c0_11, %c1, %c0_12] : memref<1x342x4xf32, #tpu.memory_space<vmem>>, vector<1x288x4xf32>
    %29 = vector.shape_cast %28 : vector<1x288x4xf32> to vector<288x4xf32>
    %30 = vector.extract_strided_slice %19 {offsets = [1, 0, 0], sizes = [1, 4, 4], strides = [1, 1, 1]} : vector<9x4x4xf32> to vector<1x4x4xf32>
    %31 = vector.shape_cast %30 : vector<1x4x4xf32> to vector<4x4xf32>
    %cst_13 = arith.constant dense<0.000000e+00> : vector<288x4xf32>
    %32 = tpu.matmul %29, %31, %cst_13 {dimension_numbers = #tpu.dot_dimension_numbers<[1], [0], [0], [1], [0, 0, 1, 1], [], []>} : vector<288x4xf32>, vector<4x4xf32>, vector<288x4xf32> -> vector<288x4xf32>
    %33 = arith.addf %27, %32 : vector<288x4xf32>
    %c0_14 = arith.constant 0 : index
    %c2 = arith.constant 2 : index
    %c0_15 = arith.constant 0 : index
    %34 = vector.load %arg1[%c0_14, %c2, %c0_15] : memref<1x342x4xf32, #tpu.memory_space<vmem>>, vector<1x288x4xf32>
    %35 = vector.shape_cast %34 : vector<1x288x4xf32> to vector<288x4xf32>
    %36 = vector.extract_strided_slice %19 {offsets = [2, 0, 0], sizes = [1, 4, 4], strides = [1, 1, 1]} : vector<9x4x4xf32> to vector<1x4x4xf32>
    %37 = vector.shape_cast %36 : vector<1x4x4xf32> to vector<4x4xf32>
    %cst_16 = arith.constant dense<0.000000e+00> : vector<288x4xf32>
    %38 = tpu.matmul %35, %37, %cst_16 {dimension_numbers = #tpu.dot_dimension_numbers<[1], [0], [0], [1], [0, 0, 1, 1], [], []>} : vector<288x4xf32>, vector<4x4xf32>, vector<288x4xf32> -> vector<288x4xf32>
    %39 = arith.addf %33, %38 : vector<288x4xf32>
    %c0_17 = arith.constant 0 : index
    %c18 = arith.constant 18 : index
    %c0_18 = arith.constant 0 : index
    %40 = vector.load %arg1[%c0_17, %c18, %c0_18] : memref<1x342x4xf32, #tpu.memory_space<vmem>>, vector<1x288x4xf32>
    %41 = vector.shape_cast %40 : vector<1x288x4xf32> to vector<288x4xf32>
    %42 = vector.extract_strided_slice %19 {offsets = [3, 0, 0], sizes = [1, 4, 4], strides = [1, 1, 1]} : vector<9x4x4xf32> to vector<1x4x4xf32>
    %43 = vector.shape_cast %42 : vector<1x4x4xf32> to vector<4x4xf32>
    %cst_19 = arith.constant dense<0.000000e+00> : vector<288x4xf32>
    %44 = tpu.matmul %41, %43, %cst_19 {dimension_numbers = #tpu.dot_dimension_numbers<[1], [0], [0], [1], [0, 0, 1, 1], [], []>} : vector<288x4xf32>, vector<4x4xf32>, vector<288x4xf32> -> vector<288x4xf32>
    %45 = arith.addf %39, %44 : vector<288x4xf32>
    %c0_20 = arith.constant 0 : index
    %c19 = arith.constant 19 : index
    %c0_21 = arith.constant 0 : index
    %46 = vector.load %arg1[%c0_20, %c19, %c0_21] : memref<1x342x4xf32, #tpu.memory_space<vmem>>, vector<1x288x4xf32>
    %47 = vector.shape_cast %46 : vector<1x288x4xf32> to vector<288x4xf32>
    %48 = vector.extract_strided_slice %19 {offsets = [4, 0, 0], sizes = [1, 4, 4], strides = [1, 1, 1]} : vector<9x4x4xf32> to vector<1x4x4xf32>
    %49 = vector.shape_cast %48 : vector<1x4x4xf32> to vector<4x4xf32>
    %cst_22 = arith.constant dense<0.000000e+00> : vector<288x4xf32>
    %50 = tpu.matmul %47, %49, %cst_22 {dimension_numbers = #tpu.dot_dimension_numbers<[1], [0], [0], [1], [0, 0, 1, 1], [], []>} : vector<288x4xf32>, vector<4x4xf32>, vector<288x4xf32> -> vector<288x4xf32>
    %51 = arith.addf %45, %50 : vector<288x4xf32>
    %c0_23 = arith.constant 0 : index
    %c20 = arith.constant 20 : index
    %c0_24 = arith.constant 0 : index
    %52 = vector.load %arg1[%c0_23, %c20, %c0_24] : memref<1x342x4xf32, #tpu.memory_space<vmem>>, vector<1x288x4xf32>
    %53 = vector.shape_cast %52 : vector<1x288x4xf32> to vector<288x4xf32>
    %54 = vector.extract_strided_slice %19 {offsets = [5, 0, 0], sizes = [1, 4, 4], strides = [1, 1, 1]} : vector<9x4x4xf32> to vector<1x4x4xf32>
    %55 = vector.shape_cast %54 : vector<1x4x4xf32> to vector<4x4xf32>
    %cst_25 = arith.constant dense<0.000000e+00> : vector<288x4xf32>
    %56 = tpu.matmul %53, %55, %cst_25 {dimension_numbers = #tpu.dot_dimension_numbers<[1], [0], [0], [1], [0, 0, 1, 1], [], []>} : vector<288x4xf32>, vector<4x4xf32>, vector<288x4xf32> -> vector<288x4xf32>
    %57 = arith.addf %51, %56 : vector<288x4xf32>
    %c0_26 = arith.constant 0 : index
    %c36 = arith.constant 36 : index
    %c0_27 = arith.constant 0 : index
    %58 = vector.load %arg1[%c0_26, %c36, %c0_27] : memref<1x342x4xf32, #tpu.memory_space<vmem>>, vector<1x288x4xf32>
    %59 = vector.shape_cast %58 : vector<1x288x4xf32> to vector<288x4xf32>
    %60 = vector.extract_strided_slice %19 {offsets = [6, 0, 0], sizes = [1, 4, 4], strides = [1, 1, 1]} : vector<9x4x4xf32> to vector<1x4x4xf32>
    %61 = vector.shape_cast %60 : vector<1x4x4xf32> to vector<4x4xf32>
    %cst_28 = arith.constant dense<0.000000e+00> : vector<288x4xf32>
    %62 = tpu.matmul %59, %61, %cst_28 {dimension_numbers = #tpu.dot_dimension_numbers<[1], [0], [0], [1], [0, 0, 1, 1], [], []>} : vector<288x4xf32>, vector<4x4xf32>, vector<288x4xf32> -> vector<288x4xf32>
    %63 = arith.addf %57, %62 : vector<288x4xf32>
    %c0_29 = arith.constant 0 : index
    %c37 = arith.constant 37 : index
    %c0_30 = arith.constant 0 : index
    %64 = vector.load %arg1[%c0_29, %c37, %c0_30] : memref<1x342x4xf32, #tpu.memory_space<vmem>>, vector<1x288x4xf32>
    %65 = vector.shape_cast %64 : vector<1x288x4xf32> to vector<288x4xf32>
    %66 = vector.extract_strided_slice %19 {offsets = [7, 0, 0], sizes = [1, 4, 4], strides = [1, 1, 1]} : vector<9x4x4xf32> to vector<1x4x4xf32>
    %67 = vector.shape_cast %66 : vector<1x4x4xf32> to vector<4x4xf32>
    %cst_31 = arith.constant dense<0.000000e+00> : vector<288x4xf32>
    %68 = tpu.matmul %65, %67, %cst_31 {dimension_numbers = #tpu.dot_dimension_numbers<[1], [0], [0], [1], [0, 0, 1, 1], [], []>} : vector<288x4xf32>, vector<4x4xf32>, vector<288x4xf32> -> vector<288x4xf32>
    %69 = arith.addf %63, %68 : vector<288x4xf32>
    %c0_32 = arith.constant 0 : index
    %c38 = arith.constant 38 : index
    %c0_33 = arith.constant 0 : index
    %70 = vector.load %arg1[%c0_32, %c38, %c0_33] : memref<1x342x4xf32, #tpu.memory_space<vmem>>, vector<1x288x4xf32>
    %71 = vector.shape_cast %70 : vector<1x288x4xf32> to vector<288x4xf32>
    %72 = vector.extract_strided_slice %19 {offsets = [8, 0, 0], sizes = [1, 4, 4], strides = [1, 1, 1]} : vector<9x4x4xf32> to vector<1x4x4xf32>
    %73 = vector.shape_cast %72 : vector<1x4x4xf32> to vector<4x4xf32>
    %cst_34 = arith.constant dense<0.000000e+00> : vector<288x4xf32>
    %74 = tpu.matmul %71, %73, %cst_34 {dimension_numbers = #tpu.dot_dimension_numbers<[1], [0], [0], [1], [0, 0, 1, 1], [], []>} : vector<288x4xf32>, vector<4x4xf32>, vector<288x4xf32> -> vector<288x4xf32>
    %75 = arith.addf %69, %74 : vector<288x4xf32>
    %76 = vector.broadcast %20 : vector<1x4xf32> to vector<288x4xf32>
    %77 = arith.addf %75, %76 : vector<288x4xf32>
    %cst_35 = arith.constant 0.000000e+00 : f32
    %78 = vector.broadcast %cst_35 : f32 to vector<288x4xf32>
    %79 = arith.maximumf %77, %78 : vector<288x4xf32>
    %cst_36 = arith.constant 0.000000e+00 : f32
    %80 = vector.shape_cast %18 : vector<288x1xi1> to vector<288x1xi1>
    %81 = vector.broadcast %80 : vector<288x1xi1> to vector<288x4xi1>
    %82 = vector.broadcast %cst_36 : f32 to vector<288x4xf32>
    %83 = arith.select %81, %79, %82 : vector<288x4xi1>, vector<288x4xf32>
    %cst_37 = arith.constant 0.000000e+00 : f32
    %84 = vector.broadcast %cst_37 : f32 to vector<342x4xf32>
    %c0_38 = arith.constant 0 : index
    %c0_39 = arith.constant 0 : index
    %85 = vector.load %arg9[%c0_38, %c0_39] : memref<342x4xf32, #tpu.memory_space<vmem>>, vector<342x4xf32>
    tpu.vector_store %arg9[%c0_38, %c0_39], %84 {strides = array<i32>} : memref<342x4xf32, #tpu.memory_space<vmem>>, vector<342x4xf32>,
    %c19_40 = arith.constant 19 : index
    %c0_41 = arith.constant 0 : index
    %86 = vector.load %arg9[%c19_40, %c0_41] : memref<342x4xf32, #tpu.memory_space<vmem>>, vector<288x4xf32>
    tpu.vector_store %arg9[%c19_40, %c0_41], %83 {strides = array<i32>} : memref<342x4xf32, #tpu.memory_space<vmem>>, vector<288x4xf32>,
    %c0_42 = arith.constant 0 : index
    %c0_43 = arith.constant 0 : index
    %c0_44 = arith.constant 0 : index
    %87 = vector.load %arg4[%c0_42, %c0_43, %c0_44] : memref<9x4x8xf32, #tpu.memory_space<vmem>>, vector<9x4x8xf32>
    %c0_45 = arith.constant 0 : index
    %c0_46 = arith.constant 0 : index
    %88 = vector.load %arg5[%c0_45, %c0_46] : memref<1x8xf32, #tpu.memory_space<vmem>>, vector<1x8xf32>
    %cst_47 = arith.constant 0.000000e+00 : f32
    %89 = vector.broadcast %cst_47 : f32 to vector<288x8xf32>
    %c0_48 = arith.constant 0 : index
    %c0_49 = arith.constant 0 : index
    %90 = vector.load %arg9[%c0_48, %c0_49] : memref<342x4xf32, #tpu.memory_space<vmem>>, vector<288x4xf32>
    %91 = vector.extract_strided_slice %87 {offsets = [0, 0, 0], sizes = [1, 4, 8], strides = [1, 1, 1]} : vector<9x4x8xf32> to vector<1x4x8xf32>
    %92 = vector.shape_cast %91 : vector<1x4x8xf32> to vector<4x8xf32>
    %cst_50 = arith.constant dense<0.000000e+00> : vector<288x8xf32>
    %93 = tpu.matmul %90, %92, %cst_50 {dimension_numbers = #tpu.dot_dimension_numbers<[1], [0], [0], [1], [0, 0, 1, 1], [], []>} : vector<288x4xf32>, vector<4x8xf32>, vector<288x8xf32> -> vector<288x8xf32>
    %94 = arith.addf %89, %93 : vector<288x8xf32>
    %c1_51 = arith.constant 1 : index
    %c0_52 = arith.constant 0 : index
    %95 = vector.load %arg9[%c1_51, %c0_52] : memref<342x4xf32, #tpu.memory_space<vmem>>, vector<288x4xf32>
    %96 = vector.extract_strided_slice %87 {offsets = [1, 0, 0], sizes = [1, 4, 8], strides = [1, 1, 1]} : vector<9x4x8xf32> to vector<1x4x8xf32>
    %97 = vector.shape_cast %96 : vector<1x4x8xf32> to vector<4x8xf32>
    %cst_53 = arith.constant dense<0.000000e+00> : vector<288x8xf32>
    %98 = tpu.matmul %95, %97, %cst_53 {dimension_numbers = #tpu.dot_dimension_numbers<[1], [0], [0], [1], [0, 0, 1, 1], [], []>} : vector<288x4xf32>, vector<4x8xf32>, vector<288x8xf32> -> vector<288x8xf32>
    %99 = arith.addf %94, %98 : vector<288x8xf32>
    %c2_54 = arith.constant 2 : index
    %c0_55 = arith.constant 0 : index
    %100 = vector.load %arg9[%c2_54, %c0_55] : memref<342x4xf32, #tpu.memory_space<vmem>>, vector<288x4xf32>
    %101 = vector.extract_strided_slice %87 {offsets = [2, 0, 0], sizes = [1, 4, 8], strides = [1, 1, 1]} : vector<9x4x8xf32> to vector<1x4x8xf32>
    %102 = vector.shape_cast %101 : vector<1x4x8xf32> to vector<4x8xf32>
    %cst_56 = arith.constant dense<0.000000e+00> : vector<288x8xf32>
    %103 = tpu.matmul %100, %102, %cst_56 {dimension_numbers = #tpu.dot_dimension_numbers<[1], [0], [0], [1], [0, 0, 1, 1], [], []>} : vector<288x4xf32>, vector<4x8xf32>, vector<288x8xf32> -> vector<288x8xf32>
    %104 = arith.addf %99, %103 : vector<288x8xf32>
    %c18_57 = arith.constant 18 : index
    %c0_58 = arith.constant 0 : index
    %105 = vector.load %arg9[%c18_57, %c0_58] : memref<342x4xf32, #tpu.memory_space<vmem>>, vector<288x4xf32>
    %106 = vector.extract_strided_slice %87 {offsets = [3, 0, 0], sizes = [1, 4, 8], strides = [1, 1, 1]} : vector<9x4x8xf32> to vector<1x4x8xf32>
    %107 = vector.shape_cast %106 : vector<1x4x8xf32> to vector<4x8xf32>
    %cst_59 = arith.constant dense<0.000000e+00> : vector<288x8xf32>
    %108 = tpu.matmul %105, %107, %cst_59 {dimension_numbers = #tpu.dot_dimension_numbers<[1], [0], [0], [1], [0, 0, 1, 1], [], []>} : vector<288x4xf32>, vector<4x8xf32>, vector<288x8xf32> -> vector<288x8xf32>
    %109 = arith.addf %104, %108 : vector<288x8xf32>
    %c19_60 = arith.constant 19 : index
    %c0_61 = arith.constant 0 : index
    %110 = vector.load %arg9[%c19_60, %c0_61] : memref<342x4xf32, #tpu.memory_space<vmem>>, vector<288x4xf32>
    %111 = vector.extract_strided_slice %87 {offsets = [4, 0, 0], sizes = [1, 4, 8], strides = [1, 1, 1]} : vector<9x4x8xf32> to vector<1x4x8xf32>
    %112 = vector.shape_cast %111 : vector<1x4x8xf32> to vector<4x8xf32>
    %cst_62 = arith.constant dense<0.000000e+00> : vector<288x8xf32>
    %113 = tpu.matmul %110, %112, %cst_62 {dimension_numbers = #tpu.dot_dimension_numbers<[1], [0], [0], [1], [0, 0, 1, 1], [], []>} : vector<288x4xf32>, vector<4x8xf32>, vector<288x8xf32> -> vector<288x8xf32>
    %114 = arith.addf %109, %113 : vector<288x8xf32>
    %c20_63 = arith.constant 20 : index
    %c0_64 = arith.constant 0 : index
    %115 = vector.load %arg9[%c20_63, %c0_64] : memref<342x4xf32, #tpu.memory_space<vmem>>, vector<288x4xf32>
    %116 = vector.extract_strided_slice %87 {offsets = [5, 0, 0], sizes = [1, 4, 8], strides = [1, 1, 1]} : vector<9x4x8xf32> to vector<1x4x8xf32>
    %117 = vector.shape_cast %116 : vector<1x4x8xf32> to vector<4x8xf32>
    %cst_65 = arith.constant dense<0.000000e+00> : vector<288x8xf32>
    %118 = tpu.matmul %115, %117, %cst_65 {dimension_numbers = #tpu.dot_dimension_numbers<[1], [0], [0], [1], [0, 0, 1, 1], [], []>} : vector<288x4xf32>, vector<4x8xf32>, vector<288x8xf32> -> vector<288x8xf32>
    %119 = arith.addf %114, %118 : vector<288x8xf32>
    %c36_66 = arith.constant 36 : index
    %c0_67 = arith.constant 0 : index
    %120 = vector.load %arg9[%c36_66, %c0_67] : memref<342x4xf32, #tpu.memory_space<vmem>>, vector<288x4xf32>
    %121 = vector.extract_strided_slice %87 {offsets = [6, 0, 0], sizes = [1, 4, 8], strides = [1, 1, 1]} : vector<9x4x8xf32> to vector<1x4x8xf32>
    %122 = vector.shape_cast %121 : vector<1x4x8xf32> to vector<4x8xf32>
    %cst_68 = arith.constant dense<0.000000e+00> : vector<288x8xf32>
    %123 = tpu.matmul %120, %122, %cst_68 {dimension_numbers = #tpu.dot_dimension_numbers<[1], [0], [0], [1], [0, 0, 1, 1], [], []>} : vector<288x4xf32>, vector<4x8xf32>, vector<288x8xf32> -> vector<288x8xf32>
    %124 = arith.addf %119, %123 : vector<288x8xf32>
    %c37_69 = arith.constant 37 : index
    %c0_70 = arith.constant 0 : index
    %125 = vector.load %arg9[%c37_69, %c0_70] : memref<342x4xf32, #tpu.memory_space<vmem>>, vector<288x4xf32>
    %126 = vector.extract_strided_slice %87 {offsets = [7, 0, 0], sizes = [1, 4, 8], strides = [1, 1, 1]} : vector<9x4x8xf32> to vector<1x4x8xf32>
    %127 = vector.shape_cast %126 : vector<1x4x8xf32> to vector<4x8xf32>
    %cst_71 = arith.constant dense<0.000000e+00> : vector<288x8xf32>
    %128 = tpu.matmul %125, %127, %cst_71 {dimension_numbers = #tpu.dot_dimension_numbers<[1], [0], [0], [1], [0, 0, 1, 1], [], []>} : vector<288x4xf32>, vector<4x8xf32>, vector<288x8xf32> -> vector<288x8xf32>
    %129 = arith.addf %124, %128 : vector<288x8xf32>
    %c38_72 = arith.constant 38 : index
    %c0_73 = arith.constant 0 : index
    %130 = vector.load %arg9[%c38_72, %c0_73] : memref<342x4xf32, #tpu.memory_space<vmem>>, vector<288x4xf32>
    %131 = vector.extract_strided_slice %87 {offsets = [8, 0, 0], sizes = [1, 4, 8], strides = [1, 1, 1]} : vector<9x4x8xf32> to vector<1x4x8xf32>
    %132 = vector.shape_cast %131 : vector<1x4x8xf32> to vector<4x8xf32>
    %cst_74 = arith.constant dense<0.000000e+00> : vector<288x8xf32>
    %133 = tpu.matmul %130, %132, %cst_74 {dimension_numbers = #tpu.dot_dimension_numbers<[1], [0], [0], [1], [0, 0, 1, 1], [], []>} : vector<288x4xf32>, vector<4x8xf32>, vector<288x8xf32> -> vector<288x8xf32>
    %134 = arith.addf %129, %133 : vector<288x8xf32>
    %135 = vector.broadcast %88 : vector<1x8xf32> to vector<288x8xf32>
    %136 = arith.addf %134, %135 : vector<288x8xf32>
    %cst_75 = arith.constant 0.000000e+00 : f32
    %137 = vector.broadcast %cst_75 : f32 to vector<288x8xf32>
    %138 = arith.maximumf %136, %137 : vector<288x8xf32>
    %c0_76 = arith.constant 0 : index
    %c0_77 = arith.constant 0 : index
    %139 = vector.load %arg6[%c0_76, %c0_77] : memref<8x30xf32, #tpu.memory_space<vmem>>, vector<8x30xf32>
    %cst_78 = arith.constant dense<0.000000e+00> : vector<288x30xf32>
    %140 = tpu.matmul %138, %139, %cst_78 {dimension_numbers = #tpu.dot_dimension_numbers<[1], [0], [0], [1], [0, 0, 1, 1], [], []>} : vector<288x8xf32>, vector<8x30xf32>, vector<288x30xf32> -> vector<288x30xf32>
    %c0_79 = arith.constant 0 : index
    %c0_80 = arith.constant 0 : index
    %141 = vector.load %arg7[%c0_79, %c0_80] : memref<1x30xf32, #tpu.memory_space<vmem>>, vector<1x30xf32>
    %142 = vector.broadcast %141 : vector<1x30xf32> to vector<288x30xf32>
    %143 = arith.addf %140, %142 : vector<288x30xf32>
    %c0_81 = arith.constant 0 : index
    %c0_82 = arith.constant 0 : index
    %c0_83 = arith.constant 0 : index
    %144 = vector.load %arg8[%c0_81, %c0_82, %c0_83] : memref<1x288x30xf32, #tpu.memory_space<vmem>>, vector<1x288x30xf32>
    %145 = vector.shape_cast %144 : vector<1x288x30xf32> to vector<288x30xf32>
    %146 = vector.shape_cast %143 : vector<288x30xf32> to vector<1x288x30xf32>
    tpu.vector_store %arg8[%c0_81, %c0_82, %c0_83], %146 {strides = array<i32>} : memref<1x288x30xf32, #tpu.memory_space<vmem>>, vector<1x288x30xf32>,
    return
  }
  func.func @transform_0(%arg0: i32) -> (i32, i32, i32) {
    %c0_i32 = arith.constant 0 : i32
    %c0_i32_0 = arith.constant 0 : i32
    %c0_i32_1 = arith.constant 0 : i32
    return %arg0, %c0_i32, %c0_i32_0 : i32, i32, i32
  }
  func.func @transform_1(%arg0: i32) -> (i32, i32, i32) {
    %c0_i32 = arith.constant 0 : i32
    %c0_i32_0 = arith.constant 0 : i32
    %c0_i32_1 = arith.constant 0 : i32
    %c0_i32_2 = arith.constant 0 : i32
    return %c0_i32, %c0_i32_0, %c0_i32_1 : i32, i32, i32
  }
  func.func @transform_2(%arg0: i32) -> (i32, i32) {
    %c0_i32 = arith.constant 0 : i32
    %c0_i32_0 = arith.constant 0 : i32
    %c0_i32_1 = arith.constant 0 : i32
    return %c0_i32, %c0_i32_0 : i32, i32
  }
  func.func @transform_3(%arg0: i32) -> (i32, i32, i32) {
    %c0_i32 = arith.constant 0 : i32
    %c0_i32_0 = arith.constant 0 : i32
    %c0_i32_1 = arith.constant 0 : i32
    %c0_i32_2 = arith.constant 0 : i32
    return %c0_i32, %c0_i32_0, %c0_i32_1 : i32, i32, i32
  }
  func.func @transform_4(%arg0: i32) -> (i32, i32) {
    %c0_i32 = arith.constant 0 : i32
    %c0_i32_0 = arith.constant 0 : i32
    %c0_i32_1 = arith.constant 0 : i32
    return %c0_i32, %c0_i32_0 : i32, i32
  }
  func.func @transform_5(%arg0: i32) -> (i32, i32) {
    %c0_i32 = arith.constant 0 : i32
    %c0_i32_0 = arith.constant 0 : i32
    %c0_i32_1 = arith.constant 0 : i32
    return %c0_i32, %c0_i32_0 : i32, i32
  }
  func.func @transform_6(%arg0: i32) -> (i32, i32) {
    %c0_i32 = arith.constant 0 : i32
    %c0_i32_0 = arith.constant 0 : i32
    %c0_i32_1 = arith.constant 0 : i32
    return %c0_i32, %c0_i32_0 : i32, i32
  }
  func.func @transform_7(%arg0: i32) -> (i32, i32, i32) {
    %c0_i32 = arith.constant 0 : i32
    %c0_i32_0 = arith.constant 0 : i32
    %c0_i32_1 = arith.constant 0 : i32
    return %arg0, %c0_i32, %c0_i32_0 : i32, i32, i32
  }
}

module attributes {stable_mosaic.version = 11 : i64} {
  func.func @kernel(%arg0: i32, %arg1: memref<1x4x128xf32, #tpu.memory_space<vmem>>, %arg2: memref<1x4x128xf32, #tpu.memory_space<vmem>>, %arg3: memref<1x128x4xf32, #tpu.memory_space<vmem>>, %arg4: memref<1x128x4xf32, #tpu.memory_space<vmem>>, %arg5: memref<1x1x128xf32, #tpu.memory_space<vmem>>, %arg6: memref<1x4x128xf32, #tpu.memory_space<vmem>>, %arg7: memref<1x1x128xf32, #tpu.memory_space<vmem>>, %arg8: memref<1x1x128xf32, #tpu.memory_space<vmem>>, %arg9: memref<128x128xf32, #tpu.memory_space<vmem>>) attributes {dimension_semantics = [#tpu.dimension_semantics<parallel>], iteration_bounds = array<i64: 2>, scalar_prefetch = 0 : i64, scratch_operands = 1 : i64, tpu.core_type = #tpu.core_type<tc>, window_params = [{transform_indices = @transform_0, window_bounds = array<i64: 1, 4, 128>}, {transform_indices = @transform_1, window_bounds = array<i64: 1, 4, 128>}, {transform_indices = @transform_2, window_bounds = array<i64: 1, 128, 4>}, {transform_indices = @transform_3, window_bounds = array<i64: 1, 128, 4>}, {transform_indices = @transform_4, window_bounds = array<i64: 1, 1, 128>}, {transform_indices = @transform_5, window_bounds = array<i64: 1, 4, 128>}, {transform_indices = @transform_6, window_bounds = array<i64: 1, 1, 128>}, {transform_indices = @transform_7, window_bounds = array<i64: 1, 1, 128>}]} {
    %c0 = arith.constant 0 : index
    %c0_0 = arith.constant 0 : index
    %c0_1 = arith.constant 0 : index
    %0 = vector.load %arg2[%c0, %c0_0, %c0_1] : memref<1x4x128xf32, #tpu.memory_space<vmem>>, vector<1x4x128xf32>
    %1 = vector.shape_cast %0 : vector<1x4x128xf32> to vector<4x128xf32>
    %c0_2 = arith.constant 0 : index
    %c0_3 = arith.constant 0 : index
    %c0_4 = arith.constant 0 : index
    %2 = vector.load %arg1[%c0_2, %c0_3, %c0_4] : memref<1x4x128xf32, #tpu.memory_space<vmem>>, vector<1x4x128xf32>
    %3 = vector.shape_cast %2 : vector<1x4x128xf32> to vector<4x128xf32>
    %4 = vector.extract_strided_slice %1 {offsets = [0, 0], sizes = [1, 128], strides = [1, 1]} : vector<4x128xf32> to vector<1x128xf32>
    %5 = vector.extract_strided_slice %1 {offsets = [1, 0], sizes = [1, 128], strides = [1, 1]} : vector<4x128xf32> to vector<1x128xf32>
    %6 = vector.extract_strided_slice %1 {offsets = [2, 0], sizes = [1, 128], strides = [1, 1]} : vector<4x128xf32> to vector<1x128xf32>
    %7 = vector.extract_strided_slice %1 {offsets = [3, 0], sizes = [1, 128], strides = [1, 1]} : vector<4x128xf32> to vector<1x128xf32>
    %8 = vector.extract_strided_slice %3 {offsets = [0, 0], sizes = [1, 128], strides = [1, 1]} : vector<4x128xf32> to vector<1x128xf32>
    %9 = vector.extract_strided_slice %3 {offsets = [1, 0], sizes = [1, 128], strides = [1, 1]} : vector<4x128xf32> to vector<1x128xf32>
    %10 = vector.extract_strided_slice %3 {offsets = [2, 0], sizes = [1, 128], strides = [1, 1]} : vector<4x128xf32> to vector<1x128xf32>
    %11 = vector.extract_strided_slice %3 {offsets = [3, 0], sizes = [1, 128], strides = [1, 1]} : vector<4x128xf32> to vector<1x128xf32>
    %12 = arith.subf %6, %4 : vector<1x128xf32>
    %13 = arith.subf %7, %5 : vector<1x128xf32>
    %cst = arith.constant 5.000000e-01 : f32
    %14 = vector.broadcast %cst : f32 to vector<1x128xf32>
    %15 = arith.mulf %14, %12 : vector<1x128xf32>
    %16 = arith.addf %4, %15 : vector<1x128xf32>
    %cst_5 = arith.constant 5.000000e-01 : f32
    %17 = vector.broadcast %cst_5 : f32 to vector<1x128xf32>
    %18 = arith.mulf %17, %13 : vector<1x128xf32>
    %19 = arith.addf %5, %18 : vector<1x128xf32>
    %cst_6 = arith.constant 4.13516665 : f32
    %20 = vector.broadcast %cst_6 : f32 to vector<1x128xf32>
    %21 = arith.minimumf %10, %20 : vector<1x128xf32>
    %cst_7 = arith.constant 4.13516665 : f32
    %22 = vector.broadcast %cst_7 : f32 to vector<1x128xf32>
    %23 = arith.minimumf %11, %22 : vector<1x128xf32>
    %24 = arith.mulf %8, %12 : vector<1x128xf32>
    %25 = arith.addf %24, %16 : vector<1x128xf32>
    %26 = arith.mulf %9, %13 : vector<1x128xf32>
    %27 = arith.addf %26, %19 : vector<1x128xf32>
    %28 = math.exp %21 : vector<1x128xf32>
    %29 = arith.mulf %28, %12 : vector<1x128xf32>
    %30 = math.exp %23 : vector<1x128xf32>
    %31 = arith.mulf %30, %13 : vector<1x128xf32>
    %cst_8 = arith.constant 5.000000e-01 : f32
    %32 = vector.broadcast %cst_8 : f32 to vector<1x128xf32>
    %33 = arith.mulf %32, %29 : vector<1x128xf32>
    %34 = arith.subf %25, %33 : vector<1x128xf32>
    %cst_9 = arith.constant 0.000000e+00 : f32
    %cst_10 = arith.constant 1.600000e+01 : f32
    %35 = vector.broadcast %cst_9 : f32 to vector<1x128xf32>
    %36 = arith.maximumf %35, %34 : vector<1x128xf32>
    %37 = vector.broadcast %cst_10 : f32 to vector<1x128xf32>
    %38 = arith.minimumf %37, %36 : vector<1x128xf32>
    %cst_11 = arith.constant 5.000000e-01 : f32
    %39 = vector.broadcast %cst_11 : f32 to vector<1x128xf32>
    %40 = arith.mulf %39, %31 : vector<1x128xf32>
    %41 = arith.subf %27, %40 : vector<1x128xf32>
    %cst_12 = arith.constant 0.000000e+00 : f32
    %cst_13 = arith.constant 1.600000e+01 : f32
    %42 = vector.broadcast %cst_12 : f32 to vector<1x128xf32>
    %43 = arith.maximumf %42, %41 : vector<1x128xf32>
    %44 = vector.broadcast %cst_13 : f32 to vector<1x128xf32>
    %45 = arith.minimumf %44, %43 : vector<1x128xf32>
    %cst_14 = arith.constant 5.000000e-01 : f32
    %46 = vector.broadcast %cst_14 : f32 to vector<1x128xf32>
    %47 = arith.mulf %46, %29 : vector<1x128xf32>
    %48 = arith.addf %25, %47 : vector<1x128xf32>
    %cst_15 = arith.constant 0.000000e+00 : f32
    %cst_16 = arith.constant 1.600000e+01 : f32
    %49 = vector.broadcast %cst_15 : f32 to vector<1x128xf32>
    %50 = arith.maximumf %49, %48 : vector<1x128xf32>
    %51 = vector.broadcast %cst_16 : f32 to vector<1x128xf32>
    %52 = arith.minimumf %51, %50 : vector<1x128xf32>
    %cst_17 = arith.constant 5.000000e-01 : f32
    %53 = vector.broadcast %cst_17 : f32 to vector<1x128xf32>
    %54 = arith.mulf %53, %31 : vector<1x128xf32>
    %55 = arith.addf %27, %54 : vector<1x128xf32>
    %cst_18 = arith.constant 0.000000e+00 : f32
    %cst_19 = arith.constant 1.600000e+01 : f32
    %56 = vector.broadcast %cst_18 : f32 to vector<1x128xf32>
    %57 = arith.maximumf %56, %55 : vector<1x128xf32>
    %58 = vector.broadcast %cst_19 : f32 to vector<1x128xf32>
    %59 = arith.minimumf %58, %57 : vector<1x128xf32>
    %60 = tpu.concatenate %38, %45, %52, %59 in 0 : vector<1x128xf32>, vector<1x128xf32>, vector<1x128xf32>, vector<1x128xf32> -> vector<4x128xf32>
    %c0_20 = arith.constant 0 : index
    %c0_21 = arith.constant 0 : index
    %c0_22 = arith.constant 0 : index
    %61 = vector.load %arg6[%c0_20, %c0_21, %c0_22] : memref<1x4x128xf32, #tpu.memory_space<vmem>>, vector<1x4x128xf32>
    %62 = vector.shape_cast %61 : vector<1x4x128xf32> to vector<4x128xf32>
    %63 = vector.shape_cast %60 : vector<4x128xf32> to vector<1x4x128xf32>
    tpu.vector_store %arg6[%c0_20, %c0_21, %c0_22], %63 {strides = array<i32>} : memref<1x4x128xf32, #tpu.memory_space<vmem>>, vector<1x4x128xf32>,
    %c0_23 = arith.constant 0 : index
    %c0_24 = arith.constant 0 : index
    %c0_25 = arith.constant 0 : index
    %64 = vector.load %arg5[%c0_23, %c0_24, %c0_25] : memref<1x1x128xf32, #tpu.memory_space<vmem>>, vector<1x1x128xf32>
    %65 = vector.shape_cast %64 : vector<1x1x128xf32> to vector<1x128xf32>
    %66 = arith.negf %65 : vector<1x128xf32>
    %67 = math.exp %66 : vector<1x128xf32>
    %cst_26 = arith.constant 1.000000e+00 : f32
    %68 = vector.broadcast %cst_26 : f32 to vector<1x128xf32>
    %69 = arith.addf %68, %67 : vector<1x128xf32>
    %70 = arith.divf %68, %69 : vector<1x128xf32>
    %c0_27 = arith.constant 0 : index
    %c0_28 = arith.constant 0 : index
    %c0_29 = arith.constant 0 : index
    %71 = vector.load %arg7[%c0_27, %c0_28, %c0_29] : memref<1x1x128xf32, #tpu.memory_space<vmem>>, vector<1x1x128xf32>
    %72 = vector.shape_cast %71 : vector<1x1x128xf32> to vector<1x128xf32>
    %73 = vector.shape_cast %70 : vector<1x128xf32> to vector<1x1x128xf32>
    tpu.vector_store %arg7[%c0_27, %c0_28, %c0_29], %73 {strides = array<i32>} : memref<1x1x128xf32, #tpu.memory_space<vmem>>, vector<1x1x128xf32>,
    %74 = arith.subf %52, %38 : vector<1x128xf32>
    %cst_30 = arith.constant 1.000000e-03 : f32
    %75 = vector.broadcast %cst_30 : f32 to vector<1x128xf32>
    %76 = arith.cmpf oge, %74, %75 : vector<1x128xf32>
    %77 = arith.subf %59, %45 : vector<1x128xf32>
    %cst_31 = arith.constant 1.000000e-03 : f32
    %78 = vector.broadcast %cst_31 : f32 to vector<1x128xf32>
    %79 = arith.cmpf oge, %77, %78 : vector<1x128xf32>
    %80 = arith.andi %76, %79 : vector<1x128xi1>
    %cst_32 = arith.constant 0.000000e+00 : f32
    %81 = vector.broadcast %cst_32 : f32 to vector<1x128xf32>
    %82 = arith.cmpf oge, %70, %81 : vector<1x128xf32>
    %83 = arith.andi %80, %82 : vector<1x128xi1>
    %c0_33 = arith.constant 0 : index
    %c0_34 = arith.constant 0 : index
    %c0_35 = arith.constant 0 : index
    %84 = vector.load %arg4[%c0_33, %c0_34, %c0_35] : memref<1x128x4xf32, #tpu.memory_space<vmem>>, vector<1x128x4xf32>
    %85 = vector.shape_cast %84 : vector<1x128x4xf32> to vector<128x4xf32>
    %c0_36 = arith.constant 0 : index
    %c0_37 = arith.constant 0 : index
    %c0_38 = arith.constant 0 : index
    %86 = vector.load %arg3[%c0_36, %c0_37, %c0_38] : memref<1x128x4xf32, #tpu.memory_space<vmem>>, vector<1x128x4xf32>
    %87 = vector.shape_cast %86 : vector<1x128x4xf32> to vector<128x4xf32>
    %88 = vector.extract_strided_slice %85 {offsets = [0, 0], sizes = [128, 1], strides = [1, 1]} : vector<128x4xf32> to vector<128x1xf32>
    %89 = vector.extract_strided_slice %85 {offsets = [0, 1], sizes = [128, 1], strides = [1, 1]} : vector<128x4xf32> to vector<128x1xf32>
    %90 = vector.extract_strided_slice %85 {offsets = [0, 2], sizes = [128, 1], strides = [1, 1]} : vector<128x4xf32> to vector<128x1xf32>
    %91 = vector.extract_strided_slice %85 {offsets = [0, 3], sizes = [128, 1], strides = [1, 1]} : vector<128x4xf32> to vector<128x1xf32>
    %92 = vector.extract_strided_slice %87 {offsets = [0, 0], sizes = [128, 1], strides = [1, 1]} : vector<128x4xf32> to vector<128x1xf32>
    %93 = vector.extract_strided_slice %87 {offsets = [0, 1], sizes = [128, 1], strides = [1, 1]} : vector<128x4xf32> to vector<128x1xf32>
    %94 = vector.extract_strided_slice %87 {offsets = [0, 2], sizes = [128, 1], strides = [1, 1]} : vector<128x4xf32> to vector<128x1xf32>
    %95 = vector.extract_strided_slice %87 {offsets = [0, 3], sizes = [128, 1], strides = [1, 1]} : vector<128x4xf32> to vector<128x1xf32>
    %96 = arith.subf %90, %88 : vector<128x1xf32>
    %97 = arith.subf %91, %89 : vector<128x1xf32>
    %cst_39 = arith.constant 5.000000e-01 : f32
    %98 = vector.broadcast %cst_39 : f32 to vector<128x1xf32>
    %99 = arith.mulf %98, %96 : vector<128x1xf32>
    %100 = arith.addf %88, %99 : vector<128x1xf32>
    %cst_40 = arith.constant 5.000000e-01 : f32
    %101 = vector.broadcast %cst_40 : f32 to vector<128x1xf32>
    %102 = arith.mulf %101, %97 : vector<128x1xf32>
    %103 = arith.addf %89, %102 : vector<128x1xf32>
    %cst_41 = arith.constant 4.13516665 : f32
    %104 = vector.broadcast %cst_41 : f32 to vector<128x1xf32>
    %105 = arith.minimumf %94, %104 : vector<128x1xf32>
    %cst_42 = arith.constant 4.13516665 : f32
    %106 = vector.broadcast %cst_42 : f32 to vector<128x1xf32>
    %107 = arith.minimumf %95, %106 : vector<128x1xf32>
    %108 = arith.mulf %92, %96 : vector<128x1xf32>
    %109 = arith.addf %108, %100 : vector<128x1xf32>
    %110 = arith.mulf %93, %97 : vector<128x1xf32>
    %111 = arith.addf %110, %103 : vector<128x1xf32>
    %112 = math.exp %105 : vector<128x1xf32>
    %113 = arith.mulf %112, %96 : vector<128x1xf32>
    %114 = math.exp %107 : vector<128x1xf32>
    %115 = arith.mulf %114, %97 : vector<128x1xf32>
    %cst_43 = arith.constant 5.000000e-01 : f32
    %116 = vector.broadcast %cst_43 : f32 to vector<128x1xf32>
    %117 = arith.mulf %116, %113 : vector<128x1xf32>
    %118 = arith.subf %109, %117 : vector<128x1xf32>
    %cst_44 = arith.constant 0.000000e+00 : f32
    %cst_45 = arith.constant 1.600000e+01 : f32
    %119 = vector.broadcast %cst_44 : f32 to vector<128x1xf32>
    %120 = arith.maximumf %119, %118 : vector<128x1xf32>
    %121 = vector.broadcast %cst_45 : f32 to vector<128x1xf32>
    %122 = arith.minimumf %121, %120 : vector<128x1xf32>
    %cst_46 = arith.constant 5.000000e-01 : f32
    %123 = vector.broadcast %cst_46 : f32 to vector<128x1xf32>
    %124 = arith.mulf %123, %115 : vector<128x1xf32>
    %125 = arith.subf %111, %124 : vector<128x1xf32>
    %cst_47 = arith.constant 0.000000e+00 : f32
    %cst_48 = arith.constant 1.600000e+01 : f32
    %126 = vector.broadcast %cst_47 : f32 to vector<128x1xf32>
    %127 = arith.maximumf %126, %125 : vector<128x1xf32>
    %128 = vector.broadcast %cst_48 : f32 to vector<128x1xf32>
    %129 = arith.minimumf %128, %127 : vector<128x1xf32>
    %cst_49 = arith.constant 5.000000e-01 : f32
    %130 = vector.broadcast %cst_49 : f32 to vector<128x1xf32>
    %131 = arith.mulf %130, %113 : vector<128x1xf32>
    %132 = arith.addf %109, %131 : vector<128x1xf32>
    %cst_50 = arith.constant 0.000000e+00 : f32
    %cst_51 = arith.constant 1.600000e+01 : f32
    %133 = vector.broadcast %cst_50 : f32 to vector<128x1xf32>
    %134 = arith.maximumf %133, %132 : vector<128x1xf32>
    %135 = vector.broadcast %cst_51 : f32 to vector<128x1xf32>
    %136 = arith.minimumf %135, %134 : vector<128x1xf32>
    %cst_52 = arith.constant 5.000000e-01 : f32
    %137 = vector.broadcast %cst_52 : f32 to vector<128x1xf32>
    %138 = arith.mulf %137, %115 : vector<128x1xf32>
    %139 = arith.addf %111, %138 : vector<128x1xf32>
    %cst_53 = arith.constant 0.000000e+00 : f32
    %cst_54 = arith.constant 1.600000e+01 : f32
    %140 = vector.broadcast %cst_53 : f32 to vector<128x1xf32>
    %141 = arith.maximumf %140, %139 : vector<128x1xf32>
    %142 = vector.broadcast %cst_54 : f32 to vector<128x1xf32>
    %143 = arith.minimumf %142, %141 : vector<128x1xf32>
    %144 = arith.subf %52, %38 : vector<1x128xf32>
    %145 = arith.subf %59, %45 : vector<1x128xf32>
    %146 = arith.mulf %144, %145 : vector<1x128xf32>
    %147 = arith.subf %136, %122 : vector<128x1xf32>
    %148 = arith.subf %143, %129 : vector<128x1xf32>
    %149 = arith.mulf %147, %148 : vector<128x1xf32>
    %150 = vector.broadcast %136 : vector<128x1xf32> to vector<128x128xf32>
    %151 = vector.broadcast %52 : vector<1x128xf32> to vector<128x128xf32>
    %152 = arith.minimumf %150, %151 : vector<128x128xf32>
    %153 = vector.broadcast %122 : vector<128x1xf32> to vector<128x128xf32>
    %154 = vector.broadcast %38 : vector<1x128xf32> to vector<128x128xf32>
    %155 = arith.maximumf %153, %154 : vector<128x128xf32>
    %156 = arith.subf %152, %155 : vector<128x128xf32>
    %cst_55 = arith.constant 0.000000e+00 : f32
    %157 = vector.broadcast %cst_55 : f32 to vector<128x128xf32>
    %158 = arith.maximumf %156, %157 : vector<128x128xf32>
    %159 = vector.broadcast %143 : vector<128x1xf32> to vector<128x128xf32>
    %160 = vector.broadcast %59 : vector<1x128xf32> to vector<128x128xf32>
    %161 = arith.minimumf %159, %160 : vector<128x128xf32>
    %162 = vector.broadcast %129 : vector<128x1xf32> to vector<128x128xf32>
    %163 = vector.broadcast %45 : vector<1x128xf32> to vector<128x128xf32>
    %164 = arith.maximumf %162, %163 : vector<128x128xf32>
    %165 = arith.subf %161, %164 : vector<128x128xf32>
    %cst_56 = arith.constant 0.000000e+00 : f32
    %166 = vector.broadcast %cst_56 : f32 to vector<128x128xf32>
    %167 = arith.maximumf %165, %166 : vector<128x128xf32>
    %168 = arith.mulf %158, %167 : vector<128x128xf32>
    %169 = vector.broadcast %149 : vector<128x1xf32> to vector<128x128xf32>
    %170 = vector.broadcast %146 : vector<1x128xf32> to vector<128x128xf32>
    %171 = arith.addf %169, %170 : vector<128x128xf32>
    %172 = arith.subf %171, %168 : vector<128x128xf32>
    %cst_57 = arith.constant 0.000000e+00 : f32
    %173 = vector.broadcast %cst_57 : f32 to vector<128x128xf32>
    %174 = arith.cmpf ogt, %172, %173 : vector<128x128xf32>
    %175 = arith.divf %168, %172 : vector<128x128xf32>
    %cst_58 = arith.constant 0.000000e+00 : f32
    %176 = vector.broadcast %cst_58 : f32 to vector<128x128xf32>
    %177 = arith.select %174, %175, %176 : vector<128x128xi1>, vector<128x128xf32>
    %c0_59 = arith.constant 0 : index
    %c0_60 = arith.constant 0 : index
    %178 = vector.load %arg9[%c0_59, %c0_60] : memref<128x128xf32, #tpu.memory_space<vmem>>, vector<128x128xf32>
    tpu.vector_store %arg9[%c0_59, %c0_60], %177 {strides = array<i32>} : memref<128x128xf32, #tpu.memory_space<vmem>>, vector<128x128xf32>,
    %179 = tpu.iota {dimensions = array<i32: 1>} : vector<1x128xi32>
    %180 = arith.extui %83 : vector<1x128xi1> to vector<1x128xi32>
    %181 = arith.sitofp %180 : vector<1x128xi32> to vector<1x128xf32>
    %c0_i32 = arith.constant 0 : i32
    %c128_i32 = arith.constant 128 : i32
    %182 = arith.addi %c0_i32, %c128_i32 : i32
    %c1_i32 = arith.constant 1 : i32
    %183 = scf.for %arg10 = %c0_i32 to %182 step %c1_i32 iter_args(%arg11 = %181) -> (vector<1x128xf32>)  : i32 {
      %187 = arith.index_cast %arg10 : i32 to index
      %c0_65 = arith.constant 0 : index
      %188 = vector.load %arg9[%187, %c0_65] : memref<128x128xf32, #tpu.memory_space<vmem>>, vector<1x128xf32>
      %189 = vector.broadcast %arg10 : i32 to vector<1x128xi32>
      %190 = arith.cmpi eq, %179, %189 : vector<1x128xi32>
      %cst_66 = arith.constant 0.000000e+00 : f32
      %191 = vector.broadcast %cst_66 : f32 to vector<1x128xf32>
      %192 = arith.select %190, %arg11, %191 : vector<1x128xi1>, vector<1x128xf32>
      %cst_67 = arith.constant dense<0xFF800000> : vector<1xf32>
      %193 = vector.multi_reduction <maximumf>, %192, %cst_67 [1] : vector<1x128xf32> to vector<1xf32>
      %194 = vector.shape_cast %193 : vector<1xf32> to vector<1x1xf32>
      %cst_68 = arith.constant 5.000000e-01 : f32
      %195 = vector.broadcast %cst_68 : f32 to vector<1x1xf32>
      %196 = arith.cmpf ogt, %194, %195 : vector<1x1xf32>
      %cst_69 = arith.constant 0.699999988 : f32
      %197 = vector.broadcast %cst_69 : f32 to vector<1x128xf32>
      %198 = arith.cmpf ogt, %188, %197 : vector<1x128xf32>
      %199 = vector.broadcast %196 : vector<1x1xi1> to vector<1x128xi1>
      %200 = arith.andi %199, %198 : vector<1x128xi1>
      %201 = vector.broadcast %arg10 : i32 to vector<1x128xi32>
      %202 = arith.cmpi sgt, %179, %201 : vector<1x128xi32>
      %203 = arith.andi %200, %202 : vector<1x128xi1>
      %cst_70 = arith.constant 0.000000e+00 : f32
      %204 = vector.broadcast %cst_70 : f32 to vector<1x128xf32>
      %205 = arith.select %203, %204, %arg11 : vector<1x128xi1>, vector<1x128xf32>
      scf.yield %205 : vector<1x128xf32>
    }
    %c128_i32_61 = arith.constant 128 : i32
    %c0_62 = arith.constant 0 : index
    %c0_63 = arith.constant 0 : index
    %c0_64 = arith.constant 0 : index
    %184 = vector.load %arg8[%c0_62, %c0_63, %c0_64] : memref<1x1x128xf32, #tpu.memory_space<vmem>>, vector<1x1x128xf32>
    %185 = vector.shape_cast %184 : vector<1x1x128xf32> to vector<1x128xf32>
    %186 = vector.shape_cast %183 : vector<1x128xf32> to vector<1x1x128xf32>
    tpu.vector_store %arg8[%c0_62, %c0_63, %c0_64], %186 {strides = array<i32>} : memref<1x1x128xf32, #tpu.memory_space<vmem>>, vector<1x1x128xf32>,
    return
  }
  func.func @transform_0(%arg0: i32) -> (i32, i32, i32) {
    %c0_i32 = arith.constant 0 : i32
    %c0_i32_0 = arith.constant 0 : i32
    %c0_i32_1 = arith.constant 0 : i32
    return %arg0, %c0_i32, %c0_i32_0 : i32, i32, i32
  }
  func.func @transform_1(%arg0: i32) -> (i32, i32, i32) {
    %c0_i32 = arith.constant 0 : i32
    %c0_i32_0 = arith.constant 0 : i32
    %c0_i32_1 = arith.constant 0 : i32
    return %arg0, %c0_i32, %c0_i32_0 : i32, i32, i32
  }
  func.func @transform_2(%arg0: i32) -> (i32, i32, i32) {
    %c0_i32 = arith.constant 0 : i32
    %c0_i32_0 = arith.constant 0 : i32
    %c0_i32_1 = arith.constant 0 : i32
    return %arg0, %c0_i32, %c0_i32_0 : i32, i32, i32
  }
  func.func @transform_3(%arg0: i32) -> (i32, i32, i32) {
    %c0_i32 = arith.constant 0 : i32
    %c0_i32_0 = arith.constant 0 : i32
    %c0_i32_1 = arith.constant 0 : i32
    return %arg0, %c0_i32, %c0_i32_0 : i32, i32, i32
  }
  func.func @transform_4(%arg0: i32) -> (i32, i32, i32) {
    %c0_i32 = arith.constant 0 : i32
    %c0_i32_0 = arith.constant 0 : i32
    %c0_i32_1 = arith.constant 0 : i32
    return %arg0, %c0_i32, %c0_i32_0 : i32, i32, i32
  }
  func.func @transform_5(%arg0: i32) -> (i32, i32, i32) {
    %c0_i32 = arith.constant 0 : i32
    %c0_i32_0 = arith.constant 0 : i32
    %c0_i32_1 = arith.constant 0 : i32
    return %arg0, %c0_i32, %c0_i32_0 : i32, i32, i32
  }
  func.func @transform_6(%arg0: i32) -> (i32, i32, i32) {
    %c0_i32 = arith.constant 0 : i32
    %c0_i32_0 = arith.constant 0 : i32
    %c0_i32_1 = arith.constant 0 : i32
    return %arg0, %c0_i32, %c0_i32_0 : i32, i32, i32
  }
  func.func @transform_7(%arg0: i32) -> (i32, i32, i32) {
    %c0_i32 = arith.constant 0 : i32
    %c0_i32_0 = arith.constant 0 : i32
    %c0_i32_1 = arith.constant 0 : i32
    return %arg0, %c0_i32, %c0_i32_0 : i32, i32, i32
  }
}

</mosaic_0001>

<llo_original>
// kernel: neg.19
$region0: #{neg.19}
  #allocation0 [shape = 's32[1]{0}', space=sflag, size = 0x4, scoped, tag = 'scoped memory for neg.19']
  %s0 = inlined_call_operand.vmem [shape: f32[6,1], index: 0, kind: input, shape index: {}]
  %s1 = inlined_call_operand.vmem [shape: f32[6,1], index: 1, kind: output, shape index: {}]
  %v2 = vld [vmem:[%s0] sm:$0x1]
  %3 = xla_tuple %v2
  %4 = xla_tuple %3
  %v5 = vxor.u32 %v2, 2147483648
  %6 = xla_tuple %v5
  %7 = vst [vmem:[%s1] sm:$0x1] %v5

// kernel: rpn_forward.2
$region0: #{rpn_forward.2}
  #allocation0 [shape = 'u32[]', space=smem, size = 0x4, offset = 0x4, fixed_abs, tag = 'smem constant byte address 0x4 - core index']
  #allocation1 [shape = 'u32[144,128]{1,0:T(1,128)}', space=vmem, size = 0x12000, scoped, tag = 'internal scratch']
  #allocation2 [shape = 'f32[342,4]{1,0:T(8,128)}', space=vmem, size = 0x2b000, scoped, tag = 'scratch operand']
  %s0 = inlined_call_operand.vmem [shape: f32[2,342,4], index: 0, kind: input, shape index: {}]
  %s1 = inlined_call_operand.vmem [shape: f32[9,4,4], index: 1, kind: input, shape index: {}]
  %s2 = inlined_call_operand.hbm [shape: f32[1,4], index: 2, kind: input, shape index: {}]
  %s3 = inlined_call_operand.vmem [shape: f32[9,4,8], index: 3, kind: input, shape index: {}]
  %s4 = inlined_call_operand.hbm [shape: f32[1,8], index: 4, kind: input, shape index: {}]
  %s5 = inlined_call_operand.vmem [shape: f32[8,30], index: 5, kind: input, shape index: {}]
  %s6 = inlined_call_operand.vmem [shape: f32[1,30], index: 6, kind: input, shape index: {}]
  %s7 = inlined_call_operand.vmem [shape: f32[2,288,30], index: 7, kind: output, shape index: {}]
  %s8 = sld [smem:[#allocation0]]
  $region69: #{rpn_forward.2} parent=0
    _
  %s10 = ssub.s32 1, %s8
  %s11 = scalar_select 0, %s10, %s8
  $region1: #{rpn_forward.2} parent=0
    #allocation3 [shape = 'u8[512]{0}', space=vmem, size = 0x400, scoped, tag = 'input window, operand 2, single buffered']
    #allocation4 [shape = 's32[2]{0}', space=sflag, size = 0x8, scoped, tag = 'scoped memory for rpn_forward.2']
    #allocation5 [shape = 'u8[512]{0}', space=vmem, size = 0x400, scoped, tag = 'input window, operand 4, single buffered']
    #allocation6 [shape = 's32[1]{0}', space=sflag, size = 0x4, scoped, tag = 'scoped memory for rpn_forward.2']
    %12 = vsyncpa [#allocation4], 0
    %13 = vsyncpa [#allocation6], 0
    loop: start=0, step=1, limit=4
    $region2: #{rpn_forward.2} parent=1 // loop_pre_header
      _
    $region3: #{rpn_forward.2} parent=1 // loop_header
      %s15 = sphi 0, %s19
      %p16 = scmp.ge.s32.totalorder %s15, 4
      %s25 = sphi 0, %s27
      %s28 = sphi 0, %s25
      %s29 = sphi 0, %s28
      %s45 = sphi 0, %s29
      %s49 = sphi 0, %s49
      %s51 = sphi 0, %s49
      %s52 = sphi 0, %s51
      %s66 = sphi 0, %s52
      %s70 = sphi 0, %s70
      %s72 = sphi 0, %s70
      %s73 = sphi 0, %s72
      %s87 = sphi 0, %s73
      %s91 = sphi 0, %s91
      %s93 = sphi 0, %s91
      %s94 = sphi 0, %s93
      %s108 = sphi 0, %s94
      %s112 = sphi 0, %s112
      %s114 = sphi 0, %s112
      %s115 = sphi 0, %s114
      %s129 = sphi 0, %s115
      %s133 = sphi 0, %s133
      %s135 = sphi 0, %s133
      %s136 = sphi 0, %s135
      %s150 = sphi 0, %s136
      %s154 = sphi 0, %s154
      %s156 = sphi 0, %s154
      %s157 = sphi 0, %s156
      %s171 = sphi 0, %s157
      %s177 = sphi 0, %s179
      %s180 = sphi 0, %s177
      %s181 = sphi 0, %s180
      %s197 = sphi 0, %s181
    $region4: #{rpn_forward.2} parent=1 // loop_header_branch
      %18 = sbr.rel (%p16) target = $region8
    $region5: #{rpn_forward.2} parent=1 // loop_body
      %s20 = ssub.s32 %s15, 1
      %s21 = ssub.s32 %s15, 2
      %s22 = sadd.s32 %s15, 1
      %s23 = ssub.s32 %s15, %s22
      %p24 = scmp.eq.s32.totalorder %s23, 0
      %s26 = sadd.s32 %s25, 1
      %s27 = scalar_select %p24, %s25, %s26
      %p30 = pneg %p24
      %p31 = scmp.eq.s32.totalorder %s15, 1
      %p32 = por %p30, %p31
      %p33 = scmp.ne.s32.totalorder %s25, %s28
      %p34 = scmp.eq.s32.totalorder %s15, 0
      %p35 = por %p33, %p34
      %p36 = scmp.ne.s32.totalorder %s25, %s28
      %p37 = scmp.eq.s32.totalorder %s20, 1
      %p38 = por %p36, %p37
      %p39 = scmp.ne.s32.totalorder %s28, %s29
      %p40 = scmp.eq.s32.totalorder %s20, 0
      %p41 = por %p39, %p40
      %p42 = scmp.ne.s32.totalorder %s28, %s29
      %p43 = scmp.eq.s32.totalorder %s21, 1
      %p44 = por %p42, %p43
      %p46 = scmp.ne.s32.totalorder %s29, %s45
      %p47 = scmp.eq.s32.totalorder %s21, 0
      %p48 = por %p46, %p47
      %s50 = sadd.s32 %s49, 1
      %p53 = scmp.eq.s32.totalorder %s15, 1
      %p54 = scmp.ne.s32.totalorder %s49, %s51
      %p55 = scmp.eq.s32.totalorder %s15, 0
      %p56 = por %p54, %p55
      %p57 = scmp.ne.s32.totalorder %s49, %s51
      %p58 = scmp.eq.s32.totalorder %s20, 1
      %p59 = por %p57, %p58
      %p60 = scmp.ne.s32.totalorder %s51, %s52
      %p61 = scmp.eq.s32.totalorder %s20, 0
      %p62 = por %p60, %p61
      %p63 = scmp.ne.s32.totalorder %s51, %s52
      %p64 = scmp.eq.s32.totalorder %s21, 1
      %p65 = por %p63, %p64
      %p67 = scmp.ne.s32.totalorder %s52, %s66
      %p68 = scmp.eq.s32.totalorder %s21, 0
      %p69 = por %p67, %p68
      %s71 = sadd.s32 %s70, 1
      %p74 = scmp.eq.s32.totalorder %s15, 1
      %p75 = scmp.ne.s32.totalorder %s70, %s72
      %p76 = scmp.eq.s32.totalorder %s15, 0
      %p77 = por %p75, %p76
      %p78 = scmp.ne.s32.totalorder %s70, %s72
      %p79 = scmp.eq.s32.totalorder %s20, 1
      %p80 = por %p78, %p79
      %p81 = scmp.ne.s32.totalorder %s72, %s73
      %p82 = scmp.eq.s32.totalorder %s20, 0
      %p83 = por %p81, %p82
      %p84 = scmp.ne.s32.totalorder %s72, %s73
      %p85 = scmp.eq.s32.totalorder %s21, 1
      %p86 = por %p84, %p85
      %p88 = scmp.ne.s32.totalorder %s73, %s87
      %p89 = scmp.eq.s32.totalorder %s21, 0
      %p90 = por %p88, %p89
      %s92 = sadd.s32 %s91, 1
      %p95 = scmp.eq.s32.totalorder %s15, 1
      %p96 = scmp.ne.s32.totalorder %s91, %s93
      %p97 = scmp.eq.s32.totalorder %s15, 0
      %p98 = por %p96, %p97
      %p99 = scmp.ne.s32.totalorder %s91, %s93
      %p100 = scmp.eq.s32.totalorder %s20, 1
      %p101 = por %p99, %p100
      %p102 = scmp.ne.s32.totalorder %s93, %s94
      %p103 = scmp.eq.s32.totalorder %s20, 0
      %p104 = por %p102, %p103
      %p105 = scmp.ne.s32.totalorder %s93, %s94
      %p106 = scmp.eq.s32.totalorder %s21, 1
      %p107 = por %p105, %p106
      %p109 = scmp.ne.s32.totalorder %s94, %s108
      %p110 = scmp.eq.s32.totalorder %s21, 0
      %p111 = por %p109, %p110
      %s113 = sadd.s32 %s112, 1
      %p116 = scmp.eq.s32.totalorder %s15, 1
      %p117 = scmp.ne.s32.totalorder %s112, %s114
      %p118 = scmp.eq.s32.totalorder %s15, 0
      %p119 = por %p117, %p118
      %p120 = scmp.ne.s32.totalorder %s112, %s114
      %p121 = scmp.eq.s32.totalorder %s20, 1
      %p122 = por %p120, %p121
      %p123 = scmp.ne.s32.totalorder %s114, %s115
      %p124 = scmp.eq.s32.totalorder %s20, 0
      %p125 = por %p123, %p124
      %p126 = scmp.ne.s32.totalorder %s114, %s115
      %p127 = scmp.eq.s32.totalorder %s21, 1
      %p128 = por %p126, %p127
      %p130 = scmp.ne.s32.totalorder %s115, %s129
      %p131 = scmp.eq.s32.totalorder %s21, 0
      %p132 = por %p130, %p131
      %s134 = sadd.s32 %s133, 1
      %p137 = scmp.eq.s32.totalorder %s15, 1
      %p138 = scmp.ne.s32.totalorder %s133, %s135
      %p139 = scmp.eq.s32.totalorder %s15, 0
      %p140 = por %p138, %p139
      %p141 = scmp.ne.s32.totalorder %s133, %s135
      %p142 = scmp.eq.s32.totalorder %s20, 1
      %p143 = por %p141, %p142
      %p144 = scmp.ne.s32.totalorder %s135, %s136
      %p145 = scmp.eq.s32.totalorder %s20, 0
      %p146 = por %p144, %p145
      %p147 = scmp.ne.s32.totalorder %s135, %s136
      %p148 = scmp.eq.s32.totalorder %s21, 1
      %p149 = por %p147, %p148
      %p151 = scmp.ne.s32.totalorder %s136, %s150
      %p152 = scmp.eq.s32.totalorder %s21, 0
      %p153 = por %p151, %p152
      %s155 = sadd.s32 %s154, 1
      %p158 = scmp.eq.s32.totalorder %s15, 1
      %p159 = scmp.ne.s32.totalorder %s154, %s156
      %p160 = scmp.eq.s32.totalorder %s15, 0
      %p161 = por %p159, %p160
      %p162 = scmp.ne.s32.totalorder %s154, %s156
      %p163 = scmp.eq.s32.totalorder %s20, 1
      %p164 = por %p162, %p163
      %p165 = scmp.ne.s32.totalorder %s156, %s157
      %p166 = scmp.eq.s32.totalorder %s20, 0
      %p167 = por %p165, %p166
      %p168 = scmp.ne.s32.totalorder %s156, %s157
      %p169 = scmp.eq.s32.totalorder %s21, 1
      %p170 = por %p168, %p169
      %p172 = scmp.ne.s32.totalorder %s157, %s171
      %p173 = scmp.eq.s32.totalorder %s21, 0
      %p174 = por %p172, %p173
      %s175 = ssub.s32 %s15, %s22
      %p176 = scmp.eq.s32.totalorder %s175, 0
      %s178 = sadd.s32 %s177, 1
      %s179 = scalar_select %p176, %s177, %s178
      %p182 = pneg %p176
      %p183 = scmp.eq.s32.totalorder %s15, 1
      %p184 = por %p182, %p183
      %p185 = scmp.ne.s32.totalorder %s177, %s180
      %p186 = scmp.eq.s32.totalorder %s15, 0
      %p187 = por %p185, %p186
      %p188 = scmp.ne.s32.totalorder %s177, %s180
      %p189 = scmp.eq.s32.totalorder %s20, 1
      %p190 = por %p188, %p189
      %p191 = scmp.ne.s32.totalorder %s180, %s181
      %p192 = scmp.eq.s32.totalorder %s20, 0
      %p193 = por %p191, %p192
      %p194 = scmp.ne.s32.totalorder %s180, %s181
      %p195 = scmp.eq.s32.totalorder %s21, 1
      %p196 = por %p194, %p195
      %p198 = scmp.ne.s32.totalorder %s181, %s197
      %p199 = scmp.eq.s32.totalorder %s21, 0
      %p200 = por %p198, %p199
      %p201 = scmp.le.s32.totalorder 1, %s15
      %p202 = scmp.lt.s32.totalorder %s15, 3
      %p203 = pnand %p201, %p202
      %p204 = pneg %p203
      // Predicated region
      $region9: #{rpn_forward.2} parent=5 // pred_check
        _
      $region10: #{rpn_forward.2} parent=5 // pred_check_branch
        %206 = sbr.rel (%p203) target = $region12
      $region11: #{rpn_forward.2} parent=5 // pred_region
        %s207 = ssub.s32 %s15, 1
        // Predicated region
        $region13: #{rpn_forward.2} parent=11 // pred_check
          %p208 = pneg %p62
        $region14: #{rpn_forward.2} parent=11 // pred_check_branch
          %210 = sbr.rel (%p208) target = $region16
        $region15: #{rpn_forward.2} parent=11 // pred_region
          _
        $region16: #{rpn_forward.2} parent=11 // pred_fallthru
          _
        // Predicated region
        $region17: #{rpn_forward.2} parent=11 // pred_check
          %p211 = pneg %p83
        $region18: #{rpn_forward.2} parent=11 // pred_check_branch
          %213 = sbr.rel (%p211) target = $region20
        $region19: #{rpn_forward.2} parent=11 // pred_region
          %s215 = ssub.s32 16, 16
          %216 = vsyncadd [#allocation4], %s215
          %s218 = sshll.u32 [#allocation3], 4
          %s219 = int_to_ptr.vmem [resolvable:$true] %s218
          %221 = dma.hbm_to_vmem [thread:$0]  %s2, 16, %s219, [#allocation4]
        $region20: #{rpn_forward.2} parent=11 // pred_fallthru
          _
        // Predicated region
        $region21: #{rpn_forward.2} parent=11 // pred_check
          %p222 = pneg %p104
        $region22: #{rpn_forward.2} parent=11 // pred_check_branch
          %224 = sbr.rel (%p222) target = $region24
        $region23: #{rpn_forward.2} parent=11 // pred_region
          _
        $region24: #{rpn_forward.2} parent=11 // pred_fallthru
          _
        // Predicated region
        $region25: #{rpn_forward.2} parent=11 // pred_check
          %p225 = pneg %p125
        $region26: #{rpn_forward.2} parent=11 // pred_check_branch
          %227 = sbr.rel (%p225) target = $region28
        $region27: #{rpn_forward.2} parent=11 // pred_region
          %s229 = ssub.s32 16, 16
          %230 = vsyncadd [#allocation6], %s229
          %s232 = sshll.u32 [#allocation5], 4
          %s233 = int_to_ptr.vmem [resolvable:$true] %s232
          %235 = dma.hbm_to_vmem [thread:$0]  %s4, 16, %s233, [#allocation6]
        $region28: #{rpn_forward.2} parent=11 // pred_fallthru
          _
        // Predicated region
        $region29: #{rpn_forward.2} parent=11 // pred_check
          %p236 = pneg %p146
        $region30: #{rpn_forward.2} parent=11 // pred_check_branch
          %238 = sbr.rel (%p236) target = $region32
        $region31: #{rpn_forward.2} parent=11 // pred_region
          _
        $region32: #{rpn_forward.2} parent=11 // pred_fallthru
          _
        // Predicated region
        $region33: #{rpn_forward.2} parent=11 // pred_check
          %p239 = pneg %p167
        $region34: #{rpn_forward.2} parent=11 // pred_check_branch
          %241 = sbr.rel (%p239) target = $region36
        $region35: #{rpn_forward.2} parent=11 // pred_region
          _
        $region36: #{rpn_forward.2} parent=11 // pred_fallthru
          _
      $region12: #{rpn_forward.2} parent=5 // pred_fallthru
        _
      %p242 = scmp.lt.s32.totalorder %s15, 2
      // Predicated region
      $region37: #{rpn_forward.2} parent=5 // pred_check
        %p243 = pneg %p242
      $region38: #{rpn_forward.2} parent=5 // pred_check_branch
        %245 = sbr.rel (%p243) target = $region40
      $region39: #{rpn_forward.2} parent=5 // pred_region
        // Predicated region
        $region41: #{rpn_forward.2} parent=39 // pred_check
          %p246 = pneg %p35
        $region42: #{rpn_forward.2} parent=39 // pred_check_branch
          %248 = sbr.rel (%p246) target = $region44
        $region43: #{rpn_forward.2} parent=39 // pred_region
          %p249 = scmp.lt.s32.totalorder %s15, 1
          %s250 = scalar_select %p249, %s15, 1
          %s251 = smul.addr %s250, 43
          %s252 = smul.addr %s251, 8
          %s253 = scalar_lea.vmem %s0, %s252
        $region44: #{rpn_forward.2} parent=39 // pred_fallthru
          _
      $region40: #{rpn_forward.2} parent=5 // pred_fallthru
        _
      %p254 = scmp.le.s32.totalorder 1, %s15
      %p255 = scmp.lt.s32.totalorder %s15, 3
      %p256 = pnand %p254, %p255
      %p257 = pneg %p256
      // Predicated region
      $region45: #{rpn_forward.2} parent=5 // pred_check
        _
      $region46: #{rpn_forward.2} parent=5 // pred_check_branch
        %259 = sbr.rel (%p256) target = $region48
      $region47: #{rpn_forward.2} parent=5 // pred_region
        %s260 = ssub.s32 %s15, 1
        // Predicated region
        $region49: #{rpn_forward.2} parent=47 // pred_check
          %p261 = pneg %p83
        $region50: #{rpn_forward.2} parent=47 // pred_check_branch
          %263 = sbr.rel (%p261) target = $region52
        $region51: #{rpn_forward.2} parent=47 // pred_region
          %264 = dma.done [#allocation4], 16
        $region52: #{rpn_forward.2} parent=47 // pred_fallthru
          _
        // Predicated region
        $region53: #{rpn_forward.2} parent=47 // pred_check
          %p265 = pneg %p125
        $region54: #{rpn_forward.2} parent=47 // pred_check_branch
          %267 = sbr.rel (%p265) target = $region56
        $region55: #{rpn_forward.2} parent=47 // pred_region
          %268 = dma.done [#allocation6], 16
        $region56: #{rpn_forward.2} parent=47 // pred_fallthru
          _
        %p269 = scmp.lt.s32.totalorder %s20, 1
        %s270 = scalar_select %p269, %s20, 1
        %s271 = smul.addr %s270, 43
        %s272 = smul.addr %s271, 8
        %s273 = scalar_lea.vmem %s0, %s272
        %p274 = pneg %p41
        %p275 = pneg %p38
        %p276 = pneg %p62
        %p277 = pneg %p59
        %p278 = pneg %p83
        %p279 = pneg %p80
        %p280 = pneg %p104
        %p281 = pneg %p101
        %p282 = pneg %p125
        %p283 = pneg %p122
        %p284 = pneg %p146
        %p285 = pneg %p143
        %p286 = pneg %p167
        %p287 = pneg %p164
        %p288 = pneg %p193
        %p289 = pneg %p190
        %p290 = scmp.lt.s32.totalorder %s20, 1
        %s291 = scalar_select %p290, %s20, 1
        %s292 = smul.addr %s291, 36
        %s293 = smul.addr %s292, 8
        %s294 = scalar_lea.vmem %s7, %s293
        %p295 = scmp.lt.s32.totalorder %s20, 1
        %s296 = scalar_select %p295, %s20, 1
        %s297 = smul.addr %s296, 43
        %s298 = smul.addr %s297, 8
        %s299 = scalar_lea.vmem %s0, %s298
        %p300 = scmp.lt.s32.totalorder %s20, 1
        %s301 = scalar_select %p300, %s20, 1
        %s302 = smul.addr %s301, 36
        %s303 = smul.addr %s302, 8
        %s304 = scalar_lea.vmem %s7, %s303
        %v305 = vlaneseq
        %v306 = vshrl.u32 %v305, 7
        %v307 = vadd.s32 %v306, 8
        %v308 = vadd.s32 %v306, 16
        %v309 = vadd.s32 %v306, 24
        %v310 = vadd.s32 %v306, 32
        %v311 = vadd.s32 %v306, 40
        %v312 = vadd.s32 %v306, 48
        %v313 = vadd.s32 %v306, 56
        %v314 = vadd.s32 %v306, 64
        %v315 = vadd.s32 %v306, 72
        %v316 = vadd.s32 %v306, 80
        %v317 = vadd.s32 %v306, 88
        %v318 = vadd.s32 %v306, 96
        %v319 = vadd.s32 %v306, 104
        %v320 = vadd.s32 %v306, 112
        %v321 = vadd.s32 %v306, 120
        %v322 = vadd.s32 %v306, 128
        %v323 = vadd.s32 %v306, 136
        %v324 = vadd.s32 %v306, 144
        %v325 = vadd.s32 %v306, 152
        %v326 = vadd.s32 %v306, 160
        %v327 = vadd.s32 %v306, 168
        %v328 = vadd.s32 %v306, 176
        %v329 = vadd.s32 %v306, 184
        %v330 = vadd.s32 %v306, 192
        %v331 = vadd.s32 %v306, 200
        %v332 = vadd.s32 %v306, 208
        %v333 = vadd.s32 %v306, 216
        %v334 = vadd.s32 %v306, 224
        %v335 = vadd.s32 %v306, 232
        %v336 = vadd.s32 %v306, 240
        %v337 = vadd.s32 %v306, 248
        %v338 = vadd.s32 %v306, 256
        %v339 = vadd.s32 %v306, 264
        %v340 = vadd.s32 %v306, 272
        %v341 = vadd.s32 %v306, 280
        %vm342 = vcmp.lt.s32.totalorder %v306, 0
        %v343 = vsub.s32 0, %v306
        %v344 = vsel %vm342, %v343, %v306
        %v345 = vmul.u32.u64.compose %v344, 3817748708
        %v346 = vextract.low.u32 %v345
        %v347 = vextract.high.u32 %v345
        %v348 = vshrl.u32 %v347, 4
        %v349 = vmul.u32 %v348, 18
        %v350 = vsub.s32 %v344, %v349
        %v351 = vsub.s32 0, %v350
        %v352 = vsel %vm342, %v351, %v350
        %vm353 = vcmp.lt.s32.totalorder %v307, 0
        %v354 = vsub.s32 0, %v307
        %v355 = vsel %vm353, %v354, %v307
        %v356 = vmul.u32.u64.compose %v355, 3817748708
        %v357 = vextract.low.u32 %v356
        %v358 = vextract.high.u32 %v356
        %v359 = vshrl.u32 %v358, 4
        %v360 = vmul.u32 %v359, 18
        %v361 = vsub.s32 %v355, %v360
        %v362 = vsub.s32 0, %v361
        %v363 = vsel %vm353, %v362, %v361
        %vm364 = vcmp.lt.s32.totalorder %v308, 0
        %v365 = vsub.s32 0, %v308
        %v366 = vsel %vm364, %v365, %v308
        %v367 = vmul.u32.u64.compose %v366, 3817748708
        %v368 = vextract.low.u32 %v367
        %v369 = vextract.high.u32 %v367
        %v370 = vshrl.u32 %v369, 4
        %v371 = vmul.u32 %v370, 18
        %v372 = vsub.s32 %v366, %v371
        %v373 = vsub.s32 0, %v372
        %v374 = vsel %vm364, %v373, %v372
        %vm375 = vcmp.lt.s32.totalorder %v309, 0
        %v376 = vsub.s32 0, %v309
        %v377 = vsel %vm375, %v376, %v309
        %v378 = vmul.u32.u64.compose %v377, 3817748708
        %v379 = vextract.low.u32 %v378
        %v380 = vextract.high.u32 %v378
        %v381 = vshrl.u32 %v380, 4
        %v382 = vmul.u32 %v381, 18
        %v383 = vsub.s32 %v377, %v382
        %v384 = vsub.s32 0, %v383
        %v385 = vsel %vm375, %v384, %v383
        %vm386 = vcmp.lt.s32.totalorder %v310, 0
        %v387 = vsub.s32 0, %v310
        %v388 = vsel %vm386, %v387, %v310
        %v389 = vmul.u32.u64.compose %v388, 3817748708
        %v390 = vextract.low.u32 %v389
        %v391 = vextract.high.u32 %v389
        %v392 = vshrl.u32 %v391, 4
        %v393 = vmul.u32 %v392, 18
        %v394 = vsub.s32 %v388, %v393
        %v395 = vsub.s32 0, %v394
        %v396 = vsel %vm386, %v395, %v394
        %vm397 = vcmp.lt.s32.totalorder %v311, 0
        %v398 = vsub.s32 0, %v311
        %v399 = vsel %vm397, %v398, %v311
        %v400 = vmul.u32.u64.compose %v399, 3817748708
        %v401 = vextract.low.u32 %v400
        %v402 = vextract.high.u32 %v400
        %v403 = vshrl.u32 %v402, 4
        %v404 = vmul.u32 %v403, 18
        %v405 = vsub.s32 %v399, %v404
        %v406 = vsub.s32 0, %v405
        %v407 = vsel %vm397, %v406, %v405
        %vm408 = vcmp.lt.s32.totalorder %v312, 0
        %v409 = vsub.s32 0, %v312
        %v410 = vsel %vm408, %v409, %v312
        %v411 = vmul.u32.u64.compose %v410, 3817748708
        %v412 = vextract.low.u32 %v411
        %v413 = vextract.high.u32 %v411
        %v414 = vshrl.u32 %v413, 4
        %v415 = vmul.u32 %v414, 18
        %v416 = vsub.s32 %v410, %v415
        %v417 = vsub.s32 0, %v416
        %v418 = vsel %vm408, %v417, %v416
        %vm419 = vcmp.lt.s32.totalorder %v313, 0
        %v420 = vsub.s32 0, %v313
        %v421 = vsel %vm419, %v420, %v313
        %v422 = vmul.u32.u64.compose %v421, 3817748708
        %v423 = vextract.low.u32 %v422
        %v424 = vextract.high.u32 %v422
        %v425 = vshrl.u32 %v424, 4
        %v426 = vmul.u32 %v425, 18
        %v427 = vsub.s32 %v421, %v426
        %v428 = vsub.s32 0, %v427
        %v429 = vsel %vm419, %v428, %v427
        %vm430 = vcmp.lt.s32.totalorder %v314, 0
        %v431 = vsub.s32 0, %v314
        %v432 = vsel %vm430, %v431, %v314
        %v433 = vmul.u32.u64.compose %v432, 3817748708
        %v434 = vextract.low.u32 %v433
        %v435 = vextract.high.u32 %v433
        %v436 = vshrl.u32 %v435, 4
        %v437 = vmul.u32 %v436, 18
        %v438 = vsub.s32 %v432, %v437
        %v439 = vsub.s32 0, %v438
        %v440 = vsel %vm430, %v439, %v438
        %vm441 = vcmp.lt.s32.totalorder %v315, 0
        %v442 = vsub.s32 0, %v315
        %v443 = vsel %vm441, %v442, %v315
        %v444 = vmul.u32.u64.compose %v443, 3817748708
        %v445 = vextract.low.u32 %v444
        %v446 = vextract.high.u32 %v444
        %v447 = vshrl.u32 %v446, 4
        %v448 = vmul.u32 %v447, 18
        %v449 = vsub.s32 %v443, %v448
        %v450 = vsub.s32 0, %v449
        %v451 = vsel %vm441, %v450, %v449
        %vm452 = vcmp.lt.s32.totalorder %v316, 0
        %v453 = vsub.s32 0, %v316
        %v454 = vsel %vm452, %v453, %v316
        %v455 = vmul.u32.u64.compose %v454, 3817748708
        %v456 = vextract.low.u32 %v455
        %v457 = vextract.high.u32 %v455
        %v458 = vshrl.u32 %v457, 4
        %v459 = vmul.u32 %v458, 18
        %v460 = vsub.s32 %v454, %v459
        %v461 = vsub.s32 0, %v460
        %v462 = vsel %vm452, %v461, %v460
        %vm463 = vcmp.lt.s32.totalorder %v317, 0
        %v464 = vsub.s32 0, %v317
        %v465 = vsel %vm463, %v464, %v317
        %v466 = vmul.u32.u64.compose %v465, 3817748708
        %v467 = vextract.low.u32 %v466
        %v468 = vextract.high.u32 %v466
        %v469 = vshrl.u32 %v468, 4
        %v470 = vmul.u32 %v469, 18
        %v471 = vsub.s32 %v465, %v470
        %v472 = vsub.s32 0, %v471
        %v473 = vsel %vm463, %v472, %v471
        %vm474 = vcmp.lt.s32.totalorder %v318, 0
        %v475 = vsub.s32 0, %v318
        %v476 = vsel %vm474, %v475, %v318
        %v477 = vmul.u32.u64.compose %v476, 3817748708
        %v478 = vextract.low.u32 %v477
        %v479 = vextract.high.u32 %v477
        %v480 = vshrl.u32 %v479, 4
        %v481 = vmul.u32 %v480, 18
        %v482 = vsub.s32 %v476, %v481
        %v483 = vsub.s32 0, %v482
        %v484 = vsel %vm474, %v483, %v482
        %vm485 = vcmp.lt.s32.totalorder %v319, 0
        %v486 = vsub.s32 0, %v319
        %v487 = vsel %vm485, %v486, %v319
        %v488 = vmul.u32.u64.compose %v487, 3817748708
        %v489 = vextract.low.u32 %v488
        %v490 = vextract.high.u32 %v488
        %v491 = vshrl.u32 %v490, 4
        %v492 = vmul.u32 %v491, 18
        %v493 = vsub.s32 %v487, %v492
        %v494 = vsub.s32 0, %v493
        %v495 = vsel %vm485, %v494, %v493
        %vm496 = vcmp.lt.s32.totalorder %v320, 0
        %v497 = vsub.s32 0, %v320
        %v498 = vsel %vm496, %v497, %v320
        %v499 = vmul.u32.u64.compose %v498, 3817748708
        %v500 = vextract.low.u32 %v499
        %v501 = vextract.high.u32 %v499
        %v502 = vshrl.u32 %v501, 4
        %v503 = vmul.u32 %v502, 18
        %v504 = vsub.s32 %v498, %v503
        %v505 = vsub.s32 0, %v504
        %v506 = vsel %vm496, %v505, %v504
        %vm507 = vcmp.lt.s32.totalorder %v321, 0
        %v508 = vsub.s32 0, %v321
        %v509 = vsel %vm507, %v508, %v321
        %v510 = vmul.u32.u64.compose %v509, 3817748708
        %v511 = vextract.low.u32 %v510
        %v512 = vextract.high.u32 %v510
        %v513 = vshrl.u32 %v512, 4
        %v514 = vmul.u32 %v513, 18
        %v515 = vsub.s32 %v509, %v514
        %v516 = vsub.s32 0, %v515
        %v517 = vsel %vm507, %v516, %v515
        %vm518 = vcmp.lt.s32.totalorder %v322, 0
        %v519 = vsub.s32 0, %v322
        %v520 = vsel %vm518, %v519, %v322
        %v521 = vmul.u32.u64.compose %v520, 3817748708
        %v522 = vextract.low.u32 %v521
        %v523 = vextract.high.u32 %v521
        %v524 = vshrl.u32 %v523, 4
        %v525 = vmul.u32 %v524, 18
        %v526 = vsub.s32 %v520, %v525
        %v527 = vsub.s32 0, %v526
        %v528 = vsel %vm518, %v527, %v526
        %vm529 = vcmp.lt.s32.totalorder %v323, 0
        %v530 = vsub.s32 0, %v323
        %v531 = vsel %vm529, %v530, %v323
        %v532 = vmul.u32.u64.compose %v531, 3817748708
        %v533 = vextract.low.u32 %v532
        %v534 = vextract.high.u32 %v532
        %v535 = vshrl.u32 %v534, 4
        %v536 = vmul.u32 %v535, 18
        %v537 = vsub.s32 %v531, %v536
        %v538 = vsub.s32 0, %v537
        %v539 = vsel %vm529, %v538, %v537
        %vm540 = vcmp.lt.s32.totalorder %v324, 0
        %v541 = vsub.s32 0, %v324
        %v542 = vsel %vm540, %v541, %v324
        %v543 = vmul.u32.u64.compose %v542, 3817748708
        %v544 = vextract.low.u32 %v543
        %v545 = vextract.high.u32 %v543
        %v546 = vshrl.u32 %v545, 4
        %v547 = vmul.u32 %v546, 18
        %v548 = vsub.s32 %v542, %v547
        %v549 = vsub.s32 0, %v548
        %v550 = vsel %vm540, %v549, %v548
        %vm551 = vcmp.lt.s32.totalorder %v325, 0
        %v552 = vsub.s32 0, %v325
        %v553 = vsel %vm551, %v552, %v325
        %v554 = vmul.u32.u64.compose %v553, 3817748708
        %v555 = vextract.low.u32 %v554
        %v556 = vextract.high.u32 %v554
        %v557 = vshrl.u32 %v556, 4
        %v558 = vmul.u32 %v557, 18
        %v559 = vsub.s32 %v553, %v558
        %v560 = vsub.s32 0, %v559
        %v561 = vsel %vm551, %v560, %v559
        %vm562 = vcmp.lt.s32.totalorder %v326, 0
        %v563 = vsub.s32 0, %v326
        %v564 = vsel %vm562, %v563, %v326
        %v565 = vmul.u32.u64.compose %v564, 3817748708
        %v566 = vextract.low.u32 %v565
        %v567 = vextract.high.u32 %v565
        %v568 = vshrl.u32 %v567, 4
        %v569 = vmul.u32 %v568, 18
        %v570 = vsub.s32 %v564, %v569
        %v571 = vsub.s32 0, %v570
        %v572 = vsel %vm562, %v571, %v570
        %vm573 = vcmp.lt.s32.totalorder %v327, 0
        %v574 = vsub.s32 0, %v327
        %v575 = vsel %vm573, %v574, %v327
        %v576 = vmul.u32.u64.compose %v575, 3817748708
        %v577 = vextract.low.u32 %v576
        %v578 = vextract.high.u32 %v576
        %v579 = vshrl.u32 %v578, 4
        %v580 = vmul.u32 %v579, 18
        %v581 = vsub.s32 %v575, %v580
        %v582 = vsub.s32 0, %v581
        %v583 = vsel %vm573, %v582, %v581
        %vm584 = vcmp.lt.s32.totalorder %v328, 0
        %v585 = vsub.s32 0, %v328
        %v586 = vsel %vm584, %v585, %v328
        %v587 = vmul.u32.u64.compose %v586, 3817748708
        %v588 = vextract.low.u32 %v587
        %v589 = vextract.high.u32 %v587
        %v590 = vshrl.u32 %v589, 4
        %v591 = vmul.u32 %v590, 18
        %v592 = vsub.s32 %v586, %v591
        %v593 = vsub.s32 0, %v592
        %v594 = vsel %vm584, %v593, %v592
        %vm595 = vcmp.lt.s32.totalorder %v329, 0
        %v596 = vsub.s32 0, %v329
        %v597 = vsel %vm595, %v596, %v329
        %v598 = vmul.u32.u64.compose %v597, 3817748708
        %v599 = vextract.low.u32 %v598
        %v600 = vextract.high.u32 %v598
        %v601 = vshrl.u32 %v600, 4
        %v602 = vmul.u32 %v601, 18
        %v603 = vsub.s32 %v597, %v602
        %v604 = vsub.s32 0, %v603
        %v605 = vsel %vm595, %v604, %v603
        %vm606 = vcmp.lt.s32.totalorder %v330, 0
        %v607 = vsub.s32 0, %v330
        %v608 = vsel %vm606, %v607, %v330
        %v609 = vmul.u32.u64.compose %v608, 3817748708
        %v610 = vextract.low.u32 %v609
        %v611 = vextract.high.u32 %v609
        %v612 = vshrl.u32 %v611, 4
        %v613 = vmul.u32 %v612, 18
        %v614 = vsub.s32 %v608, %v613
        %v615 = vsub.s32 0, %v614
        %v616 = vsel %vm606, %v615, %v614
        %vm617 = vcmp.lt.s32.totalorder %v331, 0
        %v618 = vsub.s32 0, %v331
        %v619 = vsel %vm617, %v618, %v331
        %v620 = vmul.u32.u64.compose %v619, 3817748708
        %v621 = vextract.low.u32 %v620
        %v622 = vextract.high.u32 %v620
        %v623 = vshrl.u32 %v622, 4
        %v624 = vmul.u32 %v623, 18
        %v625 = vsub.s32 %v619, %v624
        %v626 = vsub.s32 0, %v625
        %v627 = vsel %vm617, %v626, %v625
        %vm628 = vcmp.lt.s32.totalorder %v332, 0
        %v629 = vsub.s32 0, %v332
        %v630 = vsel %vm628, %v629, %v332
        %v631 = vmul.u32.u64.compose %v630, 3817748708
        %v632 = vextract.low.u32 %v631
        %v633 = vextract.high.u32 %v631
        %v634 = vshrl.u32 %v633, 4
        %v635 = vmul.u32 %v634, 18
        %v636 = vsub.s32 %v630, %v635
        %v637 = vsub.s32 0, %v636
        %v638 = vsel %vm628, %v637, %v636
        %vm639 = vcmp.lt.s32.totalorder %v333, 0
        %v640 = vsub.s32 0, %v333
        %v641 = vsel %vm639, %v640, %v333
        %v642 = vmul.u32.u64.compose %v641, 3817748708
        %v643 = vextract.low.u32 %v642
        %v644 = vextract.high.u32 %v642
        %v645 = vshrl.u32 %v644, 4
        %v646 = vmul.u32 %v645, 18
        %v647 = vsub.s32 %v641, %v646
        %v648 = vsub.s32 0, %v647
        %v649 = vsel %vm639, %v648, %v647
        %vm650 = vcmp.lt.s32.totalorder %v334, 0
        %v651 = vsub.s32 0, %v334
        %v652 = vsel %vm650, %v651, %v334
        %v653 = vmul.u32.u64.compose %v652, 3817748708
        %v654 = vextract.low.u32 %v653
        %v655 = vextract.high.u32 %v653
        %v656 = vshrl.u32 %v655, 4
        %v657 = vmul.u32 %v656, 18
        %v658 = vsub.s32 %v652, %v657
        %v659 = vsub.s32 0, %v658
        %v660 = vsel %vm650, %v659, %v658
        %vm661 = vcmp.lt.s32.totalorder %v335, 0
        %v662 = vsub.s32 0, %v335
        %v663 = vsel %vm661, %v662, %v335
        %v664 = vmul.u32.u64.compose %v663, 3817748708
        %v665 = vextract.low.u32 %v664
        %v666 = vextract.high.u32 %v664
        %v667 = vshrl.u32 %v666, 4
        %v668 = vmul.u32 %v667, 18
        %v669 = vsub.s32 %v663, %v668
        %v670 = vsub.s32 0, %v669
        %v671 = vsel %vm661, %v670, %v669
        %vm672 = vcmp.lt.s32.totalorder %v336, 0
        %v673 = vsub.s32 0, %v336
        %v674 = vsel %vm672, %v673, %v336
        %v675 = vmul.u32.u64.compose %v674, 3817748708
        %v676 = vextract.low.u32 %v675
        %v677 = vextract.high.u32 %v675
        %v678 = vshrl.u32 %v677, 4
        %v679 = vmul.u32 %v678, 18
        %v680 = vsub.s32 %v674, %v679
        %v681 = vsub.s32 0, %v680
        %v682 = vsel %vm672, %v681, %v680
        %vm683 = vcmp.lt.s32.totalorder %v337, 0
        %v684 = vsub.s32 0, %v337
        %v685 = vsel %vm683, %v684, %v337
        %v686 = vmul.u32.u64.compose %v685, 3817748708
        %v687 = vextract.low.u32 %v686
        %v688 = vextract.high.u32 %v686
        %v689 = vshrl.u32 %v688, 4
        %v690 = vmul.u32 %v689, 18
        %v691 = vsub.s32 %v685, %v690
        %v692 = vsub.s32 0, %v691
        %v693 = vsel %vm683, %v692, %v691
        %vm694 = vcmp.lt.s32.totalorder %v338, 0
        %v695 = vsub.s32 0, %v338
        %v696 = vsel %vm694, %v695, %v338
        %v697 = vmul.u32.u64.compose %v696, 3817748708
        %v698 = vextract.low.u32 %v697
        %v699 = vextract.high.u32 %v697
        %v700 = vshrl.u32 %v699, 4
        %v701 = vmul.u32 %v700, 18
        %v702 = vsub.s32 %v696, %v701
        %v703 = vsub.s32 0, %v702
        %v704 = vsel %vm694, %v703, %v702
        %vm705 = vcmp.lt.s32.totalorder %v339, 0
        %v706 = vsub.s32 0, %v339
        %v707 = vsel %vm705, %v706, %v339
        %v708 = vmul.u32.u64.compose %v707, 3817748708
        %v709 = vextract.low.u32 %v708
        %v710 = vextract.high.u32 %v708
        %v711 = vshrl.u32 %v710, 4
        %v712 = vmul.u32 %v711, 18
        %v713 = vsub.s32 %v707, %v712
        %v714 = vsub.s32 0, %v713
        %v715 = vsel %vm705, %v714, %v713
        %vm716 = vcmp.lt.s32.totalorder %v340, 0
        %v717 = vsub.s32 0, %v340
        %v718 = vsel %vm716, %v717, %v340
        %v719 = vmul.u32.u64.compose %v718, 3817748708
        %v720 = vextract.low.u32 %v719
        %v721 = vextract.high.u32 %v719
        %v722 = vshrl.u32 %v721, 4
        %v723 = vmul.u32 %v722, 18
        %v724 = vsub.s32 %v718, %v723
        %v725 = vsub.s32 0, %v724
        %v726 = vsel %vm716, %v725, %v724
        %vm727 = vcmp.lt.s32.totalorder %v341, 0
        %v728 = vsub.s32 0, %v341
        %v729 = vsel %vm727, %v728, %v341
        %v730 = vmul.u32.u64.compose %v729, 3817748708
        %v731 = vextract.low.u32 %v730
        %v732 = vextract.high.u32 %v730
        %v733 = vshrl.u32 %v732, 4
        %v734 = vmul.u32 %v733, 18
        %v735 = vsub.s32 %v729, %v734
        %v736 = vsub.s32 0, %v735
        %v737 = vsel %vm727, %v736, %v735
        %vm738 = vcmp.ne.s32.totalorder %v352, 0
        %vm739 = vcmp.ne.s32.totalorder %v363, 0
        %vm740 = vcmp.ne.s32.totalorder %v374, 0
        %vm741 = vcmp.ne.s32.totalorder %v385, 0
        %vm742 = vcmp.ne.s32.totalorder %v396, 0
        %vm743 = vcmp.ne.s32.totalorder %v407, 0
        %vm744 = vcmp.ne.s32.totalorder %v418, 0
        %vm745 = vcmp.ne.s32.totalorder %v429, 0
        %vm746 = vcmp.ne.s32.totalorder %v440, 0
        %vm747 = vcmp.ne.s32.totalorder %v451, 0
        %vm748 = vcmp.ne.s32.totalorder %v462, 0
        %vm749 = vcmp.ne.s32.totalorder %v473, 0
        %vm750 = vcmp.ne.s32.totalorder %v484, 0
        %vm751 = vcmp.ne.s32.totalorder %v495, 0
        %vm752 = vcmp.ne.s32.totalorder %v506, 0
        %vm753 = vcmp.ne.s32.totalorder %v517, 0
        %vm754 = vcmp.ne.s32.totalorder %v528, 0
        %vm755 = vcmp.ne.s32.totalorder %v539, 0
        %vm756 = vcmp.ne.s32.totalorder %v550, 0
        %vm757 = vcmp.ne.s32.totalorder %v561, 0
        %vm758 = vcmp.ne.s32.totalorder %v572, 0
        %vm759 = vcmp.ne.s32.totalorder %v583, 0
        %vm760 = vcmp.ne.s32.totalorder %v594, 0
        %vm761 = vcmp.ne.s32.totalorder %v605, 0
        %vm762 = vcmp.ne.s32.totalorder %v616, 0
        %vm763 = vcmp.ne.s32.totalorder %v627, 0
        %vm764 = vcmp.ne.s32.totalorder %v638, 0
        %vm765 = vcmp.ne.s32.totalorder %v649, 0
        %vm766 = vcmp.ne.s32.totalorder %v660, 0
        %vm767 = vcmp.ne.s32.totalorder %v671, 0
        %vm768 = vcmp.ne.s32.totalorder %v682, 0
        %vm769 = vcmp.ne.s32.totalorder %v693, 0
        %vm770 = vcmp.ne.s32.totalorder %v704, 0
        %vm771 = vcmp.ne.s32.totalorder %v715, 0
        %vm772 = vcmp.ne.s32.totalorder %v726, 0
        %vm773 = vcmp.ne.s32.totalorder %v737, 0
        %vm774 = vcmp.lt.s32.totalorder %v352, 0
        %vm775 = vcmp.lt.s32.totalorder %v363, 0
        %vm776 = vcmp.lt.s32.totalorder %v374, 0
        %vm777 = vcmp.lt.s32.totalorder %v385, 0
        %vm778 = vcmp.lt.s32.totalorder %v396, 0
        %vm779 = vcmp.lt.s32.totalorder %v407, 0
        %vm780 = vcmp.lt.s32.totalorder %v418, 0
        %vm781 = vcmp.lt.s32.totalorder %v429, 0
        %vm782 = vcmp.lt.s32.totalorder %v440, 0
        %vm783 = vcmp.lt.s32.totalorder %v451, 0
        %vm784 = vcmp.lt.s32.totalorder %v462, 0
        %vm785 = vcmp.lt.s32.totalorder %v473, 0
        %vm786 = vcmp.lt.s32.totalorder %v484, 0
        %vm787 = vcmp.lt.s32.totalorder %v495, 0
        %vm788 = vcmp.lt.s32.totalorder %v506, 0
        %vm789 = vcmp.lt.s32.totalorder %v517, 0
        %vm790 = vcmp.lt.s32.totalorder %v528, 0
        %vm791 = vcmp.lt.s32.totalorder %v539, 0
        %vm792 = vcmp.lt.s32.totalorder %v550, 0
        %vm793 = vcmp.lt.s32.totalorder %v561, 0
        %vm794 = vcmp.lt.s32.totalorder %v572, 0
        %vm795 = vcmp.lt.s32.totalorder %v583, 0
        %vm796 = vcmp.lt.s32.totalorder %v594, 0
        %vm797 = vcmp.lt.s32.totalorder %v605, 0
        %vm798 = vcmp.lt.s32.totalorder %v616, 0
        %vm799 = vcmp.lt.s32.totalorder %v627, 0
        %vm800 = vcmp.lt.s32.totalorder %v638, 0
        %vm801 = vcmp.lt.s32.totalorder %v649, 0
        %vm802 = vcmp.lt.s32.totalorder %v660, 0
        %vm803 = vcmp.lt.s32.totalorder %v671, 0
        %vm804 = vcmp.lt.s32.totalorder %v682, 0
        %vm805 = vcmp.lt.s32.totalorder %v693, 0
        %vm806 = vcmp.lt.s32.totalorder %v704, 0
        %vm807 = vcmp.lt.s32.totalorder %v715, 0
        %vm808 = vcmp.lt.s32.totalorder %v726, 0
        %vm809 = vcmp.lt.s32.totalorder %v737, 0
        %vm810 = vmand %vm774, %vm738
        %vm811 = vmand %vm775, %vm739
        %vm812 = vmand %vm776, %vm740
        %vm813 = vmand %vm777, %vm741
        %vm814 = vmand %vm778, %vm742
        %vm815 = vmand %vm779, %vm743
        %vm816 = vmand %vm780, %vm744
        %vm817 = vmand %vm781, %vm745
        %vm818 = vmand %vm782, %vm746
        %vm819 = vmand %vm783, %vm747
        %vm820 = vmand %vm784, %vm748
        %vm821 = vmand %vm785, %vm749
        %vm822 = vmand %vm786, %vm750
        %vm823 = vmand %vm787, %vm751
        %vm824 = vmand %vm788, %vm752
        %vm825 = vmand %vm789, %vm753
        %vm826 = vmand %vm790, %vm754
        %vm827 = vmand %vm791, %vm755
        %vm828 = vmand %vm792, %vm756
        %vm829 = vmand %vm793, %vm757
        %vm830 = vmand %vm794, %vm758
        %vm831 = vmand %vm795, %vm759
        %vm832 = vmand %vm796, %vm760
        %vm833 = vmand %vm797, %vm761
        %vm834 = vmand %vm798, %vm762
        %vm835 = vmand %vm799, %vm763
        %vm836 = vmand %vm800, %vm764
        %vm837 = vmand %vm801, %vm765
        %vm838 = vmand %vm802, %vm766
        %vm839 = vmand %vm803, %vm767
        %vm840 = vmand %vm804, %vm768
        %vm841 = vmand %vm805, %vm769
        %vm842 = vmand %vm806, %vm770
        %vm843 = vmand %vm807, %vm771
        %vm844 = vmand %vm808, %vm772
        %vm845 = vmand %vm809, %vm773
        %v846 = vadd.s32 %v352, 18
        %v847 = vadd.s32 %v363, 18
        %v848 = vadd.s32 %v374, 18
        %v849 = vadd.s32 %v385, 18
        %v850 = vadd.s32 %v396, 18
        %v851 = vadd.s32 %v407, 18
        %v852 = vadd.s32 %v418, 18
        %v853 = vadd.s32 %v429, 18
        %v854 = vadd.s32 %v440, 18
        %v855 = vadd.s32 %v451, 18
        %v856 = vadd.s32 %v462, 18
        %v857 = vadd.s32 %v473, 18
        %v858 = vadd.s32 %v484, 18
        %v859 = vadd.s32 %v495, 18
        %v860 = vadd.s32 %v506, 18
        %v861 = vadd.s32 %v517, 18
        %v862 = vadd.s32 %v528, 18
        %v863 = vadd.s32 %v539, 18
        %v864 = vadd.s32 %v550, 18
        %v865 = vadd.s32 %v561, 18
        %v866 = vadd.s32 %v572, 18
        %v867 = vadd.s32 %v583, 18
        %v868 = vadd.s32 %v594, 18
        %v869 = vadd.s32 %v605, 18
        %v870 = vadd.s32 %v616, 18
        %v871 = vadd.s32 %v627, 18
        %v872 = vadd.s32 %v638, 18
        %v873 = vadd.s32 %v649, 18
        %v874 = vadd.s32 %v660, 18
        %v875 = vadd.s32 %v671, 18
        %v876 = vadd.s32 %v682, 18
        %v877 = vadd.s32 %v693, 18
        %v878 = vadd.s32 %v704, 18
        %v879 = vadd.s32 %v715, 18
        %v880 = vadd.s32 %v726, 18
        %v881 = vadd.s32 %v737, 18
        %v882 = vsel %vm810, %v846, %v352
        %v883 = vsel %vm811, %v847, %v363
        %v884 = vsel %vm812, %v848, %v374
        %v885 = vsel %vm813, %v849, %v385
        %v886 = vsel %vm814, %v850, %v396
        %v887 = vsel %vm815, %v851, %v407
        %v888 = vsel %vm816, %v852, %v418
        %v889 = vsel %vm817, %v853, %v429
        %v890 = vsel %vm818, %v854, %v440
        %v891 = vsel %vm819, %v855, %v451
        %v892 = vsel %vm820, %v856, %v462
        %v893 = vsel %vm821, %v857, %v473
        %v894 = vsel %vm822, %v858, %v484
        %v895 = vsel %vm823, %v859, %v495
        %v896 = vsel %vm824, %v860, %v506
        %v897 = vsel %vm825, %v861, %v517
        %v898 = vsel %vm826, %v862, %v528
        %v899 = vsel %vm827, %v863, %v539
        %v900 = vsel %vm828, %v864, %v550
        %v901 = vsel %vm829, %v865, %v561
        %v902 = vsel %vm830, %v866, %v572
        %v903 = vsel %vm831, %v867, %v583
        %v904 = vsel %vm832, %v868, %v594
        %v905 = vsel %vm833, %v869, %v605
        %v906 = vsel %vm834, %v870, %v616
        %v907 = vsel %vm835, %v871, %v627
        %v908 = vsel %vm836, %v872, %v638
        %v909 = vsel %vm837, %v873, %v649
        %v910 = vsel %vm838, %v874, %v660
        %v911 = vsel %vm839, %v875, %v671
        %v912 = vsel %vm840, %v876, %v682
        %v913 = vsel %vm841, %v877, %v693
        %v914 = vsel %vm842, %v878, %v704
        %v915 = vsel %vm843, %v879, %v715
        %v916 = vsel %vm844, %v880, %v726
        %v917 = vsel %vm845, %v881, %v737
        %vm918 = vcmp.lt.s32.totalorder %v882, 16
        %vm919 = vcmp.lt.s32.totalorder %v883, 16
        %vm920 = vcmp.lt.s32.totalorder %v884, 16
        %vm921 = vcmp.lt.s32.totalorder %v885, 16
        %vm922 = vcmp.lt.s32.totalorder %v886, 16
        %vm923 = vcmp.lt.s32.totalorder %v887, 16
        %vm924 = vcmp.lt.s32.totalorder %v888, 16
        %vm925 = vcmp.lt.s32.totalorder %v889, 16
        %vm926 = vcmp.lt.s32.totalorder %v890, 16
        %vm927 = vcmp.lt.s32.totalorder %v891, 16
        %vm928 = vcmp.lt.s32.totalorder %v892, 16
        %vm929 = vcmp.lt.s32.totalorder %v893, 16
        %vm930 = vcmp.lt.s32.totalorder %v894, 16
        %vm931 = vcmp.lt.s32.totalorder %v895, 16
        %vm932 = vcmp.lt.s32.totalorder %v896, 16
        %vm933 = vcmp.lt.s32.totalorder %v897, 16
        %vm934 = vcmp.lt.s32.totalorder %v898, 16
        %vm935 = vcmp.lt.s32.totalorder %v899, 16
        %vm936 = vcmp.lt.s32.totalorder %v900, 16
        %vm937 = vcmp.lt.s32.totalorder %v901, 16
        %vm938 = vcmp.lt.s32.totalorder %v902, 16
        %vm939 = vcmp.lt.s32.totalorder %v903, 16
        %vm940 = vcmp.lt.s32.totalorder %v904, 16
        %vm941 = vcmp.lt.s32.totalorder %v905, 16
        %vm942 = vcmp.lt.s32.totalorder %v906, 16
        %vm943 = vcmp.lt.s32.totalorder %v907, 16
        %vm944 = vcmp.lt.s32.totalorder %v908, 16
        %vm945 = vcmp.lt.s32.totalorder %v909, 16
        %vm946 = vcmp.lt.s32.totalorder %v910, 16
        %vm947 = vcmp.lt.s32.totalorder %v911, 16
        %vm948 = vcmp.lt.s32.totalorder %v912, 16
        %vm949 = vcmp.lt.s32.totalorder %v913, 16
        %vm950 = vcmp.lt.s32.totalorder %v914, 16
        %vm951 = vcmp.lt.s32.totalorder %v915, 16
        %vm952 = vcmp.lt.s32.totalorder %v916, 16
        %vm953 = vcmp.lt.s32.totalorder %v917, 16
        %v954 = vld [vmem:[%s1] sm:$0xf]
        %v955 = vld [vmem:[%s1 + $0x4] sm:$0xf]
        %v956 = vld [vmem:[%s1 + $0x8] sm:$0xf]
        %v957 = vld [vmem:[%s1 + $0xc] sm:$0xf]
        %v958 = vld [vmem:[%s1 + $0x10] sm:$0xf]
        %v959 = vld [vmem:[%s1 + $0x14] sm:$0xf]
        %v960 = vld [vmem:[%s1 + $0x18] sm:$0xf]
        %v961 = vld [vmem:[%s1 + $0x1c] sm:$0xf]
        %v962 = vld [vmem:[%s1 + $0x20] sm:$0xf]
        %v963 = vld [vmem:[#allocation3] sm:$0x1]
        %v964 = vld [vmem:[%s299] sm:$0xff]
        %v965 = vld [vmem:[%s299 + $0x8] sm:$0xff]
        %v966 = vld [vmem:[%s299 + $0x10] sm:$0xff]
        %v967 = vld [vmem:[%s299 + $0x18] sm:$0xff]
        %v968 = vld [vmem:[%s299 + $0x20] sm:$0xff]
        %v969 = vld [vmem:[%s299 + $0x28] sm:$0xff]
        %v970 = vld [vmem:[%s299 + $0x30] sm:$0xff]
        %v971 = vld [vmem:[%s299 + $0x38] sm:$0xff]
        %v972 = vld [vmem:[%s299 + $0x40] sm:$0xff]
        %v973 = vld [vmem:[%s299 + $0x48] sm:$0xff]
        %v974 = vld [vmem:[%s299 + $0x50] sm:$0xff]
        %v975 = vld [vmem:[%s299 + $0x58] sm:$0xff]
        %v976 = vld [vmem:[%s299 + $0x60] sm:$0xff]
        %v977 = vld [vmem:[%s299 + $0x68] sm:$0xff]
        %v978 = vld [vmem:[%s299 + $0x70] sm:$0xff]
        %v979 = vld [vmem:[%s299 + $0x78] sm:$0xff]
        %v980 = vld [vmem:[%s299 + $0x80] sm:$0xff]
        %v981 = vld [vmem:[%s299 + $0x88] sm:$0xff]
        %v982 = vld [vmem:[%s299 + $0x90] sm:$0xff]
        %v983 = vld [vmem:[%s299 + $0x98] sm:$0xff]
        %v984 = vld [vmem:[%s299 + $0xa0] sm:$0xff]
        %v985 = vld [vmem:[%s299 + $0xa8] sm:$0xff]
        %v986 = vld [vmem:[%s299 + $0xb0] sm:$0xff]
        %v987 = vld [vmem:[%s299 + $0xb8] sm:$0xff]
        %v988 = vld [vmem:[%s299 + $0xc0] sm:$0xff]
        %v989 = vld [vmem:[%s299 + $0xc8] sm:$0xff]
        %v990 = vld [vmem:[%s299 + $0xd0] sm:$0xff]
        %v991 = vld [vmem:[%s299 + $0xd8] sm:$0xff]
        %v992 = vld [vmem:[%s299 + $0xe0] sm:$0xff]
        %v993 = vld [vmem:[%s299 + $0xe8] sm:$0xff]
        %v994 = vld [vmem:[%s299 + $0xf0] sm:$0xff]
        %v995 = vld [vmem:[%s299 + $0xf8] sm:$0xff]
        %v996 = vld [vmem:[%s299 + $0x100] sm:$0xff]
        %v997 = vld [vmem:[%s299 + $0x108] sm:$0xff]
        %v998 = vld [vmem:[%s299 + $0x110] sm:$0xff]
        %v999 = vld [vmem:[%s299 + $0x118] sm:$0xff]
        %v1000 = vld [vmem:[%s299 + $0x1] sm:$0xff]
        %v1001 = vld [vmem:[%s299 + $0x9] sm:$0xff]
        %v1002 = vld [vmem:[%s299 + $0x11] sm:$0xff]
        %v1003 = vld [vmem:[%s299 + $0x19] sm:$0xff]
        %v1004 = vld [vmem:[%s299 + $0x21] sm:$0xff]
        %v1005 = vld [vmem:[%s299 + $0x29] sm:$0xff]
        %v1006 = vld [vmem:[%s299 + $0x31] sm:$0xff]
        %v1007 = vld [vmem:[%s299 + $0x39] sm:$0xff]
        %v1008 = vld [vmem:[%s299 + $0x41] sm:$0xff]
        %v1009 = vld [vmem:[%s299 + $0x49] sm:$0xff]
        %v1010 = vld [vmem:[%s299 + $0x51] sm:$0xff]
        %v1011 = vld [vmem:[%s299 + $0x59] sm:$0xff]
        %v1012 = vld [vmem:[%s299 + $0x61] sm:$0xff]
        %v1013 = vld [vmem:[%s299 + $0x69] sm:$0xff]
        %v1014 = vld [vmem:[%s299 + $0x71] sm:$0xff]
        %v1015 = vld [vmem:[%s299 + $0x79] sm:$0xff]
        %v1016 = vld [vmem:[%s299 + $0x81] sm:$0xff]
        %v1017 = vld [vmem:[%s299 + $0x89] sm:$0xff]
        %v1018 = vld [vmem:[%s299 + $0x91] sm:$0xff]
        %v1019 = vld [vmem:[%s299 + $0x99] sm:$0xff]
        %v1020 = vld [vmem:[%s299 + $0xa1] sm:$0xff]
        %v1021 = vld [vmem:[%s299 + $0xa9] sm:$0xff]
        %v1022 = vld [vmem:[%s299 + $0xb1] sm:$0xff]
        %v1023 = vld [vmem:[%s299 + $0xb9] sm:$0xff]
        %v1024 = vld [vmem:[%s299 + $0xc1] sm:$0xff]
        %v1025 = vld [vmem:[%s299 + $0xc9] sm:$0xff]
        %v1026 = vld [vmem:[%s299 + $0xd1] sm:$0xff]
        %v1027 = vld [vmem:[%s299 + $0xd9] sm:$0xff]
        %v1028 = vld [vmem:[%s299 + $0xe1] sm:$0xff]
        %v1029 = vld [vmem:[%s299 + $0xe9] sm:$0xff]
        %v1030 = vld [vmem:[%s299 + $0xf1] sm:$0xff]
        %v1031 = vld [vmem:[%s299 + $0xf9] sm:$0xff]
        %v1032 = vld [vmem:[%s299 + $0x101] sm:$0xff]
        %v1033 = vld [vmem:[%s299 + $0x109] sm:$0xff]
        %v1034 = vld [vmem:[%s299 + $0x111] sm:$0xff]
        %v1035 = vld [vmem:[%s299 + $0x119] sm:$0xff]
        %vm1036 = vcmask 31744
        %v1038 = vsel %vm1036, %v1000, 0
        %v1041 = vsel %vm1036, %v1001, 0
        %v1044 = vsel %vm1036, %v1002, 0
        %v1047 = vsel %vm1036, %v1003, 0
        %v1050 = vsel %vm1036, %v1004, 0
        %v1053 = vsel %vm1036, %v1005, 0
        %v1056 = vsel %vm1036, %v1006, 0
        %v1059 = vsel %vm1036, %v1007, 0
        %v1062 = vsel %vm1036, %v1008, 0
        %v1065 = vsel %vm1036, %v1009, 0
        %v1068 = vsel %vm1036, %v1010, 0
        %v1071 = vsel %vm1036, %v1011, 0
        %v1074 = vsel %vm1036, %v1012, 0
        %v1077 = vsel %vm1036, %v1013, 0
        %v1080 = vsel %vm1036, %v1014, 0
        %v1083 = vsel %vm1036, %v1015, 0
        %v1086 = vsel %vm1036, %v1016, 0
        %v1089 = vsel %vm1036, %v1017, 0
        %v1092 = vsel %vm1036, %v1018, 0
        %v1095 = vsel %vm1036, %v1019, 0
        %v1098 = vsel %vm1036, %v1020, 0
        %v1101 = vsel %vm1036, %v1021, 0
        %v1104 = vsel %vm1036, %v1022, 0
        %v1107 = vsel %vm1036, %v1023, 0
        %v1110 = vsel %vm1036, %v1024, 0
        %v1113 = vsel %vm1036, %v1025, 0
        %v1116 = vsel %vm1036, %v1026, 0
        %v1119 = vsel %vm1036, %v1027, 0
        %v1122 = vsel %vm1036, %v1028, 0
        %v1125 = vsel %vm1036, %v1029, 0
        %v1128 = vsel %vm1036, %v1030, 0
        %v1131 = vsel %vm1036, %v1031, 0
        %v1134 = vsel %vm1036, %v1032, 0
        %v1137 = vsel %vm1036, %v1033, 0
        %v1140 = vsel %vm1036, %v1034, 0
        %v1143 = vsel %vm1036, %v1035, 0
        %vm1145 = vcmask 1043456
        %v1147 = vsel %vm1145, %v955, 0
        %1149 = vmatprep.subr.mxu0 0.0
        %1150 = vmatpush1.msra.mxu0 0.0
        %1151 = vmatprep.subr.mxu0 0.0
        %1152 = vmatpush1.msra.mxu0 0.0
        %1153 = vmatprep.subr.mxu0 0.0
        %1154 = vmatpush1.msra.mxu0 0.0
        %1155 = vmatprep.subr.mxu0 0.0
        %1156 = vmatpush1.msra.mxu0 0.0
        %1157 = vmatprep.subr.mxu0 0.0
        %1158 = vmatpush1.msra.mxu0 0.0
        %1159 = vmatprep.subr.mxu0 0.0
        %1160 = vmatpush1.msra.mxu0 0.0
        %1161 = vmatprep.subr.mxu0 0.0
        %1162 = vmatpush1.msra.mxu0 0.0
        %1163 = vmatprep.subr.mxu0 0.0
        %1164 = vmatpush1.msra.mxu0 0.0
        %1165 = vmatprep.subr.mxu0 0.0
        %1166 = vmatpush1.msra.mxu0 0.0
        %1167 = vmatprep.subr.mxu0 0.0
        %1168 = vmatpush1.msra.mxu0 0.0
        %1169 = vmatprep.subr.mxu0 0.0
        %1170 = vmatpush1.msra.mxu0 0.0
        %1171 = vmatprep.subr.mxu0 0.0
        %1172 = vmatpush1.msra.mxu0 0.0
        %1173 = vmatprep.subr.mxu0 0.0
        %1174 = vmatpush1.msra.mxu0 0.0
        %1175 = vmatprep.subr.mxu0 0.0
        %1176 = vmatpush1.msra.mxu0 0.0
        %1177 = vmatprep.subr.mxu0 0.0
        %1178 = vmatpush1.msra.mxu0 0.0
        %1179 = vmatprep.subr.mxu0 0.0
        %1180 = vmatpush1.msra.mxu0 %v1147
        %1181 = vmatprep.subr.mxu0 0.0
        %1182 = vmatpush2.msra.mxu0 0.0
        %1183 = vmatprep.subr.mxu0 0.0
        %1184 = vmatpush2.msra.mxu0 0.0
        %1185 = vmatprep.subr.mxu0 0.0
        %1186 = vmatpush2.msra.mxu0 0.0
        %1187 = vmatprep.subr.mxu0 0.0
        %1188 = vmatpush2.msra.mxu0 0.0
        %1189 = vmatprep.subr.mxu0 0.0
        %1190 = vmatpush2.msra.mxu0 0.0
        %1191 = vmatprep.subr.mxu0 0.0
        %1192 = vmatpush2.msra.mxu0 0.0
        %1193 = vmatprep.subr.mxu0 0.0
        %1194 = vmatpush2.msra.mxu0 0.0
        %1195 = vmatprep.subr.mxu0 0.0
        %1196 = vmatpush2.msra.mxu0 0.0
        %1197 = vmatprep.subr.mxu0 0.0
        %1198 = vmatpush2.msra.mxu0 0.0
        %1199 = vmatprep.subr.mxu0 0.0
        %1200 = vmatpush2.msra.mxu0 0.0
        %1201 = vmatprep.subr.mxu0 0.0
        %1202 = vmatpush2.msra.mxu0 0.0
        %1203 = vmatprep.subr.mxu0 0.0
        %1204 = vmatpush2.msra.mxu0 0.0
        %1205 = vmatprep.subr.mxu0 0.0
        %1206 = vmatpush2.msra.mxu0 0.0
        %1207 = vmatprep.subr.mxu0 0.0
        %1208 = vmatpush2.msra.mxu0 0.0
        %1209 = vmatprep.subr.mxu0 0.0
        %1210 = vmatpush2.msra.mxu0 0.0
        %1211 = vmatprep.subr.mxu0 0.0
        %1212 = vmatpush2.msra.mxu0 0.0
        %1213 = vmatprep.mubr.f32.mxu0 0.0
        %1214 = vmatmul.mubr.f32.gmra.mxu0 %v1038
        %v1215 = vpop.f32.mrf.mxu0
        %v1216 = vadd.f32 0.0, %v1215
        %v1217 = vpop.f32.mrf.mxu0
        %1218 = vmatprep.mubr.f32.mxu0 0.0
        %1219 = vmatmul.mubr.f32.gmra.mxu0 %v1041
        %v1220 = vpop.f32.mrf.mxu0
        %v1221 = vadd.f32 0.0, %v1220
        %v1222 = vpop.f32.mrf.mxu0
        %1223 = vmatprep.mubr.f32.mxu0 0.0
        %1224 = vmatmul.mubr.f32.gmra.mxu0 %v1044
        %v1225 = vpop.f32.mrf.mxu0
        %v1226 = vadd.f32 0.0, %v1225
        %v1227 = vpop.f32.mrf.mxu0
        %1228 = vmatprep.mubr.f32.mxu0 0.0
        %1229 = vmatmul.mubr.f32.gmra.mxu0 %v1047
        %v1230 = vpop.f32.mrf.mxu0
        %v1231 = vadd.f32 0.0, %v1230
        %v1232 = vpop.f32.mrf.mxu0
        %1233 = vmatprep.mubr.f32.mxu0 0.0
        %1234 = vmatmul.mubr.f32.gmra.mxu0 %v1050
        %v1235 = vpop.f32.mrf.mxu0
        %v1236 = vadd.f32 0.0, %v1235
        %v1237 = vpop.f32.mrf.mxu0
        %1238 = vmatprep.mubr.f32.mxu0 0.0
        %1239 = vmatmul.mubr.f32.gmra.mxu0 %v1053
        %v1240 = vpop.f32.mrf.mxu0
        %v1241 = vadd.f32 0.0, %v1240
        %v1242 = vpop.f32.mrf.mxu0
        %1243 = vmatprep.mubr.f32.mxu0 0.0
        %1244 = vmatmul.mubr.f32.gmra.mxu0 %v1056
        %v1245 = vpop.f32.mrf.mxu0
        %v1246 = vadd.f32 0.0, %v1245
        %v1247 = vpop.f32.mrf.mxu0
        %1248 = vmatprep.mubr.f32.mxu0 0.0
        %1249 = vmatmul.mubr.f32.gmra.mxu0 %v1059
        %v1250 = vpop.f32.mrf.mxu0
        %v1251 = vadd.f32 0.0, %v1250
        %v1252 = vpop.f32.mrf.mxu0
        %1253 = vmatprep.mubr.f32.mxu0 0.0
        %1254 = vmatmul.mubr.f32.gmra.mxu0 %v1062
        %v1255 = vpop.f32.mrf.mxu0
        %v1256 = vadd.f32 0.0, %v1255
        %v1257 = vpop.f32.mrf.mxu0
        %1258 = vmatprep.mubr.f32.mxu0 0.0
        %1259 = vmatmul.mubr.f32.gmra.mxu0 %v1065
        %v1260 = vpop.f32.mrf.mxu0
        %v1261 = vadd.f32 0.0, %v1260
        %v1262 = vpop.f32.mrf.mxu0
        %1263 = vmatprep.mubr.f32.mxu0 0.0
        %1264 = vmatmul.mubr.f32.gmra.mxu0 %v1068
        %v1265 = vpop.f32.mrf.mxu0
        %v1266 = vadd.f32 0.0, %v1265
        %v1267 = vpop.f32.mrf.mxu0
        %1268 = vmatprep.mubr.f32.mxu0 0.0
        %1269 = vmatmul.mubr.f32.gmra.mxu0 %v1071
        %v1270 = vpop.f32.mrf.mxu0
        %v1271 = vadd.f32 0.0, %v1270
        %v1272 = vpop.f32.mrf.mxu0
        %1273 = vmatprep.mubr.f32.mxu0 0.0
        %1274 = vmatmul.mubr.f32.gmra.mxu0 %v1074
        %v1275 = vpop.f32.mrf.mxu0
        %v1276 = vadd.f32 0.0, %v1275
        %v1277 = vpop.f32.mrf.mxu0
        %1278 = vmatprep.mubr.f32.mxu0 0.0
        %1279 = vmatmul.mubr.f32.gmra.mxu0 %v1077
        %v1280 = vpop.f32.mrf.mxu0
        %v1281 = vadd.f32 0.0, %v1280
        %v1282 = vpop.f32.mrf.mxu0
        %1283 = vmatprep.mubr.f32.mxu0 0.0
        %1284 = vmatmul.mubr.f32.gmra.mxu0 %v1080
        %v1285 = vpop.f32.mrf.mxu0
        %v1286 = vadd.f32 0.0, %v1285
        %v1287 = vpop.f32.mrf.mxu0
        %1288 = vmatprep.mubr.f32.mxu0 0.0
        %1289 = vmatmul.mubr.f32.gmra.mxu0 %v1083
        %v1290 = vpop.f32.mrf.mxu0
        %v1291 = vadd.f32 0.0, %v1290
        %v1292 = vpop.f32.mrf.mxu0
        %1293 = vmatprep.mubr.f32.mxu0 0.0
        %1294 = vmatmul.mubr.f32.gmra.mxu0 %v1086
        %v1295 = vpop.f32.mrf.mxu0
        %v1296 = vadd.f32 0.0, %v1295
        %v1297 = vpop.f32.mrf.mxu0
        %1298 = vmatprep.mubr.f32.mxu0 0.0
        %1299 = vmatmul.mubr.f32.gmra.mxu0 %v1089
        %v1300 = vpop.f32.mrf.mxu0
        %v1301 = vadd.f32 0.0, %v1300
        %v1302 = vpop.f32.mrf.mxu0
        %1303 = vmatprep.mubr.f32.mxu0 0.0
        %1304 = vmatmul.mubr.f32.gmra.mxu0 %v1092
        %v1305 = vpop.f32.mrf.mxu0
        %v1306 = vadd.f32 0.0, %v1305
        %v1307 = vpop.f32.mrf.mxu0
        %1308 = vmatprep.mubr.f32.mxu0 0.0
        %1309 = vmatmul.mubr.f32.gmra.mxu0 %v1095
        %v1310 = vpop.f32.mrf.mxu0
        %v1311 = vadd.f32 0.0, %v1310
        %v1312 = vpop.f32.mrf.mxu0
        %1313 = vmatprep.mubr.f32.mxu0 0.0
        %1314 = vmatmul.mubr.f32.gmra.mxu0 %v1098
        %v1315 = vpop.f32.mrf.mxu0
        %v1316 = vadd.f32 0.0, %v1315
        %v1317 = vpop.f32.mrf.mxu0
        %1318 = vmatprep.mubr.f32.mxu0 0.0
        %1319 = vmatmul.mubr.f32.gmra.mxu0 %v1101
        %v1320 = vpop.f32.mrf.mxu0
        %v1321 = vadd.f32 0.0, %v1320
        %v1322 = vpop.f32.mrf.mxu0
        %1323 = vmatprep.mubr.f32.mxu0 0.0
        %1324 = vmatmul.mubr.f32.gmra.mxu0 %v1104
        %v1325 = vpop.f32.mrf.mxu0
        %v1326 = vadd.f32 0.0, %v1325
        %v1327 = vpop.f32.mrf.mxu0
        %1328 = vmatprep.mubr.f32.mxu0 0.0
        %1329 = vmatmul.mubr.f32.gmra.mxu0 %v1107
        %v1330 = vpop.f32.mrf.mxu0
        %v1331 = vadd.f32 0.0, %v1330
        %v1332 = vpop.f32.mrf.mxu0
        %1333 = vmatprep.mubr.f32.mxu0 0.0
        %1334 = vmatmul.mubr.f32.gmra.mxu0 %v1110
        %v1335 = vpop.f32.mrf.mxu0
        %v1336 = vadd.f32 0.0, %v1335
        %v1337 = vpop.f32.mrf.mxu0
        %1338 = vmatprep.mubr.f32.mxu0 0.0
        %1339 = vmatmul.mubr.f32.gmra.mxu0 %v1113
        %v1340 = vpop.f32.mrf.mxu0
        %v1341 = vadd.f32 0.0, %v1340
        %v1342 = vpop.f32.mrf.mxu0
        %1343 = vmatprep.mubr.f32.mxu0 0.0
        %1344 = vmatmul.mubr.f32.gmra.mxu0 %v1116
        %v1345 = vpop.f32.mrf.mxu0
        %v1346 = vadd.f32 0.0, %v1345
        %v1347 = vpop.f32.mrf.mxu0
        %1348 = vmatprep.mubr.f32.mxu0 0.0
        %1349 = vmatmul.mubr.f32.gmra.mxu0 %v1119
        %v1350 = vpop.f32.mrf.mxu0
        %v1351 = vadd.f32 0.0, %v1350
        %v1352 = vpop.f32.mrf.mxu0
        %1353 = vmatprep.mubr.f32.mxu0 0.0
        %1354 = vmatmul.mubr.f32.gmra.mxu0 %v1122
        %v1355 = vpop.f32.mrf.mxu0
        %v1356 = vadd.f32 0.0, %v1355
        %v1357 = vpop.f32.mrf.mxu0
        %1358 = vmatprep.mubr.f32.mxu0 0.0
        %1359 = vmatmul.mubr.f32.gmra.mxu0 %v1125
        %v1360 = vpop.f32.mrf.mxu0
        %v1361 = vadd.f32 0.0, %v1360
        %v1362 = vpop.f32.mrf.mxu0
        %1363 = vmatprep.mubr.f32.mxu0 0.0
        %1364 = vmatmul.mubr.f32.gmra.mxu0 %v1128
        %v1365 = vpop.f32.mrf.mxu0
        %v1366 = vadd.f32 0.0, %v1365
        %v1367 = vpop.f32.mrf.mxu0
        %1368 = vmatprep.mubr.f32.mxu0 0.0
        %1369 = vmatmul.mubr.f32.gmra.mxu0 %v1131
        %v1370 = vpop.f32.mrf.mxu0
        %v1371 = vadd.f32 0.0, %v1370
        %v1372 = vpop.f32.mrf.mxu0
        %1373 = vmatprep.mubr.f32.mxu0 0.0
        %1374 = vmatmul.mubr.f32.gmra.mxu0 %v1134
        %v1375 = vpop.f32.mrf.mxu0
        %v1376 = vadd.f32 0.0, %v1375
        %v1377 = vpop.f32.mrf.mxu0
        %1378 = vmatprep.mubr.f32.mxu0 0.0
        %1379 = vmatmul.mubr.f32.gmra.mxu0 %v1137
        %v1380 = vpop.f32.mrf.mxu0
        %v1381 = vadd.f32 0.0, %v1380
        %v1382 = vpop.f32.mrf.mxu0
        %1383 = vmatprep.mubr.f32.mxu0 0.0
        %1384 = vmatmul.mubr.f32.gmra.mxu0 %v1140
        %v1385 = vpop.f32.mrf.mxu0
        %v1386 = vadd.f32 0.0, %v1385
        %v1387 = vpop.f32.mrf.mxu0
        %1388 = vmatprep.mubr.f32.mxu0 0.0
        %1389 = vmatmul.mubr.f32.gmra.mxu0 %v1143
        %v1390 = vpop.f32.mrf.mxu0
        %v1391 = vadd.f32 0.0, %v1390
        %v1392 = vpop.f32.mrf.mxu0
        %1393 = vdwg.mxu0
        %v1395 = vsel %vm1036, %v964, 0
        %v1398 = vsel %vm1036, %v965, 0
        %v1401 = vsel %vm1036, %v966, 0
        %v1404 = vsel %vm1036, %v967, 0
        %v1407 = vsel %vm1036, %v968, 0
        %v1410 = vsel %vm1036, %v969, 0
        %v1413 = vsel %vm1036, %v970, 0
        %v1416 = vsel %vm1036, %v971, 0
        %v1419 = vsel %vm1036, %v972, 0
        %v1422 = vsel %vm1036, %v973, 0
        %v1425 = vsel %vm1036, %v974, 0
        %v1428 = vsel %vm1036, %v975, 0
        %v1431 = vsel %vm1036, %v976, 0
        %v1434 = vsel %vm1036, %v977, 0
        %v1437 = vsel %vm1036, %v978, 0
        %v1440 = vsel %vm1036, %v979, 0
        %v1443 = vsel %vm1036, %v980, 0
        %v1446 = vsel %vm1036, %v981, 0
        %v1449 = vsel %vm1036, %v982, 0
        %v1452 = vsel %vm1036, %v983, 0
        %v1455 = vsel %vm1036, %v984, 0
        %v1458 = vsel %vm1036, %v985, 0
        %v1461 = vsel %vm1036, %v986, 0
        %v1464 = vsel %vm1036, %v987, 0
        %v1467 = vsel %vm1036, %v988, 0
        %v1470 = vsel %vm1036, %v989, 0
        %v1473 = vsel %vm1036, %v990, 0
        %v1476 = vsel %vm1036, %v991, 0
        %v1479 = vsel %vm1036, %v992, 0
        %v1482 = vsel %vm1036, %v993, 0
        %v1485 = vsel %vm1036, %v994, 0
        %v1488 = vsel %vm1036, %v995, 0
        %v1491 = vsel %vm1036, %v996, 0
        %v1494 = vsel %vm1036, %v997, 0
        %v1497 = vsel %vm1036, %v998, 0
        %v1500 = vsel %vm1036, %v999, 0
        %v1503 = vsel %vm1145, %v954, 0
        %1505 = vmatprep.subr.mxu0 0.0
        %1506 = vmatpush1.msra.mxu0 0.0
        %1507 = vmatprep.subr.mxu0 0.0
        %1508 = vmatpush1.msra.mxu0 0.0
        %1509 = vmatprep.subr.mxu0 0.0
        %1510 = vmatpush1.msra.mxu0 0.0
        %1511 = vmatprep.subr.mxu0 0.0
        %1512 = vmatpush1.msra.mxu0 0.0
        %1513 = vmatprep.subr.mxu0 0.0
        %1514 = vmatpush1.msra.mxu0 0.0
        %1515 = vmatprep.subr.mxu0 0.0
        %1516 = vmatpush1.msra.mxu0 0.0
        %1517 = vmatprep.subr.mxu0 0.0
        %1518 = vmatpush1.msra.mxu0 0.0
        %1519 = vmatprep.subr.mxu0 0.0
        %1520 = vmatpush1.msra.mxu0 0.0
        %1521 = vmatprep.subr.mxu0 0.0
        %1522 = vmatpush1.msra.mxu0 0.0
        %1523 = vmatprep.subr.mxu0 0.0
        %1524 = vmatpush1.msra.mxu0 0.0
        %1525 = vmatprep.subr.mxu0 0.0
        %1526 = vmatpush1.msra.mxu0 0.0
        %1527 = vmatprep.subr.mxu0 0.0
        %1528 = vmatpush1.msra.mxu0 0.0
        %1529 = vmatprep.subr.mxu0 0.0
        %1530 = vmatpush1.msra.mxu0 0.0
        %1531 = vmatprep.subr.mxu0 0.0
        %1532 = vmatpush1.msra.mxu0 0.0
        %1533 = vmatprep.subr.mxu0 0.0
        %1534 = vmatpush1.msra.mxu0 0.0
        %1535 = vmatprep.subr.mxu0 0.0
        %1536 = vmatpush1.msra.mxu0 %v1503
        %1537 = vmatprep.subr.mxu0 0.0
        %1538 = vmatpush2.msra.mxu0 0.0
        %1539 = vmatprep.subr.mxu0 0.0
        %1540 = vmatpush2.msra.mxu0 0.0
        %1541 = vmatprep.subr.mxu0 0.0
        %1542 = vmatpush2.msra.mxu0 0.0
        %1543 = vmatprep.subr.mxu0 0.0
        %1544 = vmatpush2.msra.mxu0 0.0
        %1545 = vmatprep.subr.mxu0 0.0
        %1546 = vmatpush2.msra.mxu0 0.0
        %1547 = vmatprep.subr.mxu0 0.0
        %1548 = vmatpush2.msra.mxu0 0.0
        %1549 = vmatprep.subr.mxu0 0.0
        %1550 = vmatpush2.msra.mxu0 0.0
        %1551 = vmatprep.subr.mxu0 0.0
        %1552 = vmatpush2.msra.mxu0 0.0
        %1553 = vmatprep.subr.mxu0 0.0
        %1554 = vmatpush2.msra.mxu0 0.0
        %1555 = vmatprep.subr.mxu0 0.0
        %1556 = vmatpush2.msra.mxu0 0.0
        %1557 = vmatprep.subr.mxu0 0.0
        %1558 = vmatpush2.msra.mxu0 0.0
        %1559 = vmatprep.subr.mxu0 0.0
        %1560 = vmatpush2.msra.mxu0 0.0
        %1561 = vmatprep.subr.mxu0 0.0
        %1562 = vmatpush2.msra.mxu0 0.0
        %1563 = vmatprep.subr.mxu0 0.0
        %1564 = vmatpush2.msra.mxu0 0.0
        %1565 = vmatprep.subr.mxu0 0.0
        %1566 = vmatpush2.msra.mxu0 0.0
        %1567 = vmatprep.subr.mxu0 0.0
        %1568 = vmatpush2.msra.mxu0 0.0
        %1569 = vmatprep.mubr.f32.mxu0 0.0
        %1570 = vmatmul.mubr.f32.gmra.mxu0 %v1395
        %v1571 = vpop.f32.mrf.mxu0
        %v1572 = vadd.f32 %v1216, %v1571
        %v1573 = vpop.f32.mrf.mxu0
        %1574 = vmatprep.mubr.f32.mxu0 0.0
        %1575 = vmatmul.mubr.f32.gmra.mxu0 %v1398
        %v1576 = vpop.f32.mrf.mxu0
        %v1577 = vadd.f32 %v1221, %v1576
        %v1578 = vpop.f32.mrf.mxu0
        %1579 = vmatprep.mubr.f32.mxu0 0.0
        %1580 = vmatmul.mubr.f32.gmra.mxu0 %v1401
        %v1581 = vpop.f32.mrf.mxu0
        %v1582 = vadd.f32 %v1226, %v1581
        %v1583 = vpop.f32.mrf.mxu0
        %1584 = vmatprep.mubr.f32.mxu0 0.0
        %1585 = vmatmul.mubr.f32.gmra.mxu0 %v1404
        %v1586 = vpop.f32.mrf.mxu0
        %v1587 = vadd.f32 %v1231, %v1586
        %v1588 = vpop.f32.mrf.mxu0
        %1589 = vmatprep.mubr.f32.mxu0 0.0
        %1590 = vmatmul.mubr.f32.gmra.mxu0 %v1407
        %v1591 = vpop.f32.mrf.mxu0
        %v1592 = vadd.f32 %v1236, %v1591
        %v1593 = vpop.f32.mrf.mxu0
        %1594 = vmatprep.mubr.f32.mxu0 0.0
        %1595 = vmatmul.mubr.f32.gmra.mxu0 %v1410
        %v1596 = vpop.f32.mrf.mxu0
        %v1597 = vadd.f32 %v1241, %v1596
        %v1598 = vpop.f32.mrf.mxu0
        %1599 = vmatprep.mubr.f32.mxu0 0.0
        %1600 = vmatmul.mubr.f32.gmra.mxu0 %v1413
        %v1601 = vpop.f32.mrf.mxu0
        %v1602 = vadd.f32 %v1246, %v1601
        %v1603 = vpop.f32.mrf.mxu0
        %1604 = vmatprep.mubr.f32.mxu0 0.0
        %1605 = vmatmul.mubr.f32.gmra.mxu0 %v1416
        %v1606 = vpop.f32.mrf.mxu0
        %v1607 = vadd.f32 %v1251, %v1606
        %v1608 = vpop.f32.mrf.mxu0
        %1609 = vmatprep.mubr.f32.mxu0 0.0
        %1610 = vmatmul.mubr.f32.gmra.mxu0 %v1419
        %v1611 = vpop.f32.mrf.mxu0
        %v1612 = vadd.f32 %v1256, %v1611
        %v1613 = vpop.f32.mrf.mxu0
        %1614 = vmatprep.mubr.f32.mxu0 0.0
        %1615 = vmatmul.mubr.f32.gmra.mxu0 %v1422
        %v1616 = vpop.f32.mrf.mxu0
        %v1617 = vadd.f32 %v1261, %v1616
        %v1618 = vpop.f32.mrf.mxu0
        %1619 = vmatprep.mubr.f32.mxu0 0.0
        %1620 = vmatmul.mubr.f32.gmra.mxu0 %v1425
        %v1621 = vpop.f32.mrf.mxu0
        %v1622 = vadd.f32 %v1266, %v1621
        %v1623 = vpop.f32.mrf.mxu0
        %1624 = vmatprep.mubr.f32.mxu0 0.0
        %1625 = vmatmul.mubr.f32.gmra.mxu0 %v1428
        %v1626 = vpop.f32.mrf.mxu0
        %v1627 = vadd.f32 %v1271, %v1626
        %v1628 = vpop.f32.mrf.mxu0
        %1629 = vmatprep.mubr.f32.mxu0 0.0
        %1630 = vmatmul.mubr.f32.gmra.mxu0 %v1431
        %v1631 = vpop.f32.mrf.mxu0
        %v1632 = vadd.f32 %v1276, %v1631
        %v1633 = vpop.f32.mrf.mxu0
        %1634 = vmatprep.mubr.f32.mxu0 0.0
        %1635 = vmatmul.mubr.f32.gmra.mxu0 %v1434
        %v1636 = vpop.f32.mrf.mxu0
        %v1637 = vadd.f32 %v1281, %v1636
        %v1638 = vpop.f32.mrf.mxu0
        %1639 = vmatprep.mubr.f32.mxu0 0.0
        %1640 = vmatmul.mubr.f32.gmra.mxu0 %v1437
        %v1641 = vpop.f32.mrf.mxu0
        %v1642 = vadd.f32 %v1286, %v1641
        %v1643 = vpop.f32.mrf.mxu0
        %1644 = vmatprep.mubr.f32.mxu0 0.0
        %1645 = vmatmul.mubr.f32.gmra.mxu0 %v1440
        %v1646 = vpop.f32.mrf.mxu0
        %v1647 = vadd.f32 %v1291, %v1646
        %v1648 = vpop.f32.mrf.mxu0
        %1649 = vmatprep.mubr.f32.mxu0 0.0
        %1650 = vmatmul.mubr.f32.gmra.mxu0 %v1443
        %v1651 = vpop.f32.mrf.mxu0
        %v1652 = vadd.f32 %v1296, %v1651
        %v1653 = vpop.f32.mrf.mxu0
        %1654 = vmatprep.mubr.f32.mxu0 0.0
        %1655 = vmatmul.mubr.f32.gmra.mxu0 %v1446
        %v1656 = vpop.f32.mrf.mxu0
        %v1657 = vadd.f32 %v1301, %v1656
        %v1658 = vpop.f32.mrf.mxu0
        %1659 = vmatprep.mubr.f32.mxu0 0.0
        %1660 = vmatmul.mubr.f32.gmra.mxu0 %v1449
        %v1661 = vpop.f32.mrf.mxu0
        %v1662 = vadd.f32 %v1306, %v1661
        %v1663 = vpop.f32.mrf.mxu0
        %1664 = vmatprep.mubr.f32.mxu0 0.0
        %1665 = vmatmul.mubr.f32.gmra.mxu0 %v1452
        %v1666 = vpop.f32.mrf.mxu0
        %v1667 = vadd.f32 %v1311, %v1666
        %v1668 = vpop.f32.mrf.mxu0
        %1669 = vmatprep.mubr.f32.mxu0 0.0
        %1670 = vmatmul.mubr.f32.gmra.mxu0 %v1455
        %v1671 = vpop.f32.mrf.mxu0
        %v1672 = vadd.f32 %v1316, %v1671
        %v1673 = vpop.f32.mrf.mxu0
        %1674 = vmatprep.mubr.f32.mxu0 0.0
        %1675 = vmatmul.mubr.f32.gmra.mxu0 %v1458
        %v1676 = vpop.f32.mrf.mxu0
        %v1677 = vadd.f32 %v1321, %v1676
        %v1678 = vpop.f32.mrf.mxu0
        %1679 = vmatprep.mubr.f32.mxu0 0.0
        %1680 = vmatmul.mubr.f32.gmra.mxu0 %v1461
        %v1681 = vpop.f32.mrf.mxu0
        %v1682 = vadd.f32 %v1326, %v1681
        %v1683 = vpop.f32.mrf.mxu0
        %1684 = vmatprep.mubr.f32.mxu0 0.0
        %1685 = vmatmul.mubr.f32.gmra.mxu0 %v1464
        %v1686 = vpop.f32.mrf.mxu0
        %v1687 = vadd.f32 %v1331, %v1686
        %v1688 = vpop.f32.mrf.mxu0
        %1689 = vmatprep.mubr.f32.mxu0 0.0
        %1690 = vmatmul.mubr.f32.gmra.mxu0 %v1467
        %v1691 = vpop.f32.mrf.mxu0
        %v1692 = vadd.f32 %v1336, %v1691
        %v1693 = vpop.f32.mrf.mxu0
        %1694 = vmatprep.mubr.f32.mxu0 0.0
        %1695 = vmatmul.mubr.f32.gmra.mxu0 %v1470
        %v1696 = vpop.f32.mrf.mxu0
        %v1697 = vadd.f32 %v1341, %v1696
        %v1698 = vpop.f32.mrf.mxu0
        %1699 = vmatprep.mubr.f32.mxu0 0.0
        %1700 = vmatmul.mubr.f32.gmra.mxu0 %v1473
        %v1701 = vpop.f32.mrf.mxu0
        %v1702 = vadd.f32 %v1346, %v1701
        %v1703 = vpop.f32.mrf.mxu0
        %1704 = vmatprep.mubr.f32.mxu0 0.0
        %1705 = vmatmul.mubr.f32.gmra.mxu0 %v1476
        %v1706 = vpop.f32.mrf.mxu0
        %v1707 = vadd.f32 %v1351, %v1706
        %v1708 = vpop.f32.mrf.mxu0
        %1709 = vmatprep.mubr.f32.mxu0 0.0
        %1710 = vmatmul.mubr.f32.gmra.mxu0 %v1479
        %v1711 = vpop.f32.mrf.mxu0
        %v1712 = vadd.f32 %v1356, %v1711
        %v1713 = vpop.f32.mrf.mxu0
        %1714 = vmatprep.mubr.f32.mxu0 0.0
        %1715 = vmatmul.mubr.f32.gmra.mxu0 %v1482
        %v1716 = vpop.f32.mrf.mxu0
        %v1717 = vadd.f32 %v1361, %v1716
        %v1718 = vpop.f32.mrf.mxu0
        %1719 = vmatprep.mubr.f32.mxu0 0.0
        %1720 = vmatmul.mubr.f32.gmra.mxu0 %v1485
        %v1721 = vpop.f32.mrf.mxu0
        %v1722 = vadd.f32 %v1366, %v1721
        %v1723 = vpop.f32.mrf.mxu0
        %1724 = vmatprep.mubr.f32.mxu0 0.0
        %1725 = vmatmul.mubr.f32.gmra.mxu0 %v1488
        %v1726 = vpop.f32.mrf.mxu0
        %v1727 = vadd.f32 %v1371, %v1726
        %v1728 = vpop.f32.mrf.mxu0
        %1729 = vmatprep.mubr.f32.mxu0 0.0
        %1730 = vmatmul.mubr.f32.gmra.mxu0 %v1491
        %v1731 = vpop.f32.mrf.mxu0
        %v1732 = vadd.f32 %v1376, %v1731
        %v1733 = vpop.f32.mrf.mxu0
        %1734 = vmatprep.mubr.f32.mxu0 0.0
        %1735 = vmatmul.mubr.f32.gmra.mxu0 %v1494
        %v1736 = vpop.f32.mrf.mxu0
        %v1737 = vadd.f32 %v1381, %v1736
        %v1738 = vpop.f32.mrf.mxu0
        %1739 = vmatprep.mubr.f32.mxu0 0.0
        %1740 = vmatmul.mubr.f32.gmra.mxu0 %v1497
        %v1741 = vpop.f32.mrf.mxu0
        %v1742 = vadd.f32 %v1386, %v1741
        %v1743 = vpop.f32.mrf.mxu0
        %1744 = vmatprep.mubr.f32.mxu0 0.0
        %1745 = vmatmul.mubr.f32.gmra.mxu0 %v1500
        %v1746 = vpop.f32.mrf.mxu0
        %v1747 = vadd.f32 %v1391, %v1746
        %v1748 = vpop.f32.mrf.mxu0
        %1749 = vdwg.mxu0
        %v1750 = vld [vmem:[%s299 + $0x2] sm:$0xff]
        %v1751 = vld [vmem:[%s299 + $0xa] sm:$0xff]
        %v1752 = vld [vmem:[%s299 + $0x12] sm:$0xff]
        %v1753 = vld [vmem:[%s299 + $0x1a] sm:$0xff]
        %v1754 = vld [vmem:[%s299 + $0x22] sm:$0xff]
        %v1755 = vld [vmem:[%s299 + $0x2a] sm:$0xff]
        %v1756 = vld [vmem:[%s299 + $0x32] sm:$0xff]
        %v1757 = vld [vmem:[%s299 + $0x3a] sm:$0xff]
        %v1758 = vld [vmem:[%s299 + $0x42] sm:$0xff]
        %v1759 = vld [vmem:[%s299 + $0x4a] sm:$0xff]
        %v1760 = vld [vmem:[%s299 + $0x52] sm:$0xff]
        %v1761 = vld [vmem:[%s299 + $0x5a] sm:$0xff]
        %v1762 = vld [vmem:[%s299 + $0x62] sm:$0xff]
        %v1763 = vld [vmem:[%s299 + $0x6a] sm:$0xff]
        %v1764 = vld [vmem:[%s299 + $0x72] sm:$0xff]
        %v1765 = vld [vmem:[%s299 + $0x7a] sm:$0xff]
        %v1766 = vld [vmem:[%s299 + $0x82] sm:$0xff]
        %v1767 = vld [vmem:[%s299 + $0x8a] sm:$0xff]
        %v1768 = vld [vmem:[%s299 + $0x92] sm:$0xff]
        %v1769 = vld [vmem:[%s299 + $0x9a] sm:$0xff]
        %v1770 = vld [vmem:[%s299 + $0xa2] sm:$0xff]
        %v1771 = vld [vmem:[%s299 + $0xaa] sm:$0xff]
        %v1772 = vld [vmem:[%s299 + $0xb2] sm:$0xff]
        %v1773 = vld [vmem:[%s299 + $0xba] sm:$0xff]
        %v1774 = vld [vmem:[%s299 + $0xc2] sm:$0xff]
        %v1775 = vld [vmem:[%s299 + $0xca] sm:$0xff]
        %v1776 = vld [vmem:[%s299 + $0xd2] sm:$0xff]
        %v1777 = vld [vmem:[%s299 + $0xda] sm:$0xff]
        %v1778 = vld [vmem:[%s299 + $0xe2] sm:$0xff]
        %v1779 = vld [vmem:[%s299 + $0xea] sm:$0xff]
        %v1780 = vld [vmem:[%s299 + $0xf2] sm:$0xff]
        %v1781 = vld [vmem:[%s299 + $0xfa] sm:$0xff]
        %v1782 = vld [vmem:[%s299 + $0x102] sm:$0xff]
        %v1783 = vld [vmem:[%s299 + $0x10a] sm:$0xff]
        %v1784 = vld [vmem:[%s299 + $0x112] sm:$0xff]
        %v1785 = vld [vmem:[%s299 + $0x11a] sm:$0xff]
        %v1787 = vsel %vm1036, %v1750, 0
        %v1790 = vsel %vm1036, %v1751, 0
        %v1793 = vsel %vm1036, %v1752, 0
        %v1796 = vsel %vm1036, %v1753, 0
        %v1799 = vsel %vm1036, %v1754, 0
        %v1802 = vsel %vm1036, %v1755, 0
        %v1805 = vsel %vm1036, %v1756, 0
        %v1808 = vsel %vm1036, %v1757, 0
        %v1811 = vsel %vm1036, %v1758, 0
        %v1814 = vsel %vm1036, %v1759, 0
        %v1817 = vsel %vm1036, %v1760, 0
        %v1820 = vsel %vm1036, %v1761, 0
        %v1823 = vsel %vm1036, %v1762, 0
        %v1826 = vsel %vm1036, %v1763, 0
        %v1829 = vsel %vm1036, %v1764, 0
        %v1832 = vsel %vm1036, %v1765, 0
        %v1835 = vsel %vm1036, %v1766, 0
        %v1838 = vsel %vm1036, %v1767, 0
        %v1841 = vsel %vm1036, %v1768, 0
        %v1844 = vsel %vm1036, %v1769, 0
        %v1847 = vsel %vm1036, %v1770, 0
        %v1850 = vsel %vm1036, %v1771, 0
        %v1853 = vsel %vm1036, %v1772, 0
        %v1856 = vsel %vm1036, %v1773, 0
        %v1859 = vsel %vm1036, %v1774, 0
        %v1862 = vsel %vm1036, %v1775, 0
        %v1865 = vsel %vm1036, %v1776, 0
        %v1868 = vsel %vm1036, %v1777, 0
        %v1871 = vsel %vm1036, %v1778, 0
        %v1874 = vsel %vm1036, %v1779, 0
        %v1877 = vsel %vm1036, %v1780, 0
        %v1880 = vsel %vm1036, %v1781, 0
        %v1883 = vsel %vm1036, %v1782, 0
        %v1886 = vsel %vm1036, %v1783, 0
        %v1889 = vsel %vm1036, %v1784, 0
        %v1892 = vsel %vm1036, %v1785, 0
        %v1895 = vsel %vm1145, %v956, 0
        %1897 = vmatprep.subr.mxu0 0.0
        %1898 = vmatpush1.msra.mxu0 0.0
        %1899 = vmatprep.subr.mxu0 0.0
        %1900 = vmatpush1.msra.mxu0 0.0
        %1901 = vmatprep.subr.mxu0 0.0
        %1902 = vmatpush1.msra.mxu0 0.0
        %1903 = vmatprep.subr.mxu0 0.0
        %1904 = vmatpush1.msra.mxu0 0.0
        %1905 = vmatprep.subr.mxu0 0.0
        %1906 = vmatpush1.msra.mxu0 0.0
        %1907 = vmatprep.subr.mxu0 0.0
        %1908 = vmatpush1.msra.mxu0 0.0
        %1909 = vmatprep.subr.mxu0 0.0
        %1910 = vmatpush1.msra.mxu0 0.0
        %1911 = vmatprep.subr.mxu0 0.0
        %1912 = vmatpush1.msra.mxu0 0.0
        %1913 = vmatprep.subr.mxu0 0.0
        %1914 = vmatpush1.msra.mxu0 0.0
        %1915 = vmatprep.subr.mxu0 0.0
        %1916 = vmatpush1.msra.mxu0 0.0
        %1917 = vmatprep.subr.mxu0 0.0
        %1918 = vmatpush1.msra.mxu0 0.0
        %1919 = vmatprep.subr.mxu0 0.0
        %1920 = vmatpush1.msra.mxu0 0.0
        %1921 = vmatprep.subr.mxu0 0.0
        %1922 = vmatpush1.msra.mxu0 0.0
        %1923 = vmatprep.subr.mxu0 0.0
        %1924 = vmatpush1.msra.mxu0 0.0
        %1925 = vmatprep.subr.mxu0 0.0
        %1926 = vmatpush1.msra.mxu0 0.0
        %1927 = vmatprep.subr.mxu0 0.0
        %1928 = vmatpush1.msra.mxu0 %v1895
        %1929 = vmatprep.subr.mxu0 0.0
        %1930 = vmatpush2.msra.mxu0 0.0
        %1931 = vmatprep.subr.mxu0 0.0
        %1932 = vmatpush2.msra.mxu0 0.0
        %1933 = vmatprep.subr.mxu0 0.0
        %1934 = vmatpush2.msra.mxu0 0.0
        %1935 = vmatprep.subr.mxu0 0.0
        %1936 = vmatpush2.msra.mxu0 0.0
        %1937 = vmatprep.subr.mxu0 0.0
        %1938 = vmatpush2.msra.mxu0 0.0
        %1939 = vmatprep.subr.mxu0 0.0
        %1940 = vmatpush2.msra.mxu0 0.0
        %1941 = vmatprep.subr.mxu0 0.0
        %1942 = vmatpush2.msra.mxu0 0.0
        %1943 = vmatprep.subr.mxu0 0.0
        %1944 = vmatpush2.msra.mxu0 0.0
        %1945 = vmatprep.subr.mxu0 0.0
        %1946 = vmatpush2.msra.mxu0 0.0
        %1947 = vmatprep.subr.mxu0 0.0
        %1948 = vmatpush2.msra.mxu0 0.0
        %1949 = vmatprep.subr.mxu0 0.0
        %1950 = vmatpush2.msra.mxu0 0.0
        %1951 = vmatprep.subr.mxu0 0.0
        %1952 = vmatpush2.msra.mxu0 0.0
        %1953 = vmatprep.subr.mxu0 0.0
        %1954 = vmatpush2.msra.mxu0 0.0
        %1955 = vmatprep.subr.mxu0 0.0
        %1956 = vmatpush2.msra.mxu0 0.0
        %1957 = vmatprep.subr.mxu0 0.0
        %1958 = vmatpush2.msra.mxu0 0.0
        %1959 = vmatprep.subr.mxu0 0.0
        %1960 = vmatpush2.msra.mxu0 0.0
        %1961 = vmatprep.mubr.f32.mxu0 0.0
        %1962 = vmatmul.mubr.f32.gmra.mxu0 %v1787
        %v1963 = vpop.f32.mrf.mxu0
        %v1964 = vadd.f32 0.0, %v1963
        %v1965 = vpop.f32.mrf.mxu0
        %1966 = vmatprep.mubr.f32.mxu0 0.0
        %1967 = vmatmul.mubr.f32.gmra.mxu0 %v1790
        %v1968 = vpop.f32.mrf.mxu0
        %v1969 = vadd.f32 0.0, %v1968
        %v1970 = vpop.f32.mrf.mxu0
        %1971 = vmatprep.mubr.f32.mxu0 0.0
        %1972 = vmatmul.mubr.f32.gmra.mxu0 %v1793
        %v1973 = vpop.f32.mrf.mxu0
        %v1974 = vadd.f32 0.0, %v1973
        %v1975 = vpop.f32.mrf.mxu0
        %1976 = vmatprep.mubr.f32.mxu0 0.0
        %1977 = vmatmul.mubr.f32.gmra.mxu0 %v1796
        %v1978 = vpop.f32.mrf.mxu0
        %v1979 = vadd.f32 0.0, %v1978
        %v1980 = vpop.f32.mrf.mxu0
        %1981 = vmatprep.mubr.f32.mxu0 0.0
        %1982 = vmatmul.mubr.f32.gmra.mxu0 %v1799
        %v1983 = vpop.f32.mrf.mxu0
        %v1984 = vadd.f32 0.0, %v1983
        %v1985 = vpop.f32.mrf.mxu0
        %1986 = vmatprep.mubr.f32.mxu0 0.0
        %1987 = vmatmul.mubr.f32.gmra.mxu0 %v1802
        %v1988 = vpop.f32.mrf.mxu0
        %v1989 = vadd.f32 0.0, %v1988
        %v1990 = vpop.f32.mrf.mxu0
        %1991 = vmatprep.mubr.f32.mxu0 0.0
        %1992 = vmatmul.mubr.f32.gmra.mxu0 %v1805
        %v1993 = vpop.f32.mrf.mxu0
        %v1994 = vadd.f32 0.0, %v1993
        %v1995 = vpop.f32.mrf.mxu0
        %1996 = vmatprep.mubr.f32.mxu0 0.0
        %1997 = vmatmul.mubr.f32.gmra.mxu0 %v1808
        %v1998 = vpop.f32.mrf.mxu0
        %v1999 = vadd.f32 0.0, %v1998
        %v2000 = vpop.f32.mrf.mxu0
        %2001 = vmatprep.mubr.f32.mxu0 0.0
        %2002 = vmatmul.mubr.f32.gmra.mxu0 %v1811
        %v2003 = vpop.f32.mrf.mxu0
        %v2004 = vadd.f32 0.0, %v2003
        %v2005 = vpop.f32.mrf.mxu0
        %2006 = vmatprep.mubr.f32.mxu0 0.0
        %2007 = vmatmul.mubr.f32.gmra.mxu0 %v1814
        %v2008 = vpop.f32.mrf.mxu0
        %v2009 = vadd.f32 0.0, %v2008
        %v2010 = vpop.f32.mrf.mxu0
        %2011 = vmatprep.mubr.f32.mxu0 0.0
        %2012 = vmatmul.mubr.f32.gmra.mxu0 %v1817
        %v2013 = vpop.f32.mrf.mxu0
        %v2014 = vadd.f32 0.0, %v2013
        %v2015 = vpop.f32.mrf.mxu0
        %2016 = vmatprep.mubr.f32.mxu0 0.0
        %2017 = vmatmul.mubr.f32.gmra.mxu0 %v1820
        %v2018 = vpop.f32.mrf.mxu0
        %v2019 = vadd.f32 0.0, %v2018
        %v2020 = vpop.f32.mrf.mxu0
        %2021 = vmatprep.mubr.f32.mxu0 0.0
        %2022 = vmatmul.mubr.f32.gmra.mxu0 %v1823
        %v2023 = vpop.f32.mrf.mxu0
        %v2024 = vadd.f32 0.0, %v2023
        %v2025 = vpop.f32.mrf.mxu0
        %2026 = vmatprep.mubr.f32.mxu0 0.0
        %2027 = vmatmul.mubr.f32.gmra.mxu0 %v1826
        %v2028 = vpop.f32.mrf.mxu0
        %v2029 = vadd.f32 0.0, %v2028
        %v2030 = vpop.f32.mrf.mxu0
        %2031 = vmatprep.mubr.f32.mxu0 0.0
        %2032 = vmatmul.mubr.f32.gmra.mxu0 %v1829
        %v2033 = vpop.f32.mrf.mxu0
        %v2034 = vadd.f32 0.0, %v2033
        %v2035 = vpop.f32.mrf.mxu0
        %2036 = vmatprep.mubr.f32.mxu0 0.0
        %2037 = vmatmul.mubr.f32.gmra.mxu0 %v1832
        %v2038 = vpop.f32.mrf.mxu0
        %v2039 = vadd.f32 0.0, %v2038
        %v2040 = vpop.f32.mrf.mxu0
        %2041 = vmatprep.mubr.f32.mxu0 0.0
        %2042 = vmatmul.mubr.f32.gmra.mxu0 %v1835
        %v2043 = vpop.f32.mrf.mxu0
        %v2044 = vadd.f32 0.0, %v2043
        %v2045 = vpop.f32.mrf.mxu0
        %2046 = vmatprep.mubr.f32.mxu0 0.0
        %2047 = vmatmul.mubr.f32.gmra.mxu0 %v1838
        %v2048 = vpop.f32.mrf.mxu0
        %v2049 = vadd.f32 0.0, %v2048
        %v2050 = vpop.f32.mrf.mxu0
        %2051 = vmatprep.mubr.f32.mxu0 0.0
        %2052 = vmatmul.mubr.f32.gmra.mxu0 %v1841
        %v2053 = vpop.f32.mrf.mxu0
        %v2054 = vadd.f32 0.0, %v2053
        %v2055 = vpop.f32.mrf.mxu0
        %2056 = vmatprep.mubr.f32.mxu0 0.0
        %2057 = vmatmul.mubr.f32.gmra.mxu0 %v1844
        %v2058 = vpop.f32.mrf.mxu0
        %v2059 = vadd.f32 0.0, %v2058
        %v2060 = vpop.f32.mrf.mxu0
        %2061 = vmatprep.mubr.f32.mxu0 0.0
        %2062 = vmatmul.mubr.f32.gmra.mxu0 %v1847
        %v2063 = vpop.f32.mrf.mxu0
        %v2064 = vadd.f32 0.0, %v2063
        %v2065 = vpop.f32.mrf.mxu0
        %2066 = vmatprep.mubr.f32.mxu0 0.0
        %2067 = vmatmul.mubr.f32.gmra.mxu0 %v1850
        %v2068 = vpop.f32.mrf.mxu0
        %v2069 = vadd.f32 0.0, %v2068
        %v2070 = vpop.f32.mrf.mxu0
        %2071 = vmatprep.mubr.f32.mxu0 0.0
        %2072 = vmatmul.mubr.f32.gmra.mxu0 %v1853
        %v2073 = vpop.f32.mrf.mxu0
        %v2074 = vadd.f32 0.0, %v2073
        %v2075 = vpop.f32.mrf.mxu0
        %2076 = vmatprep.mubr.f32.mxu0 0.0
        %2077 = vmatmul.mubr.f32.gmra.mxu0 %v1856
        %v2078 = vpop.f32.mrf.mxu0
        %v2079 = vadd.f32 0.0, %v2078
        %v2080 = vpop.f32.mrf.mxu0
        %2081 = vmatprep.mubr.f32.mxu0 0.0
        %2082 = vmatmul.mubr.f32.gmra.mxu0 %v1859
        %v2083 = vpop.f32.mrf.mxu0
        %v2084 = vadd.f32 0.0, %v2083
        %v2085 = vpop.f32.mrf.mxu0
        %2086 = vmatprep.mubr.f32.mxu0 0.0
        %2087 = vmatmul.mubr.f32.gmra.mxu0 %v1862
        %v2088 = vpop.f32.mrf.mxu0
        %v2089 = vadd.f32 0.0, %v2088
        %v2090 = vpop.f32.mrf.mxu0
        %2091 = vmatprep.mubr.f32.mxu0 0.0
        %2092 = vmatmul.mubr.f32.gmra.mxu0 %v1865
        %v2093 = vpop.f32.mrf.mxu0
        %v2094 = vadd.f32 0.0, %v2093
        %v2095 = vpop.f32.mrf.mxu0
        %2096 = vmatprep.mubr.f32.mxu0 0.0
        %2097 = vmatmul.mubr.f32.gmra.mxu0 %v1868
        %v2098 = vpop.f32.mrf.mxu0
        %v2099 = vadd.f32 0.0, %v2098
        %v2100 = vpop.f32.mrf.mxu0
        %2101 = vmatprep.mubr.f32.mxu0 0.0
        %2102 = vmatmul.mubr.f32.gmra.mxu0 %v1871
        %v2103 = vpop.f32.mrf.mxu0
        %v2104 = vadd.f32 0.0, %v2103
        %v2105 = vpop.f32.mrf.mxu0
        %2106 = vmatprep.mubr.f32.mxu0 0.0
        %2107 = vmatmul.mubr.f32.gmra.mxu0 %v1874
        %v2108 = vpop.f32.mrf.mxu0
        %v2109 = vadd.f32 0.0, %v2108
        %v2110 = vpop.f32.mrf.mxu0
        %2111 = vmatprep.mubr.f32.mxu0 0.0
        %2112 = vmatmul.mubr.f32.gmra.mxu0 %v1877
        %v2113 = vpop.f32.mrf.mxu0
        %v2114 = vadd.f32 0.0, %v2113
        %v2115 = vpop.f32.mrf.mxu0
        %2116 = vmatprep.mubr.f32.mxu0 0.0
        %2117 = vmatmul.mubr.f32.gmra.mxu0 %v1880
        %v2118 = vpop.f32.mrf.mxu0
        %v2119 = vadd.f32 0.0, %v2118
        %v2120 = vpop.f32.mrf.mxu0
        %2121 = vmatprep.mubr.f32.mxu0 0.0
        %2122 = vmatmul.mubr.f32.gmra.mxu0 %v1883
        %v2123 = vpop.f32.mrf.mxu0
        %v2124 = vadd.f32 0.0, %v2123
        %v2125 = vpop.f32.mrf.mxu0
        %2126 = vmatprep.mubr.f32.mxu0 0.0
        %2127 = vmatmul.mubr.f32.gmra.mxu0 %v1886
        %v2128 = vpop.f32.mrf.mxu0
        %v2129 = vadd.f32 0.0, %v2128
        %v2130 = vpop.f32.mrf.mxu0
        %2131 = vmatprep.mubr.f32.mxu0 0.0
        %2132 = vmatmul.mubr.f32.gmra.mxu0 %v1889
        %v2133 = vpop.f32.mrf.mxu0
        %v2134 = vadd.f32 0.0, %v2133
        %v2135 = vpop.f32.mrf.mxu0
        %2136 = vmatprep.mubr.f32.mxu0 0.0
        %2137 = vmatmul.mubr.f32.gmra.mxu0 %v1892
        %v2138 = vpop.f32.mrf.mxu0
        %v2139 = vadd.f32 0.0, %v2138
        %v2140 = vpop.f32.mrf.mxu0
        %2141 = vdwg.mxu0
        %v2142 = vadd.f32 %v1572, %v1964
        %v2143 = vadd.f32 %v1577, %v1969
        %v2144 = vadd.f32 %v1582, %v1974
        %v2145 = vadd.f32 %v1587, %v1979
        %v2146 = vadd.f32 %v1592, %v1984
        %v2147 = vadd.f32 %v1597, %v1989
        %v2148 = vadd.f32 %v1602, %v1994
        %v2149 = vadd.f32 %v1607, %v1999
        %v2150 = vadd.f32 %v1612, %v2004
        %v2151 = vadd.f32 %v1617, %v2009
        %v2152 = vadd.f32 %v1622, %v2014
        %v2153 = vadd.f32 %v1627, %v2019
        %v2154 = vadd.f32 %v1632, %v2024
        %v2155 = vadd.f32 %v1637, %v2029
        %v2156 = vadd.f32 %v1642, %v2034
        %v2157 = vadd.f32 %v1647, %v2039
        %v2158 = vadd.f32 %v1652, %v2044
        %v2159 = vadd.f32 %v1657, %v2049
        %v2160 = vadd.f32 %v1662, %v2054
        %v2161 = vadd.f32 %v1667, %v2059
        %v2162 = vadd.f32 %v1672, %v2064
        %v2163 = vadd.f32 %v1677, %v2069
        %v2164 = vadd.f32 %v1682, %v2074
        %v2165 = vadd.f32 %v1687, %v2079
        %v2166 = vadd.f32 %v1692, %v2084
        %v2167 = vadd.f32 %v1697, %v2089
        %v2168 = vadd.f32 %v1702, %v2094
        %v2169 = vadd.f32 %v1707, %v2099
        %v2170 = vadd.f32 %v1712, %v2104
        %v2171 = vadd.f32 %v1717, %v2109
        %v2172 = vadd.f32 %v1722, %v2114
        %v2173 = vadd.f32 %v1727, %v2119
        %v2174 = vadd.f32 %v1732, %v2124
        %v2175 = vadd.f32 %v1737, %v2129
        %v2176 = vadd.f32 %v1742, %v2134
        %v2177 = vadd.f32 %v1747, %v2139
        %v2178 = vld [vmem:[%s299 + $0x12] sm:$0xff]
        %v2179 = vld [vmem:[%s299 + $0x1a] sm:$0xff]
        %v2180 = vld [vmem:[%s299 + $0x22] sm:$0xff]
        %v2181 = vld [vmem:[%s299 + $0x2a] sm:$0xff]
        %v2182 = vld [vmem:[%s299 + $0x32] sm:$0xff]
        %v2183 = vld [vmem:[%s299 + $0x3a] sm:$0xff]
        %v2184 = vld [vmem:[%s299 + $0x42] sm:$0xff]
        %v2185 = vld [vmem:[%s299 + $0x4a] sm:$0xff]
        %v2186 = vld [vmem:[%s299 + $0x52] sm:$0xff]
        %v2187 = vld [vmem:[%s299 + $0x5a] sm:$0xff]
        %v2188 = vld [vmem:[%s299 + $0x62] sm:$0xff]
        %v2189 = vld [vmem:[%s299 + $0x6a] sm:$0xff]
        %v2190 = vld [vmem:[%s299 + $0x72] sm:$0xff]
        %v2191 = vld [vmem:[%s299 + $0x7a] sm:$0xff]
        %v2192 = vld [vmem:[%s299 + $0x82] sm:$0xff]
        %v2193 = vld [vmem:[%s299 + $0x8a] sm:$0xff]
        %v2194 = vld [vmem:[%s299 + $0x92] sm:$0xff]
        %v2195 = vld [vmem:[%s299 + $0x9a] sm:$0xff]
        %v2196 = vld [vmem:[%s299 + $0xa2] sm:$0xff]
        %v2197 = vld [vmem:[%s299 + $0xaa] sm:$0xff]
        %v2198 = vld [vmem:[%s299 + $0xb2] sm:$0xff]
        %v2199 = vld [vmem:[%s299 + $0xba] sm:$0xff]
        %v2200 = vld [vmem:[%s299 + $0xc2] sm:$0xff]
        %v2201 = vld [vmem:[%s299 + $0xca] sm:$0xff]
        %v2202 = vld [vmem:[%s299 + $0xd2] sm:$0xff]
        %v2203 = vld [vmem:[%s299 + $0xda] sm:$0xff]
        %v2204 = vld [vmem:[%s299 + $0xe2] sm:$0xff]
        %v2205 = vld [vmem:[%s299 + $0xea] sm:$0xff]
        %v2206 = vld [vmem:[%s299 + $0xf2] sm:$0xff]
        %v2207 = vld [vmem:[%s299 + $0xfa] sm:$0xff]
        %v2208 = vld [vmem:[%s299 + $0x102] sm:$0xff]
        %v2209 = vld [vmem:[%s299 + $0x10a] sm:$0xff]
        %v2210 = vld [vmem:[%s299 + $0x112] sm:$0xff]
        %v2211 = vld [vmem:[%s299 + $0x11a] sm:$0xff]
        %v2212 = vld [vmem:[%s299 + $0x122] sm:$0xff]
        %v2213 = vld [vmem:[%s299 + $0x12a] sm:$0xff]
        %v2215 = vsel %vm1036, %v2178, 0
        %v2218 = vsel %vm1036, %v2179, 0
        %v2221 = vsel %vm1036, %v2180, 0
        %v2224 = vsel %vm1036, %v2181, 0
        %v2227 = vsel %vm1036, %v2182, 0
        %v2230 = vsel %vm1036, %v2183, 0
        %v2233 = vsel %vm1036, %v2184, 0
        %v2236 = vsel %vm1036, %v2185, 0
        %v2239 = vsel %vm1036, %v2186, 0
        %v2242 = vsel %vm1036, %v2187, 0
        %v2245 = vsel %vm1036, %v2188, 0
        %v2248 = vsel %vm1036, %v2189, 0
        %v2251 = vsel %vm1036, %v2190, 0
        %v2254 = vsel %vm1036, %v2191, 0
        %v2257 = vsel %vm1036, %v2192, 0
        %v2260 = vsel %vm1036, %v2193, 0
        %v2263 = vsel %vm1036, %v2194, 0
        %v2266 = vsel %vm1036, %v2195, 0
        %v2269 = vsel %vm1036, %v2196, 0
        %v2272 = vsel %vm1036, %v2197, 0
        %v2275 = vsel %vm1036, %v2198, 0
        %v2278 = vsel %vm1036, %v2199, 0
        %v2281 = vsel %vm1036, %v2200, 0
        %v2284 = vsel %vm1036, %v2201, 0
        %v2287 = vsel %vm1036, %v2202, 0
        %v2290 = vsel %vm1036, %v2203, 0
        %v2293 = vsel %vm1036, %v2204, 0
        %v2296 = vsel %vm1036, %v2205, 0
        %v2299 = vsel %vm1036, %v2206, 0
        %v2302 = vsel %vm1036, %v2207, 0
        %v2305 = vsel %vm1036, %v2208, 0
        %v2308 = vsel %vm1036, %v2209, 0
        %v2311 = vsel %vm1036, %v2210, 0
        %v2314 = vsel %vm1036, %v2211, 0
        %v2317 = vsel %vm1036, %v2212, 0
        %v2320 = vsel %vm1036, %v2213, 0
        %v2323 = vsel %vm1145, %v957, 0
        %2325 = vmatprep.subr.mxu0 0.0
        %2326 = vmatpush1.msra.mxu0 0.0
        %2327 = vmatprep.subr.mxu0 0.0
        %2328 = vmatpush1.msra.mxu0 0.0
        %2329 = vmatprep.subr.mxu0 0.0
        %2330 = vmatpush1.msra.mxu0 0.0
        %2331 = vmatprep.subr.mxu0 0.0
        %2332 = vmatpush1.msra.mxu0 0.0
        %2333 = vmatprep.subr.mxu0 0.0
        %2334 = vmatpush1.msra.mxu0 0.0
        %2335 = vmatprep.subr.mxu0 0.0
        %2336 = vmatpush1.msra.mxu0 0.0
        %2337 = vmatprep.subr.mxu0 0.0
        %2338 = vmatpush1.msra.mxu0 0.0
        %2339 = vmatprep.subr.mxu0 0.0
        %2340 = vmatpush1.msra.mxu0 0.0
        %2341 = vmatprep.subr.mxu0 0.0
        %2342 = vmatpush1.msra.mxu0 0.0
        %2343 = vmatprep.subr.mxu0 0.0
        %2344 = vmatpush1.msra.mxu0 0.0
        %2345 = vmatprep.subr.mxu0 0.0
        %2346 = vmatpush1.msra.mxu0 0.0
        %2347 = vmatprep.subr.mxu0 0.0
        %2348 = vmatpush1.msra.mxu0 0.0
        %2349 = vmatprep.subr.mxu0 0.0
        %2350 = vmatpush1.msra.mxu0 0.0
        %2351 = vmatprep.subr.mxu0 0.0
        %2352 = vmatpush1.msra.mxu0 0.0
        %2353 = vmatprep.subr.mxu0 0.0
        %2354 = vmatpush1.msra.mxu0 0.0
        %2355 = vmatprep.subr.mxu0 0.0
        %2356 = vmatpush1.msra.mxu0 %v2323
        %2357 = vmatprep.subr.mxu0 0.0
        %2358 = vmatpush2.msra.mxu0 0.0
        %2359 = vmatprep.subr.mxu0 0.0
        %2360 = vmatpush2.msra.mxu0 0.0
        %2361 = vmatprep.subr.mxu0 0.0
        %2362 = vmatpush2.msra.mxu0 0.0
        %2363 = vmatprep.subr.mxu0 0.0
        %2364 = vmatpush2.msra.mxu0 0.0
        %2365 = vmatprep.subr.mxu0 0.0
        %2366 = vmatpush2.msra.mxu0 0.0
        %2367 = vmatprep.subr.mxu0 0.0
        %2368 = vmatpush2.msra.mxu0 0.0
        %2369 = vmatprep.subr.mxu0 0.0
        %2370 = vmatpush2.msra.mxu0 0.0
        %2371 = vmatprep.subr.mxu0 0.0
        %2372 = vmatpush2.msra.mxu0 0.0
        %2373 = vmatprep.subr.mxu0 0.0
        %2374 = vmatpush2.msra.mxu0 0.0
        %2375 = vmatprep.subr.mxu0 0.0
        %2376 = vmatpush2.msra.mxu0 0.0
        %2377 = vmatprep.subr.mxu0 0.0
        %2378 = vmatpush2.msra.mxu0 0.0
        %2379 = vmatprep.subr.mxu0 0.0
        %2380 = vmatpush2.msra.mxu0 0.0
        %2381 = vmatprep.subr.mxu0 0.0
        %2382 = vmatpush2.msra.mxu0 0.0
        %2383 = vmatprep.subr.mxu0 0.0
        %2384 = vmatpush2.msra.mxu0 0.0
        %2385 = vmatprep.subr.mxu0 0.0
        %2386 = vmatpush2.msra.mxu0 0.0
        %2387 = vmatprep.subr.mxu0 0.0
        %2388 = vmatpush2.msra.mxu0 0.0
        %2389 = vmatprep.mubr.f32.mxu0 0.0
        %2390 = vmatmul.mubr.f32.gmra.mxu0 %v2215
        %v2391 = vpop.f32.mrf.mxu0
        %v2392 = vadd.f32 0.0, %v2391
        %v2393 = vpop.f32.mrf.mxu0
        %2394 = vmatprep.mubr.f32.mxu0 0.0
        %2395 = vmatmul.mubr.f32.gmra.mxu0 %v2218
        %v2396 = vpop.f32.mrf.mxu0
        %v2397 = vadd.f32 0.0, %v2396
        %v2398 = vpop.f32.mrf.mxu0
        %2399 = vmatprep.mubr.f32.mxu0 0.0
        %2400 = vmatmul.mubr.f32.gmra.mxu0 %v2221
        %v2401 = vpop.f32.mrf.mxu0
        %v2402 = vadd.f32 0.0, %v2401
        %v2403 = vpop.f32.mrf.mxu0
        %2404 = vmatprep.mubr.f32.mxu0 0.0
        %2405 = vmatmul.mubr.f32.gmra.mxu0 %v2224
        %v2406 = vpop.f32.mrf.mxu0
        %v2407 = vadd.f32 0.0, %v2406
        %v2408 = vpop.f32.mrf.mxu0
        %2409 = vmatprep.mubr.f32.mxu0 0.0
        %2410 = vmatmul.mubr.f32.gmra.mxu0 %v2227
        %v2411 = vpop.f32.mrf.mxu0
        %v2412 = vadd.f32 0.0, %v2411
        %v2413 = vpop.f32.mrf.mxu0
        %2414 = vmatprep.mubr.f32.mxu0 0.0
        %2415 = vmatmul.mubr.f32.gmra.mxu0 %v2230
        %v2416 = vpop.f32.mrf.mxu0
        %v2417 = vadd.f32 0.0, %v2416
        %v2418 = vpop.f32.mrf.mxu0
        %2419 = vmatprep.mubr.f32.mxu0 0.0
        %2420 = vmatmul.mubr.f32.gmra.mxu0 %v2233
        %v2421 = vpop.f32.mrf.mxu0
        %v2422 = vadd.f32 0.0, %v2421
        %v2423 = vpop.f32.mrf.mxu0
        %2424 = vmatprep.mubr.f32.mxu0 0.0
        %2425 = vmatmul.mubr.f32.gmra.mxu0 %v2236
        %v2426 = vpop.f32.mrf.mxu0
        %v2427 = vadd.f32 0.0, %v2426
        %v2428 = vpop.f32.mrf.mxu0
        %2429 = vmatprep.mubr.f32.mxu0 0.0
        %2430 = vmatmul.mubr.f32.gmra.mxu0 %v2239
        %v2431 = vpop.f32.mrf.mxu0
        %v2432 = vadd.f32 0.0, %v2431
        %v2433 = vpop.f32.mrf.mxu0
        %2434 = vmatprep.mubr.f32.mxu0 0.0
        %2435 = vmatmul.mubr.f32.gmra.mxu0 %v2242
        %v2436 = vpop.f32.mrf.mxu0
        %v2437 = vadd.f32 0.0, %v2436
        %v2438 = vpop.f32.mrf.mxu0
        %2439 = vmatprep.mubr.f32.mxu0 0.0
        %2440 = vmatmul.mubr.f32.gmra.mxu0 %v2245
        %v2441 = vpop.f32.mrf.mxu0
        %v2442 = vadd.f32 0.0, %v2441
        %v2443 = vpop.f32.mrf.mxu0
        %2444 = vmatprep.mubr.f32.mxu0 0.0
        %2445 = vmatmul.mubr.f32.gmra.mxu0 %v2248
        %v2446 = vpop.f32.mrf.mxu0
        %v2447 = vadd.f32 0.0, %v2446
        %v2448 = vpop.f32.mrf.mxu0
        %2449 = vmatprep.mubr.f32.mxu0 0.0
        %2450 = vmatmul.mubr.f32.gmra.mxu0 %v2251
        %v2451 = vpop.f32.mrf.mxu0
        %v2452 = vadd.f32 0.0, %v2451
        %v2453 = vpop.f32.mrf.mxu0
        %2454 = vmatprep.mubr.f32.mxu0 0.0
        %2455 = vmatmul.mubr.f32.gmra.mxu0 %v2254
        %v2456 = vpop.f32.mrf.mxu0
        %v2457 = vadd.f32 0.0, %v2456
        %v2458 = vpop.f32.mrf.mxu0
        %2459 = vmatprep.mubr.f32.mxu0 0.0
        %2460 = vmatmul.mubr.f32.gmra.mxu0 %v2257
        %v2461 = vpop.f32.mrf.mxu0
        %v2462 = vadd.f32 0.0, %v2461
        %v2463 = vpop.f32.mrf.mxu0
        %2464 = vmatprep.mubr.f32.mxu0 0.0
        %2465 = vmatmul.mubr.f32.gmra.mxu0 %v2260
        %v2466 = vpop.f32.mrf.mxu0
        %v2467 = vadd.f32 0.0, %v2466
        %v2468 = vpop.f32.mrf.mxu0
        %2469 = vmatprep.mubr.f32.mxu0 0.0
        %2470 = vmatmul.mubr.f32.gmra.mxu0 %v2263
        %v2471 = vpop.f32.mrf.mxu0
        %v2472 = vadd.f32 0.0, %v2471
        %v2473 = vpop.f32.mrf.mxu0
        %2474 = vmatprep.mubr.f32.mxu0 0.0
        %2475 = vmatmul.mubr.f32.gmra.mxu0 %v2266
        %v2476 = vpop.f32.mrf.mxu0
        %v2477 = vadd.f32 0.0, %v2476
        %v2478 = vpop.f32.mrf.mxu0
        %2479 = vmatprep.mubr.f32.mxu0 0.0
        %2480 = vmatmul.mubr.f32.gmra.mxu0 %v2269
        %v2481 = vpop.f32.mrf.mxu0
        %v2482 = vadd.f32 0.0, %v2481
        %v2483 = vpop.f32.mrf.mxu0
        %2484 = vmatprep.mubr.f32.mxu0 0.0
        %2485 = vmatmul.mubr.f32.gmra.mxu0 %v2272
        %v2486 = vpop.f32.mrf.mxu0
        %v2487 = vadd.f32 0.0, %v2486
        %v2488 = vpop.f32.mrf.mxu0
        %2489 = vmatprep.mubr.f32.mxu0 0.0
        %2490 = vmatmul.mubr.f32.gmra.mxu0 %v2275
        %v2491 = vpop.f32.mrf.mxu0
        %v2492 = vadd.f32 0.0, %v2491
        %v2493 = vpop.f32.mrf.mxu0
        %2494 = vmatprep.mubr.f32.mxu0 0.0
        %2495 = vmatmul.mubr.f32.gmra.mxu0 %v2278
        %v2496 = vpop.f32.mrf.mxu0
        %v2497 = vadd.f32 0.0, %v2496
        %v2498 = vpop.f32.mrf.mxu0
        %2499 = vmatprep.mubr.f32.mxu0 0.0
        %2500 = vmatmul.mubr.f32.gmra.mxu0 %v2281
        %v2501 = vpop.f32.mrf.mxu0
        %v2502 = vadd.f32 0.0, %v2501
        %v2503 = vpop.f32.mrf.mxu0
        %2504 = vmatprep.mubr.f32.mxu0 0.0
        %2505 = vmatmul.mubr.f32.gmra.mxu0 %v2284
        %v2506 = vpop.f32.mrf.mxu0
        %v2507 = vadd.f32 0.0, %v2506
        %v2508 = vpop.f32.mrf.mxu0
        %2509 = vmatprep.mubr.f32.mxu0 0.0
        %2510 = vmatmul.mubr.f32.gmra.mxu0 %v2287
        %v2511 = vpop.f32.mrf.mxu0
        %v2512 = vadd.f32 0.0, %v2511
        %v2513 = vpop.f32.mrf.mxu0
        %2514 = vmatprep.mubr.f32.mxu0 0.0
        %2515 = vmatmul.mubr.f32.gmra.mxu0 %v2290
        %v2516 = vpop.f32.mrf.mxu0
        %v2517 = vadd.f32 0.0, %v2516
        %v2518 = vpop.f32.mrf.mxu0
        %2519 = vmatprep.mubr.f32.mxu0 0.0
        %2520 = vmatmul.mubr.f32.gmra.mxu0 %v2293
        %v2521 = vpop.f32.mrf.mxu0
        %v2522 = vadd.f32 0.0, %v2521
        %v2523 = vpop.f32.mrf.mxu0
        %2524 = vmatprep.mubr.f32.mxu0 0.0
        %2525 = vmatmul.mubr.f32.gmra.mxu0 %v2296
        %v2526 = vpop.f32.mrf.mxu0
        %v2527 = vadd.f32 0.0, %v2526
        %v2528 = vpop.f32.mrf.mxu0
        %2529 = vmatprep.mubr.f32.mxu0 0.0
        %2530 = vmatmul.mubr.f32.gmra.mxu0 %v2299
        %v2531 = vpop.f32.mrf.mxu0
        %v2532 = vadd.f32 0.0, %v2531
        %v2533 = vpop.f32.mrf.mxu0
        %2534 = vmatprep.mubr.f32.mxu0 0.0
        %2535 = vmatmul.mubr.f32.gmra.mxu0 %v2302
        %v2536 = vpop.f32.mrf.mxu0
        %v2537 = vadd.f32 0.0, %v2536
        %v2538 = vpop.f32.mrf.mxu0
        %2539 = vmatprep.mubr.f32.mxu0 0.0
        %2540 = vmatmul.mubr.f32.gmra.mxu0 %v2305
        %v2541 = vpop.f32.mrf.mxu0
        %v2542 = vadd.f32 0.0, %v2541
        %v2543 = vpop.f32.mrf.mxu0
        %2544 = vmatprep.mubr.f32.mxu0 0.0
        %2545 = vmatmul.mubr.f32.gmra.mxu0 %v2308
        %v2546 = vpop.f32.mrf.mxu0
        %v2547 = vadd.f32 0.0, %v2546
        %v2548 = vpop.f32.mrf.mxu0
        %2549 = vmatprep.mubr.f32.mxu0 0.0
        %2550 = vmatmul.mubr.f32.gmra.mxu0 %v2311
        %v2551 = vpop.f32.mrf.mxu0
        %v2552 = vadd.f32 0.0, %v2551
        %v2553 = vpop.f32.mrf.mxu0
        %2554 = vmatprep.mubr.f32.mxu0 0.0
        %2555 = vmatmul.mubr.f32.gmra.mxu0 %v2314
        %v2556 = vpop.f32.mrf.mxu0
        %v2557 = vadd.f32 0.0, %v2556
        %v2558 = vpop.f32.mrf.mxu0
        %2559 = vmatprep.mubr.f32.mxu0 0.0
        %2560 = vmatmul.mubr.f32.gmra.mxu0 %v2317
        %v2561 = vpop.f32.mrf.mxu0
        %v2562 = vadd.f32 0.0, %v2561
        %v2563 = vpop.f32.mrf.mxu0
        %2564 = vmatprep.mubr.f32.mxu0 0.0
        %2565 = vmatmul.mubr.f32.gmra.mxu0 %v2320
        %v2566 = vpop.f32.mrf.mxu0
        %v2567 = vadd.f32 0.0, %v2566
        %v2568 = vpop.f32.mrf.mxu0
        %2569 = vdwg.mxu0
        %v2570 = vadd.f32 %v2142, %v2392
        %v2571 = vadd.f32 %v2143, %v2397
        %v2572 = vadd.f32 %v2144, %v2402
        %v2573 = vadd.f32 %v2145, %v2407
        %v2574 = vadd.f32 %v2146, %v2412
        %v2575 = vadd.f32 %v2147, %v2417
        %v2576 = vadd.f32 %v2148, %v2422
        %v2577 = vadd.f32 %v2149, %v2427
        %v2578 = vadd.f32 %v2150, %v2432
        %v2579 = vadd.f32 %v2151, %v2437
        %v2580 = vadd.f32 %v2152, %v2442
        %v2581 = vadd.f32 %v2153, %v2447
        %v2582 = vadd.f32 %v2154, %v2452
        %v2583 = vadd.f32 %v2155, %v2457
        %v2584 = vadd.f32 %v2156, %v2462
        %v2585 = vadd.f32 %v2157, %v2467
        %v2586 = vadd.f32 %v2158, %v2472
        %v2587 = vadd.f32 %v2159, %v2477
        %v2588 = vadd.f32 %v2160, %v2482
        %v2589 = vadd.f32 %v2161, %v2487
        %v2590 = vadd.f32 %v2162, %v2492
        %v2591 = vadd.f32 %v2163, %v2497
        %v2592 = vadd.f32 %v2164, %v2502
        %v2593 = vadd.f32 %v2165, %v2507
        %v2594 = vadd.f32 %v2166, %v2512
        %v2595 = vadd.f32 %v2167, %v2517
        %v2596 = vadd.f32 %v2168, %v2522
        %v2597 = vadd.f32 %v2169, %v2527
        %v2598 = vadd.f32 %v2170, %v2532
        %v2599 = vadd.f32 %v2171, %v2537
        %v2600 = vadd.f32 %v2172, %v2542
        %v2601 = vadd.f32 %v2173, %v2547
        %v2602 = vadd.f32 %v2174, %v2552
        %v2603 = vadd.f32 %v2175, %v2557
        %v2604 = vadd.f32 %v2176, %v2562
        %v2605 = vadd.f32 %v2177, %v2567
        %v2606 = vld [vmem:[%s299 + $0x13] sm:$0xff]
        %v2607 = vld [vmem:[%s299 + $0x1b] sm:$0xff]
        %v2608 = vld [vmem:[%s299 + $0x23] sm:$0xff]
        %v2609 = vld [vmem:[%s299 + $0x2b] sm:$0xff]
        %v2610 = vld [vmem:[%s299 + $0x33] sm:$0xff]
        %v2611 = vld [vmem:[%s299 + $0x3b] sm:$0xff]
        %v2612 = vld [vmem:[%s299 + $0x43] sm:$0xff]
        %v2613 = vld [vmem:[%s299 + $0x4b] sm:$0xff]
        %v2614 = vld [vmem:[%s299 + $0x53] sm:$0xff]
        %v2615 = vld [vmem:[%s299 + $0x5b] sm:$0xff]
        %v2616 = vld [vmem:[%s299 + $0x63] sm:$0xff]
        %v2617 = vld [vmem:[%s299 + $0x6b] sm:$0xff]
        %v2618 = vld [vmem:[%s299 + $0x73] sm:$0xff]
        %v2619 = vld [vmem:[%s299 + $0x7b] sm:$0xff]
        %v2620 = vld [vmem:[%s299 + $0x83] sm:$0xff]
        %v2621 = vld [vmem:[%s299 + $0x8b] sm:$0xff]
        %v2622 = vld [vmem:[%s299 + $0x93] sm:$0xff]
        %v2623 = vld [vmem:[%s299 + $0x9b] sm:$0xff]
        %v2624 = vld [vmem:[%s299 + $0xa3] sm:$0xff]
        %v2625 = vld [vmem:[%s299 + $0xab] sm:$0xff]
        %v2626 = vld [vmem:[%s299 + $0xb3] sm:$0xff]
        %v2627 = vld [vmem:[%s299 + $0xbb] sm:$0xff]
        %v2628 = vld [vmem:[%s299 + $0xc3] sm:$0xff]
        %v2629 = vld [vmem:[%s299 + $0xcb] sm:$0xff]
        %v2630 = vld [vmem:[%s299 + $0xd3] sm:$0xff]
        %v2631 = vld [vmem:[%s299 + $0xdb] sm:$0xff]
        %v2632 = vld [vmem:[%s299 + $0xe3] sm:$0xff]
        %v2633 = vld [vmem:[%s299 + $0xeb] sm:$0xff]
        %v2634 = vld [vmem:[%s299 + $0xf3] sm:$0xff]
        %v2635 = vld [vmem:[%s299 + $0xfb] sm:$0xff]
        %v2636 = vld [vmem:[%s299 + $0x103] sm:$0xff]
        %v2637 = vld [vmem:[%s299 + $0x10b] sm:$0xff]
        %v2638 = vld [vmem:[%s299 + $0x113] sm:$0xff]
        %v2639 = vld [vmem:[%s299 + $0x11b] sm:$0xff]
        %v2640 = vld [vmem:[%s299 + $0x123] sm:$0xff]
        %v2641 = vld [vmem:[%s299 + $0x12b] sm:$0xff]
        %v2643 = vsel %vm1036, %v2606, 0
        %v2646 = vsel %vm1036, %v2607, 0
        %v2649 = vsel %vm1036, %v2608, 0
        %v2652 = vsel %vm1036, %v2609, 0
        %v2655 = vsel %vm1036, %v2610, 0
        %v2658 = vsel %vm1036, %v2611, 0
        %v2661 = vsel %vm1036, %v2612, 0
        %v2664 = vsel %vm1036, %v2613, 0
        %v2667 = vsel %vm1036, %v2614, 0
        %v2670 = vsel %vm1036, %v2615, 0
        %v2673 = vsel %vm1036, %v2616, 0
        %v2676 = vsel %vm1036, %v2617, 0
        %v2679 = vsel %vm1036, %v2618, 0
        %v2682 = vsel %vm1036, %v2619, 0
        %v2685 = vsel %vm1036, %v2620, 0
        %v2688 = vsel %vm1036, %v2621, 0
        %v2691 = vsel %vm1036, %v2622, 0
        %v2694 = vsel %vm1036, %v2623, 0
        %v2697 = vsel %vm1036, %v2624, 0
        %v2700 = vsel %vm1036, %v2625, 0
        %v2703 = vsel %vm1036, %v2626, 0
        %v2706 = vsel %vm1036, %v2627, 0
        %v2709 = vsel %vm1036, %v2628, 0
        %v2712 = vsel %vm1036, %v2629, 0
        %v2715 = vsel %vm1036, %v2630, 0
        %v2718 = vsel %vm1036, %v2631, 0
        %v2721 = vsel %vm1036, %v2632, 0
        %v2724 = vsel %vm1036, %v2633, 0
        %v2727 = vsel %vm1036, %v2634, 0
        %v2730 = vsel %vm1036, %v2635, 0
        %v2733 = vsel %vm1036, %v2636, 0
        %v2736 = vsel %vm1036, %v2637, 0
        %v2739 = vsel %vm1036, %v2638, 0
        %v2742 = vsel %vm1036, %v2639, 0
        %v2745 = vsel %vm1036, %v2640, 0
        %v2748 = vsel %vm1036, %v2641, 0
        %v2751 = vsel %vm1145, %v958, 0
        %2753 = vmatprep.subr.mxu0 0.0
        %2754 = vmatpush1.msra.mxu0 0.0
        %2755 = vmatprep.subr.mxu0 0.0
        %2756 = vmatpush1.msra.mxu0 0.0
        %2757 = vmatprep.subr.mxu0 0.0
        %2758 = vmatpush1.msra.mxu0 0.0
        %2759 = vmatprep.subr.mxu0 0.0
        %2760 = vmatpush1.msra.mxu0 0.0
        %2761 = vmatprep.subr.mxu0 0.0
        %2762 = vmatpush1.msra.mxu0 0.0
        %2763 = vmatprep.subr.mxu0 0.0
        %2764 = vmatpush1.msra.mxu0 0.0
        %2765 = vmatprep.subr.mxu0 0.0
        %2766 = vmatpush1.msra.mxu0 0.0
        %2767 = vmatprep.subr.mxu0 0.0
        %2768 = vmatpush1.msra.mxu0 0.0
        %2769 = vmatprep.subr.mxu0 0.0
        %2770 = vmatpush1.msra.mxu0 0.0
        %2771 = vmatprep.subr.mxu0 0.0
        %2772 = vmatpush1.msra.mxu0 0.0
        %2773 = vmatprep.subr.mxu0 0.0
        %2774 = vmatpush1.msra.mxu0 0.0
        %2775 = vmatprep.subr.mxu0 0.0
        %2776 = vmatpush1.msra.mxu0 0.0
        %2777 = vmatprep.subr.mxu0 0.0
        %2778 = vmatpush1.msra.mxu0 0.0
        %2779 = vmatprep.subr.mxu0 0.0
        %2780 = vmatpush1.msra.mxu0 0.0
        %2781 = vmatprep.subr.mxu0 0.0
        %2782 = vmatpush1.msra.mxu0 0.0
        %2783 = vmatprep.subr.mxu0 0.0
        %2784 = vmatpush1.msra.mxu0 %v2751
        %2785 = vmatprep.subr.mxu0 0.0
        %2786 = vmatpush2.msra.mxu0 0.0
        %2787 = vmatprep.subr.mxu0 0.0
        %2788 = vmatpush2.msra.mxu0 0.0
        %2789 = vmatprep.subr.mxu0 0.0
        %2790 = vmatpush2.msra.mxu0 0.0
        %2791 = vmatprep.subr.mxu0 0.0
        %2792 = vmatpush2.msra.mxu0 0.0
        %2793 = vmatprep.subr.mxu0 0.0
        %2794 = vmatpush2.msra.mxu0 0.0
        %2795 = vmatprep.subr.mxu0 0.0
        %2796 = vmatpush2.msra.mxu0 0.0
        %2797 = vmatprep.subr.mxu0 0.0
        %2798 = vmatpush2.msra.mxu0 0.0
        %2799 = vmatprep.subr.mxu0 0.0
        %2800 = vmatpush2.msra.mxu0 0.0
        %2801 = vmatprep.subr.mxu0 0.0
        %2802 = vmatpush2.msra.mxu0 0.0
        %2803 = vmatprep.subr.mxu0 0.0
        %2804 = vmatpush2.msra.mxu0 0.0
        %2805 = vmatprep.subr.mxu0 0.0
        %2806 = vmatpush2.msra.mxu0 0.0
        %2807 = vmatprep.subr.mxu0 0.0
        %2808 = vmatpush2.msra.mxu0 0.0
        %2809 = vmatprep.subr.mxu0 0.0
        %2810 = vmatpush2.msra.mxu0 0.0
        %2811 = vmatprep.subr.mxu0 0.0
        %2812 = vmatpush2.msra.mxu0 0.0
        %2813 = vmatprep.subr.mxu0 0.0
        %2814 = vmatpush2.msra.mxu0 0.0
        %2815 = vmatprep.subr.mxu0 0.0
        %2816 = vmatpush2.msra.mxu0 0.0
        %2817 = vmatprep.mubr.f32.mxu0 0.0
        %2818 = vmatmul.mubr.f32.gmra.mxu0 %v2643
        %v2819 = vpop.f32.mrf.mxu0
        %v2820 = vadd.f32 0.0, %v2819
        %v2821 = vpop.f32.mrf.mxu0
        %2822 = vmatprep.mubr.f32.mxu0 0.0
        %2823 = vmatmul.mubr.f32.gmra.mxu0 %v2646
        %v2824 = vpop.f32.mrf.mxu0
        %v2825 = vadd.f32 0.0, %v2824
        %v2826 = vpop.f32.mrf.mxu0
        %2827 = vmatprep.mubr.f32.mxu0 0.0
        %2828 = vmatmul.mubr.f32.gmra.mxu0 %v2649
        %v2829 = vpop.f32.mrf.mxu0
        %v2830 = vadd.f32 0.0, %v2829
        %v2831 = vpop.f32.mrf.mxu0
        %2832 = vmatprep.mubr.f32.mxu0 0.0
        %2833 = vmatmul.mubr.f32.gmra.mxu0 %v2652
        %v2834 = vpop.f32.mrf.mxu0
        %v2835 = vadd.f32 0.0, %v2834
        %v2836 = vpop.f32.mrf.mxu0
        %2837 = vmatprep.mubr.f32.mxu0 0.0
        %2838 = vmatmul.mubr.f32.gmra.mxu0 %v2655
        %v2839 = vpop.f32.mrf.mxu0
        %v2840 = vadd.f32 0.0, %v2839
        %v2841 = vpop.f32.mrf.mxu0
        %2842 = vmatprep.mubr.f32.mxu0 0.0
        %2843 = vmatmul.mubr.f32.gmra.mxu0 %v2658
        %v2844 = vpop.f32.mrf.mxu0
        %v2845 = vadd.f32 0.0, %v2844
        %v2846 = vpop.f32.mrf.mxu0
        %2847 = vmatprep.mubr.f32.mxu0 0.0
        %2848 = vmatmul.mubr.f32.gmra.mxu0 %v2661
        %v2849 = vpop.f32.mrf.mxu0
        %v2850 = vadd.f32 0.0, %v2849
        %v2851 = vpop.f32.mrf.mxu0
        %2852 = vmatprep.mubr.f32.mxu0 0.0
        %2853 = vmatmul.mubr.f32.gmra.mxu0 %v2664
        %v2854 = vpop.f32.mrf.mxu0
        %v2855 = vadd.f32 0.0, %v2854
        %v2856 = vpop.f32.mrf.mxu0
        %2857 = vmatprep.mubr.f32.mxu0 0.0
        %2858 = vmatmul.mubr.f32.gmra.mxu0 %v2667
        %v2859 = vpop.f32.mrf.mxu0
        %v2860 = vadd.f32 0.0, %v2859
        %v2861 = vpop.f32.mrf.mxu0
        %2862 = vmatprep.mubr.f32.mxu0 0.0
        %2863 = vmatmul.mubr.f32.gmra.mxu0 %v2670
        %v2864 = vpop.f32.mrf.mxu0
        %v2865 = vadd.f32 0.0, %v2864
        %v2866 = vpop.f32.mrf.mxu0
        %2867 = vmatprep.mubr.f32.mxu0 0.0
        %2868 = vmatmul.mubr.f32.gmra.mxu0 %v2673
        %v2869 = vpop.f32.mrf.mxu0
        %v2870 = vadd.f32 0.0, %v2869
        %v2871 = vpop.f32.mrf.mxu0
        %2872 = vmatprep.mubr.f32.mxu0 0.0
        %2873 = vmatmul.mubr.f32.gmra.mxu0 %v2676
        %v2874 = vpop.f32.mrf.mxu0
        %v2875 = vadd.f32 0.0, %v2874
        %v2876 = vpop.f32.mrf.mxu0
        %2877 = vmatprep.mubr.f32.mxu0 0.0
        %2878 = vmatmul.mubr.f32.gmra.mxu0 %v2679
        %v2879 = vpop.f32.mrf.mxu0
        %v2880 = vadd.f32 0.0, %v2879
        %v2881 = vpop.f32.mrf.mxu0
        %2882 = vmatprep.mubr.f32.mxu0 0.0
        %2883 = vmatmul.mubr.f32.gmra.mxu0 %v2682
        %v2884 = vpop.f32.mrf.mxu0
        %v2885 = vadd.f32 0.0, %v2884
        %v2886 = vpop.f32.mrf.mxu0
        %2887 = vmatprep.mubr.f32.mxu0 0.0
        %2888 = vmatmul.mubr.f32.gmra.mxu0 %v2685
        %v2889 = vpop.f32.mrf.mxu0
        %v2890 = vadd.f32 0.0, %v2889
        %v2891 = vpop.f32.mrf.mxu0
        %2892 = vmatprep.mubr.f32.mxu0 0.0
        %2893 = vmatmul.mubr.f32.gmra.mxu0 %v2688
        %v2894 = vpop.f32.mrf.mxu0
        %v2895 = vadd.f32 0.0, %v2894
        %v2896 = vpop.f32.mrf.mxu0
        %2897 = vmatprep.mubr.f32.mxu0 0.0
        %2898 = vmatmul.mubr.f32.gmra.mxu0 %v2691
        %v2899 = vpop.f32.mrf.mxu0
        %v2900 = vadd.f32 0.0, %v2899
        %v2901 = vpop.f32.mrf.mxu0
        %2902 = vmatprep.mubr.f32.mxu0 0.0
        %2903 = vmatmul.mubr.f32.gmra.mxu0 %v2694
        %v2904 = vpop.f32.mrf.mxu0
        %v2905 = vadd.f32 0.0, %v2904
        %v2906 = vpop.f32.mrf.mxu0
        %2907 = vmatprep.mubr.f32.mxu0 0.0
        %2908 = vmatmul.mubr.f32.gmra.mxu0 %v2697
        %v2909 = vpop.f32.mrf.mxu0
        %v2910 = vadd.f32 0.0, %v2909
        %v2911 = vpop.f32.mrf.mxu0
        %2912 = vmatprep.mubr.f32.mxu0 0.0
        %2913 = vmatmul.mubr.f32.gmra.mxu0 %v2700
        %v2914 = vpop.f32.mrf.mxu0
        %v2915 = vadd.f32 0.0, %v2914
        %v2916 = vpop.f32.mrf.mxu0
        %2917 = vmatprep.mubr.f32.mxu0 0.0
        %2918 = vmatmul.mubr.f32.gmra.mxu0 %v2703
        %v2919 = vpop.f32.mrf.mxu0
        %v2920 = vadd.f32 0.0, %v2919
        %v2921 = vpop.f32.mrf.mxu0
        %2922 = vmatprep.mubr.f32.mxu0 0.0
        %2923 = vmatmul.mubr.f32.gmra.mxu0 %v2706
        %v2924 = vpop.f32.mrf.mxu0
        %v2925 = vadd.f32 0.0, %v2924
        %v2926 = vpop.f32.mrf.mxu0
        %2927 = vmatprep.mubr.f32.mxu0 0.0
        %2928 = vmatmul.mubr.f32.gmra.mxu0 %v2709
        %v2929 = vpop.f32.mrf.mxu0
        %v2930 = vadd.f32 0.0, %v2929
        %v2931 = vpop.f32.mrf.mxu0
        %2932 = vmatprep.mubr.f32.mxu0 0.0
        %2933 = vmatmul.mubr.f32.gmra.mxu0 %v2712
        %v2934 = vpop.f32.mrf.mxu0
        %v2935 = vadd.f32 0.0, %v2934
        %v2936 = vpop.f32.mrf.mxu0
        %2937 = vmatprep.mubr.f32.mxu0 0.0
        %2938 = vmatmul.mubr.f32.gmra.mxu0 %v2715
        %v2939 = vpop.f32.mrf.mxu0
        %v2940 = vadd.f32 0.0, %v2939
        %v2941 = vpop.f32.mrf.mxu0
        %2942 = vmatprep.mubr.f32.mxu0 0.0
        %2943 = vmatmul.mubr.f32.gmra.mxu0 %v2718
        %v2944 = vpop.f32.mrf.mxu0
        %v2945 = vadd.f32 0.0, %v2944
        %v2946 = vpop.f32.mrf.mxu0
        %2947 = vmatprep.mubr.f32.mxu0 0.0
        %2948 = vmatmul.mubr.f32.gmra.mxu0 %v2721
        %v2949 = vpop.f32.mrf.mxu0
        %v2950 = vadd.f32 0.0, %v2949
        %v2951 = vpop.f32.mrf.mxu0
        %2952 = vmatprep.mubr.f32.mxu0 0.0
        %2953 = vmatmul.mubr.f32.gmra.mxu0 %v2724
        %v2954 = vpop.f32.mrf.mxu0
        %v2955 = vadd.f32 0.0, %v2954
        %v2956 = vpop.f32.mrf.mxu0
        %2957 = vmatprep.mubr.f32.mxu0 0.0
        %2958 = vmatmul.mubr.f32.gmra.mxu0 %v2727
        %v2959 = vpop.f32.mrf.mxu0
        %v2960 = vadd.f32 0.0, %v2959
        %v2961 = vpop.f32.mrf.mxu0
        %2962 = vmatprep.mubr.f32.mxu0 0.0
        %2963 = vmatmul.mubr.f32.gmra.mxu0 %v2730
        %v2964 = vpop.f32.mrf.mxu0
        %v2965 = vadd.f32 0.0, %v2964
        %v2966 = vpop.f32.mrf.mxu0
        %2967 = vmatprep.mubr.f32.mxu0 0.0
        %2968 = vmatmul.mubr.f32.gmra.mxu0 %v2733
        %v2969 = vpop.f32.mrf.mxu0
        %v2970 = vadd.f32 0.0, %v2969
        %v2971 = vpop.f32.mrf.mxu0
        %2972 = vmatprep.mubr.f32.mxu0 0.0
        %2973 = vmatmul.mubr.f32.gmra.mxu0 %v2736
        %v2974 = vpop.f32.mrf.mxu0
        %v2975 = vadd.f32 0.0, %v2974
        %v2976 = vpop.f32.mrf.mxu0
        %2977 = vmatprep.mubr.f32.mxu0 0.0
        %2978 = vmatmul.mubr.f32.gmra.mxu0 %v2739
        %v2979 = vpop.f32.mrf.mxu0
        %v2980 = vadd.f32 0.0, %v2979
        %v2981 = vpop.f32.mrf.mxu0
        %2982 = vmatprep.mubr.f32.mxu0 0.0
        %2983 = vmatmul.mubr.f32.gmra.mxu0 %v2742
        %v2984 = vpop.f32.mrf.mxu0
        %v2985 = vadd.f32 0.0, %v2984
        %v2986 = vpop.f32.mrf.mxu0
        %2987 = vmatprep.mubr.f32.mxu0 0.0
        %2988 = vmatmul.mubr.f32.gmra.mxu0 %v2745
        %v2989 = vpop.f32.mrf.mxu0
        %v2990 = vadd.f32 0.0, %v2989
        %v2991 = vpop.f32.mrf.mxu0
        %2992 = vmatprep.mubr.f32.mxu0 0.0
        %2993 = vmatmul.mubr.f32.gmra.mxu0 %v2748
        %v2994 = vpop.f32.mrf.mxu0
        %v2995 = vadd.f32 0.0, %v2994
        %v2996 = vpop.f32.mrf.mxu0
        %2997 = vdwg.mxu0
        %v2998 = vadd.f32 %v2570, %v2820
        %v2999 = vadd.f32 %v2571, %v2825
        %v3000 = vadd.f32 %v2572, %v2830
        %v3001 = vadd.f32 %v2573, %v2835
        %v3002 = vadd.f32 %v2574, %v2840
        %v3003 = vadd.f32 %v2575, %v2845
        %v3004 = vadd.f32 %v2576, %v2850
        %v3005 = vadd.f32 %v2577, %v2855
        %v3006 = vadd.f32 %v2578, %v2860
        %v3007 = vadd.f32 %v2579, %v2865
        %v3008 = vadd.f32 %v2580, %v2870
        %v3009 = vadd.f32 %v2581, %v2875
        %v3010 = vadd.f32 %v2582, %v2880
        %v3011 = vadd.f32 %v2583, %v2885
        %v3012 = vadd.f32 %v2584, %v2890
        %v3013 = vadd.f32 %v2585, %v2895
        %v3014 = vadd.f32 %v2586, %v2900
        %v3015 = vadd.f32 %v2587, %v2905
        %v3016 = vadd.f32 %v2588, %v2910
        %v3017 = vadd.f32 %v2589, %v2915
        %v3018 = vadd.f32 %v2590, %v2920
        %v3019 = vadd.f32 %v2591, %v2925
        %v3020 = vadd.f32 %v2592, %v2930
        %v3021 = vadd.f32 %v2593, %v2935
        %v3022 = vadd.f32 %v2594, %v2940
        %v3023 = vadd.f32 %v2595, %v2945
        %v3024 = vadd.f32 %v2596, %v2950
        %v3025 = vadd.f32 %v2597, %v2955
        %v3026 = vadd.f32 %v2598, %v2960
        %v3027 = vadd.f32 %v2599, %v2965
        %v3028 = vadd.f32 %v2600, %v2970
        %v3029 = vadd.f32 %v2601, %v2975
        %v3030 = vadd.f32 %v2602, %v2980
        %v3031 = vadd.f32 %v2603, %v2985
        %v3032 = vadd.f32 %v2604, %v2990
        %v3033 = vadd.f32 %v2605, %v2995
        %v3034 = vld [vmem:[%s299 + $0x14] sm:$0xff]
        %v3035 = vld [vmem:[%s299 + $0x1c] sm:$0xff]
        %v3036 = vld [vmem:[%s299 + $0x24] sm:$0xff]
        %v3037 = vld [vmem:[%s299 + $0x2c] sm:$0xff]
        %v3038 = vld [vmem:[%s299 + $0x34] sm:$0xff]
        %v3039 = vld [vmem:[%s299 + $0x3c] sm:$0xff]
        %v3040 = vld [vmem:[%s299 + $0x44] sm:$0xff]
        %v3041 = vld [vmem:[%s299 + $0x4c] sm:$0xff]
        %v3042 = vld [vmem:[%s299 + $0x54] sm:$0xff]
        %v3043 = vld [vmem:[%s299 + $0x5c] sm:$0xff]
        %v3044 = vld [vmem:[%s299 + $0x64] sm:$0xff]
        %v3045 = vld [vmem:[%s299 + $0x6c] sm:$0xff]
        %v3046 = vld [vmem:[%s299 + $0x74] sm:$0xff]
        %v3047 = vld [vmem:[%s299 + $0x7c] sm:$0xff]
        %v3048 = vld [vmem:[%s299 + $0x84] sm:$0xff]
        %v3049 = vld [vmem:[%s299 + $0x8c] sm:$0xff]
        %v3050 = vld [vmem:[%s299 + $0x94] sm:$0xff]
        %v3051 = vld [vmem:[%s299 + $0x9c] sm:$0xff]
        %v3052 = vld [vmem:[%s299 + $0xa4] sm:$0xff]
        %v3053 = vld [vmem:[%s299 + $0xac] sm:$0xff]
        %v3054 = vld [vmem:[%s299 + $0xb4] sm:$0xff]
        %v3055 = vld [vmem:[%s299 + $0xbc] sm:$0xff]
        %v3056 = vld [vmem:[%s299 + $0xc4] sm:$0xff]
        %v3057 = vld [vmem:[%s299 + $0xcc] sm:$0xff]
        %v3058 = vld [vmem:[%s299 + $0xd4] sm:$0xff]
        %v3059 = vld [vmem:[%s299 + $0xdc] sm:$0xff]
        %v3060 = vld [vmem:[%s299 + $0xe4] sm:$0xff]
        %v3061 = vld [vmem:[%s299 + $0xec] sm:$0xff]
        %v3062 = vld [vmem:[%s299 + $0xf4] sm:$0xff]
        %v3063 = vld [vmem:[%s299 + $0xfc] sm:$0xff]
        %v3064 = vld [vmem:[%s299 + $0x104] sm:$0xff]
        %v3065 = vld [vmem:[%s299 + $0x10c] sm:$0xff]
        %v3066 = vld [vmem:[%s299 + $0x114] sm:$0xff]
        %v3067 = vld [vmem:[%s299 + $0x11c] sm:$0xff]
        %v3068 = vld [vmem:[%s299 + $0x124] sm:$0xff]
        %v3069 = vld [vmem:[%s299 + $0x12c] sm:$0xff]
        %v3071 = vsel %vm1036, %v3034, 0
        %v3074 = vsel %vm1036, %v3035, 0
        %v3077 = vsel %vm1036, %v3036, 0
        %v3080 = vsel %vm1036, %v3037, 0
        %v3083 = vsel %vm1036, %v3038, 0
        %v3086 = vsel %vm1036, %v3039, 0
        %v3089 = vsel %vm1036, %v3040, 0
        %v3092 = vsel %vm1036, %v3041, 0
        %v3095 = vsel %vm1036, %v3042, 0
        %v3098 = vsel %vm1036, %v3043, 0
        %v3101 = vsel %vm1036, %v3044, 0
        %v3104 = vsel %vm1036, %v3045, 0
        %v3107 = vsel %vm1036, %v3046, 0
        %v3110 = vsel %vm1036, %v3047, 0
        %v3113 = vsel %vm1036, %v3048, 0
        %v3116 = vsel %vm1036, %v3049, 0
        %v3119 = vsel %vm1036, %v3050, 0
        %v3122 = vsel %vm1036, %v3051, 0
        %v3125 = vsel %vm1036, %v3052, 0
        %v3128 = vsel %vm1036, %v3053, 0
        %v3131 = vsel %vm1036, %v3054, 0
        %v3134 = vsel %vm1036, %v3055, 0
        %v3137 = vsel %vm1036, %v3056, 0
        %v3140 = vsel %vm1036, %v3057, 0
        %v3143 = vsel %vm1036, %v3058, 0
        %v3146 = vsel %vm1036, %v3059, 0
        %v3149 = vsel %vm1036, %v3060, 0
        %v3152 = vsel %vm1036, %v3061, 0
        %v3155 = vsel %vm1036, %v3062, 0
        %v3158 = vsel %vm1036, %v3063, 0
        %v3161 = vsel %vm1036, %v3064, 0
        %v3164 = vsel %vm1036, %v3065, 0
        %v3167 = vsel %vm1036, %v3066, 0
        %v3170 = vsel %vm1036, %v3067, 0
        %v3173 = vsel %vm1036, %v3068, 0
        %v3176 = vsel %vm1036, %v3069, 0
        %v3179 = vsel %vm1145, %v959, 0
        %3181 = vmatprep.subr.mxu0 0.0
        %3182 = vmatpush1.msra.mxu0 0.0
        %3183 = vmatprep.subr.mxu0 0.0
        %3184 = vmatpush1.msra.mxu0 0.0
        %3185 = vmatprep.subr.mxu0 0.0
        %3186 = vmatpush1.msra.mxu0 0.0
        %3187 = vmatprep.subr.mxu0 0.0
        %3188 = vmatpush1.msra.mxu0 0.0
        %3189 = vmatprep.subr.mxu0 0.0
        %3190 = vmatpush1.msra.mxu0 0.0
        %3191 = vmatprep.subr.mxu0 0.0
        %3192 = vmatpush1.msra.mxu0 0.0
        %3193 = vmatprep.subr.mxu0 0.0
        %3194 = vmatpush1.msra.mxu0 0.0
        %3195 = vmatprep.subr.mxu0 0.0
        %3196 = vmatpush1.msra.mxu0 0.0
        %3197 = vmatprep.subr.mxu0 0.0
        %3198 = vmatpush1.msra.mxu0 0.0
        %3199 = vmatprep.subr.mxu0 0.0
        %3200 = vmatpush1.msra.mxu0 0.0
        %3201 = vmatprep.subr.mxu0 0.0
        %3202 = vmatpush1.msra.mxu0 0.0
        %3203 = vmatprep.subr.mxu0 0.0
        %3204 = vmatpush1.msra.mxu0 0.0
        %3205 = vmatprep.subr.mxu0 0.0
        %3206 = vmatpush1.msra.mxu0 0.0
        %3207 = vmatprep.subr.mxu0 0.0
        %3208 = vmatpush1.msra.mxu0 0.0
        %3209 = vmatprep.subr.mxu0 0.0
        %3210 = vmatpush1.msra.mxu0 0.0
        %3211 = vmatprep.subr.mxu0 0.0
        %3212 = vmatpush1.msra.mxu0 %v3179
        %3213 = vmatprep.subr.mxu0 0.0
        %3214 = vmatpush2.msra.mxu0 0.0
        %3215 = vmatprep.subr.mxu0 0.0
        %3216 = vmatpush2.msra.mxu0 0.0
        %3217 = vmatprep.subr.mxu0 0.0
        %3218 = vmatpush2.msra.mxu0 0.0
        %3219 = vmatprep.subr.mxu0 0.0
        %3220 = vmatpush2.msra.mxu0 0.0
        %3221 = vmatprep.subr.mxu0 0.0
        %3222 = vmatpush2.msra.mxu0 0.0
        %3223 = vmatprep.subr.mxu0 0.0
        %3224 = vmatpush2.msra.mxu0 0.0
        %3225 = vmatprep.subr.mxu0 0.0
        %3226 = vmatpush2.msra.mxu0 0.0
        %3227 = vmatprep.subr.mxu0 0.0
        %3228 = vmatpush2.msra.mxu0 0.0
        %3229 = vmatprep.subr.mxu0 0.0
        %3230 = vmatpush2.msra.mxu0 0.0
        %3231 = vmatprep.subr.mxu0 0.0
        %3232 = vmatpush2.msra.mxu0 0.0
        %3233 = vmatprep.subr.mxu0 0.0
        %3234 = vmatpush2.msra.mxu0 0.0
        %3235 = vmatprep.subr.mxu0 0.0
        %3236 = vmatpush2.msra.mxu0 0.0
        %3237 = vmatprep.subr.mxu0 0.0
        %3238 = vmatpush2.msra.mxu0 0.0
        %3239 = vmatprep.subr.mxu0 0.0
        %3240 = vmatpush2.msra.mxu0 0.0
        %3241 = vmatprep.subr.mxu0 0.0
        %3242 = vmatpush2.msra.mxu0 0.0
        %3243 = vmatprep.subr.mxu0 0.0
        %3244 = vmatpush2.msra.mxu0 0.0
        %3245 = vmatprep.mubr.f32.mxu0 0.0
        %3246 = vmatmul.mubr.f32.gmra.mxu0 %v3071
        %v3247 = vpop.f32.mrf.mxu0
        %v3248 = vadd.f32 0.0, %v3247
        %v3249 = vpop.f32.mrf.mxu0
        %3250 = vmatprep.mubr.f32.mxu0 0.0
        %3251 = vmatmul.mubr.f32.gmra.mxu0 %v3074
        %v3252 = vpop.f32.mrf.mxu0
        %v3253 = vadd.f32 0.0, %v3252
        %v3254 = vpop.f32.mrf.mxu0
        %3255 = vmatprep.mubr.f32.mxu0 0.0
        %3256 = vmatmul.mubr.f32.gmra.mxu0 %v3077
        %v3257 = vpop.f32.mrf.mxu0
        %v3258 = vadd.f32 0.0, %v3257
        %v3259 = vpop.f32.mrf.mxu0
        %3260 = vmatprep.mubr.f32.mxu0 0.0
        %3261 = vmatmul.mubr.f32.gmra.mxu0 %v3080
        %v3262 = vpop.f32.mrf.mxu0
        %v3263 = vadd.f32 0.0, %v3262
        %v3264 = vpop.f32.mrf.mxu0
        %3265 = vmatprep.mubr.f32.mxu0 0.0
        %3266 = vmatmul.mubr.f32.gmra.mxu0 %v3083
        %v3267 = vpop.f32.mrf.mxu0
        %v3268 = vadd.f32 0.0, %v3267
        %v3269 = vpop.f32.mrf.mxu0
        %3270 = vmatprep.mubr.f32.mxu0 0.0
        %3271 = vmatmul.mubr.f32.gmra.mxu0 %v3086
        %v3272 = vpop.f32.mrf.mxu0
        %v3273 = vadd.f32 0.0, %v3272
        %v3274 = vpop.f32.mrf.mxu0
        %3275 = vmatprep.mubr.f32.mxu0 0.0
        %3276 = vmatmul.mubr.f32.gmra.mxu0 %v3089
        %v3277 = vpop.f32.mrf.mxu0
        %v3278 = vadd.f32 0.0, %v3277
        %v3279 = vpop.f32.mrf.mxu0
        %3280 = vmatprep.mubr.f32.mxu0 0.0
        %3281 = vmatmul.mubr.f32.gmra.mxu0 %v3092
        %v3282 = vpop.f32.mrf.mxu0
        %v3283 = vadd.f32 0.0, %v3282
        %v3284 = vpop.f32.mrf.mxu0
        %3285 = vmatprep.mubr.f32.mxu0 0.0
        %3286 = vmatmul.mubr.f32.gmra.mxu0 %v3095
        %v3287 = vpop.f32.mrf.mxu0
        %v3288 = vadd.f32 0.0, %v3287
        %v3289 = vpop.f32.mrf.mxu0
        %3290 = vmatprep.mubr.f32.mxu0 0.0
        %3291 = vmatmul.mubr.f32.gmra.mxu0 %v3098
        %v3292 = vpop.f32.mrf.mxu0
        %v3293 = vadd.f32 0.0, %v3292
        %v3294 = vpop.f32.mrf.mxu0
        %3295 = vmatprep.mubr.f32.mxu0 0.0
        %3296 = vmatmul.mubr.f32.gmra.mxu0 %v3101
        %v3297 = vpop.f32.mrf.mxu0
        %v3298 = vadd.f32 0.0, %v3297
        %v3299 = vpop.f32.mrf.mxu0
        %3300 = vmatprep.mubr.f32.mxu0 0.0
        %3301 = vmatmul.mubr.f32.gmra.mxu0 %v3104
        %v3302 = vpop.f32.mrf.mxu0
        %v3303 = vadd.f32 0.0, %v3302
        %v3304 = vpop.f32.mrf.mxu0
        %3305 = vmatprep.mubr.f32.mxu0 0.0
        %3306 = vmatmul.mubr.f32.gmra.mxu0 %v3107
        %v3307 = vpop.f32.mrf.mxu0
        %v3308 = vadd.f32 0.0, %v3307
        %v3309 = vpop.f32.mrf.mxu0
        %3310 = vmatprep.mubr.f32.mxu0 0.0
        %3311 = vmatmul.mubr.f32.gmra.mxu0 %v3110
        %v3312 = vpop.f32.mrf.mxu0
        %v3313 = vadd.f32 0.0, %v3312
        %v3314 = vpop.f32.mrf.mxu0
        %3315 = vmatprep.mubr.f32.mxu0 0.0
        %3316 = vmatmul.mubr.f32.gmra.mxu0 %v3113
        %v3317 = vpop.f32.mrf.mxu0
        %v3318 = vadd.f32 0.0, %v3317
        %v3319 = vpop.f32.mrf.mxu0
        %3320 = vmatprep.mubr.f32.mxu0 0.0
        %3321 = vmatmul.mubr.f32.gmra.mxu0 %v3116
        %v3322 = vpop.f32.mrf.mxu0
        %v3323 = vadd.f32 0.0, %v3322
        %v3324 = vpop.f32.mrf.mxu0
        %3325 = vmatprep.mubr.f32.mxu0 0.0
        %3326 = vmatmul.mubr.f32.gmra.mxu0 %v3119
        %v3327 = vpop.f32.mrf.mxu0
        %v3328 = vadd.f32 0.0, %v3327
        %v3329 = vpop.f32.mrf.mxu0
        %3330 = vmatprep.mubr.f32.mxu0 0.0
        %3331 = vmatmul.mubr.f32.gmra.mxu0 %v3122
        %v3332 = vpop.f32.mrf.mxu0
        %v3333 = vadd.f32 0.0, %v3332
        %v3334 = vpop.f32.mrf.mxu0
        %3335 = vmatprep.mubr.f32.mxu0 0.0
        %3336 = vmatmul.mubr.f32.gmra.mxu0 %v3125
        %v3337 = vpop.f32.mrf.mxu0
        %v3338 = vadd.f32 0.0, %v3337
        %v3339 = vpop.f32.mrf.mxu0
        %3340 = vmatprep.mubr.f32.mxu0 0.0
        %3341 = vmatmul.mubr.f32.gmra.mxu0 %v3128
        %v3342 = vpop.f32.mrf.mxu0
        %v3343 = vadd.f32 0.0, %v3342
        %v3344 = vpop.f32.mrf.mxu0
        %3345 = vmatprep.mubr.f32.mxu0 0.0
        %3346 = vmatmul.mubr.f32.gmra.mxu0 %v3131
        %v3347 = vpop.f32.mrf.mxu0
        %v3348 = vadd.f32 0.0, %v3347
        %v3349 = vpop.f32.mrf.mxu0
        %3350 = vmatprep.mubr.f32.mxu0 0.0
        %3351 = vmatmul.mubr.f32.gmra.mxu0 %v3134
        %v3352 = vpop.f32.mrf.mxu0
        %v3353 = vadd.f32 0.0, %v3352
        %v3354 = vpop.f32.mrf.mxu0
        %3355 = vmatprep.mubr.f32.mxu0 0.0
        %3356 = vmatmul.mubr.f32.gmra.mxu0 %v3137
        %v3357 = vpop.f32.mrf.mxu0
        %v3358 = vadd.f32 0.0, %v3357
        %v3359 = vpop.f32.mrf.mxu0
        %3360 = vmatprep.mubr.f32.mxu0 0.0
        %3361 = vmatmul.mubr.f32.gmra.mxu0 %v3140
        %v3362 = vpop.f32.mrf.mxu0
        %v3363 = vadd.f32 0.0, %v3362
        %v3364 = vpop.f32.mrf.mxu0
        %3365 = vmatprep.mubr.f32.mxu0 0.0
        %3366 = vmatmul.mubr.f32.gmra.mxu0 %v3143
        %v3367 = vpop.f32.mrf.mxu0
        %v3368 = vadd.f32 0.0, %v3367
        %v3369 = vpop.f32.mrf.mxu0
        %3370 = vmatprep.mubr.f32.mxu0 0.0
        %3371 = vmatmul.mubr.f32.gmra.mxu0 %v3146
        %v3372 = vpop.f32.mrf.mxu0
        %v3373 = vadd.f32 0.0, %v3372
        %v3374 = vpop.f32.mrf.mxu0
        %3375 = vmatprep.mubr.f32.mxu0 0.0
        %3376 = vmatmul.mubr.f32.gmra.mxu0 %v3149
        %v3377 = vpop.f32.mrf.mxu0
        %v3378 = vadd.f32 0.0, %v3377
        %v3379 = vpop.f32.mrf.mxu0
        %3380 = vmatprep.mubr.f32.mxu0 0.0
        %3381 = vmatmul.mubr.f32.gmra.mxu0 %v3152
        %v3382 = vpop.f32.mrf.mxu0
        %v3383 = vadd.f32 0.0, %v3382
        %v3384 = vpop.f32.mrf.mxu0
        %3385 = vmatprep.mubr.f32.mxu0 0.0
        %3386 = vmatmul.mubr.f32.gmra.mxu0 %v3155
        %v3387 = vpop.f32.mrf.mxu0
        %v3388 = vadd.f32 0.0, %v3387
        %v3389 = vpop.f32.mrf.mxu0
        %3390 = vmatprep.mubr.f32.mxu0 0.0
        %3391 = vmatmul.mubr.f32.gmra.mxu0 %v3158
        %v3392 = vpop.f32.mrf.mxu0
        %v3393 = vadd.f32 0.0, %v3392
        %v3394 = vpop.f32.mrf.mxu0
        %3395 = vmatprep.mubr.f32.mxu0 0.0
        %3396 = vmatmul.mubr.f32.gmra.mxu0 %v3161
        %v3397 = vpop.f32.mrf.mxu0
        %v3398 = vadd.f32 0.0, %v3397
        %v3399 = vpop.f32.mrf.mxu0
        %3400 = vmatprep.mubr.f32.mxu0 0.0
        %3401 = vmatmul.mubr.f32.gmra.mxu0 %v3164
        %v3402 = vpop.f32.mrf.mxu0
        %v3403 = vadd.f32 0.0, %v3402
        %v3404 = vpop.f32.mrf.mxu0
        %3405 = vmatprep.mubr.f32.mxu0 0.0
        %3406 = vmatmul.mubr.f32.gmra.mxu0 %v3167
        %v3407 = vpop.f32.mrf.mxu0
        %v3408 = vadd.f32 0.0, %v3407
        %v3409 = vpop.f32.mrf.mxu0
        %3410 = vmatprep.mubr.f32.mxu0 0.0
        %3411 = vmatmul.mubr.f32.gmra.mxu0 %v3170
        %v3412 = vpop.f32.mrf.mxu0
        %v3413 = vadd.f32 0.0, %v3412
        %v3414 = vpop.f32.mrf.mxu0
        %3415 = vmatprep.mubr.f32.mxu0 0.0
        %3416 = vmatmul.mubr.f32.gmra.mxu0 %v3173
        %v3417 = vpop.f32.mrf.mxu0
        %v3418 = vadd.f32 0.0, %v3417
        %v3419 = vpop.f32.mrf.mxu0
        %3420 = vmatprep.mubr.f32.mxu0 0.0
        %3421 = vmatmul.mubr.f32.gmra.mxu0 %v3176
        %v3422 = vpop.f32.mrf.mxu0
        %v3423 = vadd.f32 0.0, %v3422
        %v3424 = vpop.f32.mrf.mxu0
        %3425 = vdwg.mxu0
        %v3426 = vadd.f32 %v2998, %v3248
        %v3427 = vadd.f32 %v2999, %v3253
        %v3428 = vadd.f32 %v3000, %v3258
        %v3429 = vadd.f32 %v3001, %v3263
        %v3430 = vadd.f32 %v3002, %v3268
        %v3431 = vadd.f32 %v3003, %v3273
        %v3432 = vadd.f32 %v3004, %v3278
        %v3433 = vadd.f32 %v3005, %v3283
        %v3434 = vadd.f32 %v3006, %v3288
        %v3435 = vadd.f32 %v3007, %v3293
        %v3436 = vadd.f32 %v3008, %v3298
        %v3437 = vadd.f32 %v3009, %v3303
        %v3438 = vadd.f32 %v3010, %v3308
        %v3439 = vadd.f32 %v3011, %v3313
        %v3440 = vadd.f32 %v3012, %v3318
        %v3441 = vadd.f32 %v3013, %v3323
        %v3442 = vadd.f32 %v3014, %v3328
        %v3443 = vadd.f32 %v3015, %v3333
        %v3444 = vadd.f32 %v3016, %v3338
        %v3445 = vadd.f32 %v3017, %v3343
        %v3446 = vadd.f32 %v3018, %v3348
        %v3447 = vadd.f32 %v3019, %v3353
        %v3448 = vadd.f32 %v3020, %v3358
        %v3449 = vadd.f32 %v3021, %v3363
        %v3450 = vadd.f32 %v3022, %v3368
        %v3451 = vadd.f32 %v3023, %v3373
        %v3452 = vadd.f32 %v3024, %v3378
        %v3453 = vadd.f32 %v3025, %v3383
        %v3454 = vadd.f32 %v3026, %v3388
        %v3455 = vadd.f32 %v3027, %v3393
        %v3456 = vadd.f32 %v3028, %v3398
        %v3457 = vadd.f32 %v3029, %v3403
        %v3458 = vadd.f32 %v3030, %v3408
        %v3459 = vadd.f32 %v3031, %v3413
        %v3460 = vadd.f32 %v3032, %v3418
        %v3461 = vadd.f32 %v3033, %v3423
        %v3462 = vld [vmem:[%s299 + $0x24] sm:$0xff]
        %v3463 = vld [vmem:[%s299 + $0x2c] sm:$0xff]
        %v3464 = vld [vmem:[%s299 + $0x34] sm:$0xff]
        %v3465 = vld [vmem:[%s299 + $0x3c] sm:$0xff]
        %v3466 = vld [vmem:[%s299 + $0x44] sm:$0xff]
        %v3467 = vld [vmem:[%s299 + $0x4c] sm:$0xff]
        %v3468 = vld [vmem:[%s299 + $0x54] sm:$0xff]
        %v3469 = vld [vmem:[%s299 + $0x5c] sm:$0xff]
        %v3470 = vld [vmem:[%s299 + $0x64] sm:$0xff]
        %v3471 = vld [vmem:[%s299 + $0x6c] sm:$0xff]
        %v3472 = vld [vmem:[%s299 + $0x74] sm:$0xff]
        %v3473 = vld [vmem:[%s299 + $0x7c] sm:$0xff]
        %v3474 = vld [vmem:[%s299 + $0x84] sm:$0xff]
        %v3475 = vld [vmem:[%s299 + $0x8c] sm:$0xff]
        %v3476 = vld [vmem:[%s299 + $0x94] sm:$0xff]
        %v3477 = vld [vmem:[%s299 + $0x9c] sm:$0xff]
        %v3478 = vld [vmem:[%s299 + $0xa4] sm:$0xff]
        %v3479 = vld [vmem:[%s299 + $0xac] sm:$0xff]
        %v3480 = vld [vmem:[%s299 + $0xb4] sm:$0xff]
        %v3481 = vld [vmem:[%s299 + $0xbc] sm:$0xff]
        %v3482 = vld [vmem:[%s299 + $0xc4] sm:$0xff]
        %v3483 = vld [vmem:[%s299 + $0xcc] sm:$0xff]
        %v3484 = vld [vmem:[%s299 + $0xd4] sm:$0xff]
        %v3485 = vld [vmem:[%s299 + $0xdc] sm:$0xff]
        %v3486 = vld [vmem:[%s299 + $0xe4] sm:$0xff]
        %v3487 = vld [vmem:[%s299 + $0xec] sm:$0xff]
        %v3488 = vld [vmem:[%s299 + $0xf4] sm:$0xff]
        %v3489 = vld [vmem:[%s299 + $0xfc] sm:$0xff]
        %v3490 = vld [vmem:[%s299 + $0x104] sm:$0xff]
        %v3491 = vld [vmem:[%s299 + $0x10c] sm:$0xff]
        %v3492 = vld [vmem:[%s299 + $0x114] sm:$0xff]
        %v3493 = vld [vmem:[%s299 + $0x11c] sm:$0xff]
        %v3494 = vld [vmem:[%s299 + $0x124] sm:$0xff]
        %v3495 = vld [vmem:[%s299 + $0x12c] sm:$0xff]
        %v3496 = vld [vmem:[%s299 + $0x134] sm:$0xff]
        %v3497 = vld [vmem:[%s299 + $0x13c] sm:$0xff]
        %v3499 = vsel %vm1036, %v3462, 0
        %v3502 = vsel %vm1036, %v3463, 0
        %v3505 = vsel %vm1036, %v3464, 0
        %v3508 = vsel %vm1036, %v3465, 0
        %v3511 = vsel %vm1036, %v3466, 0
        %v3514 = vsel %vm1036, %v3467, 0
        %v3517 = vsel %vm1036, %v3468, 0
        %v3520 = vsel %vm1036, %v3469, 0
        %v3523 = vsel %vm1036, %v3470, 0
        %v3526 = vsel %vm1036, %v3471, 0
        %v3529 = vsel %vm1036, %v3472, 0
        %v3532 = vsel %vm1036, %v3473, 0
        %v3535 = vsel %vm1036, %v3474, 0
        %v3538 = vsel %vm1036, %v3475, 0
        %v3541 = vsel %vm1036, %v3476, 0
        %v3544 = vsel %vm1036, %v3477, 0
        %v3547 = vsel %vm1036, %v3478, 0
        %v3550 = vsel %vm1036, %v3479, 0
        %v3553 = vsel %vm1036, %v3480, 0
        %v3556 = vsel %vm1036, %v3481, 0
        %v3559 = vsel %vm1036, %v3482, 0
        %v3562 = vsel %vm1036, %v3483, 0
        %v3565 = vsel %vm1036, %v3484, 0
        %v3568 = vsel %vm1036, %v3485, 0
        %v3571 = vsel %vm1036, %v3486, 0
        %v3574 = vsel %vm1036, %v3487, 0
        %v3577 = vsel %vm1036, %v3488, 0
        %v3580 = vsel %vm1036, %v3489, 0
        %v3583 = vsel %vm1036, %v3490, 0
        %v3586 = vsel %vm1036, %v3491, 0
        %v3589 = vsel %vm1036, %v3492, 0
        %v3592 = vsel %vm1036, %v3493, 0
        %v3595 = vsel %vm1036, %v3494, 0
        %v3598 = vsel %vm1036, %v3495, 0
        %v3601 = vsel %vm1036, %v3496, 0
        %v3604 = vsel %vm1036, %v3497, 0
        %v3607 = vsel %vm1145, %v960, 0
        %3609 = vmatprep.subr.mxu0 0.0
        %3610 = vmatpush1.msra.mxu0 0.0
        %3611 = vmatprep.subr.mxu0 0.0
        %3612 = vmatpush1.msra.mxu0 0.0
        %3613 = vmatprep.subr.mxu0 0.0
        %3614 = vmatpush1.msra.mxu0 0.0
        %3615 = vmatprep.subr.mxu0 0.0
        %3616 = vmatpush1.msra.mxu0 0.0
        %3617 = vmatprep.subr.mxu0 0.0
        %3618 = vmatpush1.msra.mxu0 0.0
        %3619 = vmatprep.subr.mxu0 0.0
        %3620 = vmatpush1.msra.mxu0 0.0
        %3621 = vmatprep.subr.mxu0 0.0
        %3622 = vmatpush1.msra.mxu0 0.0
        %3623 = vmatprep.subr.mxu0 0.0
        %3624 = vmatpush1.msra.mxu0 0.0
        %3625 = vmatprep.subr.mxu0 0.0
        %3626 = vmatpush1.msra.mxu0 0.0
        %3627 = vmatprep.subr.mxu0 0.0
        %3628 = vmatpush1.msra.mxu0 0.0
        %3629 = vmatprep.subr.mxu0 0.0
        %3630 = vmatpush1.msra.mxu0 0.0
        %3631 = vmatprep.subr.mxu0 0.0
        %3632 = vmatpush1.msra.mxu0 0.0
        %3633 = vmatprep.subr.mxu0 0.0
        %3634 = vmatpush1.msra.mxu0 0.0
        %3635 = vmatprep.subr.mxu0 0.0
        %3636 = vmatpush1.msra.mxu0 0.0
        %3637 = vmatprep.subr.mxu0 0.0
        %3638 = vmatpush1.msra.mxu0 0.0
        %3639 = vmatprep.subr.mxu0 0.0
        %3640 = vmatpush1.msra.mxu0 %v3607
        %3641 = vmatprep.subr.mxu0 0.0
        %3642 = vmatpush2.msra.mxu0 0.0
        %3643 = vmatprep.subr.mxu0 0.0
        %3644 = vmatpush2.msra.mxu0 0.0
        %3645 = vmatprep.subr.mxu0 0.0
        %3646 = vmatpush2.msra.mxu0 0.0
        %3647 = vmatprep.subr.mxu0 0.0
        %3648 = vmatpush2.msra.mxu0 0.0
        %3649 = vmatprep.subr.mxu0 0.0
        %3650 = vmatpush2.msra.mxu0 0.0
        %3651 = vmatprep.subr.mxu0 0.0
        %3652 = vmatpush2.msra.mxu0 0.0
        %3653 = vmatprep.subr.mxu0 0.0
        %3654 = vmatpush2.msra.mxu0 0.0
        %3655 = vmatprep.subr.mxu0 0.0
        %3656 = vmatpush2.msra.mxu0 0.0
        %3657 = vmatprep.subr.mxu0 0.0
        %3658 = vmatpush2.msra.mxu0 0.0
        %3659 = vmatprep.subr.mxu0 0.0
        %3660 = vmatpush2.msra.mxu0 0.0
        %3661 = vmatprep.subr.mxu0 0.0
        %3662 = vmatpush2.msra.mxu0 0.0
        %3663 = vmatprep.subr.mxu0 0.0
        %3664 = vmatpush2.msra.mxu0 0.0
        %3665 = vmatprep.subr.mxu0 0.0
        %3666 = vmatpush2.msra.mxu0 0.0
        %3667 = vmatprep.subr.mxu0 0.0
        %3668 = vmatpush2.msra.mxu0 0.0
        %3669 = vmatprep.subr.mxu0 0.0
        %3670 = vmatpush2.msra.mxu0 0.0
        %3671 = vmatprep.subr.mxu0 0.0
        %3672 = vmatpush2.msra.mxu0 0.0
        %3673 = vmatprep.mubr.f32.mxu0 0.0
        %3674 = vmatmul.mubr.f32.gmra.mxu0 %v3499
        %v3675 = vpop.f32.mrf.mxu0
        %v3676 = vadd.f32 0.0, %v3675
        %v3677 = vpop.f32.mrf.mxu0
        %3678 = vmatprep.mubr.f32.mxu0 0.0
        %3679 = vmatmul.mubr.f32.gmra.mxu0 %v3502
        %v3680 = vpop.f32.mrf.mxu0
        %v3681 = vadd.f32 0.0, %v3680
        %v3682 = vpop.f32.mrf.mxu0
        %3683 = vmatprep.mubr.f32.mxu0 0.0
        %3684 = vmatmul.mubr.f32.gmra.mxu0 %v3505
        %v3685 = vpop.f32.mrf.mxu0
        %v3686 = vadd.f32 0.0, %v3685
        %v3687 = vpop.f32.mrf.mxu0
        %3688 = vmatprep.mubr.f32.mxu0 0.0
        %3689 = vmatmul.mubr.f32.gmra.mxu0 %v3508
        %v3690 = vpop.f32.mrf.mxu0
        %v3691 = vadd.f32 0.0, %v3690
        %v3692 = vpop.f32.mrf.mxu0
        %3693 = vmatprep.mubr.f32.mxu0 0.0
        %3694 = vmatmul.mubr.f32.gmra.mxu0 %v3511
        %v3695 = vpop.f32.mrf.mxu0
        %v3696 = vadd.f32 0.0, %v3695
        %v3697 = vpop.f32.mrf.mxu0
        %3698 = vmatprep.mubr.f32.mxu0 0.0
        %3699 = vmatmul.mubr.f32.gmra.mxu0 %v3514
        %v3700 = vpop.f32.mrf.mxu0
        %v3701 = vadd.f32 0.0, %v3700
        %v3702 = vpop.f32.mrf.mxu0
        %3703 = vmatprep.mubr.f32.mxu0 0.0
        %3704 = vmatmul.mubr.f32.gmra.mxu0 %v3517
        %v3705 = vpop.f32.mrf.mxu0
        %v3706 = vadd.f32 0.0, %v3705
        %v3707 = vpop.f32.mrf.mxu0
        %3708 = vmatprep.mubr.f32.mxu0 0.0
        %3709 = vmatmul.mubr.f32.gmra.mxu0 %v3520
        %v3710 = vpop.f32.mrf.mxu0
        %v3711 = vadd.f32 0.0, %v3710
        %v3712 = vpop.f32.mrf.mxu0
        %3713 = vmatprep.mubr.f32.mxu0 0.0
        %3714 = vmatmul.mubr.f32.gmra.mxu0 %v3523
        %v3715 = vpop.f32.mrf.mxu0
        %v3716 = vadd.f32 0.0, %v3715
        %v3717 = vpop.f32.mrf.mxu0
        %3718 = vmatprep.mubr.f32.mxu0 0.0
        %3719 = vmatmul.mubr.f32.gmra.mxu0 %v3526
        %v3720 = vpop.f32.mrf.mxu0
        %v3721 = vadd.f32 0.0, %v3720
        %v3722 = vpop.f32.mrf.mxu0
        %3723 = vmatprep.mubr.f32.mxu0 0.0
        %3724 = vmatmul.mubr.f32.gmra.mxu0 %v3529
        %v3725 = vpop.f32.mrf.mxu0
        %v3726 = vadd.f32 0.0, %v3725
        %v3727 = vpop.f32.mrf.mxu0
        %3728 = vmatprep.mubr.f32.mxu0 0.0
        %3729 = vmatmul.mubr.f32.gmra.mxu0 %v3532
        %v3730 = vpop.f32.mrf.mxu0
        %v3731 = vadd.f32 0.0, %v3730
        %v3732 = vpop.f32.mrf.mxu0
        %3733 = vmatprep.mubr.f32.mxu0 0.0
        %3734 = vmatmul.mubr.f32.gmra.mxu0 %v3535
        %v3735 = vpop.f32.mrf.mxu0
        %v3736 = vadd.f32 0.0, %v3735
        %v3737 = vpop.f32.mrf.mxu0
        %3738 = vmatprep.mubr.f32.mxu0 0.0
        %3739 = vmatmul.mubr.f32.gmra.mxu0 %v3538
        %v3740 = vpop.f32.mrf.mxu0
        %v3741 = vadd.f32 0.0, %v3740
        %v3742 = vpop.f32.mrf.mxu0
        %3743 = vmatprep.mubr.f32.mxu0 0.0
        %3744 = vmatmul.mubr.f32.gmra.mxu0 %v3541
        %v3745 = vpop.f32.mrf.mxu0
        %v3746 = vadd.f32 0.0, %v3745
        %v3747 = vpop.f32.mrf.mxu0
        %3748 = vmatprep.mubr.f32.mxu0 0.0
        %3749 = vmatmul.mubr.f32.gmra.mxu0 %v3544
        %v3750 = vpop.f32.mrf.mxu0
        %v3751 = vadd.f32 0.0, %v3750
        %v3752 = vpop.f32.mrf.mxu0
        %3753 = vmatprep.mubr.f32.mxu0 0.0
        %3754 = vmatmul.mubr.f32.gmra.mxu0 %v3547
        %v3755 = vpop.f32.mrf.mxu0
        %v3756 = vadd.f32 0.0, %v3755
        %v3757 = vpop.f32.mrf.mxu0
        %3758 = vmatprep.mubr.f32.mxu0 0.0
        %3759 = vmatmul.mubr.f32.gmra.mxu0 %v3550
        %v3760 = vpop.f32.mrf.mxu0
        %v3761 = vadd.f32 0.0, %v3760
        %v3762 = vpop.f32.mrf.mxu0
        %3763 = vmatprep.mubr.f32.mxu0 0.0
        %3764 = vmatmul.mubr.f32.gmra.mxu0 %v3553
        %v3765 = vpop.f32.mrf.mxu0
        %v3766 = vadd.f32 0.0, %v3765
        %v3767 = vpop.f32.mrf.mxu0
        %3768 = vmatprep.mubr.f32.mxu0 0.0
        %3769 = vmatmul.mubr.f32.gmra.mxu0 %v3556
        %v3770 = vpop.f32.mrf.mxu0
        %v3771 = vadd.f32 0.0, %v3770
        %v3772 = vpop.f32.mrf.mxu0
        %3773 = vmatprep.mubr.f32.mxu0 0.0
        %3774 = vmatmul.mubr.f32.gmra.mxu0 %v3559
        %v3775 = vpop.f32.mrf.mxu0
        %v3776 = vadd.f32 0.0, %v3775
        %v3777 = vpop.f32.mrf.mxu0
        %3778 = vmatprep.mubr.f32.mxu0 0.0
        %3779 = vmatmul.mubr.f32.gmra.mxu0 %v3562
        %v3780 = vpop.f32.mrf.mxu0
        %v3781 = vadd.f32 0.0, %v3780
        %v3782 = vpop.f32.mrf.mxu0
        %3783 = vmatprep.mubr.f32.mxu0 0.0
        %3784 = vmatmul.mubr.f32.gmra.mxu0 %v3565
        %v3785 = vpop.f32.mrf.mxu0
        %v3786 = vadd.f32 0.0, %v3785
        %v3787 = vpop.f32.mrf.mxu0
        %3788 = vmatprep.mubr.f32.mxu0 0.0
        %3789 = vmatmul.mubr.f32.gmra.mxu0 %v3568
        %v3790 = vpop.f32.mrf.mxu0
        %v3791 = vadd.f32 0.0, %v3790
        %v3792 = vpop.f32.mrf.mxu0
        %3793 = vmatprep.mubr.f32.mxu0 0.0
        %3794 = vmatmul.mubr.f32.gmra.mxu0 %v3571
        %v3795 = vpop.f32.mrf.mxu0
        %v3796 = vadd.f32 0.0, %v3795
        %v3797 = vpop.f32.mrf.mxu0
        %3798 = vmatprep.mubr.f32.mxu0 0.0
        %3799 = vmatmul.mubr.f32.gmra.mxu0 %v3574
        %v3800 = vpop.f32.mrf.mxu0
        %v3801 = vadd.f32 0.0, %v3800
        %v3802 = vpop.f32.mrf.mxu0
        %3803 = vmatprep.mubr.f32.mxu0 0.0
        %3804 = vmatmul.mubr.f32.gmra.mxu0 %v3577
        %v3805 = vpop.f32.mrf.mxu0
        %v3806 = vadd.f32 0.0, %v3805
        %v3807 = vpop.f32.mrf.mxu0
        %3808 = vmatprep.mubr.f32.mxu0 0.0
        %3809 = vmatmul.mubr.f32.gmra.mxu0 %v3580
        %v3810 = vpop.f32.mrf.mxu0
        %v3811 = vadd.f32 0.0, %v3810
        %v3812 = vpop.f32.mrf.mxu0
        %3813 = vmatprep.mubr.f32.mxu0 0.0
        %3814 = vmatmul.mubr.f32.gmra.mxu0 %v3583
        %v3815 = vpop.f32.mrf.mxu0
        %v3816 = vadd.f32 0.0, %v3815
        %v3817 = vpop.f32.mrf.mxu0
        %3818 = vmatprep.mubr.f32.mxu0 0.0
        %3819 = vmatmul.mubr.f32.gmra.mxu0 %v3586
        %v3820 = vpop.f32.mrf.mxu0
        %v3821 = vadd.f32 0.0, %v3820
        %v3822 = vpop.f32.mrf.mxu0
        %3823 = vmatprep.mubr.f32.mxu0 0.0
        %3824 = vmatmul.mubr.f32.gmra.mxu0 %v3589
        %v3825 = vpop.f32.mrf.mxu0
        %v3826 = vadd.f32 0.0, %v3825
        %v3827 = vpop.f32.mrf.mxu0
        %3828 = vmatprep.mubr.f32.mxu0 0.0
        %3829 = vmatmul.mubr.f32.gmra.mxu0 %v3592
        %v3830 = vpop.f32.mrf.mxu0
        %v3831 = vadd.f32 0.0, %v3830
        %v3832 = vpop.f32.mrf.mxu0
        %3833 = vmatprep.mubr.f32.mxu0 0.0
        %3834 = vmatmul.mubr.f32.gmra.mxu0 %v3595
        %v3835 = vpop.f32.mrf.mxu0
        %v3836 = vadd.f32 0.0, %v3835
        %v3837 = vpop.f32.mrf.mxu0
        %3838 = vmatprep.mubr.f32.mxu0 0.0
        %3839 = vmatmul.mubr.f32.gmra.mxu0 %v3598
        %v3840 = vpop.f32.mrf.mxu0
        %v3841 = vadd.f32 0.0, %v3840
        %v3842 = vpop.f32.mrf.mxu0
        %3843 = vmatprep.mubr.f32.mxu0 0.0
        %3844 = vmatmul.mubr.f32.gmra.mxu0 %v3601
        %v3845 = vpop.f32.mrf.mxu0
        %v3846 = vadd.f32 0.0, %v3845
        %v3847 = vpop.f32.mrf.mxu0
        %3848 = vmatprep.mubr.f32.mxu0 0.0
        %3849 = vmatmul.mubr.f32.gmra.mxu0 %v3604
        %v3850 = vpop.f32.mrf.mxu0
        %v3851 = vadd.f32 0.0, %v3850
        %v3852 = vpop.f32.mrf.mxu0
        %3853 = vdwg.mxu0
        %v3854 = vadd.f32 %v3426, %v3676
        %v3855 = vadd.f32 %v3427, %v3681
        %v3856 = vadd.f32 %v3428, %v3686
        %v3857 = vadd.f32 %v3429, %v3691
        %v3858 = vadd.f32 %v3430, %v3696
        %v3859 = vadd.f32 %v3431, %v3701
        %v3860 = vadd.f32 %v3432, %v3706
        %v3861 = vadd.f32 %v3433, %v3711
        %v3862 = vadd.f32 %v3434, %v3716
        %v3863 = vadd.f32 %v3435, %v3721
        %v3864 = vadd.f32 %v3436, %v3726
        %v3865 = vadd.f32 %v3437, %v3731
        %v3866 = vadd.f32 %v3438, %v3736
        %v3867 = vadd.f32 %v3439, %v3741
        %v3868 = vadd.f32 %v3440, %v3746
        %v3869 = vadd.f32 %v3441, %v3751
        %v3870 = vadd.f32 %v3442, %v3756
        %v3871 = vadd.f32 %v3443, %v3761
        %v3872 = vadd.f32 %v3444, %v3766
        %v3873 = vadd.f32 %v3445, %v3771
        %v3874 = vadd.f32 %v3446, %v3776
        %v3875 = vadd.f32 %v3447, %v3781
        %v3876 = vadd.f32 %v3448, %v3786
        %v3877 = vadd.f32 %v3449, %v3791
        %v3878 = vadd.f32 %v3450, %v3796
        %v3879 = vadd.f32 %v3451, %v3801
        %v3880 = vadd.f32 %v3452, %v3806
        %v3881 = vadd.f32 %v3453, %v3811
        %v3882 = vadd.f32 %v3454, %v3816
        %v3883 = vadd.f32 %v3455, %v3821
        %v3884 = vadd.f32 %v3456, %v3826
        %v3885 = vadd.f32 %v3457, %v3831
        %v3886 = vadd.f32 %v3458, %v3836
        %v3887 = vadd.f32 %v3459, %v3841
        %v3888 = vadd.f32 %v3460, %v3846
        %v3889 = vadd.f32 %v3461, %v3851
        %v3890 = vld [vmem:[%s299 + $0x25] sm:$0xff]
        %v3891 = vld [vmem:[%s299 + $0x2d] sm:$0xff]
        %v3892 = vld [vmem:[%s299 + $0x35] sm:$0xff]
        %v3893 = vld [vmem:[%s299 + $0x3d] sm:$0xff]
        %v3894 = vld [vmem:[%s299 + $0x45] sm:$0xff]
        %v3895 = vld [vmem:[%s299 + $0x4d] sm:$0xff]
        %v3896 = vld [vmem:[%s299 + $0x55] sm:$0xff]
        %v3897 = vld [vmem:[%s299 + $0x5d] sm:$0xff]
        %v3898 = vld [vmem:[%s299 + $0x65] sm:$0xff]
        %v3899 = vld [vmem:[%s299 + $0x6d] sm:$0xff]
        %v3900 = vld [vmem:[%s299 + $0x75] sm:$0xff]
        %v3901 = vld [vmem:[%s299 + $0x7d] sm:$0xff]
        %v3902 = vld [vmem:[%s299 + $0x85] sm:$0xff]
        %v3903 = vld [vmem:[%s299 + $0x8d] sm:$0xff]
        %v3904 = vld [vmem:[%s299 + $0x95] sm:$0xff]
        %v3905 = vld [vmem:[%s299 + $0x9d] sm:$0xff]
        %v3906 = vld [vmem:[%s299 + $0xa5] sm:$0xff]
        %v3907 = vld [vmem:[%s299 + $0xad] sm:$0xff]
        %v3908 = vld [vmem:[%s299 + $0xb5] sm:$0xff]
        %v3909 = vld [vmem:[%s299 + $0xbd] sm:$0xff]
        %v3910 = vld [vmem:[%s299 + $0xc5] sm:$0xff]
        %v3911 = vld [vmem:[%s299 + $0xcd] sm:$0xff]
        %v3912 = vld [vmem:[%s299 + $0xd5] sm:$0xff]
        %v3913 = vld [vmem:[%s299 + $0xdd] sm:$0xff]
        %v3914 = vld [vmem:[%s299 + $0xe5] sm:$0xff]
        %v3915 = vld [vmem:[%s299 + $0xed] sm:$0xff]
        %v3916 = vld [vmem:[%s299 + $0xf5] sm:$0xff]
        %v3917 = vld [vmem:[%s299 + $0xfd] sm:$0xff]
        %v3918 = vld [vmem:[%s299 + $0x105] sm:$0xff]
        %v3919 = vld [vmem:[%s299 + $0x10d] sm:$0xff]
        %v3920 = vld [vmem:[%s299 + $0x115] sm:$0xff]
        %v3921 = vld [vmem:[%s299 + $0x11d] sm:$0xff]
        %v3922 = vld [vmem:[%s299 + $0x125] sm:$0xff]
        %v3923 = vld [vmem:[%s299 + $0x12d] sm:$0xff]
        %v3924 = vld [vmem:[%s299 + $0x135] sm:$0xff]
        %v3925 = vld [vmem:[%s299 + $0x13d] sm:$0xff]
        %v3927 = vsel %vm1036, %v3890, 0
        %v3930 = vsel %vm1036, %v3891, 0
        %v3933 = vsel %vm1036, %v3892, 0
        %v3936 = vsel %vm1036, %v3893, 0
        %v3939 = vsel %vm1036, %v3894, 0
        %v3942 = vsel %vm1036, %v3895, 0
        %v3945 = vsel %vm1036, %v3896, 0
        %v3948 = vsel %vm1036, %v3897, 0
        %v3951 = vsel %vm1036, %v3898, 0
        %v3954 = vsel %vm1036, %v3899, 0
        %v3957 = vsel %vm1036, %v3900, 0
        %v3960 = vsel %vm1036, %v3901, 0
        %v3963 = vsel %vm1036, %v3902, 0
        %v3966 = vsel %vm1036, %v3903, 0
        %v3969 = vsel %vm1036, %v3904, 0
        %v3972 = vsel %vm1036, %v3905, 0
        %v3975 = vsel %vm1036, %v3906, 0
        %v3978 = vsel %vm1036, %v3907, 0
        %v3981 = vsel %vm1036, %v3908, 0
        %v3984 = vsel %vm1036, %v3909, 0
        %v3987 = vsel %vm1036, %v3910, 0
        %v3990 = vsel %vm1036, %v3911, 0
        %v3993 = vsel %vm1036, %v3912, 0
        %v3996 = vsel %vm1036, %v3913, 0
        %v3999 = vsel %vm1036, %v3914, 0
        %v4002 = vsel %vm1036, %v3915, 0
        %v4005 = vsel %vm1036, %v3916, 0
        %v4008 = vsel %vm1036, %v3917, 0
        %v4011 = vsel %vm1036, %v3918, 0
        %v4014 = vsel %vm1036, %v3919, 0
        %v4017 = vsel %vm1036, %v3920, 0
        %v4020 = vsel %vm1036, %v3921, 0
        %v4023 = vsel %vm1036, %v3922, 0
        %v4026 = vsel %vm1036, %v3923, 0
        %v4029 = vsel %vm1036, %v3924, 0
        %v4032 = vsel %vm1036, %v3925, 0
        %v4035 = vsel %vm1145, %v961, 0
        %4037 = vmatprep.subr.mxu0 0.0
        %4038 = vmatpush1.msra.mxu0 0.0
        %4039 = vmatprep.subr.mxu0 0.0
        %4040 = vmatpush1.msra.mxu0 0.0
        %4041 = vmatprep.subr.mxu0 0.0
        %4042 = vmatpush1.msra.mxu0 0.0
        %4043 = vmatprep.subr.mxu0 0.0
        %4044 = vmatpush1.msra.mxu0 0.0
        %4045 = vmatprep.subr.mxu0 0.0
        %4046 = vmatpush1.msra.mxu0 0.0
        %4047 = vmatprep.subr.mxu0 0.0
        %4048 = vmatpush1.msra.mxu0 0.0
        %4049 = vmatprep.subr.mxu0 0.0
        %4050 = vmatpush1.msra.mxu0 0.0
        %4051 = vmatprep.subr.mxu0 0.0
        %4052 = vmatpush1.msra.mxu0 0.0
        %4053 = vmatprep.subr.mxu0 0.0
        %4054 = vmatpush1.msra.mxu0 0.0
        %4055 = vmatprep.subr.mxu0 0.0
        %4056 = vmatpush1.msra.mxu0 0.0
        %4057 = vmatprep.subr.mxu0 0.0
        %4058 = vmatpush1.msra.mxu0 0.0
        %4059 = vmatprep.subr.mxu0 0.0
        %4060 = vmatpush1.msra.mxu0 0.0
        %4061 = vmatprep.subr.mxu0 0.0
        %4062 = vmatpush1.msra.mxu0 0.0
        %4063 = vmatprep.subr.mxu0 0.0
        %4064 = vmatpush1.msra.mxu0 0.0
        %4065 = vmatprep.subr.mxu0 0.0
        %4066 = vmatpush1.msra.mxu0 0.0
        %4067 = vmatprep.subr.mxu0 0.0
        %4068 = vmatpush1.msra.mxu0 %v4035
        %4069 = vmatprep.subr.mxu0 0.0
        %4070 = vmatpush2.msra.mxu0 0.0
        %4071 = vmatprep.subr.mxu0 0.0
        %4072 = vmatpush2.msra.mxu0 0.0
        %4073 = vmatprep.subr.mxu0 0.0
        %4074 = vmatpush2.msra.mxu0 0.0
        %4075 = vmatprep.subr.mxu0 0.0
        %4076 = vmatpush2.msra.mxu0 0.0
        %4077 = vmatprep.subr.mxu0 0.0
        %4078 = vmatpush2.msra.mxu0 0.0
        %4079 = vmatprep.subr.mxu0 0.0
        %4080 = vmatpush2.msra.mxu0 0.0
        %4081 = vmatprep.subr.mxu0 0.0
        %4082 = vmatpush2.msra.mxu0 0.0
        %4083 = vmatprep.subr.mxu0 0.0
        %4084 = vmatpush2.msra.mxu0 0.0
        %4085 = vmatprep.subr.mxu0 0.0
        %4086 = vmatpush2.msra.mxu0 0.0
        %4087 = vmatprep.subr.mxu0 0.0
        %4088 = vmatpush2.msra.mxu0 0.0
        %4089 = vmatprep.subr.mxu0 0.0
        %4090 = vmatpush2.msra.mxu0 0.0
        %4091 = vmatprep.subr.mxu0 0.0
        %4092 = vmatpush2.msra.mxu0 0.0
        %4093 = vmatprep.subr.mxu0 0.0
        %4094 = vmatpush2.msra.mxu0 0.0
        %4095 = vmatprep.subr.mxu0 0.0
        %4096 = vmatpush2.msra.mxu0 0.0
        %4097 = vmatprep.subr.mxu0 0.0
        %4098 = vmatpush2.msra.mxu0 0.0
        %4099 = vmatprep.subr.mxu0 0.0
        %4100 = vmatpush2.msra.mxu0 0.0
        %4101 = vmatprep.mubr.f32.mxu0 0.0
        %4102 = vmatmul.mubr.f32.gmra.mxu0 %v3927
        %v4103 = vpop.f32.mrf.mxu0
        %v4104 = vadd.f32 0.0, %v4103
        %v4105 = vpop.f32.mrf.mxu0
        %4106 = vmatprep.mubr.f32.mxu0 0.0
        %4107 = vmatmul.mubr.f32.gmra.mxu0 %v3930
        %v4108 = vpop.f32.mrf.mxu0
        %v4109 = vadd.f32 0.0, %v4108
        %v4110 = vpop.f32.mrf.mxu0
        %4111 = vmatprep.mubr.f32.mxu0 0.0
        %4112 = vmatmul.mubr.f32.gmra.mxu0 %v3933
        %v4113 = vpop.f32.mrf.mxu0
        %v4114 = vadd.f32 0.0, %v4113
        %v4115 = vpop.f32.mrf.mxu0
        %4116 = vmatprep.mubr.f32.mxu0 0.0
        %4117 = vmatmul.mubr.f32.gmra.mxu0 %v3936
        %v4118 = vpop.f32.mrf.mxu0
        %v4119 = vadd.f32 0.0, %v4118
        %v4120 = vpop.f32.mrf.mxu0
        %4121 = vmatprep.mubr.f32.mxu0 0.0
        %4122 = vmatmul.mubr.f32.gmra.mxu0 %v3939
        %v4123 = vpop.f32.mrf.mxu0
        %v4124 = vadd.f32 0.0, %v4123
        %v4125 = vpop.f32.mrf.mxu0
        %4126 = vmatprep.mubr.f32.mxu0 0.0
        %4127 = vmatmul.mubr.f32.gmra.mxu0 %v3942
        %v4128 = vpop.f32.mrf.mxu0
        %v4129 = vadd.f32 0.0, %v4128
        %v4130 = vpop.f32.mrf.mxu0
        %4131 = vmatprep.mubr.f32.mxu0 0.0
        %4132 = vmatmul.mubr.f32.gmra.mxu0 %v3945
        %v4133 = vpop.f32.mrf.mxu0
        %v4134 = vadd.f32 0.0, %v4133
        %v4135 = vpop.f32.mrf.mxu0
        %4136 = vmatprep.mubr.f32.mxu0 0.0
        %4137 = vmatmul.mubr.f32.gmra.mxu0 %v3948
        %v4138 = vpop.f32.mrf.mxu0
        %v4139 = vadd.f32 0.0, %v4138
        %v4140 = vpop.f32.mrf.mxu0
        %4141 = vmatprep.mubr.f32.mxu0 0.0
        %4142 = vmatmul.mubr.f32.gmra.mxu0 %v3951
        %v4143 = vpop.f32.mrf.mxu0
        %v4144 = vadd.f32 0.0, %v4143
        %v4145 = vpop.f32.mrf.mxu0
        %4146 = vmatprep.mubr.f32.mxu0 0.0
        %4147 = vmatmul.mubr.f32.gmra.mxu0 %v3954
        %v4148 = vpop.f32.mrf.mxu0
        %v4149 = vadd.f32 0.0, %v4148
        %v4150 = vpop.f32.mrf.mxu0
        %4151 = vmatprep.mubr.f32.mxu0 0.0
        %4152 = vmatmul.mubr.f32.gmra.mxu0 %v3957
        %v4153 = vpop.f32.mrf.mxu0
        %v4154 = vadd.f32 0.0, %v4153
        %v4155 = vpop.f32.mrf.mxu0
        %4156 = vmatprep.mubr.f32.mxu0 0.0
        %4157 = vmatmul.mubr.f32.gmra.mxu0 %v3960
        %v4158 = vpop.f32.mrf.mxu0
        %v4159 = vadd.f32 0.0, %v4158
        %v4160 = vpop.f32.mrf.mxu0
        %4161 = vmatprep.mubr.f32.mxu0 0.0
        %4162 = vmatmul.mubr.f32.gmra.mxu0 %v3963
        %v4163 = vpop.f32.mrf.mxu0
        %v4164 = vadd.f32 0.0, %v4163
        %v4165 = vpop.f32.mrf.mxu0
        %4166 = vmatprep.mubr.f32.mxu0 0.0
        %4167 = vmatmul.mubr.f32.gmra.mxu0 %v3966
        %v4168 = vpop.f32.mrf.mxu0
        %v4169 = vadd.f32 0.0, %v4168
        %v4170 = vpop.f32.mrf.mxu0
        %4171 = vmatprep.mubr.f32.mxu0 0.0
        %4172 = vmatmul.mubr.f32.gmra.mxu0 %v3969
        %v4173 = vpop.f32.mrf.mxu0
        %v4174 = vadd.f32 0.0, %v4173
        %v4175 = vpop.f32.mrf.mxu0
        %4176 = vmatprep.mubr.f32.mxu0 0.0
        %4177 = vmatmul.mubr.f32.gmra.mxu0 %v3972
        %v4178 = vpop.f32.mrf.mxu0
        %v4179 = vadd.f32 0.0, %v4178
        %v4180 = vpop.f32.mrf.mxu0
        %4181 = vmatprep.mubr.f32.mxu0 0.0
        %4182 = vmatmul.mubr.f32.gmra.mxu0 %v3975
        %v4183 = vpop.f32.mrf.mxu0
        %v4184 = vadd.f32 0.0, %v4183
        %v4185 = vpop.f32.mrf.mxu0
        %4186 = vmatprep.mubr.f32.mxu0 0.0
        %4187 = vmatmul.mubr.f32.gmra.mxu0 %v3978
        %v4188 = vpop.f32.mrf.mxu0
        %v4189 = vadd.f32 0.0, %v4188
        %v4190 = vpop.f32.mrf.mxu0
        %4191 = vmatprep.mubr.f32.mxu0 0.0
        %4192 = vmatmul.mubr.f32.gmra.mxu0 %v3981
        %v4193 = vpop.f32.mrf.mxu0
        %v4194 = vadd.f32 0.0, %v4193
        %v4195 = vpop.f32.mrf.mxu0
        %4196 = vmatprep.mubr.f32.mxu0 0.0
        %4197 = vmatmul.mubr.f32.gmra.mxu0 %v3984
        %v4198 = vpop.f32.mrf.mxu0
        %v4199 = vadd.f32 0.0, %v4198
        %v4200 = vpop.f32.mrf.mxu0
        %4201 = vmatprep.mubr.f32.mxu0 0.0
        %4202 = vmatmul.mubr.f32.gmra.mxu0 %v3987
        %v4203 = vpop.f32.mrf.mxu0
        %v4204 = vadd.f32 0.0, %v4203
        %v4205 = vpop.f32.mrf.mxu0
        %4206 = vmatprep.mubr.f32.mxu0 0.0
        %4207 = vmatmul.mubr.f32.gmra.mxu0 %v3990
        %v4208 = vpop.f32.mrf.mxu0
        %v4209 = vadd.f32 0.0, %v4208
        %v4210 = vpop.f32.mrf.mxu0
        %4211 = vmatprep.mubr.f32.mxu0 0.0
        %4212 = vmatmul.mubr.f32.gmra.mxu0 %v3993
        %v4213 = vpop.f32.mrf.mxu0
        %v4214 = vadd.f32 0.0, %v4213
        %v4215 = vpop.f32.mrf.mxu0
        %4216 = vmatprep.mubr.f32.mxu0 0.0
        %4217 = vmatmul.mubr.f32.gmra.mxu0 %v3996
        %v4218 = vpop.f32.mrf.mxu0
        %v4219 = vadd.f32 0.0, %v4218
        %v4220 = vpop.f32.mrf.mxu0
        %4221 = vmatprep.mubr.f32.mxu0 0.0
        %4222 = vmatmul.mubr.f32.gmra.mxu0 %v3999
        %v4223 = vpop.f32.mrf.mxu0
        %v4224 = vadd.f32 0.0, %v4223
        %v4225 = vpop.f32.mrf.mxu0
        %4226 = vmatprep.mubr.f32.mxu0 0.0
        %4227 = vmatmul.mubr.f32.gmra.mxu0 %v4002
        %v4228 = vpop.f32.mrf.mxu0
        %v4229 = vadd.f32 0.0, %v4228
        %v4230 = vpop.f32.mrf.mxu0
        %4231 = vmatprep.mubr.f32.mxu0 0.0
        %4232 = vmatmul.mubr.f32.gmra.mxu0 %v4005
        %v4233 = vpop.f32.mrf.mxu0
        %v4234 = vadd.f32 0.0, %v4233
        %v4235 = vpop.f32.mrf.mxu0
        %4236 = vmatprep.mubr.f32.mxu0 0.0
        %4237 = vmatmul.mubr.f32.gmra.mxu0 %v4008
        %v4238 = vpop.f32.mrf.mxu0
        %v4239 = vadd.f32 0.0, %v4238
        %v4240 = vpop.f32.mrf.mxu0
        %4241 = vmatprep.mubr.f32.mxu0 0.0
        %4242 = vmatmul.mubr.f32.gmra.mxu0 %v4011
        %v4243 = vpop.f32.mrf.mxu0
        %v4244 = vadd.f32 0.0, %v4243
        %v4245 = vpop.f32.mrf.mxu0
        %4246 = vmatprep.mubr.f32.mxu0 0.0
        %4247 = vmatmul.mubr.f32.gmra.mxu0 %v4014
        %v4248 = vpop.f32.mrf.mxu0
        %v4249 = vadd.f32 0.0, %v4248
        %v4250 = vpop.f32.mrf.mxu0
        %4251 = vmatprep.mubr.f32.mxu0 0.0
        %4252 = vmatmul.mubr.f32.gmra.mxu0 %v4017
        %v4253 = vpop.f32.mrf.mxu0
        %v4254 = vadd.f32 0.0, %v4253
        %v4255 = vpop.f32.mrf.mxu0
        %4256 = vmatprep.mubr.f32.mxu0 0.0
        %4257 = vmatmul.mubr.f32.gmra.mxu0 %v4020
        %v4258 = vpop.f32.mrf.mxu0
        %v4259 = vadd.f32 0.0, %v4258
        %v4260 = vpop.f32.mrf.mxu0
        %4261 = vmatprep.mubr.f32.mxu0 0.0
        %4262 = vmatmul.mubr.f32.gmra.mxu0 %v4023
        %v4263 = vpop.f32.mrf.mxu0
        %v4264 = vadd.f32 0.0, %v4263
        %v4265 = vpop.f32.mrf.mxu0
        %4266 = vmatprep.mubr.f32.mxu0 0.0
        %4267 = vmatmul.mubr.f32.gmra.mxu0 %v4026
        %v4268 = vpop.f32.mrf.mxu0
        %v4269 = vadd.f32 0.0, %v4268
        %v4270 = vpop.f32.mrf.mxu0
        %4271 = vmatprep.mubr.f32.mxu0 0.0
        %4272 = vmatmul.mubr.f32.gmra.mxu0 %v4029
        %v4273 = vpop.f32.mrf.mxu0
        %v4274 = vadd.f32 0.0, %v4273
        %v4275 = vpop.f32.mrf.mxu0
        %4276 = vmatprep.mubr.f32.mxu0 0.0
        %4277 = vmatmul.mubr.f32.gmra.mxu0 %v4032
        %v4278 = vpop.f32.mrf.mxu0
        %v4279 = vadd.f32 0.0, %v4278
        %v4280 = vpop.f32.mrf.mxu0
        %4281 = vdwg.mxu0
        %v4282 = vadd.f32 %v3854, %v4104
        %v4283 = vadd.f32 %v3855, %v4109
        %v4284 = vadd.f32 %v3856, %v4114
        %v4285 = vadd.f32 %v3857, %v4119
        %v4286 = vadd.f32 %v3858, %v4124
        %v4287 = vadd.f32 %v3859, %v4129
        %v4288 = vadd.f32 %v3860, %v4134
        %v4289 = vadd.f32 %v3861, %v4139
        %v4290 = vadd.f32 %v3862, %v4144
        %v4291 = vadd.f32 %v3863, %v4149
        %v4292 = vadd.f32 %v3864, %v4154
        %v4293 = vadd.f32 %v3865, %v4159
        %v4294 = vadd.f32 %v3866, %v4164
        %v4295 = vadd.f32 %v3867, %v4169
        %v4296 = vadd.f32 %v3868, %v4174
        %v4297 = vadd.f32 %v3869, %v4179
        %v4298 = vadd.f32 %v3870, %v4184
        %v4299 = vadd.f32 %v3871, %v4189
        %v4300 = vadd.f32 %v3872, %v4194
        %v4301 = vadd.f32 %v3873, %v4199
        %v4302 = vadd.f32 %v3874, %v4204
        %v4303 = vadd.f32 %v3875, %v4209
        %v4304 = vadd.f32 %v3876, %v4214
        %v4305 = vadd.f32 %v3877, %v4219
        %v4306 = vadd.f32 %v3878, %v4224
        %v4307 = vadd.f32 %v3879, %v4229
        %v4308 = vadd.f32 %v3880, %v4234
        %v4309 = vadd.f32 %v3881, %v4239
        %v4310 = vadd.f32 %v3882, %v4244
        %v4311 = vadd.f32 %v3883, %v4249
        %v4312 = vadd.f32 %v3884, %v4254
        %v4313 = vadd.f32 %v3885, %v4259
        %v4314 = vadd.f32 %v3886, %v4264
        %v4315 = vadd.f32 %v3887, %v4269
        %v4316 = vadd.f32 %v3888, %v4274
        %v4317 = vadd.f32 %v3889, %v4279
        %v4318 = vld [vmem:[%s299 + $0x26] sm:$0xff]
        %v4319 = vld [vmem:[%s299 + $0x2e] sm:$0xff]
        %v4320 = vld [vmem:[%s299 + $0x36] sm:$0xff]
        %v4321 = vld [vmem:[%s299 + $0x3e] sm:$0xff]
        %v4322 = vld [vmem:[%s299 + $0x46] sm:$0xff]
        %v4323 = vld [vmem:[%s299 + $0x4e] sm:$0xff]
        %v4324 = vld [vmem:[%s299 + $0x56] sm:$0xff]
        %v4325 = vld [vmem:[%s299 + $0x5e] sm:$0xff]
        %v4326 = vld [vmem:[%s299 + $0x66] sm:$0xff]
        %v4327 = vld [vmem:[%s299 + $0x6e] sm:$0xff]
        %v4328 = vld [vmem:[%s299 + $0x76] sm:$0xff]
        %v4329 = vld [vmem:[%s299 + $0x7e] sm:$0xff]
        %v4330 = vld [vmem:[%s299 + $0x86] sm:$0xff]
        %v4331 = vld [vmem:[%s299 + $0x8e] sm:$0xff]
        %v4332 = vld [vmem:[%s299 + $0x96] sm:$0xff]
        %v4333 = vld [vmem:[%s299 + $0x9e] sm:$0xff]
        %v4334 = vld [vmem:[%s299 + $0xa6] sm:$0xff]
        %v4335 = vld [vmem:[%s299 + $0xae] sm:$0xff]
        %v4336 = vld [vmem:[%s299 + $0xb6] sm:$0xff]
        %v4337 = vld [vmem:[%s299 + $0xbe] sm:$0xff]
        %v4338 = vld [vmem:[%s299 + $0xc6] sm:$0xff]
        %v4339 = vld [vmem:[%s299 + $0xce] sm:$0xff]
        %v4340 = vld [vmem:[%s299 + $0xd6] sm:$0xff]
        %v4341 = vld [vmem:[%s299 + $0xde] sm:$0xff]
        %v4342 = vld [vmem:[%s299 + $0xe6] sm:$0xff]
        %v4343 = vld [vmem:[%s299 + $0xee] sm:$0xff]
        %v4344 = vld [vmem:[%s299 + $0xf6] sm:$0xff]
        %v4345 = vld [vmem:[%s299 + $0xfe] sm:$0xff]
        %v4346 = vld [vmem:[%s299 + $0x106] sm:$0xff]
        %v4347 = vld [vmem:[%s299 + $0x10e] sm:$0xff]
        %v4348 = vld [vmem:[%s299 + $0x116] sm:$0xff]
        %v4349 = vld [vmem:[%s299 + $0x11e] sm:$0xff]
        %v4350 = vld [vmem:[%s299 + $0x126] sm:$0xff]
        %v4351 = vld [vmem:[%s299 + $0x12e] sm:$0xff]
        %v4352 = vld [vmem:[%s299 + $0x136] sm:$0xff]
        %v4353 = vld [vmem:[%s299 + $0x13e] sm:$0xff]
        %v4355 = vsel %vm1036, %v4318, 0
        %v4358 = vsel %vm1036, %v4319, 0
        %v4361 = vsel %vm1036, %v4320, 0
        %v4364 = vsel %vm1036, %v4321, 0
        %v4367 = vsel %vm1036, %v4322, 0
        %v4370 = vsel %vm1036, %v4323, 0
        %v4373 = vsel %vm1036, %v4324, 0
        %v4376 = vsel %vm1036, %v4325, 0
        %v4379 = vsel %vm1036, %v4326, 0
        %v4382 = vsel %vm1036, %v4327, 0
        %v4385 = vsel %vm1036, %v4328, 0
        %v4388 = vsel %vm1036, %v4329, 0
        %v4391 = vsel %vm1036, %v4330, 0
        %v4394 = vsel %vm1036, %v4331, 0
        %v4397 = vsel %vm1036, %v4332, 0
        %v4400 = vsel %vm1036, %v4333, 0
        %v4403 = vsel %vm1036, %v4334, 0
        %v4406 = vsel %vm1036, %v4335, 0
        %v4409 = vsel %vm1036, %v4336, 0
        %v4412 = vsel %vm1036, %v4337, 0
        %v4415 = vsel %vm1036, %v4338, 0
        %v4418 = vsel %vm1036, %v4339, 0
        %v4421 = vsel %vm1036, %v4340, 0
        %v4424 = vsel %vm1036, %v4341, 0
        %v4427 = vsel %vm1036, %v4342, 0
        %v4430 = vsel %vm1036, %v4343, 0
        %v4433 = vsel %vm1036, %v4344, 0
        %v4436 = vsel %vm1036, %v4345, 0
        %v4439 = vsel %vm1036, %v4346, 0
        %v4442 = vsel %vm1036, %v4347, 0
        %v4445 = vsel %vm1036, %v4348, 0
        %v4448 = vsel %vm1036, %v4349, 0
        %v4451 = vsel %vm1036, %v4350, 0
        %v4454 = vsel %vm1036, %v4351, 0
        %v4457 = vsel %vm1036, %v4352, 0
        %v4460 = vsel %vm1036, %v4353, 0
        %v4463 = vsel %vm1145, %v962, 0
        %4465 = vmatprep.subr.mxu0 0.0
        %4466 = vmatpush1.msra.mxu0 0.0
        %4467 = vmatprep.subr.mxu0 0.0
        %4468 = vmatpush1.msra.mxu0 0.0
        %4469 = vmatprep.subr.mxu0 0.0
        %4470 = vmatpush1.msra.mxu0 0.0
        %4471 = vmatprep.subr.mxu0 0.0
        %4472 = vmatpush1.msra.mxu0 0.0
        %4473 = vmatprep.subr.mxu0 0.0
        %4474 = vmatpush1.msra.mxu0 0.0
        %4475 = vmatprep.subr.mxu0 0.0
        %4476 = vmatpush1.msra.mxu0 0.0
        %4477 = vmatprep.subr.mxu0 0.0
        %4478 = vmatpush1.msra.mxu0 0.0
        %4479 = vmatprep.subr.mxu0 0.0
        %4480 = vmatpush1.msra.mxu0 0.0
        %4481 = vmatprep.subr.mxu0 0.0
        %4482 = vmatpush1.msra.mxu0 0.0
        %4483 = vmatprep.subr.mxu0 0.0
        %4484 = vmatpush1.msra.mxu0 0.0
        %4485 = vmatprep.subr.mxu0 0.0
        %4486 = vmatpush1.msra.mxu0 0.0
        %4487 = vmatprep.subr.mxu0 0.0
        %4488 = vmatpush1.msra.mxu0 0.0
        %4489 = vmatprep.subr.mxu0 0.0
        %4490 = vmatpush1.msra.mxu0 0.0
        %4491 = vmatprep.subr.mxu0 0.0
        %4492 = vmatpush1.msra.mxu0 0.0
        %4493 = vmatprep.subr.mxu0 0.0
        %4494 = vmatpush1.msra.mxu0 0.0
        %4495 = vmatprep.subr.mxu0 0.0
        %4496 = vmatpush1.msra.mxu0 %v4463
        %4497 = vmatprep.subr.mxu0 0.0
        %4498 = vmatpush2.msra.mxu0 0.0
        %4499 = vmatprep.subr.mxu0 0.0
        %4500 = vmatpush2.msra.mxu0 0.0
        %4501 = vmatprep.subr.mxu0 0.0
        %4502 = vmatpush2.msra.mxu0 0.0
        %4503 = vmatprep.subr.mxu0 0.0
        %4504 = vmatpush2.msra.mxu0 0.0
        %4505 = vmatprep.subr.mxu0 0.0
        %4506 = vmatpush2.msra.mxu0 0.0
        %4507 = vmatprep.subr.mxu0 0.0
        %4508 = vmatpush2.msra.mxu0 0.0
        %4509 = vmatprep.subr.mxu0 0.0
        %4510 = vmatpush2.msra.mxu0 0.0
        %4511 = vmatprep.subr.mxu0 0.0
        %4512 = vmatpush2.msra.mxu0 0.0
        %4513 = vmatprep.subr.mxu0 0.0
        %4514 = vmatpush2.msra.mxu0 0.0
        %4515 = vmatprep.subr.mxu0 0.0
        %4516 = vmatpush2.msra.mxu0 0.0
        %4517 = vmatprep.subr.mxu0 0.0
        %4518 = vmatpush2.msra.mxu0 0.0
        %4519 = vmatprep.subr.mxu0 0.0
        %4520 = vmatpush2.msra.mxu0 0.0
        %4521 = vmatprep.subr.mxu0 0.0
        %4522 = vmatpush2.msra.mxu0 0.0
        %4523 = vmatprep.subr.mxu0 0.0
        %4524 = vmatpush2.msra.mxu0 0.0
        %4525 = vmatprep.subr.mxu0 0.0
        %4526 = vmatpush2.msra.mxu0 0.0
        %4527 = vmatprep.subr.mxu0 0.0
        %4528 = vmatpush2.msra.mxu0 0.0
        %4529 = vmatprep.mubr.f32.mxu0 0.0
        %4530 = vmatmul.mubr.f32.gmra.mxu0 %v4355
        %v4531 = vpop.f32.mrf.mxu0
        %v4532 = vadd.f32 0.0, %v4531
        %v4533 = vpop.f32.mrf.mxu0
        %4534 = vmatprep.mubr.f32.mxu0 0.0
        %4535 = vmatmul.mubr.f32.gmra.mxu0 %v4358
        %v4536 = vpop.f32.mrf.mxu0
        %v4537 = vadd.f32 0.0, %v4536
        %v4538 = vpop.f32.mrf.mxu0
        %4539 = vmatprep.mubr.f32.mxu0 0.0
        %4540 = vmatmul.mubr.f32.gmra.mxu0 %v4361
        %v4541 = vpop.f32.mrf.mxu0
        %v4542 = vadd.f32 0.0, %v4541
        %v4543 = vpop.f32.mrf.mxu0
        %4544 = vmatprep.mubr.f32.mxu0 0.0
        %4545 = vmatmul.mubr.f32.gmra.mxu0 %v4364
        %v4546 = vpop.f32.mrf.mxu0
        %v4547 = vadd.f32 0.0, %v4546
        %v4548 = vpop.f32.mrf.mxu0
        %4549 = vmatprep.mubr.f32.mxu0 0.0
        %4550 = vmatmul.mubr.f32.gmra.mxu0 %v4367
        %v4551 = vpop.f32.mrf.mxu0
        %v4552 = vadd.f32 0.0, %v4551
        %v4553 = vpop.f32.mrf.mxu0
        %4554 = vmatprep.mubr.f32.mxu0 0.0
        %4555 = vmatmul.mubr.f32.gmra.mxu0 %v4370
        %v4556 = vpop.f32.mrf.mxu0
        %v4557 = vadd.f32 0.0, %v4556
        %v4558 = vpop.f32.mrf.mxu0
        %4559 = vmatprep.mubr.f32.mxu0 0.0
        %4560 = vmatmul.mubr.f32.gmra.mxu0 %v4373
        %v4561 = vpop.f32.mrf.mxu0
        %v4562 = vadd.f32 0.0, %v4561
        %v4563 = vpop.f32.mrf.mxu0
        %4564 = vmatprep.mubr.f32.mxu0 0.0
        %4565 = vmatmul.mubr.f32.gmra.mxu0 %v4376
        %v4566 = vpop.f32.mrf.mxu0
        %v4567 = vadd.f32 0.0, %v4566
        %v4568 = vpop.f32.mrf.mxu0
        %4569 = vmatprep.mubr.f32.mxu0 0.0
        %4570 = vmatmul.mubr.f32.gmra.mxu0 %v4379
        %v4571 = vpop.f32.mrf.mxu0
        %v4572 = vadd.f32 0.0, %v4571
        %v4573 = vpop.f32.mrf.mxu0
        %4574 = vmatprep.mubr.f32.mxu0 0.0
        %4575 = vmatmul.mubr.f32.gmra.mxu0 %v4382
        %v4576 = vpop.f32.mrf.mxu0
        %v4577 = vadd.f32 0.0, %v4576
        %v4578 = vpop.f32.mrf.mxu0
        %4579 = vmatprep.mubr.f32.mxu0 0.0
        %4580 = vmatmul.mubr.f32.gmra.mxu0 %v4385
        %v4581 = vpop.f32.mrf.mxu0
        %v4582 = vadd.f32 0.0, %v4581
        %v4583 = vpop.f32.mrf.mxu0
        %4584 = vmatprep.mubr.f32.mxu0 0.0
        %4585 = vmatmul.mubr.f32.gmra.mxu0 %v4388
        %v4586 = vpop.f32.mrf.mxu0
        %v4587 = vadd.f32 0.0, %v4586
        %v4588 = vpop.f32.mrf.mxu0
        %4589 = vmatprep.mubr.f32.mxu0 0.0
        %4590 = vmatmul.mubr.f32.gmra.mxu0 %v4391
        %v4591 = vpop.f32.mrf.mxu0
        %v4592 = vadd.f32 0.0, %v4591
        %v4593 = vpop.f32.mrf.mxu0
        %4594 = vmatprep.mubr.f32.mxu0 0.0
        %4595 = vmatmul.mubr.f32.gmra.mxu0 %v4394
        %v4596 = vpop.f32.mrf.mxu0
        %v4597 = vadd.f32 0.0, %v4596
        %v4598 = vpop.f32.mrf.mxu0
        %4599 = vmatprep.mubr.f32.mxu0 0.0
        %4600 = vmatmul.mubr.f32.gmra.mxu0 %v4397
        %v4601 = vpop.f32.mrf.mxu0
        %v4602 = vadd.f32 0.0, %v4601
        %v4603 = vpop.f32.mrf.mxu0
        %4604 = vmatprep.mubr.f32.mxu0 0.0
        %4605 = vmatmul.mubr.f32.gmra.mxu0 %v4400
        %v4606 = vpop.f32.mrf.mxu0
        %v4607 = vadd.f32 0.0, %v4606
        %v4608 = vpop.f32.mrf.mxu0
        %4609 = vmatprep.mubr.f32.mxu0 0.0
        %4610 = vmatmul.mubr.f32.gmra.mxu0 %v4403
        %v4611 = vpop.f32.mrf.mxu0
        %v4612 = vadd.f32 0.0, %v4611
        %v4613 = vpop.f32.mrf.mxu0
        %4614 = vmatprep.mubr.f32.mxu0 0.0
        %4615 = vmatmul.mubr.f32.gmra.mxu0 %v4406
        %v4616 = vpop.f32.mrf.mxu0
        %v4617 = vadd.f32 0.0, %v4616
        %v4618 = vpop.f32.mrf.mxu0
        %4619 = vmatprep.mubr.f32.mxu0 0.0
        %4620 = vmatmul.mubr.f32.gmra.mxu0 %v4409
        %v4621 = vpop.f32.mrf.mxu0
        %v4622 = vadd.f32 0.0, %v4621
        %v4623 = vpop.f32.mrf.mxu0
        %4624 = vmatprep.mubr.f32.mxu0 0.0
        %4625 = vmatmul.mubr.f32.gmra.mxu0 %v4412
        %v4626 = vpop.f32.mrf.mxu0
        %v4627 = vadd.f32 0.0, %v4626
        %v4628 = vpop.f32.mrf.mxu0
        %4629 = vmatprep.mubr.f32.mxu0 0.0
        %4630 = vmatmul.mubr.f32.gmra.mxu0 %v4415
        %v4631 = vpop.f32.mrf.mxu0
        %v4632 = vadd.f32 0.0, %v4631
        %v4633 = vpop.f32.mrf.mxu0
        %4634 = vmatprep.mubr.f32.mxu0 0.0
        %4635 = vmatmul.mubr.f32.gmra.mxu0 %v4418
        %v4636 = vpop.f32.mrf.mxu0
        %v4637 = vadd.f32 0.0, %v4636
        %v4638 = vpop.f32.mrf.mxu0
        %4639 = vmatprep.mubr.f32.mxu0 0.0
        %4640 = vmatmul.mubr.f32.gmra.mxu0 %v4421
        %v4641 = vpop.f32.mrf.mxu0
        %v4642 = vadd.f32 0.0, %v4641
        %v4643 = vpop.f32.mrf.mxu0
        %4644 = vmatprep.mubr.f32.mxu0 0.0
        %4645 = vmatmul.mubr.f32.gmra.mxu0 %v4424
        %v4646 = vpop.f32.mrf.mxu0
        %v4647 = vadd.f32 0.0, %v4646
        %v4648 = vpop.f32.mrf.mxu0
        %4649 = vmatprep.mubr.f32.mxu0 0.0
        %4650 = vmatmul.mubr.f32.gmra.mxu0 %v4427
        %v4651 = vpop.f32.mrf.mxu0
        %v4652 = vadd.f32 0.0, %v4651
        %v4653 = vpop.f32.mrf.mxu0
        %4654 = vmatprep.mubr.f32.mxu0 0.0
        %4655 = vmatmul.mubr.f32.gmra.mxu0 %v4430
        %v4656 = vpop.f32.mrf.mxu0
        %v4657 = vadd.f32 0.0, %v4656
        %v4658 = vpop.f32.mrf.mxu0
        %4659 = vmatprep.mubr.f32.mxu0 0.0
        %4660 = vmatmul.mubr.f32.gmra.mxu0 %v4433
        %v4661 = vpop.f32.mrf.mxu0
        %v4662 = vadd.f32 0.0, %v4661
        %v4663 = vpop.f32.mrf.mxu0
        %4664 = vmatprep.mubr.f32.mxu0 0.0
        %4665 = vmatmul.mubr.f32.gmra.mxu0 %v4436
        %v4666 = vpop.f32.mrf.mxu0
        %v4667 = vadd.f32 0.0, %v4666
        %v4668 = vpop.f32.mrf.mxu0
        %4669 = vmatprep.mubr.f32.mxu0 0.0
        %4670 = vmatmul.mubr.f32.gmra.mxu0 %v4439
        %v4671 = vpop.f32.mrf.mxu0
        %v4672 = vadd.f32 0.0, %v4671
        %v4673 = vpop.f32.mrf.mxu0
        %4674 = vmatprep.mubr.f32.mxu0 0.0
        %4675 = vmatmul.mubr.f32.gmra.mxu0 %v4442
        %v4676 = vpop.f32.mrf.mxu0
        %v4677 = vadd.f32 0.0, %v4676
        %v4678 = vpop.f32.mrf.mxu0
        %4679 = vmatprep.mubr.f32.mxu0 0.0
        %4680 = vmatmul.mubr.f32.gmra.mxu0 %v4445
        %v4681 = vpop.f32.mrf.mxu0
        %v4682 = vadd.f32 0.0, %v4681
        %v4683 = vpop.f32.mrf.mxu0
        %4684 = vmatprep.mubr.f32.mxu0 0.0
        %4685 = vmatmul.mubr.f32.gmra.mxu0 %v4448
        %v4686 = vpop.f32.mrf.mxu0
        %v4687 = vadd.f32 0.0, %v4686
        %v4688 = vpop.f32.mrf.mxu0
        %4689 = vmatprep.mubr.f32.mxu0 0.0
        %4690 = vmatmul.mubr.f32.gmra.mxu0 %v4451
        %v4691 = vpop.f32.mrf.mxu0
        %v4692 = vadd.f32 0.0, %v4691
        %v4693 = vpop.f32.mrf.mxu0
        %4694 = vmatprep.mubr.f32.mxu0 0.0
        %4695 = vmatmul.mubr.f32.gmra.mxu0 %v4454
        %v4696 = vpop.f32.mrf.mxu0
        %v4697 = vadd.f32 0.0, %v4696
        %v4698 = vpop.f32.mrf.mxu0
        %4699 = vmatprep.mubr.f32.mxu0 0.0
        %4700 = vmatmul.mubr.f32.gmra.mxu0 %v4457
        %v4701 = vpop.f32.mrf.mxu0
        %v4702 = vadd.f32 0.0, %v4701
        %v4703 = vpop.f32.mrf.mxu0
        %4704 = vmatprep.mubr.f32.mxu0 0.0
        %4705 = vmatmul.mubr.f32.gmra.mxu0 %v4460
        %v4706 = vpop.f32.mrf.mxu0
        %v4707 = vadd.f32 0.0, %v4706
        %v4708 = vpop.f32.mrf.mxu0
        %4709 = vdwg.mxu0
        %v4710 = vadd.f32 %v4282, %v4532
        %v4711 = vadd.f32 %v4283, %v4537
        %v4712 = vadd.f32 %v4284, %v4542
        %v4713 = vadd.f32 %v4285, %v4547
        %v4714 = vadd.f32 %v4286, %v4552
        %v4715 = vadd.f32 %v4287, %v4557
        %v4716 = vadd.f32 %v4288, %v4562
        %v4717 = vadd.f32 %v4289, %v4567
        %v4718 = vadd.f32 %v4290, %v4572
        %v4719 = vadd.f32 %v4291, %v4577
        %v4720 = vadd.f32 %v4292, %v4582
        %v4721 = vadd.f32 %v4293, %v4587
        %v4722 = vadd.f32 %v4294, %v4592
        %v4723 = vadd.f32 %v4295, %v4597
        %v4724 = vadd.f32 %v4296, %v4602
        %v4725 = vadd.f32 %v4297, %v4607
        %v4726 = vadd.f32 %v4298, %v4612
        %v4727 = vadd.f32 %v4299, %v4617
        %v4728 = vadd.f32 %v4300, %v4622
        %v4729 = vadd.f32 %v4301, %v4627
        %v4730 = vadd.f32 %v4302, %v4632
        %v4731 = vadd.f32 %v4303, %v4637
        %v4732 = vadd.f32 %v4304, %v4642
        %v4733 = vadd.f32 %v4305, %v4647
        %v4734 = vadd.f32 %v4306, %v4652
        %v4735 = vadd.f32 %v4307, %v4657
        %v4736 = vadd.f32 %v4308, %v4662
        %v4737 = vadd.f32 %v4309, %v4667
        %v4738 = vadd.f32 %v4310, %v4672
        %v4739 = vadd.f32 %v4311, %v4677
        %v4740 = vadd.f32 %v4312, %v4682
        %v4741 = vadd.f32 %v4313, %v4687
        %v4742 = vadd.f32 %v4314, %v4692
        %v4743 = vadd.f32 %v4315, %v4697
        %v4744 = vadd.f32 %v4316, %v4702
        %v4745 = vadd.f32 %v4317, %v4707
        %v4747 = vlaneseq
        %v4748 = vshrl.u32 %v4747, 7
        %v4749 = vsub.s32 0, %v4748
        %v4750 = vrot.slane %v963, %v4749
        %v4752 = vadd.f32 %v4710, %v4750
        %v4753 = vadd.f32 %v4711, %v4750
        %v4754 = vadd.f32 %v4712, %v4750
        %v4755 = vadd.f32 %v4713, %v4750
        %v4756 = vadd.f32 %v4714, %v4750
        %v4757 = vadd.f32 %v4715, %v4750
        %v4758 = vadd.f32 %v4716, %v4750
        %v4759 = vadd.f32 %v4717, %v4750
        %v4760 = vadd.f32 %v4718, %v4750
        %v4761 = vadd.f32 %v4719, %v4750
        %v4762 = vadd.f32 %v4720, %v4750
        %v4763 = vadd.f32 %v4721, %v4750
        %v4764 = vadd.f32 %v4722, %v4750
        %v4765 = vadd.f32 %v4723, %v4750
        %v4766 = vadd.f32 %v4724, %v4750
        %v4767 = vadd.f32 %v4725, %v4750
        %v4768 = vadd.f32 %v4726, %v4750
        %v4769 = vadd.f32 %v4727, %v4750
        %v4770 = vadd.f32 %v4728, %v4750
        %v4771 = vadd.f32 %v4729, %v4750
        %v4772 = vadd.f32 %v4730, %v4750
        %v4773 = vadd.f32 %v4731, %v4750
        %v4774 = vadd.f32 %v4732, %v4750
        %v4775 = vadd.f32 %v4733, %v4750
        %v4776 = vadd.f32 %v4734, %v4750
        %v4777 = vadd.f32 %v4735, %v4750
        %v4778 = vadd.f32 %v4736, %v4750
        %v4779 = vadd.f32 %v4737, %v4750
        %v4780 = vadd.f32 %v4738, %v4750
        %v4781 = vadd.f32 %v4739, %v4750
        %v4782 = vadd.f32 %v4740, %v4750
        %v4783 = vadd.f32 %v4741, %v4750
        %v4784 = vadd.f32 %v4742, %v4750
        %v4785 = vadd.f32 %v4743, %v4750
        %v4786 = vadd.f32 %v4744, %v4750
        %v4787 = vadd.f32 %v4745, %v4750
        %v4788 = vmax.f32 %v4752, 0.0
        %v4789 = vmax.f32 %v4753, 0.0
        %v4790 = vmax.f32 %v4754, 0.0
        %v4791 = vmax.f32 %v4755, 0.0
        %v4792 = vmax.f32 %v4756, 0.0
        %v4793 = vmax.f32 %v4757, 0.0
        %v4794 = vmax.f32 %v4758, 0.0
        %v4795 = vmax.f32 %v4759, 0.0
        %v4796 = vmax.f32 %v4760, 0.0
        %v4797 = vmax.f32 %v4761, 0.0
        %v4798 = vmax.f32 %v4762, 0.0
        %v4799 = vmax.f32 %v4763, 0.0
        %v4800 = vmax.f32 %v4764, 0.0
        %v4801 = vmax.f32 %v4765, 0.0
        %v4802 = vmax.f32 %v4766, 0.0
        %v4803 = vmax.f32 %v4767, 0.0
        %v4804 = vmax.f32 %v4768, 0.0
        %v4805 = vmax.f32 %v4769, 0.0
        %v4806 = vmax.f32 %v4770, 0.0
        %v4807 = vmax.f32 %v4771, 0.0
        %v4808 = vmax.f32 %v4772, 0.0
        %v4809 = vmax.f32 %v4773, 0.0
        %v4810 = vmax.f32 %v4774, 0.0
        %v4811 = vmax.f32 %v4775, 0.0
        %v4812 = vmax.f32 %v4776, 0.0
        %v4813 = vmax.f32 %v4777, 0.0
        %v4814 = vmax.f32 %v4778, 0.0
        %v4815 = vmax.f32 %v4779, 0.0
        %v4816 = vmax.f32 %v4780, 0.0
        %v4817 = vmax.f32 %v4781, 0.0
        %v4818 = vmax.f32 %v4782, 0.0
        %v4819 = vmax.f32 %v4783, 0.0
        %v4820 = vmax.f32 %v4784, 0.0
        %v4821 = vmax.f32 %v4785, 0.0
        %v4822 = vmax.f32 %v4786, 0.0
        %v4823 = vmax.f32 %v4787, 0.0
        %v4824 = vsel %vm918, 1, 0
        %v4825 = vsel %vm919, 1, 0
        %v4826 = vsel %vm920, 1, 0
        %v4827 = vsel %vm921, 1, 0
        %v4828 = vsel %vm922, 1, 0
        %v4829 = vsel %vm923, 1, 0
        %v4830 = vsel %vm924, 1, 0
        %v4831 = vsel %vm925, 1, 0
        %v4832 = vsel %vm926, 1, 0
        %v4833 = vsel %vm927, 1, 0
        %v4834 = vsel %vm928, 1, 0
        %v4835 = vsel %vm929, 1, 0
        %v4836 = vsel %vm930, 1, 0
        %v4837 = vsel %vm931, 1, 0
        %v4838 = vsel %vm932, 1, 0
        %v4839 = vsel %vm933, 1, 0
        %v4840 = vsel %vm934, 1, 0
        %v4841 = vsel %vm935, 1, 0
        %v4842 = vsel %vm936, 1, 0
        %v4843 = vsel %vm937, 1, 0
        %v4844 = vsel %vm938, 1, 0
        %v4845 = vsel %vm939, 1, 0
        %v4846 = vsel %vm940, 1, 0
        %v4847 = vsel %vm941, 1, 0
        %v4848 = vsel %vm942, 1, 0
        %v4849 = vsel %vm943, 1, 0
        %v4850 = vsel %vm944, 1, 0
        %v4851 = vsel %vm945, 1, 0
        %v4852 = vsel %vm946, 1, 0
        %v4853 = vsel %vm947, 1, 0
        %v4854 = vsel %vm948, 1, 0
        %v4855 = vsel %vm949, 1, 0
        %v4856 = vsel %vm950, 1, 0
        %v4857 = vsel %vm951, 1, 0
        %v4858 = vsel %vm952, 1, 0
        %v4859 = vsel %vm953, 1, 0
        %vm4860 = vcmp.eq.s32.totalorder %v4824, 1
        %vm4861 = vcmp.eq.s32.totalorder %v4825, 1
        %vm4862 = vcmp.eq.s32.totalorder %v4826, 1
        %vm4863 = vcmp.eq.s32.totalorder %v4827, 1
        %vm4864 = vcmp.eq.s32.totalorder %v4828, 1
        %vm4865 = vcmp.eq.s32.totalorder %v4829, 1
        %vm4866 = vcmp.eq.s32.totalorder %v4830, 1
        %vm4867 = vcmp.eq.s32.totalorder %v4831, 1
        %vm4868 = vcmp.eq.s32.totalorder %v4832, 1
        %vm4869 = vcmp.eq.s32.totalorder %v4833, 1
        %vm4870 = vcmp.eq.s32.totalorder %v4834, 1
        %vm4871 = vcmp.eq.s32.totalorder %v4835, 1
        %vm4872 = vcmp.eq.s32.totalorder %v4836, 1
        %vm4873 = vcmp.eq.s32.totalorder %v4837, 1
        %vm4874 = vcmp.eq.s32.totalorder %v4838, 1
        %vm4875 = vcmp.eq.s32.totalorder %v4839, 1
        %vm4876 = vcmp.eq.s32.totalorder %v4840, 1
        %vm4877 = vcmp.eq.s32.totalorder %v4841, 1
        %vm4878 = vcmp.eq.s32.totalorder %v4842, 1
        %vm4879 = vcmp.eq.s32.totalorder %v4843, 1
        %vm4880 = vcmp.eq.s32.totalorder %v4844, 1
        %vm4881 = vcmp.eq.s32.totalorder %v4845, 1
        %vm4882 = vcmp.eq.s32.totalorder %v4846, 1
        %vm4883 = vcmp.eq.s32.totalorder %v4847, 1
        %vm4884 = vcmp.eq.s32.totalorder %v4848, 1
        %vm4885 = vcmp.eq.s32.totalorder %v4849, 1
        %vm4886 = vcmp.eq.s32.totalorder %v4850, 1
        %vm4887 = vcmp.eq.s32.totalorder %v4851, 1
        %vm4888 = vcmp.eq.s32.totalorder %v4852, 1
        %vm4889 = vcmp.eq.s32.totalorder %v4853, 1
        %vm4890 = vcmp.eq.s32.totalorder %v4854, 1
        %vm4891 = vcmp.eq.s32.totalorder %v4855, 1
        %vm4892 = vcmp.eq.s32.totalorder %v4856, 1
        %vm4893 = vcmp.eq.s32.totalorder %v4857, 1
        %vm4894 = vcmp.eq.s32.totalorder %v4858, 1
        %vm4895 = vcmp.eq.s32.totalorder %v4859, 1
        %v4896 = vsel %vm4860, %v4788, 0.0
        %v4897 = vsel %vm4861, %v4789, 0.0
        %v4898 = vsel %vm4862, %v4790, 0.0
        %v4899 = vsel %vm4863, %v4791, 0.0
        %v4900 = vsel %vm4864, %v4792, 0.0
        %v4901 = vsel %vm4865, %v4793, 0.0
        %v4902 = vsel %vm4866, %v4794, 0.0
        %v4903 = vsel %vm4867, %v4795, 0.0
        %v4904 = vsel %vm4868, %v4796, 0.0
        %v4905 = vsel %vm4869, %v4797, 0.0
        %v4906 = vsel %vm4870, %v4798, 0.0
        %v4907 = vsel %vm4871, %v4799, 0.0
        %v4908 = vsel %vm4872, %v4800, 0.0
        %v4909 = vsel %vm4873, %v4801, 0.0
        %v4910 = vsel %vm4874, %v4802, 0.0
        %v4911 = vsel %vm4875, %v4803, 0.0
        %v4912 = vsel %vm4876, %v4804, 0.0
        %v4913 = vsel %vm4877, %v4805, 0.0
        %v4914 = vsel %vm4878, %v4806, 0.0
        %v4915 = vsel %vm4879, %v4807, 0.0
        %v4916 = vsel %vm4880, %v4808, 0.0
        %v4917 = vsel %vm4881, %v4809, 0.0
        %v4918 = vsel %vm4882, %v4810, 0.0
        %v4919 = vsel %vm4883, %v4811, 0.0
        %v4920 = vsel %vm4884, %v4812, 0.0
        %v4921 = vsel %vm4885, %v4813, 0.0
        %v4922 = vsel %vm4886, %v4814, 0.0
        %v4923 = vsel %vm4887, %v4815, 0.0
        %v4924 = vsel %vm4888, %v4816, 0.0
        %v4925 = vsel %vm4889, %v4817, 0.0
        %v4926 = vsel %vm4890, %v4818, 0.0
        %v4927 = vsel %vm4891, %v4819, 0.0
        %v4928 = vsel %vm4892, %v4820, 0.0
        %v4929 = vsel %vm4893, %v4821, 0.0
        %v4930 = vsel %vm4894, %v4822, 0.0
        %v4931 = vsel %vm4895, %v4823, 0.0
        %4932 = vst.msk [vmem:[#allocation2] sm:$0xff] %vm1036, 0.0
        %4933 = vst.msk [vmem:[#allocation2 + $0x8] sm:$0xff] %vm1036, 0.0
        %4934 = vst.msk [vmem:[#allocation2 + $0x10] sm:$0xff] %vm1036, 0.0
        %4935 = vst.msk [vmem:[#allocation2 + $0x18] sm:$0xff] %vm1036, 0.0
        %4936 = vst.msk [vmem:[#allocation2 + $0x20] sm:$0xff] %vm1036, 0.0
        %4937 = vst.msk [vmem:[#allocation2 + $0x28] sm:$0xff] %vm1036, 0.0
        %4938 = vst.msk [vmem:[#allocation2 + $0x30] sm:$0xff] %vm1036, 0.0
        %4939 = vst.msk [vmem:[#allocation2 + $0x38] sm:$0xff] %vm1036, 0.0
        %4940 = vst.msk [vmem:[#allocation2 + $0x40] sm:$0xff] %vm1036, 0.0
        %4941 = vst.msk [vmem:[#allocation2 + $0x48] sm:$0xff] %vm1036, 0.0
        %4942 = vst.msk [vmem:[#allocation2 + $0x50] sm:$0xff] %vm1036, 0.0
        %4943 = vst.msk [vmem:[#allocation2 + $0x58] sm:$0xff] %vm1036, 0.0
        %4944 = vst.msk [vmem:[#allocation2 + $0x60] sm:$0xff] %vm1036, 0.0
        %4945 = vst.msk [vmem:[#allocation2 + $0x68] sm:$0xff] %vm1036, 0.0
        %4946 = vst.msk [vmem:[#allocation2 + $0x70] sm:$0xff] %vm1036, 0.0
        %4947 = vst.msk [vmem:[#allocation2 + $0x78] sm:$0xff] %vm1036, 0.0
        %4948 = vst.msk [vmem:[#allocation2 + $0x80] sm:$0xff] %vm1036, 0.0
        %4949 = vst.msk [vmem:[#allocation2 + $0x88] sm:$0xff] %vm1036, 0.0
        %4950 = vst.msk [vmem:[#allocation2 + $0x90] sm:$0xff] %vm1036, 0.0
        %4951 = vst.msk [vmem:[#allocation2 + $0x98] sm:$0xff] %vm1036, 0.0
        %4952 = vst.msk [vmem:[#allocation2 + $0xa0] sm:$0xff] %vm1036, 0.0
        %4953 = vst.msk [vmem:[#allocation2 + $0xa8] sm:$0xff] %vm1036, 0.0
        %4954 = vst.msk [vmem:[#allocation2 + $0xb0] sm:$0xff] %vm1036, 0.0
        %4955 = vst.msk [vmem:[#allocation2 + $0xb8] sm:$0xff] %vm1036, 0.0
        %4956 = vst.msk [vmem:[#allocation2 + $0xc0] sm:$0xff] %vm1036, 0.0
        %4957 = vst.msk [vmem:[#allocation2 + $0xc8] sm:$0xff] %vm1036, 0.0
        %4958 = vst.msk [vmem:[#allocation2 + $0xd0] sm:$0xff] %vm1036, 0.0
        %4959 = vst.msk [vmem:[#allocation2 + $0xd8] sm:$0xff] %vm1036, 0.0
        %4960 = vst.msk [vmem:[#allocation2 + $0xe0] sm:$0xff] %vm1036, 0.0
        %4961 = vst.msk [vmem:[#allocation2 + $0xe8] sm:$0xff] %vm1036, 0.0
        %4962 = vst.msk [vmem:[#allocation2 + $0xf0] sm:$0xff] %vm1036, 0.0
        %4963 = vst.msk [vmem:[#allocation2 + $0xf8] sm:$0xff] %vm1036, 0.0
        %4964 = vst.msk [vmem:[#allocation2 + $0x100] sm:$0xff] %vm1036, 0.0
        %4965 = vst.msk [vmem:[#allocation2 + $0x108] sm:$0xff] %vm1036, 0.0
        %4966 = vst.msk [vmem:[#allocation2 + $0x110] sm:$0xff] %vm1036, 0.0
        %4967 = vst.msk [vmem:[#allocation2 + $0x118] sm:$0xff] %vm1036, 0.0
        %4968 = vst.msk [vmem:[#allocation2 + $0x120] sm:$0xff] %vm1036, 0.0
        %4969 = vst.msk [vmem:[#allocation2 + $0x128] sm:$0xff] %vm1036, 0.0
        %4970 = vst.msk [vmem:[#allocation2 + $0x130] sm:$0xff] %vm1036, 0.0
        %4971 = vst.msk [vmem:[#allocation2 + $0x138] sm:$0xff] %vm1036, 0.0
        %4972 = vst.msk [vmem:[#allocation2 + $0x140] sm:$0xff] %vm1036, 0.0
        %4973 = vst.msk [vmem:[#allocation2 + $0x148] sm:$0xff] %vm1036, 0.0
        %vm4974 = vcmask 29696
        %4975 = vst.msk [vmem:[#allocation2 + $0x150] sm:$0x3f] %vm4974, 0.0
        %4976 = vst.msk [vmem:[#allocation2 + $0x13] sm:$0xff] %vm1036, %v4896
        %4977 = vst.msk [vmem:[#allocation2 + $0x1b] sm:$0xff] %vm1036, %v4897
        %4978 = vst.msk [vmem:[#allocation2 + $0x23] sm:$0xff] %vm1036, %v4898
        %4979 = vst.msk [vmem:[#allocation2 + $0x2b] sm:$0xff] %vm1036, %v4899
        %4980 = vst.msk [vmem:[#allocation2 + $0x33] sm:$0xff] %vm1036, %v4900
        %4981 = vst.msk [vmem:[#allocation2 + $0x3b] sm:$0xff] %vm1036, %v4901
        %4982 = vst.msk [vmem:[#allocation2 + $0x43] sm:$0xff] %vm1036, %v4902
        %4983 = vst.msk [vmem:[#allocation2 + $0x4b] sm:$0xff] %vm1036, %v4903
        %4984 = vst.msk [vmem:[#allocation2 + $0x53] sm:$0xff] %vm1036, %v4904
        %4985 = vst.msk [vmem:[#allocation2 + $0x5b] sm:$0xff] %vm1036, %v4905
        %4986 = vst.msk [vmem:[#allocation2 + $0x63] sm:$0xff] %vm1036, %v4906
        %4987 = vst.msk [vmem:[#allocation2 + $0x6b] sm:$0xff] %vm1036, %v4907
        %4988 = vst.msk [vmem:[#allocation2 + $0x73] sm:$0xff] %vm1036, %v4908
        %4989 = vst.msk [vmem:[#allocation2 + $0x7b] sm:$0xff] %vm1036, %v4909
        %4990 = vst.msk [vmem:[#allocation2 + $0x83] sm:$0xff] %vm1036, %v4910
        %4991 = vst.msk [vmem:[#allocation2 + $0x8b] sm:$0xff] %vm1036, %v4911
        %4992 = vst.msk [vmem:[#allocation2 + $0x93] sm:$0xff] %vm1036, %v4912
        %4993 = vst.msk [vmem:[#allocation2 + $0x9b] sm:$0xff] %vm1036, %v4913
        %4994 = vst.msk [vmem:[#allocation2 + $0xa3] sm:$0xff] %vm1036, %v4914
        %4995 = vst.msk [vmem:[#allocation2 + $0xab] sm:$0xff] %vm1036, %v4915
        %4996 = vst.msk [vmem:[#allocation2 + $0xb3] sm:$0xff] %vm1036, %v4916
        %4997 = vst.msk [vmem:[#allocation2 + $0xbb] sm:$0xff] %vm1036, %v4917
        %4998 = vst.msk [vmem:[#allocation2 + $0xc3] sm:$0xff] %vm1036, %v4918
        %4999 = vst.msk [vmem:[#allocation2 + $0xcb] sm:$0xff] %vm1036, %v4919
        %5000 = vst.msk [vmem:[#allocation2 + $0xd3] sm:$0xff] %vm1036, %v4920
        %5001 = vst.msk [vmem:[#allocation2 + $0xdb] sm:$0xff] %vm1036, %v4921
        %5002 = vst.msk [vmem:[#allocation2 + $0xe3] sm:$0xff] %vm1036, %v4922
        %5003 = vst.msk [vmem:[#allocation2 + $0xeb] sm:$0xff] %vm1036, %v4923
        %5004 = vst.msk [vmem:[#allocation2 + $0xf3] sm:$0xff] %vm1036, %v4924
        %5005 = vst.msk [vmem:[#allocation2 + $0xfb] sm:$0xff] %vm1036, %v4925
        %5006 = vst.msk [vmem:[#allocation2 + $0x103] sm:$0xff] %vm1036, %v4926
        %5007 = vst.msk [vmem:[#allocation2 + $0x10b] sm:$0xff] %vm1036, %v4927
        %5008 = vst.msk [vmem:[#allocation2 + $0x113] sm:$0xff] %vm1036, %v4928
        %5009 = vst.msk [vmem:[#allocation2 + $0x11b] sm:$0xff] %vm1036, %v4929
        %5010 = vst.msk [vmem:[#allocation2 + $0x123] sm:$0xff] %vm1036, %v4930
        %5011 = vst.msk [vmem:[#allocation2 + $0x12b] sm:$0xff] %vm1036, %v4931
        %v5012 = vld [vmem:[%s3] sm:$0xf]
        %v5013 = vld [vmem:[%s3 + $0x4] sm:$0xf]
        %v5014 = vld [vmem:[%s3 + $0x8] sm:$0xf]
        %v5015 = vld [vmem:[%s3 + $0xc] sm:$0xf]
        %v5016 = vld [vmem:[%s3 + $0x10] sm:$0xf]
        %v5017 = vld [vmem:[%s3 + $0x14] sm:$0xf]
        %v5018 = vld [vmem:[%s3 + $0x18] sm:$0xf]
        %v5019 = vld [vmem:[%s3 + $0x1c] sm:$0xf]
        %v5020 = vld [vmem:[%s3 + $0x20] sm:$0xf]
        %v5021 = vld [vmem:[#allocation5] sm:$0x1]
        %v5022 = vld [vmem:[#allocation2] sm:$0xff]
        %v5023 = vld [vmem:[#allocation2 + $0x8] sm:$0xff]
        %v5024 = vld [vmem:[#allocation2 + $0x10] sm:$0xff]
        %v5025 = vld [vmem:[#allocation2 + $0x18] sm:$0xff]
        %v5026 = vld [vmem:[#allocation2 + $0x20] sm:$0xff]
        %v5027 = vld [vmem:[#allocation2 + $0x28] sm:$0xff]
        %v5028 = vld [vmem:[#allocation2 + $0x30] sm:$0xff]
        %v5029 = vld [vmem:[#allocation2 + $0x38] sm:$0xff]
        %v5030 = vld [vmem:[#allocation2 + $0x40] sm:$0xff]
        %v5031 = vld [vmem:[#allocation2 + $0x48] sm:$0xff]
        %v5032 = vld [vmem:[#allocation2 + $0x50] sm:$0xff]
        %v5033 = vld [vmem:[#allocation2 + $0x58] sm:$0xff]
        %v5034 = vld [vmem:[#allocation2 + $0x60] sm:$0xff]
        %v5035 = vld [vmem:[#allocation2 + $0x68] sm:$0xff]
        %v5036 = vld [vmem:[#allocation2 + $0x70] sm:$0xff]
        %v5037 = vld [vmem:[#allocation2 + $0x78] sm:$0xff]
        %v5038 = vld [vmem:[#allocation2 + $0x80] sm:$0xff]
        %v5039 = vld [vmem:[#allocation2 + $0x88] sm:$0xff]
        %v5040 = vld [vmem:[#allocation2 + $0x90] sm:$0xff]
        %v5041 = vld [vmem:[#allocation2 + $0x98] sm:$0xff]
        %v5042 = vld [vmem:[#allocation2 + $0xa0] sm:$0xff]
        %v5043 = vld [vmem:[#allocation2 + $0xa8] sm:$0xff]
        %v5044 = vld [vmem:[#allocation2 + $0xb0] sm:$0xff]
        %v5045 = vld [vmem:[#allocation2 + $0xb8] sm:$0xff]
        %v5046 = vld [vmem:[#allocation2 + $0xc0] sm:$0xff]
        %v5047 = vld [vmem:[#allocation2 + $0xc8] sm:$0xff]
        %v5048 = vld [vmem:[#allocation2 + $0xd0] sm:$0xff]
        %v5049 = vld [vmem:[#allocation2 + $0xd8] sm:$0xff]
        %v5050 = vld [vmem:[#allocation2 + $0xe0] sm:$0xff]
        %v5051 = vld [vmem:[#allocation2 + $0xe8] sm:$0xff]
        %v5052 = vld [vmem:[#allocation2 + $0xf0] sm:$0xff]
        %v5053 = vld [vmem:[#allocation2 + $0xf8] sm:$0xff]
        %v5054 = vld [vmem:[#allocation2 + $0x100] sm:$0xff]
        %v5055 = vld [vmem:[#allocation2 + $0x108] sm:$0xff]
        %v5056 = vld [vmem:[#allocation2 + $0x110] sm:$0xff]
        %v5057 = vld [vmem:[#allocation2 + $0x118] sm:$0xff]
        %v5058 = vld [vmem:[#allocation2 + $0x1] sm:$0xff]
        %v5059 = vld [vmem:[#allocation2 + $0x9] sm:$0xff]
        %v5060 = vld [vmem:[#allocation2 + $0x11] sm:$0xff]
        %v5061 = vld [vmem:[#allocation2 + $0x19] sm:$0xff]
        %v5062 = vld [vmem:[#allocation2 + $0x21] sm:$0xff]
        %v5063 = vld [vmem:[#allocation2 + $0x29] sm:$0xff]
        %v5064 = vld [vmem:[#allocation2 + $0x31] sm:$0xff]
        %v5065 = vld [vmem:[#allocation2 + $0x39] sm:$0xff]
        %v5066 = vld [vmem:[#allocation2 + $0x41] sm:$0xff]
        %v5067 = vld [vmem:[#allocation2 + $0x49] sm:$0xff]
        %v5068 = vld [vmem:[#allocation2 + $0x51] sm:$0xff]
        %v5069 = vld [vmem:[#allocation2 + $0x59] sm:$0xff]
        %v5070 = vld [vmem:[#allocation2 + $0x61] sm:$0xff]
        %v5071 = vld [vmem:[#allocation2 + $0x69] sm:$0xff]
        %v5072 = vld [vmem:[#allocation2 + $0x71] sm:$0xff]
        %v5073 = vld [vmem:[#allocation2 + $0x79] sm:$0xff]
        %v5074 = vld [vmem:[#allocation2 + $0x81] sm:$0xff]
        %v5075 = vld [vmem:[#allocation2 + $0x89] sm:$0xff]
        %v5076 = vld [vmem:[#allocation2 + $0x91] sm:$0xff]
        %v5077 = vld [vmem:[#allocation2 + $0x99] sm:$0xff]
        %v5078 = vld [vmem:[#allocation2 + $0xa1] sm:$0xff]
        %v5079 = vld [vmem:[#allocation2 + $0xa9] sm:$0xff]
        %v5080 = vld [vmem:[#allocation2 + $0xb1] sm:$0xff]
        %v5081 = vld [vmem:[#allocation2 + $0xb9] sm:$0xff]
        %v5082 = vld [vmem:[#allocation2 + $0xc1] sm:$0xff]
        %v5083 = vld [vmem:[#allocation2 + $0xc9] sm:$0xff]
        %v5084 = vld [vmem:[#allocation2 + $0xd1] sm:$0xff]
        %v5085 = vld [vmem:[#allocation2 + $0xd9] sm:$0xff]
        %v5086 = vld [vmem:[#allocation2 + $0xe1] sm:$0xff]
        %v5087 = vld [vmem:[#allocation2 + $0xe9] sm:$0xff]
        %v5088 = vld [vmem:[#allocation2 + $0xf1] sm:$0xff]
        %v5089 = vld [vmem:[#allocation2 + $0xf9] sm:$0xff]
        %v5090 = vld [vmem:[#allocation2 + $0x101] sm:$0xff]
        %v5091 = vld [vmem:[#allocation2 + $0x109] sm:$0xff]
        %v5092 = vld [vmem:[#allocation2 + $0x111] sm:$0xff]
        %v5093 = vld [vmem:[#allocation2 + $0x119] sm:$0xff]
        %v5095 = vsel %vm1036, %v5058, 0
        %v5098 = vsel %vm1036, %v5059, 0
        %v5101 = vsel %vm1036, %v5060, 0
        %v5104 = vsel %vm1036, %v5061, 0
        %v5107 = vsel %vm1036, %v5062, 0
        %v5110 = vsel %vm1036, %v5063, 0
        %v5113 = vsel %vm1036, %v5064, 0
        %v5116 = vsel %vm1036, %v5065, 0
        %v5119 = vsel %vm1036, %v5066, 0
        %v5122 = vsel %vm1036, %v5067, 0
        %v5125 = vsel %vm1036, %v5068, 0
        %v5128 = vsel %vm1036, %v5069, 0
        %v5131 = vsel %vm1036, %v5070, 0
        %v5134 = vsel %vm1036, %v5071, 0
        %v5137 = vsel %vm1036, %v5072, 0
        %v5140 = vsel %vm1036, %v5073, 0
        %v5143 = vsel %vm1036, %v5074, 0
        %v5146 = vsel %vm1036, %v5075, 0
        %v5149 = vsel %vm1036, %v5076, 0
        %v5152 = vsel %vm1036, %v5077, 0
        %v5155 = vsel %vm1036, %v5078, 0
        %v5158 = vsel %vm1036, %v5079, 0
        %v5161 = vsel %vm1036, %v5080, 0
        %v5164 = vsel %vm1036, %v5081, 0
        %v5167 = vsel %vm1036, %v5082, 0
        %v5170 = vsel %vm1036, %v5083, 0
        %v5173 = vsel %vm1036, %v5084, 0
        %v5176 = vsel %vm1036, %v5085, 0
        %v5179 = vsel %vm1036, %v5086, 0
        %v5182 = vsel %vm1036, %v5087, 0
        %v5185 = vsel %vm1036, %v5088, 0
        %v5188 = vsel %vm1036, %v5089, 0
        %v5191 = vsel %vm1036, %v5090, 0
        %v5194 = vsel %vm1036, %v5091, 0
        %v5197 = vsel %vm1036, %v5092, 0
        %v5200 = vsel %vm1036, %v5093, 0
        %v5203 = vsel %vm1145, %v5013, 0
        %5205 = vmatprep.subr.mxu0 0.0
        %5206 = vmatpush1.msra.mxu0 0.0
        %5207 = vmatprep.subr.mxu0 0.0
        %5208 = vmatpush1.msra.mxu0 0.0
        %5209 = vmatprep.subr.mxu0 0.0
        %5210 = vmatpush1.msra.mxu0 0.0
        %5211 = vmatprep.subr.mxu0 0.0
        %5212 = vmatpush1.msra.mxu0 0.0
        %5213 = vmatprep.subr.mxu0 0.0
        %5214 = vmatpush1.msra.mxu0 0.0
        %5215 = vmatprep.subr.mxu0 0.0
        %5216 = vmatpush1.msra.mxu0 0.0
        %5217 = vmatprep.subr.mxu0 0.0
        %5218 = vmatpush1.msra.mxu0 0.0
        %5219 = vmatprep.subr.mxu0 0.0
        %5220 = vmatpush1.msra.mxu0 0.0
        %5221 = vmatprep.subr.mxu0 0.0
        %5222 = vmatpush1.msra.mxu0 0.0
        %5223 = vmatprep.subr.mxu0 0.0
        %5224 = vmatpush1.msra.mxu0 0.0
        %5225 = vmatprep.subr.mxu0 0.0
        %5226 = vmatpush1.msra.mxu0 0.0
        %5227 = vmatprep.subr.mxu0 0.0
        %5228 = vmatpush1.msra.mxu0 0.0
        %5229 = vmatprep.subr.mxu0 0.0
        %5230 = vmatpush1.msra.mxu0 0.0
        %5231 = vmatprep.subr.mxu0 0.0
        %5232 = vmatpush1.msra.mxu0 0.0
        %5233 = vmatprep.subr.mxu0 0.0
        %5234 = vmatpush1.msra.mxu0 0.0
        %5235 = vmatprep.subr.mxu0 0.0
        %5236 = vmatpush1.msra.mxu0 %v5203
        %5237 = vmatprep.subr.mxu0 0.0
        %5238 = vmatpush2.msra.mxu0 0.0
        %5239 = vmatprep.subr.mxu0 0.0
        %5240 = vmatpush2.msra.mxu0 0.0
        %5241 = vmatprep.subr.mxu0 0.0
        %5242 = vmatpush2.msra.mxu0 0.0
        %5243 = vmatprep.subr.mxu0 0.0
        %5244 = vmatpush2.msra.mxu0 0.0
        %5245 = vmatprep.subr.mxu0 0.0
        %5246 = vmatpush2.msra.mxu0 0.0
        %5247 = vmatprep.subr.mxu0 0.0
        %5248 = vmatpush2.msra.mxu0 0.0
        %5249 = vmatprep.subr.mxu0 0.0
        %5250 = vmatpush2.msra.mxu0 0.0
        %5251 = vmatprep.subr.mxu0 0.0
        %5252 = vmatpush2.msra.mxu0 0.0
        %5253 = vmatprep.subr.mxu0 0.0
        %5254 = vmatpush2.msra.mxu0 0.0
        %5255 = vmatprep.subr.mxu0 0.0
        %5256 = vmatpush2.msra.mxu0 0.0
        %5257 = vmatprep.subr.mxu0 0.0
        %5258 = vmatpush2.msra.mxu0 0.0
        %5259 = vmatprep.subr.mxu0 0.0
        %5260 = vmatpush2.msra.mxu0 0.0
        %5261 = vmatprep.subr.mxu0 0.0
        %5262 = vmatpush2.msra.mxu0 0.0
        %5263 = vmatprep.subr.mxu0 0.0
        %5264 = vmatpush2.msra.mxu0 0.0
        %5265 = vmatprep.subr.mxu0 0.0
        %5266 = vmatpush2.msra.mxu0 0.0
        %5267 = vmatprep.subr.mxu0 0.0
        %5268 = vmatpush2.msra.mxu0 0.0
        %5269 = vmatprep.mubr.f32.mxu0 0.0
        %5270 = vmatmul.mubr.f32.gmra.mxu0 %v5095
        %v5271 = vpop.f32.mrf.mxu0
        %v5272 = vadd.f32 0.0, %v5271
        %v5273 = vpop.f32.mrf.mxu0
        %5274 = vmatprep.mubr.f32.mxu0 0.0
        %5275 = vmatmul.mubr.f32.gmra.mxu0 %v5098
        %v5276 = vpop.f32.mrf.mxu0
        %v5277 = vadd.f32 0.0, %v5276
        %v5278 = vpop.f32.mrf.mxu0
        %5279 = vmatprep.mubr.f32.mxu0 0.0
        %5280 = vmatmul.mubr.f32.gmra.mxu0 %v5101
        %v5281 = vpop.f32.mrf.mxu0
        %v5282 = vadd.f32 0.0, %v5281
        %v5283 = vpop.f32.mrf.mxu0
        %5284 = vmatprep.mubr.f32.mxu0 0.0
        %5285 = vmatmul.mubr.f32.gmra.mxu0 %v5104
        %v5286 = vpop.f32.mrf.mxu0
        %v5287 = vadd.f32 0.0, %v5286
        %v5288 = vpop.f32.mrf.mxu0
        %5289 = vmatprep.mubr.f32.mxu0 0.0
        %5290 = vmatmul.mubr.f32.gmra.mxu0 %v5107
        %v5291 = vpop.f32.mrf.mxu0
        %v5292 = vadd.f32 0.0, %v5291
        %v5293 = vpop.f32.mrf.mxu0
        %5294 = vmatprep.mubr.f32.mxu0 0.0
        %5295 = vmatmul.mubr.f32.gmra.mxu0 %v5110
        %v5296 = vpop.f32.mrf.mxu0
        %v5297 = vadd.f32 0.0, %v5296
        %v5298 = vpop.f32.mrf.mxu0
        %5299 = vmatprep.mubr.f32.mxu0 0.0
        %5300 = vmatmul.mubr.f32.gmra.mxu0 %v5113
        %v5301 = vpop.f32.mrf.mxu0
        %v5302 = vadd.f32 0.0, %v5301
        %v5303 = vpop.f32.mrf.mxu0
        %5304 = vmatprep.mubr.f32.mxu0 0.0
        %5305 = vmatmul.mubr.f32.gmra.mxu0 %v5116
        %v5306 = vpop.f32.mrf.mxu0
        %v5307 = vadd.f32 0.0, %v5306
        %v5308 = vpop.f32.mrf.mxu0
        %5309 = vmatprep.mubr.f32.mxu0 0.0
        %5310 = vmatmul.mubr.f32.gmra.mxu0 %v5119
        %v5311 = vpop.f32.mrf.mxu0
        %v5312 = vadd.f32 0.0, %v5311
        %v5313 = vpop.f32.mrf.mxu0
        %5314 = vmatprep.mubr.f32.mxu0 0.0
        %5315 = vmatmul.mubr.f32.gmra.mxu0 %v5122
        %v5316 = vpop.f32.mrf.mxu0
        %v5317 = vadd.f32 0.0, %v5316
        %v5318 = vpop.f32.mrf.mxu0
        %5319 = vmatprep.mubr.f32.mxu0 0.0
        %5320 = vmatmul.mubr.f32.gmra.mxu0 %v5125
        %v5321 = vpop.f32.mrf.mxu0
        %v5322 = vadd.f32 0.0, %v5321
        %v5323 = vpop.f32.mrf.mxu0
        %5324 = vmatprep.mubr.f32.mxu0 0.0
        %5325 = vmatmul.mubr.f32.gmra.mxu0 %v5128
        %v5326 = vpop.f32.mrf.mxu0
        %v5327 = vadd.f32 0.0, %v5326
        %v5328 = vpop.f32.mrf.mxu0
        %5329 = vmatprep.mubr.f32.mxu0 0.0
        %5330 = vmatmul.mubr.f32.gmra.mxu0 %v5131
        %v5331 = vpop.f32.mrf.mxu0
        %v5332 = vadd.f32 0.0, %v5331
        %v5333 = vpop.f32.mrf.mxu0
        %5334 = vmatprep.mubr.f32.mxu0 0.0
        %5335 = vmatmul.mubr.f32.gmra.mxu0 %v5134
        %v5336 = vpop.f32.mrf.mxu0
        %v5337 = vadd.f32 0.0, %v5336
        %v5338 = vpop.f32.mrf.mxu0
        %5339 = vmatprep.mubr.f32.mxu0 0.0
        %5340 = vmatmul.mubr.f32.gmra.mxu0 %v5137
        %v5341 = vpop.f32.mrf.mxu0
        %v5342 = vadd.f32 0.0, %v5341
        %v5343 = vpop.f32.mrf.mxu0
        %5344 = vmatprep.mubr.f32.mxu0 0.0
        %5345 = vmatmul.mubr.f32.gmra.mxu0 %v5140
        %v5346 = vpop.f32.mrf.mxu0
        %v5347 = vadd.f32 0.0, %v5346
        %v5348 = vpop.f32.mrf.mxu0
        %5349 = vmatprep.mubr.f32.mxu0 0.0
        %5350 = vmatmul.mubr.f32.gmra.mxu0 %v5143
        %v5351 = vpop.f32.mrf.mxu0
        %v5352 = vadd.f32 0.0, %v5351
        %v5353 = vpop.f32.mrf.mxu0
        %5354 = vmatprep.mubr.f32.mxu0 0.0
        %5355 = vmatmul.mubr.f32.gmra.mxu0 %v5146
        %v5356 = vpop.f32.mrf.mxu0
        %v5357 = vadd.f32 0.0, %v5356
        %v5358 = vpop.f32.mrf.mxu0
        %5359 = vmatprep.mubr.f32.mxu0 0.0
        %5360 = vmatmul.mubr.f32.gmra.mxu0 %v5149
        %v5361 = vpop.f32.mrf.mxu0
        %v5362 = vadd.f32 0.0, %v5361
        %v5363 = vpop.f32.mrf.mxu0
        %5364 = vmatprep.mubr.f32.mxu0 0.0
        %5365 = vmatmul.mubr.f32.gmra.mxu0 %v5152
        %v5366 = vpop.f32.mrf.mxu0
        %v5367 = vadd.f32 0.0, %v5366
        %v5368 = vpop.f32.mrf.mxu0
        %5369 = vmatprep.mubr.f32.mxu0 0.0
        %5370 = vmatmul.mubr.f32.gmra.mxu0 %v5155
        %v5371 = vpop.f32.mrf.mxu0
        %v5372 = vadd.f32 0.0, %v5371
        %v5373 = vpop.f32.mrf.mxu0
        %5374 = vmatprep.mubr.f32.mxu0 0.0
        %5375 = vmatmul.mubr.f32.gmra.mxu0 %v5158
        %v5376 = vpop.f32.mrf.mxu0
        %v5377 = vadd.f32 0.0, %v5376
        %v5378 = vpop.f32.mrf.mxu0
        %5379 = vmatprep.mubr.f32.mxu0 0.0
        %5380 = vmatmul.mubr.f32.gmra.mxu0 %v5161
        %v5381 = vpop.f32.mrf.mxu0
        %v5382 = vadd.f32 0.0, %v5381
        %v5383 = vpop.f32.mrf.mxu0
        %5384 = vmatprep.mubr.f32.mxu0 0.0
        %5385 = vmatmul.mubr.f32.gmra.mxu0 %v5164
        %v5386 = vpop.f32.mrf.mxu0
        %v5387 = vadd.f32 0.0, %v5386
        %v5388 = vpop.f32.mrf.mxu0
        %5389 = vmatprep.mubr.f32.mxu0 0.0
        %5390 = vmatmul.mubr.f32.gmra.mxu0 %v5167
        %v5391 = vpop.f32.mrf.mxu0
        %v5392 = vadd.f32 0.0, %v5391
        %v5393 = vpop.f32.mrf.mxu0
        %5394 = vmatprep.mubr.f32.mxu0 0.0
        %5395 = vmatmul.mubr.f32.gmra.mxu0 %v5170
        %v5396 = vpop.f32.mrf.mxu0
        %v5397 = vadd.f32 0.0, %v5396
        %v5398 = vpop.f32.mrf.mxu0
        %5399 = vmatprep.mubr.f32.mxu0 0.0
        %5400 = vmatmul.mubr.f32.gmra.mxu0 %v5173
        %v5401 = vpop.f32.mrf.mxu0
        %v5402 = vadd.f32 0.0, %v5401
        %v5403 = vpop.f32.mrf.mxu0
        %5404 = vmatprep.mubr.f32.mxu0 0.0
        %5405 = vmatmul.mubr.f32.gmra.mxu0 %v5176
        %v5406 = vpop.f32.mrf.mxu0
        %v5407 = vadd.f32 0.0, %v5406
        %v5408 = vpop.f32.mrf.mxu0
        %5409 = vmatprep.mubr.f32.mxu0 0.0
        %5410 = vmatmul.mubr.f32.gmra.mxu0 %v5179
        %v5411 = vpop.f32.mrf.mxu0
        %v5412 = vadd.f32 0.0, %v5411
        %v5413 = vpop.f32.mrf.mxu0
        %5414 = vmatprep.mubr.f32.mxu0 0.0
        %5415 = vmatmul.mubr.f32.gmra.mxu0 %v5182
        %v5416 = vpop.f32.mrf.mxu0
        %v5417 = vadd.f32 0.0, %v5416
        %v5418 = vpop.f32.mrf.mxu0
        %5419 = vmatprep.mubr.f32.mxu0 0.0
        %5420 = vmatmul.mubr.f32.gmra.mxu0 %v5185
        %v5421 = vpop.f32.mrf.mxu0
        %v5422 = vadd.f32 0.0, %v5421
        %v5423 = vpop.f32.mrf.mxu0
        %5424 = vmatprep.mubr.f32.mxu0 0.0
        %5425 = vmatmul.mubr.f32.gmra.mxu0 %v5188
        %v5426 = vpop.f32.mrf.mxu0
        %v5427 = vadd.f32 0.0, %v5426
        %v5428 = vpop.f32.mrf.mxu0
        %5429 = vmatprep.mubr.f32.mxu0 0.0
        %5430 = vmatmul.mubr.f32.gmra.mxu0 %v5191
        %v5431 = vpop.f32.mrf.mxu0
        %v5432 = vadd.f32 0.0, %v5431
        %v5433 = vpop.f32.mrf.mxu0
        %5434 = vmatprep.mubr.f32.mxu0 0.0
        %5435 = vmatmul.mubr.f32.gmra.mxu0 %v5194
        %v5436 = vpop.f32.mrf.mxu0
        %v5437 = vadd.f32 0.0, %v5436
        %v5438 = vpop.f32.mrf.mxu0
        %5439 = vmatprep.mubr.f32.mxu0 0.0
        %5440 = vmatmul.mubr.f32.gmra.mxu0 %v5197
        %v5441 = vpop.f32.mrf.mxu0
        %v5442 = vadd.f32 0.0, %v5441
        %v5443 = vpop.f32.mrf.mxu0
        %5444 = vmatprep.mubr.f32.mxu0 0.0
        %5445 = vmatmul.mubr.f32.gmra.mxu0 %v5200
        %v5446 = vpop.f32.mrf.mxu0
        %v5447 = vadd.f32 0.0, %v5446
        %v5448 = vpop.f32.mrf.mxu0
        %5449 = vdwg.mxu0
        %v5451 = vsel %vm1036, %v5022, 0
        %v5454 = vsel %vm1036, %v5023, 0
        %v5457 = vsel %vm1036, %v5024, 0
        %v5460 = vsel %vm1036, %v5025, 0
        %v5463 = vsel %vm1036, %v5026, 0
        %v5466 = vsel %vm1036, %v5027, 0
        %v5469 = vsel %vm1036, %v5028, 0
        %v5472 = vsel %vm1036, %v5029, 0
        %v5475 = vsel %vm1036, %v5030, 0
        %v5478 = vsel %vm1036, %v5031, 0
        %v5481 = vsel %vm1036, %v5032, 0
        %v5484 = vsel %vm1036, %v5033, 0
        %v5487 = vsel %vm1036, %v5034, 0
        %v5490 = vsel %vm1036, %v5035, 0
        %v5493 = vsel %vm1036, %v5036, 0
        %v5496 = vsel %vm1036, %v5037, 0
        %v5499 = vsel %vm1036, %v5038, 0
        %v5502 = vsel %vm1036, %v5039, 0
        %v5505 = vsel %vm1036, %v5040, 0
        %v5508 = vsel %vm1036, %v5041, 0
        %v5511 = vsel %vm1036, %v5042, 0
        %v5514 = vsel %vm1036, %v5043, 0
        %v5517 = vsel %vm1036, %v5044, 0
        %v5520 = vsel %vm1036, %v5045, 0
        %v5523 = vsel %vm1036, %v5046, 0
        %v5526 = vsel %vm1036, %v5047, 0
        %v5529 = vsel %vm1036, %v5048, 0
        %v5532 = vsel %vm1036, %v5049, 0
        %v5535 = vsel %vm1036, %v5050, 0
        %v5538 = vsel %vm1036, %v5051, 0
        %v5541 = vsel %vm1036, %v5052, 0
        %v5544 = vsel %vm1036, %v5053, 0
        %v5547 = vsel %vm1036, %v5054, 0
        %v5550 = vsel %vm1036, %v5055, 0
        %v5553 = vsel %vm1036, %v5056, 0
        %v5556 = vsel %vm1036, %v5057, 0
        %v5559 = vsel %vm1145, %v5012, 0
        %5561 = vmatprep.subr.mxu0 0.0
        %5562 = vmatpush1.msra.mxu0 0.0
        %5563 = vmatprep.subr.mxu0 0.0
        %5564 = vmatpush1.msra.mxu0 0.0
        %5565 = vmatprep.subr.mxu0 0.0
        %5566 = vmatpush1.msra.mxu0 0.0
        %5567 = vmatprep.subr.mxu0 0.0
        %5568 = vmatpush1.msra.mxu0 0.0
        %5569 = vmatprep.subr.mxu0 0.0
        %5570 = vmatpush1.msra.mxu0 0.0
        %5571 = vmatprep.subr.mxu0 0.0
        %5572 = vmatpush1.msra.mxu0 0.0
        %5573 = vmatprep.subr.mxu0 0.0
        %5574 = vmatpush1.msra.mxu0 0.0
        %5575 = vmatprep.subr.mxu0 0.0
        %5576 = vmatpush1.msra.mxu0 0.0
        %5577 = vmatprep.subr.mxu0 0.0
        %5578 = vmatpush1.msra.mxu0 0.0
        %5579 = vmatprep.subr.mxu0 0.0
        %5580 = vmatpush1.msra.mxu0 0.0
        %5581 = vmatprep.subr.mxu0 0.0
        %5582 = vmatpush1.msra.mxu0 0.0
        %5583 = vmatprep.subr.mxu0 0.0
        %5584 = vmatpush1.msra.mxu0 0.0
        %5585 = vmatprep.subr.mxu0 0.0
        %5586 = vmatpush1.msra.mxu0 0.0
        %5587 = vmatprep.subr.mxu0 0.0
        %5588 = vmatpush1.msra.mxu0 0.0
        %5589 = vmatprep.subr.mxu0 0.0
        %5590 = vmatpush1.msra.mxu0 0.0
        %5591 = vmatprep.subr.mxu0 0.0
        %5592 = vmatpush1.msra.mxu0 %v5559
        %5593 = vmatprep.subr.mxu0 0.0
        %5594 = vmatpush2.msra.mxu0 0.0
        %5595 = vmatprep.subr.mxu0 0.0
        %5596 = vmatpush2.msra.mxu0 0.0
        %5597 = vmatprep.subr.mxu0 0.0
        %5598 = vmatpush2.msra.mxu0 0.0
        %5599 = vmatprep.subr.mxu0 0.0
        %5600 = vmatpush2.msra.mxu0 0.0
        %5601 = vmatprep.subr.mxu0 0.0
        %5602 = vmatpush2.msra.mxu0 0.0
        %5603 = vmatprep.subr.mxu0 0.0
        %5604 = vmatpush2.msra.mxu0 0.0
        %5605 = vmatprep.subr.mxu0 0.0
        %5606 = vmatpush2.msra.mxu0 0.0
        %5607 = vmatprep.subr.mxu0 0.0
        %5608 = vmatpush2.msra.mxu0 0.0
        %5609 = vmatprep.subr.mxu0 0.0
        %5610 = vmatpush2.msra.mxu0 0.0
        %5611 = vmatprep.subr.mxu0 0.0
        %5612 = vmatpush2.msra.mxu0 0.0
        %5613 = vmatprep.subr.mxu0 0.0
        %5614 = vmatpush2.msra.mxu0 0.0
        %5615 = vmatprep.subr.mxu0 0.0
        %5616 = vmatpush2.msra.mxu0 0.0
        %5617 = vmatprep.subr.mxu0 0.0
        %5618 = vmatpush2.msra.mxu0 0.0
        %5619 = vmatprep.subr.mxu0 0.0
        %5620 = vmatpush2.msra.mxu0 0.0
        %5621 = vmatprep.subr.mxu0 0.0
        %5622 = vmatpush2.msra.mxu0 0.0
        %5623 = vmatprep.subr.mxu0 0.0
        %5624 = vmatpush2.msra.mxu0 0.0
        %5625 = vmatprep.mubr.f32.mxu0 0.0
        %5626 = vmatmul.mubr.f32.gmra.mxu0 %v5451
        %v5627 = vpop.f32.mrf.mxu0
        %v5628 = vadd.f32 %v5272, %v5627
        %v5629 = vpop.f32.mrf.mxu0
        %5630 = vmatprep.mubr.f32.mxu0 0.0
        %5631 = vmatmul.mubr.f32.gmra.mxu0 %v5454
        %v5632 = vpop.f32.mrf.mxu0
        %v5633 = vadd.f32 %v5277, %v5632
        %v5634 = vpop.f32.mrf.mxu0
        %5635 = vmatprep.mubr.f32.mxu0 0.0
        %5636 = vmatmul.mubr.f32.gmra.mxu0 %v5457
        %v5637 = vpop.f32.mrf.mxu0
        %v5638 = vadd.f32 %v5282, %v5637
        %v5639 = vpop.f32.mrf.mxu0
        %5640 = vmatprep.mubr.f32.mxu0 0.0
        %5641 = vmatmul.mubr.f32.gmra.mxu0 %v5460
        %v5642 = vpop.f32.mrf.mxu0
        %v5643 = vadd.f32 %v5287, %v5642
        %v5644 = vpop.f32.mrf.mxu0
        %5645 = vmatprep.mubr.f32.mxu0 0.0
        %5646 = vmatmul.mubr.f32.gmra.mxu0 %v5463
        %v5647 = vpop.f32.mrf.mxu0
        %v5648 = vadd.f32 %v5292, %v5647
        %v5649 = vpop.f32.mrf.mxu0
        %5650 = vmatprep.mubr.f32.mxu0 0.0
        %5651 = vmatmul.mubr.f32.gmra.mxu0 %v5466
        %v5652 = vpop.f32.mrf.mxu0
        %v5653 = vadd.f32 %v5297, %v5652
        %v5654 = vpop.f32.mrf.mxu0
        %5655 = vmatprep.mubr.f32.mxu0 0.0
        %5656 = vmatmul.mubr.f32.gmra.mxu0 %v5469
        %v5657 = vpop.f32.mrf.mxu0
        %v5658 = vadd.f32 %v5302, %v5657
        %v5659 = vpop.f32.mrf.mxu0
        %5660 = vmatprep.mubr.f32.mxu0 0.0
        %5661 = vmatmul.mubr.f32.gmra.mxu0 %v5472
        %v5662 = vpop.f32.mrf.mxu0
        %v5663 = vadd.f32 %v5307, %v5662
        %v5664 = vpop.f32.mrf.mxu0
        %5665 = vmatprep.mubr.f32.mxu0 0.0
        %5666 = vmatmul.mubr.f32.gmra.mxu0 %v5475
        %v5667 = vpop.f32.mrf.mxu0
        %v5668 = vadd.f32 %v5312, %v5667
        %v5669 = vpop.f32.mrf.mxu0
        %5670 = vmatprep.mubr.f32.mxu0 0.0
        %5671 = vmatmul.mubr.f32.gmra.mxu0 %v5478
        %v5672 = vpop.f32.mrf.mxu0
        %v5673 = vadd.f32 %v5317, %v5672
        %v5674 = vpop.f32.mrf.mxu0
        %5675 = vmatprep.mubr.f32.mxu0 0.0
        %5676 = vmatmul.mubr.f32.gmra.mxu0 %v5481
        %v5677 = vpop.f32.mrf.mxu0
        %v5678 = vadd.f32 %v5322, %v5677
        %v5679 = vpop.f32.mrf.mxu0
        %5680 = vmatprep.mubr.f32.mxu0 0.0
        %5681 = vmatmul.mubr.f32.gmra.mxu0 %v5484
        %v5682 = vpop.f32.mrf.mxu0
        %v5683 = vadd.f32 %v5327, %v5682
        %v5684 = vpop.f32.mrf.mxu0
        %5685 = vmatprep.mubr.f32.mxu0 0.0
        %5686 = vmatmul.mubr.f32.gmra.mxu0 %v5487
        %v5687 = vpop.f32.mrf.mxu0
        %v5688 = vadd.f32 %v5332, %v5687
        %v5689 = vpop.f32.mrf.mxu0
        %5690 = vmatprep.mubr.f32.mxu0 0.0
        %5691 = vmatmul.mubr.f32.gmra.mxu0 %v5490
        %v5692 = vpop.f32.mrf.mxu0
        %v5693 = vadd.f32 %v5337, %v5692
        %v5694 = vpop.f32.mrf.mxu0
        %5695 = vmatprep.mubr.f32.mxu0 0.0
        %5696 = vmatmul.mubr.f32.gmra.mxu0 %v5493
        %v5697 = vpop.f32.mrf.mxu0
        %v5698 = vadd.f32 %v5342, %v5697
        %v5699 = vpop.f32.mrf.mxu0
        %5700 = vmatprep.mubr.f32.mxu0 0.0
        %5701 = vmatmul.mubr.f32.gmra.mxu0 %v5496
        %v5702 = vpop.f32.mrf.mxu0
        %v5703 = vadd.f32 %v5347, %v5702
        %v5704 = vpop.f32.mrf.mxu0
        %5705 = vmatprep.mubr.f32.mxu0 0.0
        %5706 = vmatmul.mubr.f32.gmra.mxu0 %v5499
        %v5707 = vpop.f32.mrf.mxu0
        %v5708 = vadd.f32 %v5352, %v5707
        %v5709 = vpop.f32.mrf.mxu0
        %5710 = vmatprep.mubr.f32.mxu0 0.0
        %5711 = vmatmul.mubr.f32.gmra.mxu0 %v5502
        %v5712 = vpop.f32.mrf.mxu0
        %v5713 = vadd.f32 %v5357, %v5712
        %v5714 = vpop.f32.mrf.mxu0
        %5715 = vmatprep.mubr.f32.mxu0 0.0
        %5716 = vmatmul.mubr.f32.gmra.mxu0 %v5505
        %v5717 = vpop.f32.mrf.mxu0
        %v5718 = vadd.f32 %v5362, %v5717
        %v5719 = vpop.f32.mrf.mxu0
        %5720 = vmatprep.mubr.f32.mxu0 0.0
        %5721 = vmatmul.mubr.f32.gmra.mxu0 %v5508
        %v5722 = vpop.f32.mrf.mxu0
        %v5723 = vadd.f32 %v5367, %v5722
        %v5724 = vpop.f32.mrf.mxu0
        %5725 = vmatprep.mubr.f32.mxu0 0.0
        %5726 = vmatmul.mubr.f32.gmra.mxu0 %v5511
        %v5727 = vpop.f32.mrf.mxu0
        %v5728 = vadd.f32 %v5372, %v5727
        %v5729 = vpop.f32.mrf.mxu0
        %5730 = vmatprep.mubr.f32.mxu0 0.0
        %5731 = vmatmul.mubr.f32.gmra.mxu0 %v5514
        %v5732 = vpop.f32.mrf.mxu0
        %v5733 = vadd.f32 %v5377, %v5732
        %v5734 = vpop.f32.mrf.mxu0
        %5735 = vmatprep.mubr.f32.mxu0 0.0
        %5736 = vmatmul.mubr.f32.gmra.mxu0 %v5517
        %v5737 = vpop.f32.mrf.mxu0
        %v5738 = vadd.f32 %v5382, %v5737
        %v5739 = vpop.f32.mrf.mxu0
        %5740 = vmatprep.mubr.f32.mxu0 0.0
        %5741 = vmatmul.mubr.f32.gmra.mxu0 %v5520
        %v5742 = vpop.f32.mrf.mxu0
        %v5743 = vadd.f32 %v5387, %v5742
        %v5744 = vpop.f32.mrf.mxu0
        %5745 = vmatprep.mubr.f32.mxu0 0.0
        %5746 = vmatmul.mubr.f32.gmra.mxu0 %v5523
        %v5747 = vpop.f32.mrf.mxu0
        %v5748 = vadd.f32 %v5392, %v5747
        %v5749 = vpop.f32.mrf.mxu0
        %5750 = vmatprep.mubr.f32.mxu0 0.0
        %5751 = vmatmul.mubr.f32.gmra.mxu0 %v5526
        %v5752 = vpop.f32.mrf.mxu0
        %v5753 = vadd.f32 %v5397, %v5752
        %v5754 = vpop.f32.mrf.mxu0
        %5755 = vmatprep.mubr.f32.mxu0 0.0
        %5756 = vmatmul.mubr.f32.gmra.mxu0 %v5529
        %v5757 = vpop.f32.mrf.mxu0
        %v5758 = vadd.f32 %v5402, %v5757
        %v5759 = vpop.f32.mrf.mxu0
        %5760 = vmatprep.mubr.f32.mxu0 0.0
        %5761 = vmatmul.mubr.f32.gmra.mxu0 %v5532
        %v5762 = vpop.f32.mrf.mxu0
        %v5763 = vadd.f32 %v5407, %v5762
        %v5764 = vpop.f32.mrf.mxu0
        %5765 = vmatprep.mubr.f32.mxu0 0.0
        %5766 = vmatmul.mubr.f32.gmra.mxu0 %v5535
        %v5767 = vpop.f32.mrf.mxu0
        %v5768 = vadd.f32 %v5412, %v5767
        %v5769 = vpop.f32.mrf.mxu0
        %5770 = vmatprep.mubr.f32.mxu0 0.0
        %5771 = vmatmul.mubr.f32.gmra.mxu0 %v5538
        %v5772 = vpop.f32.mrf.mxu0
        %v5773 = vadd.f32 %v5417, %v5772
        %v5774 = vpop.f32.mrf.mxu0
        %5775 = vmatprep.mubr.f32.mxu0 0.0
        %5776 = vmatmul.mubr.f32.gmra.mxu0 %v5541
        %v5777 = vpop.f32.mrf.mxu0
        %v5778 = vadd.f32 %v5422, %v5777
        %v5779 = vpop.f32.mrf.mxu0
        %5780 = vmatprep.mubr.f32.mxu0 0.0
        %5781 = vmatmul.mubr.f32.gmra.mxu0 %v5544
        %v5782 = vpop.f32.mrf.mxu0
        %v5783 = vadd.f32 %v5427, %v5782
        %v5784 = vpop.f32.mrf.mxu0
        %5785 = vmatprep.mubr.f32.mxu0 0.0
        %5786 = vmatmul.mubr.f32.gmra.mxu0 %v5547
        %v5787 = vpop.f32.mrf.mxu0
        %v5788 = vadd.f32 %v5432, %v5787
        %v5789 = vpop.f32.mrf.mxu0
        %5790 = vmatprep.mubr.f32.mxu0 0.0
        %5791 = vmatmul.mubr.f32.gmra.mxu0 %v5550
        %v5792 = vpop.f32.mrf.mxu0
        %v5793 = vadd.f32 %v5437, %v5792
        %v5794 = vpop.f32.mrf.mxu0
        %5795 = vmatprep.mubr.f32.mxu0 0.0
        %5796 = vmatmul.mubr.f32.gmra.mxu0 %v5553
        %v5797 = vpop.f32.mrf.mxu0
        %v5798 = vadd.f32 %v5442, %v5797
        %v5799 = vpop.f32.mrf.mxu0
        %5800 = vmatprep.mubr.f32.mxu0 0.0
        %5801 = vmatmul.mubr.f32.gmra.mxu0 %v5556
        %v5802 = vpop.f32.mrf.mxu0
        %v5803 = vadd.f32 %v5447, %v5802
        %v5804 = vpop.f32.mrf.mxu0
        %5805 = vdwg.mxu0
        %v5806 = vld [vmem:[#allocation2 + $0x2] sm:$0xff]
        %v5807 = vld [vmem:[#allocation2 + $0xa] sm:$0xff]
        %v5808 = vld [vmem:[#allocation2 + $0x12] sm:$0xff]
        %v5809 = vld [vmem:[#allocation2 + $0x1a] sm:$0xff]
        %v5810 = vld [vmem:[#allocation2 + $0x22] sm:$0xff]
        %v5811 = vld [vmem:[#allocation2 + $0x2a] sm:$0xff]
        %v5812 = vld [vmem:[#allocation2 + $0x32] sm:$0xff]
        %v5813 = vld [vmem:[#allocation2 + $0x3a] sm:$0xff]
        %v5814 = vld [vmem:[#allocation2 + $0x42] sm:$0xff]
        %v5815 = vld [vmem:[#allocation2 + $0x4a] sm:$0xff]
        %v5816 = vld [vmem:[#allocation2 + $0x52] sm:$0xff]
        %v5817 = vld [vmem:[#allocation2 + $0x5a] sm:$0xff]
        %v5818 = vld [vmem:[#allocation2 + $0x62] sm:$0xff]
        %v5819 = vld [vmem:[#allocation2 + $0x6a] sm:$0xff]
        %v5820 = vld [vmem:[#allocation2 + $0x72] sm:$0xff]
        %v5821 = vld [vmem:[#allocation2 + $0x7a] sm:$0xff]
        %v5822 = vld [vmem:[#allocation2 + $0x82] sm:$0xff]
        %v5823 = vld [vmem:[#allocation2 + $0x8a] sm:$0xff]
        %v5824 = vld [vmem:[#allocation2 + $0x92] sm:$0xff]
        %v5825 = vld [vmem:[#allocation2 + $0x9a] sm:$0xff]
        %v5826 = vld [vmem:[#allocation2 + $0xa2] sm:$0xff]
        %v5827 = vld [vmem:[#allocation2 + $0xaa] sm:$0xff]
        %v5828 = vld [vmem:[#allocation2 + $0xb2] sm:$0xff]
        %v5829 = vld [vmem:[#allocation2 + $0xba] sm:$0xff]
        %v5830 = vld [vmem:[#allocation2 + $0xc2] sm:$0xff]
        %v5831 = vld [vmem:[#allocation2 + $0xca] sm:$0xff]
        %v5832 = vld [vmem:[#allocation2 + $0xd2] sm:$0xff]
        %v5833 = vld [vmem:[#allocation2 + $0xda] sm:$0xff]
        %v5834 = vld [vmem:[#allocation2 + $0xe2] sm:$0xff]
        %v5835 = vld [vmem:[#allocation2 + $0xea] sm:$0xff]
        %v5836 = vld [vmem:[#allocation2 + $0xf2] sm:$0xff]
        %v5837 = vld [vmem:[#allocation2 + $0xfa] sm:$0xff]
        %v5838 = vld [vmem:[#allocation2 + $0x102] sm:$0xff]
        %v5839 = vld [vmem:[#allocation2 + $0x10a] sm:$0xff]
        %v5840 = vld [vmem:[#allocation2 + $0x112] sm:$0xff]
        %v5841 = vld [vmem:[#allocation2 + $0x11a] sm:$0xff]
        %v5843 = vsel %vm1036, %v5806, 0
        %v5846 = vsel %vm1036, %v5807, 0
        %v5849 = vsel %vm1036, %v5808, 0
        %v5852 = vsel %vm1036, %v5809, 0
        %v5855 = vsel %vm1036, %v5810, 0
        %v5858 = vsel %vm1036, %v5811, 0
        %v5861 = vsel %vm1036, %v5812, 0
        %v5864 = vsel %vm1036, %v5813, 0
        %v5867 = vsel %vm1036, %v5814, 0
        %v5870 = vsel %vm1036, %v5815, 0
        %v5873 = vsel %vm1036, %v5816, 0
        %v5876 = vsel %vm1036, %v5817, 0
        %v5879 = vsel %vm1036, %v5818, 0
        %v5882 = vsel %vm1036, %v5819, 0
        %v5885 = vsel %vm1036, %v5820, 0
        %v5888 = vsel %vm1036, %v5821, 0
        %v5891 = vsel %vm1036, %v5822, 0
        %v5894 = vsel %vm1036, %v5823, 0
        %v5897 = vsel %vm1036, %v5824, 0
        %v5900 = vsel %vm1036, %v5825, 0
        %v5903 = vsel %vm1036, %v5826, 0
        %v5906 = vsel %vm1036, %v5827, 0
        %v5909 = vsel %vm1036, %v5828, 0
        %v5912 = vsel %vm1036, %v5829, 0
        %v5915 = vsel %vm1036, %v5830, 0
        %v5918 = vsel %vm1036, %v5831, 0
        %v5921 = vsel %vm1036, %v5832, 0
        %v5924 = vsel %vm1036, %v5833, 0
        %v5927 = vsel %vm1036, %v5834, 0
        %v5930 = vsel %vm1036, %v5835, 0
        %v5933 = vsel %vm1036, %v5836, 0
        %v5936 = vsel %vm1036, %v5837, 0
        %v5939 = vsel %vm1036, %v5838, 0
        %v5942 = vsel %vm1036, %v5839, 0
        %v5945 = vsel %vm1036, %v5840, 0
        %v5948 = vsel %vm1036, %v5841, 0
        %v5951 = vsel %vm1145, %v5014, 0
        %5953 = vmatprep.subr.mxu0 0.0
        %5954 = vmatpush1.msra.mxu0 0.0
        %5955 = vmatprep.subr.mxu0 0.0
        %5956 = vmatpush1.msra.mxu0 0.0
        %5957 = vmatprep.subr.mxu0 0.0
        %5958 = vmatpush1.msra.mxu0 0.0
        %5959 = vmatprep.subr.mxu0 0.0
        %5960 = vmatpush1.msra.mxu0 0.0
        %5961 = vmatprep.subr.mxu0 0.0
        %5962 = vmatpush1.msra.mxu0 0.0
        %5963 = vmatprep.subr.mxu0 0.0
        %5964 = vmatpush1.msra.mxu0 0.0
        %5965 = vmatprep.subr.mxu0 0.0
        %5966 = vmatpush1.msra.mxu0 0.0
        %5967 = vmatprep.subr.mxu0 0.0
        %5968 = vmatpush1.msra.mxu0 0.0
        %5969 = vmatprep.subr.mxu0 0.0
        %5970 = vmatpush1.msra.mxu0 0.0
        %5971 = vmatprep.subr.mxu0 0.0
        %5972 = vmatpush1.msra.mxu0 0.0
        %5973 = vmatprep.subr.mxu0 0.0
        %5974 = vmatpush1.msra.mxu0 0.0
        %5975 = vmatprep.subr.mxu0 0.0
        %5976 = vmatpush1.msra.mxu0 0.0
        %5977 = vmatprep.subr.mxu0 0.0
        %5978 = vmatpush1.msra.mxu0 0.0
        %5979 = vmatprep.subr.mxu0 0.0
        %5980 = vmatpush1.msra.mxu0 0.0
        %5981 = vmatprep.subr.mxu0 0.0
        %5982 = vmatpush1.msra.mxu0 0.0
        %5983 = vmatprep.subr.mxu0 0.0
        %5984 = vmatpush1.msra.mxu0 %v5951
        %5985 = vmatprep.subr.mxu0 0.0
        %5986 = vmatpush2.msra.mxu0 0.0
        %5987 = vmatprep.subr.mxu0 0.0
        %5988 = vmatpush2.msra.mxu0 0.0
        %5989 = vmatprep.subr.mxu0 0.0
        %5990 = vmatpush2.msra.mxu0 0.0
        %5991 = vmatprep.subr.mxu0 0.0
        %5992 = vmatpush2.msra.mxu0 0.0
        %5993 = vmatprep.subr.mxu0 0.0
        %5994 = vmatpush2.msra.mxu0 0.0
        %5995 = vmatprep.subr.mxu0 0.0
        %5996 = vmatpush2.msra.mxu0 0.0
        %5997 = vmatprep.subr.mxu0 0.0
        %5998 = vmatpush2.msra.mxu0 0.0
        %5999 = vmatprep.subr.mxu0 0.0
        %6000 = vmatpush2.msra.mxu0 0.0
        %6001 = vmatprep.subr.mxu0 0.0
        %6002 = vmatpush2.msra.mxu0 0.0
        %6003 = vmatprep.subr.mxu0 0.0
        %6004 = vmatpush2.msra.mxu0 0.0
        %6005 = vmatprep.subr.mxu0 0.0
        %6006 = vmatpush2.msra.mxu0 0.0
        %6007 = vmatprep.subr.mxu0 0.0
        %6008 = vmatpush2.msra.mxu0 0.0
        %6009 = vmatprep.subr.mxu0 0.0
        %6010 = vmatpush2.msra.mxu0 0.0
        %6011 = vmatprep.subr.mxu0 0.0
        %6012 = vmatpush2.msra.mxu0 0.0
        %6013 = vmatprep.subr.mxu0 0.0
        %6014 = vmatpush2.msra.mxu0 0.0
        %6015 = vmatprep.subr.mxu0 0.0
        %6016 = vmatpush2.msra.mxu0 0.0
        %6017 = vmatprep.mubr.f32.mxu0 0.0
        %6018 = vmatmul.mubr.f32.gmra.mxu0 %v5843
        %v6019 = vpop.f32.mrf.mxu0
        %v6020 = vadd.f32 0.0, %v6019
        %v6021 = vpop.f32.mrf.mxu0
        %6022 = vmatprep.mubr.f32.mxu0 0.0
        %6023 = vmatmul.mubr.f32.gmra.mxu0 %v5846
        %v6024 = vpop.f32.mrf.mxu0
        %v6025 = vadd.f32 0.0, %v6024
        %v6026 = vpop.f32.mrf.mxu0
        %6027 = vmatprep.mubr.f32.mxu0 0.0
        %6028 = vmatmul.mubr.f32.gmra.mxu0 %v5849
        %v6029 = vpop.f32.mrf.mxu0
        %v6030 = vadd.f32 0.0, %v6029
        %v6031 = vpop.f32.mrf.mxu0
        %6032 = vmatprep.mubr.f32.mxu0 0.0
        %6033 = vmatmul.mubr.f32.gmra.mxu0 %v5852
        %v6034 = vpop.f32.mrf.mxu0
        %v6035 = vadd.f32 0.0, %v6034
        %v6036 = vpop.f32.mrf.mxu0
        %6037 = vmatprep.mubr.f32.mxu0 0.0
        %6038 = vmatmul.mubr.f32.gmra.mxu0 %v5855
        %v6039 = vpop.f32.mrf.mxu0
        %v6040 = vadd.f32 0.0, %v6039
        %v6041 = vpop.f32.mrf.mxu0
        %6042 = vmatprep.mubr.f32.mxu0 0.0
        %6043 = vmatmul.mubr.f32.gmra.mxu0 %v5858
        %v6044 = vpop.f32.mrf.mxu0
        %v6045 = vadd.f32 0.0, %v6044
        %v6046 = vpop.f32.mrf.mxu0
        %6047 = vmatprep.mubr.f32.mxu0 0.0
        %6048 = vmatmul.mubr.f32.gmra.mxu0 %v5861
        %v6049 = vpop.f32.mrf.mxu0
        %v6050 = vadd.f32 0.0, %v6049
        %v6051 = vpop.f32.mrf.mxu0
        %6052 = vmatprep.mubr.f32.mxu0 0.0
        %6053 = vmatmul.mubr.f32.gmra.mxu0 %v5864
        %v6054 = vpop.f32.mrf.mxu0
        %v6055 = vadd.f32 0.0, %v6054
        %v6056 = vpop.f32.mrf.mxu0
        %6057 = vmatprep.mubr.f32.mxu0 0.0
        %6058 = vmatmul.mubr.f32.gmra.mxu0 %v5867
        %v6059 = vpop.f32.mrf.mxu0
        %v6060 = vadd.f32 0.0, %v6059
        %v6061 = vpop.f32.mrf.mxu0
        %6062 = vmatprep.mubr.f32.mxu0 0.0
        %6063 = vmatmul.mubr.f32.gmra.mxu0 %v5870
        %v6064 = vpop.f32.mrf.mxu0
        %v6065 = vadd.f32 0.0, %v6064
        %v6066 = vpop.f32.mrf.mxu0
        %6067 = vmatprep.mubr.f32.mxu0 0.0
        %6068 = vmatmul.mubr.f32.gmra.mxu0 %v5873
        %v6069 = vpop.f32.mrf.mxu0
        %v6070 = vadd.f32 0.0, %v6069
        %v6071 = vpop.f32.mrf.mxu0
        %6072 = vmatprep.mubr.f32.mxu0 0.0
        %6073 = vmatmul.mubr.f32.gmra.mxu0 %v5876
        %v6074 = vpop.f32.mrf.mxu0
        %v6075 = vadd.f32 0.0, %v6074
        %v6076 = vpop.f32.mrf.mxu0
        %6077 = vmatprep.mubr.f32.mxu0 0.0
        %6078 = vmatmul.mubr.f32.gmra.mxu0 %v5879
        %v6079 = vpop.f32.mrf.mxu0
        %v6080 = vadd.f32 0.0, %v6079
        %v6081 = vpop.f32.mrf.mxu0
        %6082 = vmatprep.mubr.f32.mxu0 0.0
        %6083 = vmatmul.mubr.f32.gmra.mxu0 %v5882
        %v6084 = vpop.f32.mrf.mxu0
        %v6085 = vadd.f32 0.0, %v6084
        %v6086 = vpop.f32.mrf.mxu0
        %6087 = vmatprep.mubr.f32.mxu0 0.0
        %6088 = vmatmul.mubr.f32.gmra.mxu0 %v5885
        %v6089 = vpop.f32.mrf.mxu0
        %v6090 = vadd.f32 0.0, %v6089
        %v6091 = vpop.f32.mrf.mxu0
        %6092 = vmatprep.mubr.f32.mxu0 0.0
        %6093 = vmatmul.mubr.f32.gmra.mxu0 %v5888
        %v6094 = vpop.f32.mrf.mxu0
        %v6095 = vadd.f32 0.0, %v6094
        %v6096 = vpop.f32.mrf.mxu0
        %6097 = vmatprep.mubr.f32.mxu0 0.0
        %6098 = vmatmul.mubr.f32.gmra.mxu0 %v5891
        %v6099 = vpop.f32.mrf.mxu0
        %v6100 = vadd.f32 0.0, %v6099
        %v6101 = vpop.f32.mrf.mxu0
        %6102 = vmatprep.mubr.f32.mxu0 0.0
        %6103 = vmatmul.mubr.f32.gmra.mxu0 %v5894
        %v6104 = vpop.f32.mrf.mxu0
        %v6105 = vadd.f32 0.0, %v6104
        %v6106 = vpop.f32.mrf.mxu0
        %6107 = vmatprep.mubr.f32.mxu0 0.0
        %6108 = vmatmul.mubr.f32.gmra.mxu0 %v5897
        %v6109 = vpop.f32.mrf.mxu0
        %v6110 = vadd.f32 0.0, %v6109
        %v6111 = vpop.f32.mrf.mxu0
        %6112 = vmatprep.mubr.f32.mxu0 0.0
        %6113 = vmatmul.mubr.f32.gmra.mxu0 %v5900
        %v6114 = vpop.f32.mrf.mxu0
        %v6115 = vadd.f32 0.0, %v6114
        %v6116 = vpop.f32.mrf.mxu0
        %6117 = vmatprep.mubr.f32.mxu0 0.0
        %6118 = vmatmul.mubr.f32.gmra.mxu0 %v5903
        %v6119 = vpop.f32.mrf.mxu0
        %v6120 = vadd.f32 0.0, %v6119
        %v6121 = vpop.f32.mrf.mxu0
        %6122 = vmatprep.mubr.f32.mxu0 0.0
        %6123 = vmatmul.mubr.f32.gmra.mxu0 %v5906
        %v6124 = vpop.f32.mrf.mxu0
        %v6125 = vadd.f32 0.0, %v6124
        %v6126 = vpop.f32.mrf.mxu0
        %6127 = vmatprep.mubr.f32.mxu0 0.0
        %6128 = vmatmul.mubr.f32.gmra.mxu0 %v5909
        %v6129 = vpop.f32.mrf.mxu0
        %v6130 = vadd.f32 0.0, %v6129
        %v6131 = vpop.f32.mrf.mxu0
        %6132 = vmatprep.mubr.f32.mxu0 0.0
        %6133 = vmatmul.mubr.f32.gmra.mxu0 %v5912
        %v6134 = vpop.f32.mrf.mxu0
        %v6135 = vadd.f32 0.0, %v6134
        %v6136 = vpop.f32.mrf.mxu0
        %6137 = vmatprep.mubr.f32.mxu0 0.0
        %6138 = vmatmul.mubr.f32.gmra.mxu0 %v5915
        %v6139 = vpop.f32.mrf.mxu0
        %v6140 = vadd.f32 0.0, %v6139
        %v6141 = vpop.f32.mrf.mxu0
        %6142 = vmatprep.mubr.f32.mxu0 0.0
        %6143 = vmatmul.mubr.f32.gmra.mxu0 %v5918
        %v6144 = vpop.f32.mrf.mxu0
        %v6145 = vadd.f32 0.0, %v6144
        %v6146 = vpop.f32.mrf.mxu0
        %6147 = vmatprep.mubr.f32.mxu0 0.0
        %6148 = vmatmul.mubr.f32.gmra.mxu0 %v5921
        %v6149 = vpop.f32.mrf.mxu0
        %v6150 = vadd.f32 0.0, %v6149
        %v6151 = vpop.f32.mrf.mxu0
        %6152 = vmatprep.mubr.f32.mxu0 0.0
        %6153 = vmatmul.mubr.f32.gmra.mxu0 %v5924
        %v6154 = vpop.f32.mrf.mxu0
        %v6155 = vadd.f32 0.0, %v6154
        %v6156 = vpop.f32.mrf.mxu0
        %6157 = vmatprep.mubr.f32.mxu0 0.0
        %6158 = vmatmul.mubr.f32.gmra.mxu0 %v5927
        %v6159 = vpop.f32.mrf.mxu0
        %v6160 = vadd.f32 0.0, %v6159
        %v6161 = vpop.f32.mrf.mxu0
        %6162 = vmatprep.mubr.f32.mxu0 0.0
        %6163 = vmatmul.mubr.f32.gmra.mxu0 %v5930
        %v6164 = vpop.f32.mrf.mxu0
        %v6165 = vadd.f32 0.0, %v6164
        %v6166 = vpop.f32.mrf.mxu0
        %6167 = vmatprep.mubr.f32.mxu0 0.0
        %6168 = vmatmul.mubr.f32.gmra.mxu0 %v5933
        %v6169 = vpop.f32.mrf.mxu0
        %v6170 = vadd.f32 0.0, %v6169
        %v6171 = vpop.f32.mrf.mxu0
        %6172 = vmatprep.mubr.f32.mxu0 0.0
        %6173 = vmatmul.mubr.f32.gmra.mxu0 %v5936
        %v6174 = vpop.f32.mrf.mxu0
        %v6175 = vadd.f32 0.0, %v6174
        %v6176 = vpop.f32.mrf.mxu0
        %6177 = vmatprep.mubr.f32.mxu0 0.0
        %6178 = vmatmul.mubr.f32.gmra.mxu0 %v5939
        %v6179 = vpop.f32.mrf.mxu0
        %v6180 = vadd.f32 0.0, %v6179
        %v6181 = vpop.f32.mrf.mxu0
        %6182 = vmatprep.mubr.f32.mxu0 0.0
        %6183 = vmatmul.mubr.f32.gmra.mxu0 %v5942
        %v6184 = vpop.f32.mrf.mxu0
        %v6185 = vadd.f32 0.0, %v6184
        %v6186 = vpop.f32.mrf.mxu0
        %6187 = vmatprep.mubr.f32.mxu0 0.0
        %6188 = vmatmul.mubr.f32.gmra.mxu0 %v5945
        %v6189 = vpop.f32.mrf.mxu0
        %v6190 = vadd.f32 0.0, %v6189
        %v6191 = vpop.f32.mrf.mxu0
        %6192 = vmatprep.mubr.f32.mxu0 0.0
        %6193 = vmatmul.mubr.f32.gmra.mxu0 %v5948
        %v6194 = vpop.f32.mrf.mxu0
        %v6195 = vadd.f32 0.0, %v6194
        %v6196 = vpop.f32.mrf.mxu0
        %6197 = vdwg.mxu0
        %v6198 = vadd.f32 %v5628, %v6020
        %v6199 = vadd.f32 %v5633, %v6025
        %v6200 = vadd.f32 %v5638, %v6030
        %v6201 = vadd.f32 %v5643, %v6035
        %v6202 = vadd.f32 %v5648, %v6040
        %v6203 = vadd.f32 %v5653, %v6045
        %v6204 = vadd.f32 %v5658, %v6050
        %v6205 = vadd.f32 %v5663, %v6055
        %v6206 = vadd.f32 %v5668, %v6060
        %v6207 = vadd.f32 %v5673, %v6065
        %v6208 = vadd.f32 %v5678, %v6070
        %v6209 = vadd.f32 %v5683, %v6075
        %v6210 = vadd.f32 %v5688, %v6080
        %v6211 = vadd.f32 %v5693, %v6085
        %v6212 = vadd.f32 %v5698, %v6090
        %v6213 = vadd.f32 %v5703, %v6095
        %v6214 = vadd.f32 %v5708, %v6100
        %v6215 = vadd.f32 %v5713, %v6105
        %v6216 = vadd.f32 %v5718, %v6110
        %v6217 = vadd.f32 %v5723, %v6115
        %v6218 = vadd.f32 %v5728, %v6120
        %v6219 = vadd.f32 %v5733, %v6125
        %v6220 = vadd.f32 %v5738, %v6130
        %v6221 = vadd.f32 %v5743, %v6135
        %v6222 = vadd.f32 %v5748, %v6140
        %v6223 = vadd.f32 %v5753, %v6145
        %v6224 = vadd.f32 %v5758, %v6150
        %v6225 = vadd.f32 %v5763, %v6155
        %v6226 = vadd.f32 %v5768, %v6160
        %v6227 = vadd.f32 %v5773, %v6165
        %v6228 = vadd.f32 %v5778, %v6170
        %v6229 = vadd.f32 %v5783, %v6175
        %v6230 = vadd.f32 %v5788, %v6180
        %v6231 = vadd.f32 %v5793, %v6185
        %v6232 = vadd.f32 %v5798, %v6190
        %v6233 = vadd.f32 %v5803, %v6195
        %v6234 = vld [vmem:[#allocation2 + $0x12] sm:$0xff]
        %v6235 = vld [vmem:[#allocation2 + $0x1a] sm:$0xff]
        %v6236 = vld [vmem:[#allocation2 + $0x22] sm:$0xff]
        %v6237 = vld [vmem:[#allocation2 + $0x2a] sm:$0xff]
        %v6238 = vld [vmem:[#allocation2 + $0x32] sm:$0xff]
        %v6239 = vld [vmem:[#allocation2 + $0x3a] sm:$0xff]
        %v6240 = vld [vmem:[#allocation2 + $0x42] sm:$0xff]
        %v6241 = vld [vmem:[#allocation2 + $0x4a] sm:$0xff]
        %v6242 = vld [vmem:[#allocation2 + $0x52] sm:$0xff]
        %v6243 = vld [vmem:[#allocation2 + $0x5a] sm:$0xff]
        %v6244 = vld [vmem:[#allocation2 + $0x62] sm:$0xff]
        %v6245 = vld [vmem:[#allocation2 + $0x6a] sm:$0xff]
        %v6246 = vld [vmem:[#allocation2 + $0x72] sm:$0xff]
        %v6247 = vld [vmem:[#allocation2 + $0x7a] sm:$0xff]
        %v6248 = vld [vmem:[#allocation2 + $0x82] sm:$0xff]
        %v6249 = vld [vmem:[#allocation2 + $0x8a] sm:$0xff]
        %v6250 = vld [vmem:[#allocation2 + $0x92] sm:$0xff]
        %v6251 = vld [vmem:[#allocation2 + $0x9a] sm:$0xff]
        %v6252 = vld [vmem:[#allocation2 + $0xa2] sm:$0xff]
        %v6253 = vld [vmem:[#allocation2 + $0xaa] sm:$0xff]
        %v6254 = vld [vmem:[#allocation2 + $0xb2] sm:$0xff]
        %v6255 = vld [vmem:[#allocation2 + $0xba] sm:$0xff]
        %v6256 = vld [vmem:[#allocation2 + $0xc2] sm:$0xff]
        %v6257 = vld [vmem:[#allocation2 + $0xca] sm:$0xff]
        %v6258 = vld [vmem:[#allocation2 + $0xd2] sm:$0xff]
        %v6259 = vld [vmem:[#allocation2 + $0xda] sm:$0xff]
        %v6260 = vld [vmem:[#allocation2 + $0xe2] sm:$0xff]
        %v6261 = vld [vmem:[#allocation2 + $0xea] sm:$0xff]
        %v6262 = vld [vmem:[#allocation2 + $0xf2] sm:$0xff]
        %v6263 = vld [vmem:[#allocation2 + $0xfa] sm:$0xff]
        %v6264 = vld [vmem:[#allocation2 + $0x102] sm:$0xff]
        %v6265 = vld [vmem:[#allocation2 + $0x10a] sm:$0xff]
        %v6266 = vld [vmem:[#allocation2 + $0x112] sm:$0xff]
        %v6267 = vld [vmem:[#allocation2 + $0x11a] sm:$0xff]
        %v6268 = vld [vmem:[#allocation2 + $0x122] sm:$0xff]
        %v6269 = vld [vmem:[#allocation2 + $0x12a] sm:$0xff]
        %v6271 = vsel %vm1036, %v6234, 0
        %v6274 = vsel %vm1036, %v6235, 0
        %v6277 = vsel %vm1036, %v6236, 0
        %v6280 = vsel %vm1036, %v6237, 0
        %v6283 = vsel %vm1036, %v6238, 0
        %v6286 = vsel %vm1036, %v6239, 0
        %v6289 = vsel %vm1036, %v6240, 0
        %v6292 = vsel %vm1036, %v6241, 0
        %v6295 = vsel %vm1036, %v6242, 0
        %v6298 = vsel %vm1036, %v6243, 0
        %v6301 = vsel %vm1036, %v6244, 0
        %v6304 = vsel %vm1036, %v6245, 0
        %v6307 = vsel %vm1036, %v6246, 0
        %v6310 = vsel %vm1036, %v6247, 0
        %v6313 = vsel %vm1036, %v6248, 0
        %v6316 = vsel %vm1036, %v6249, 0
        %v6319 = vsel %vm1036, %v6250, 0
        %v6322 = vsel %vm1036, %v6251, 0
        %v6325 = vsel %vm1036, %v6252, 0
        %v6328 = vsel %vm1036, %v6253, 0
        %v6331 = vsel %vm1036, %v6254, 0
        %v6334 = vsel %vm1036, %v6255, 0
        %v6337 = vsel %vm1036, %v6256, 0
        %v6340 = vsel %vm1036, %v6257, 0
        %v6343 = vsel %vm1036, %v6258, 0
        %v6346 = vsel %vm1036, %v6259, 0
        %v6349 = vsel %vm1036, %v6260, 0
        %v6352 = vsel %vm1036, %v6261, 0
        %v6355 = vsel %vm1036, %v6262, 0
        %v6358 = vsel %vm1036, %v6263, 0
        %v6361 = vsel %vm1036, %v6264, 0
        %v6364 = vsel %vm1036, %v6265, 0
        %v6367 = vsel %vm1036, %v6266, 0
        %v6370 = vsel %vm1036, %v6267, 0
        %v6373 = vsel %vm1036, %v6268, 0
        %v6376 = vsel %vm1036, %v6269, 0
        %v6379 = vsel %vm1145, %v5015, 0
        %6381 = vmatprep.subr.mxu0 0.0
        %6382 = vmatpush1.msra.mxu0 0.0
        %6383 = vmatprep.subr.mxu0 0.0
        %6384 = vmatpush1.msra.mxu0 0.0
        %6385 = vmatprep.subr.mxu0 0.0
        %6386 = vmatpush1.msra.mxu0 0.0
        %6387 = vmatprep.subr.mxu0 0.0
        %6388 = vmatpush1.msra.mxu0 0.0
        %6389 = vmatprep.subr.mxu0 0.0
        %6390 = vmatpush1.msra.mxu0 0.0
        %6391 = vmatprep.subr.mxu0 0.0
        %6392 = vmatpush1.msra.mxu0 0.0
        %6393 = vmatprep.subr.mxu0 0.0
        %6394 = vmatpush1.msra.mxu0 0.0
        %6395 = vmatprep.subr.mxu0 0.0
        %6396 = vmatpush1.msra.mxu0 0.0
        %6397 = vmatprep.subr.mxu0 0.0
        %6398 = vmatpush1.msra.mxu0 0.0
        %6399 = vmatprep.subr.mxu0 0.0
        %6400 = vmatpush1.msra.mxu0 0.0
        %6401 = vmatprep.subr.mxu0 0.0
        %6402 = vmatpush1.msra.mxu0 0.0
        %6403 = vmatprep.subr.mxu0 0.0
        %6404 = vmatpush1.msra.mxu0 0.0
        %6405 = vmatprep.subr.mxu0 0.0
        %6406 = vmatpush1.msra.mxu0 0.0
        %6407 = vmatprep.subr.mxu0 0.0
        %6408 = vmatpush1.msra.mxu0 0.0
        %6409 = vmatprep.subr.mxu0 0.0
        %6410 = vmatpush1.msra.mxu0 0.0
        %6411 = vmatprep.subr.mxu0 0.0
        %6412 = vmatpush1.msra.mxu0 %v6379
        %6413 = vmatprep.subr.mxu0 0.0
        %6414 = vmatpush2.msra.mxu0 0.0
        %6415 = vmatprep.subr.mxu0 0.0
        %6416 = vmatpush2.msra.mxu0 0.0
        %6417 = vmatprep.subr.mxu0 0.0
        %6418 = vmatpush2.msra.mxu0 0.0
        %6419 = vmatprep.subr.mxu0 0.0
        %6420 = vmatpush2.msra.mxu0 0.0
        %6421 = vmatprep.subr.mxu0 0.0
        %6422 = vmatpush2.msra.mxu0 0.0
        %6423 = vmatprep.subr.mxu0 0.0
        %6424 = vmatpush2.msra.mxu0 0.0
        %6425 = vmatprep.subr.mxu0 0.0
        %6426 = vmatpush2.msra.mxu0 0.0
        %6427 = vmatprep.subr.mxu0 0.0
        %6428 = vmatpush2.msra.mxu0 0.0
        %6429 = vmatprep.subr.mxu0 0.0
        %6430 = vmatpush2.msra.mxu0 0.0
        %6431 = vmatprep.subr.mxu0 0.0
        %6432 = vmatpush2.msra.mxu0 0.0
        %6433 = vmatprep.subr.mxu0 0.0
        %6434 = vmatpush2.msra.mxu0 0.0
        %6435 = vmatprep.subr.mxu0 0.0
        %6436 = vmatpush2.msra.mxu0 0.0
        %6437 = vmatprep.subr.mxu0 0.0
        %6438 = vmatpush2.msra.mxu0 0.0
        %6439 = vmatprep.subr.mxu0 0.0
        %6440 = vmatpush2.msra.mxu0 0.0
        %6441 = vmatprep.subr.mxu0 0.0
        %6442 = vmatpush2.msra.mxu0 0.0
        %6443 = vmatprep.subr.mxu0 0.0
        %6444 = vmatpush2.msra.mxu0 0.0
        %6445 = vmatprep.mubr.f32.mxu0 0.0
        %6446 = vmatmul.mubr.f32.gmra.mxu0 %v6271
        %v6447 = vpop.f32.mrf.mxu0
        %v6448 = vadd.f32 0.0, %v6447
        %v6449 = vpop.f32.mrf.mxu0
        %6450 = vmatprep.mubr.f32.mxu0 0.0
        %6451 = vmatmul.mubr.f32.gmra.mxu0 %v6274
        %v6452 = vpop.f32.mrf.mxu0
        %v6453 = vadd.f32 0.0, %v6452
        %v6454 = vpop.f32.mrf.mxu0
        %6455 = vmatprep.mubr.f32.mxu0 0.0
        %6456 = vmatmul.mubr.f32.gmra.mxu0 %v6277
        %v6457 = vpop.f32.mrf.mxu0
        %v6458 = vadd.f32 0.0, %v6457
        %v6459 = vpop.f32.mrf.mxu0
        %6460 = vmatprep.mubr.f32.mxu0 0.0
        %6461 = vmatmul.mubr.f32.gmra.mxu0 %v6280
        %v6462 = vpop.f32.mrf.mxu0
        %v6463 = vadd.f32 0.0, %v6462
        %v6464 = vpop.f32.mrf.mxu0
        %6465 = vmatprep.mubr.f32.mxu0 0.0
        %6466 = vmatmul.mubr.f32.gmra.mxu0 %v6283
        %v6467 = vpop.f32.mrf.mxu0
        %v6468 = vadd.f32 0.0, %v6467
        %v6469 = vpop.f32.mrf.mxu0
        %6470 = vmatprep.mubr.f32.mxu0 0.0
        %6471 = vmatmul.mubr.f32.gmra.mxu0 %v6286
        %v6472 = vpop.f32.mrf.mxu0
        %v6473 = vadd.f32 0.0, %v6472
        %v6474 = vpop.f32.mrf.mxu0
        %6475 = vmatprep.mubr.f32.mxu0 0.0
        %6476 = vmatmul.mubr.f32.gmra.mxu0 %v6289
        %v6477 = vpop.f32.mrf.mxu0
        %v6478 = vadd.f32 0.0, %v6477
        %v6479 = vpop.f32.mrf.mxu0
        %6480 = vmatprep.mubr.f32.mxu0 0.0
        %6481 = vmatmul.mubr.f32.gmra.mxu0 %v6292
        %v6482 = vpop.f32.mrf.mxu0
        %v6483 = vadd.f32 0.0, %v6482
        %v6484 = vpop.f32.mrf.mxu0
        %6485 = vmatprep.mubr.f32.mxu0 0.0
        %6486 = vmatmul.mubr.f32.gmra.mxu0 %v6295
        %v6487 = vpop.f32.mrf.mxu0
        %v6488 = vadd.f32 0.0, %v6487
        %v6489 = vpop.f32.mrf.mxu0
        %6490 = vmatprep.mubr.f32.mxu0 0.0
        %6491 = vmatmul.mubr.f32.gmra.mxu0 %v6298
        %v6492 = vpop.f32.mrf.mxu0
        %v6493 = vadd.f32 0.0, %v6492
        %v6494 = vpop.f32.mrf.mxu0
        %6495 = vmatprep.mubr.f32.mxu0 0.0
        %6496 = vmatmul.mubr.f32.gmra.mxu0 %v6301
        %v6497 = vpop.f32.mrf.mxu0
        %v6498 = vadd.f32 0.0, %v6497
        %v6499 = vpop.f32.mrf.mxu0
        %6500 = vmatprep.mubr.f32.mxu0 0.0
        %6501 = vmatmul.mubr.f32.gmra.mxu0 %v6304
        %v6502 = vpop.f32.mrf.mxu0
        %v6503 = vadd.f32 0.0, %v6502
        %v6504 = vpop.f32.mrf.mxu0
        %6505 = vmatprep.mubr.f32.mxu0 0.0
        %6506 = vmatmul.mubr.f32.gmra.mxu0 %v6307
        %v6507 = vpop.f32.mrf.mxu0
        %v6508 = vadd.f32 0.0, %v6507
        %v6509 = vpop.f32.mrf.mxu0
        %6510 = vmatprep.mubr.f32.mxu0 0.0
        %6511 = vmatmul.mubr.f32.gmra.mxu0 %v6310
        %v6512 = vpop.f32.mrf.mxu0
        %v6513 = vadd.f32 0.0, %v6512
        %v6514 = vpop.f32.mrf.mxu0
        %6515 = vmatprep.mubr.f32.mxu0 0.0
        %6516 = vmatmul.mubr.f32.gmra.mxu0 %v6313
        %v6517 = vpop.f32.mrf.mxu0
        %v6518 = vadd.f32 0.0, %v6517
        %v6519 = vpop.f32.mrf.mxu0
        %6520 = vmatprep.mubr.f32.mxu0 0.0
        %6521 = vmatmul.mubr.f32.gmra.mxu0 %v6316
        %v6522 = vpop.f32.mrf.mxu0
        %v6523 = vadd.f32 0.0, %v6522
        %v6524 = vpop.f32.mrf.mxu0
        %6525 = vmatprep.mubr.f32.mxu0 0.0
        %6526 = vmatmul.mubr.f32.gmra.mxu0 %v6319
        %v6527 = vpop.f32.mrf.mxu0
        %v6528 = vadd.f32 0.0, %v6527
        %v6529 = vpop.f32.mrf.mxu0
        %6530 = vmatprep.mubr.f32.mxu0 0.0
        %6531 = vmatmul.mubr.f32.gmra.mxu0 %v6322
        %v6532 = vpop.f32.mrf.mxu0
        %v6533 = vadd.f32 0.0, %v6532
        %v6534 = vpop.f32.mrf.mxu0
        %6535 = vmatprep.mubr.f32.mxu0 0.0
        %6536 = vmatmul.mubr.f32.gmra.mxu0 %v6325
        %v6537 = vpop.f32.mrf.mxu0
        %v6538 = vadd.f32 0.0, %v6537
        %v6539 = vpop.f32.mrf.mxu0
        %6540 = vmatprep.mubr.f32.mxu0 0.0
        %6541 = vmatmul.mubr.f32.gmra.mxu0 %v6328
        %v6542 = vpop.f32.mrf.mxu0
        %v6543 = vadd.f32 0.0, %v6542
        %v6544 = vpop.f32.mrf.mxu0
        %6545 = vmatprep.mubr.f32.mxu0 0.0
        %6546 = vmatmul.mubr.f32.gmra.mxu0 %v6331
        %v6547 = vpop.f32.mrf.mxu0
        %v6548 = vadd.f32 0.0, %v6547
        %v6549 = vpop.f32.mrf.mxu0
        %6550 = vmatprep.mubr.f32.mxu0 0.0
        %6551 = vmatmul.mubr.f32.gmra.mxu0 %v6334
        %v6552 = vpop.f32.mrf.mxu0
        %v6553 = vadd.f32 0.0, %v6552
        %v6554 = vpop.f32.mrf.mxu0
        %6555 = vmatprep.mubr.f32.mxu0 0.0
        %6556 = vmatmul.mubr.f32.gmra.mxu0 %v6337
        %v6557 = vpop.f32.mrf.mxu0
        %v6558 = vadd.f32 0.0, %v6557
        %v6559 = vpop.f32.mrf.mxu0
        %6560 = vmatprep.mubr.f32.mxu0 0.0
        %6561 = vmatmul.mubr.f32.gmra.mxu0 %v6340
        %v6562 = vpop.f32.mrf.mxu0
        %v6563 = vadd.f32 0.0, %v6562
        %v6564 = vpop.f32.mrf.mxu0
        %6565 = vmatprep.mubr.f32.mxu0 0.0
        %6566 = vmatmul.mubr.f32.gmra.mxu0 %v6343
        %v6567 = vpop.f32.mrf.mxu0
        %v6568 = vadd.f32 0.0, %v6567
        %v6569 = vpop.f32.mrf.mxu0
        %6570 = vmatprep.mubr.f32.mxu0 0.0
        %6571 = vmatmul.mubr.f32.gmra.mxu0 %v6346
        %v6572 = vpop.f32.mrf.mxu0
        %v6573 = vadd.f32 0.0, %v6572
        %v6574 = vpop.f32.mrf.mxu0
        %6575 = vmatprep.mubr.f32.mxu0 0.0
        %6576 = vmatmul.mubr.f32.gmra.mxu0 %v6349
        %v6577 = vpop.f32.mrf.mxu0
        %v6578 = vadd.f32 0.0, %v6577
        %v6579 = vpop.f32.mrf.mxu0
        %6580 = vmatprep.mubr.f32.mxu0 0.0
        %6581 = vmatmul.mubr.f32.gmra.mxu0 %v6352
        %v6582 = vpop.f32.mrf.mxu0
        %v6583 = vadd.f32 0.0, %v6582
        %v6584 = vpop.f32.mrf.mxu0
        %6585 = vmatprep.mubr.f32.mxu0 0.0
        %6586 = vmatmul.mubr.f32.gmra.mxu0 %v6355
        %v6587 = vpop.f32.mrf.mxu0
        %v6588 = vadd.f32 0.0, %v6587
        %v6589 = vpop.f32.mrf.mxu0
        %6590 = vmatprep.mubr.f32.mxu0 0.0
        %6591 = vmatmul.mubr.f32.gmra.mxu0 %v6358
        %v6592 = vpop.f32.mrf.mxu0
        %v6593 = vadd.f32 0.0, %v6592
        %v6594 = vpop.f32.mrf.mxu0
        %6595 = vmatprep.mubr.f32.mxu0 0.0
        %6596 = vmatmul.mubr.f32.gmra.mxu0 %v6361
        %v6597 = vpop.f32.mrf.mxu0
        %v6598 = vadd.f32 0.0, %v6597
        %v6599 = vpop.f32.mrf.mxu0
        %6600 = vmatprep.mubr.f32.mxu0 0.0
        %6601 = vmatmul.mubr.f32.gmra.mxu0 %v6364
        %v6602 = vpop.f32.mrf.mxu0
        %v6603 = vadd.f32 0.0, %v6602
        %v6604 = vpop.f32.mrf.mxu0
        %6605 = vmatprep.mubr.f32.mxu0 0.0
        %6606 = vmatmul.mubr.f32.gmra.mxu0 %v6367
        %v6607 = vpop.f32.mrf.mxu0
        %v6608 = vadd.f32 0.0, %v6607
        %v6609 = vpop.f32.mrf.mxu0
        %6610 = vmatprep.mubr.f32.mxu0 0.0
        %6611 = vmatmul.mubr.f32.gmra.mxu0 %v6370
        %v6612 = vpop.f32.mrf.mxu0
        %v6613 = vadd.f32 0.0, %v6612
        %v6614 = vpop.f32.mrf.mxu0
        %6615 = vmatprep.mubr.f32.mxu0 0.0
        %6616 = vmatmul.mubr.f32.gmra.mxu0 %v6373
        %v6617 = vpop.f32.mrf.mxu0
        %v6618 = vadd.f32 0.0, %v6617
        %v6619 = vpop.f32.mrf.mxu0
        %6620 = vmatprep.mubr.f32.mxu0 0.0
        %6621 = vmatmul.mubr.f32.gmra.mxu0 %v6376
        %v6622 = vpop.f32.mrf.mxu0
        %v6623 = vadd.f32 0.0, %v6622
        %v6624 = vpop.f32.mrf.mxu0
        %6625 = vdwg.mxu0
        %v6626 = vadd.f32 %v6198, %v6448
        %v6627 = vadd.f32 %v6199, %v6453
        %v6628 = vadd.f32 %v6200, %v6458
        %v6629 = vadd.f32 %v6201, %v6463
        %v6630 = vadd.f32 %v6202, %v6468
        %v6631 = vadd.f32 %v6203, %v6473
        %v6632 = vadd.f32 %v6204, %v6478
        %v6633 = vadd.f32 %v6205, %v6483
        %v6634 = vadd.f32 %v6206, %v6488
        %v6635 = vadd.f32 %v6207, %v6493
        %v6636 = vadd.f32 %v6208, %v6498
        %v6637 = vadd.f32 %v6209, %v6503
        %v6638 = vadd.f32 %v6210, %v6508
        %v6639 = vadd.f32 %v6211, %v6513
        %v6640 = vadd.f32 %v6212, %v6518
        %v6641 = vadd.f32 %v6213, %v6523
        %v6642 = vadd.f32 %v6214, %v6528
        %v6643 = vadd.f32 %v6215, %v6533
        %v6644 = vadd.f32 %v6216, %v6538
        %v6645 = vadd.f32 %v6217, %v6543
        %v6646 = vadd.f32 %v6218, %v6548
        %v6647 = vadd.f32 %v6219, %v6553
        %v6648 = vadd.f32 %v6220, %v6558
        %v6649 = vadd.f32 %v6221, %v6563
        %v6650 = vadd.f32 %v6222, %v6568
        %v6651 = vadd.f32 %v6223, %v6573
        %v6652 = vadd.f32 %v6224, %v6578
        %v6653 = vadd.f32 %v6225, %v6583
        %v6654 = vadd.f32 %v6226, %v6588
        %v6655 = vadd.f32 %v6227, %v6593
        %v6656 = vadd.f32 %v6228, %v6598
        %v6657 = vadd.f32 %v6229, %v6603
        %v6658 = vadd.f32 %v6230, %v6608
        %v6659 = vadd.f32 %v6231, %v6613
        %v6660 = vadd.f32 %v6232, %v6618
        %v6661 = vadd.f32 %v6233, %v6623
        %v6662 = vld [vmem:[#allocation2 + $0x13] sm:$0xff]
        %v6663 = vld [vmem:[#allocation2 + $0x1b] sm:$0xff]
        %v6664 = vld [vmem:[#allocation2 + $0x23] sm:$0xff]
        %v6665 = vld [vmem:[#allocation2 + $0x2b] sm:$0xff]
        %v6666 = vld [vmem:[#allocation2 + $0x33] sm:$0xff]
        %v6667 = vld [vmem:[#allocation2 + $0x3b] sm:$0xff]
        %v6668 = vld [vmem:[#allocation2 + $0x43] sm:$0xff]
        %v6669 = vld [vmem:[#allocation2 + $0x4b] sm:$0xff]
        %v6670 = vld [vmem:[#allocation2 + $0x53] sm:$0xff]
        %v6671 = vld [vmem:[#allocation2 + $0x5b] sm:$0xff]
        %v6672 = vld [vmem:[#allocation2 + $0x63] sm:$0xff]
        %v6673 = vld [vmem:[#allocation2 + $0x6b] sm:$0xff]
        %v6674 = vld [vmem:[#allocation2 + $0x73] sm:$0xff]
        %v6675 = vld [vmem:[#allocation2 + $0x7b] sm:$0xff]
        %v6676 = vld [vmem:[#allocation2 + $0x83] sm:$0xff]
        %v6677 = vld [vmem:[#allocation2 + $0x8b] sm:$0xff]
        %v6678 = vld [vmem:[#allocation2 + $0x93] sm:$0xff]
        %v6679 = vld [vmem:[#allocation2 + $0x9b] sm:$0xff]
        %v6680 = vld [vmem:[#allocation2 + $0xa3] sm:$0xff]
        %v6681 = vld [vmem:[#allocation2 + $0xab] sm:$0xff]
        %v6682 = vld [vmem:[#allocation2 + $0xb3] sm:$0xff]
        %v6683 = vld [vmem:[#allocation2 + $0xbb] sm:$0xff]
        %v6684 = vld [vmem:[#allocation2 + $0xc3] sm:$0xff]
        %v6685 = vld [vmem:[#allocation2 + $0xcb] sm:$0xff]
        %v6686 = vld [vmem:[#allocation2 + $0xd3] sm:$0xff]
        %v6687 = vld [vmem:[#allocation2 + $0xdb] sm:$0xff]
        %v6688 = vld [vmem:[#allocation2 + $0xe3] sm:$0xff]
        %v6689 = vld [vmem:[#allocation2 + $0xeb] sm:$0xff]
        %v6690 = vld [vmem:[#allocation2 + $0xf3] sm:$0xff]
        %v6691 = vld [vmem:[#allocation2 + $0xfb] sm:$0xff]
        %v6692 = vld [vmem:[#allocation2 + $0x103] sm:$0xff]
        %v6693 = vld [vmem:[#allocation2 + $0x10b] sm:$0xff]
        %v6694 = vld [vmem:[#allocation2 + $0x113] sm:$0xff]
        %v6695 = vld [vmem:[#allocation2 + $0x11b] sm:$0xff]
        %v6696 = vld [vmem:[#allocation2 + $0x123] sm:$0xff]
        %v6697 = vld [vmem:[#allocation2 + $0x12b] sm:$0xff]
        %v6699 = vsel %vm1036, %v6662, 0
        %v6702 = vsel %vm1036, %v6663, 0
        %v6705 = vsel %vm1036, %v6664, 0
        %v6708 = vsel %vm1036, %v6665, 0
        %v6711 = vsel %vm1036, %v6666, 0
        %v6714 = vsel %vm1036, %v6667, 0
        %v6717 = vsel %vm1036, %v6668, 0
        %v6720 = vsel %vm1036, %v6669, 0
        %v6723 = vsel %vm1036, %v6670, 0
        %v6726 = vsel %vm1036, %v6671, 0
        %v6729 = vsel %vm1036, %v6672, 0
        %v6732 = vsel %vm1036, %v6673, 0
        %v6735 = vsel %vm1036, %v6674, 0
        %v6738 = vsel %vm1036, %v6675, 0
        %v6741 = vsel %vm1036, %v6676, 0
        %v6744 = vsel %vm1036, %v6677, 0
        %v6747 = vsel %vm1036, %v6678, 0
        %v6750 = vsel %vm1036, %v6679, 0
        %v6753 = vsel %vm1036, %v6680, 0
        %v6756 = vsel %vm1036, %v6681, 0
        %v6759 = vsel %vm1036, %v6682, 0
        %v6762 = vsel %vm1036, %v6683, 0
        %v6765 = vsel %vm1036, %v6684, 0
        %v6768 = vsel %vm1036, %v6685, 0
        %v6771 = vsel %vm1036, %v6686, 0
        %v6774 = vsel %vm1036, %v6687, 0
        %v6777 = vsel %vm1036, %v6688, 0
        %v6780 = vsel %vm1036, %v6689, 0
        %v6783 = vsel %vm1036, %v6690, 0
        %v6786 = vsel %vm1036, %v6691, 0
        %v6789 = vsel %vm1036, %v6692, 0
        %v6792 = vsel %vm1036, %v6693, 0
        %v6795 = vsel %vm1036, %v6694, 0
        %v6798 = vsel %vm1036, %v6695, 0
        %v6801 = vsel %vm1036, %v6696, 0
        %v6804 = vsel %vm1036, %v6697, 0
        %v6807 = vsel %vm1145, %v5016, 0
        %6809 = vmatprep.subr.mxu0 0.0
        %6810 = vmatpush1.msra.mxu0 0.0
        %6811 = vmatprep.subr.mxu0 0.0
        %6812 = vmatpush1.msra.mxu0 0.0
        %6813 = vmatprep.subr.mxu0 0.0
        %6814 = vmatpush1.msra.mxu0 0.0
        %6815 = vmatprep.subr.mxu0 0.0
        %6816 = vmatpush1.msra.mxu0 0.0
        %6817 = vmatprep.subr.mxu0 0.0
        %6818 = vmatpush1.msra.mxu0 0.0
        %6819 = vmatprep.subr.mxu0 0.0
        %6820 = vmatpush1.msra.mxu0 0.0
        %6821 = vmatprep.subr.mxu0 0.0
        %6822 = vmatpush1.msra.mxu0 0.0
        %6823 = vmatprep.subr.mxu0 0.0
        %6824 = vmatpush1.msra.mxu0 0.0
        %6825 = vmatprep.subr.mxu0 0.0
        %6826 = vmatpush1.msra.mxu0 0.0
        %6827 = vmatprep.subr.mxu0 0.0
        %6828 = vmatpush1.msra.mxu0 0.0
        %6829 = vmatprep.subr.mxu0 0.0
        %6830 = vmatpush1.msra.mxu0 0.0
        %6831 = vmatprep.subr.mxu0 0.0
        %6832 = vmatpush1.msra.mxu0 0.0
        %6833 = vmatprep.subr.mxu0 0.0
        %6834 = vmatpush1.msra.mxu0 0.0
        %6835 = vmatprep.subr.mxu0 0.0
        %6836 = vmatpush1.msra.mxu0 0.0
        %6837 = vmatprep.subr.mxu0 0.0
        %6838 = vmatpush1.msra.mxu0 0.0
        %6839 = vmatprep.subr.mxu0 0.0
        %6840 = vmatpush1.msra.mxu0 %v6807
        %6841 = vmatprep.subr.mxu0 0.0
        %6842 = vmatpush2.msra.mxu0 0.0
        %6843 = vmatprep.subr.mxu0 0.0
        %6844 = vmatpush2.msra.mxu0 0.0
        %6845 = vmatprep.subr.mxu0 0.0
        %6846 = vmatpush2.msra.mxu0 0.0
        %6847 = vmatprep.subr.mxu0 0.0
        %6848 = vmatpush2.msra.mxu0 0.0
        %6849 = vmatprep.subr.mxu0 0.0
        %6850 = vmatpush2.msra.mxu0 0.0
        %6851 = vmatprep.subr.mxu0 0.0
        %6852 = vmatpush2.msra.mxu0 0.0
        %6853 = vmatprep.subr.mxu0 0.0
        %6854 = vmatpush2.msra.mxu0 0.0
        %6855 = vmatprep.subr.mxu0 0.0
        %6856 = vmatpush2.msra.mxu0 0.0
        %6857 = vmatprep.subr.mxu0 0.0
        %6858 = vmatpush2.msra.mxu0 0.0
        %6859 = vmatprep.subr.mxu0 0.0
        %6860 = vmatpush2.msra.mxu0 0.0
        %6861 = vmatprep.subr.mxu0 0.0
        %6862 = vmatpush2.msra.mxu0 0.0
        %6863 = vmatprep.subr.mxu0 0.0
        %6864 = vmatpush2.msra.mxu0 0.0
        %6865 = vmatprep.subr.mxu0 0.0
        %6866 = vmatpush2.msra.mxu0 0.0
        %6867 = vmatprep.subr.mxu0 0.0
        %6868 = vmatpush2.msra.mxu0 0.0
        %6869 = vmatprep.subr.mxu0 0.0
        %6870 = vmatpush2.msra.mxu0 0.0
        %6871 = vmatprep.subr.mxu0 0.0
        %6872 = vmatpush2.msra.mxu0 0.0
        %6873 = vmatprep.mubr.f32.mxu0 0.0
        %6874 = vmatmul.mubr.f32.gmra.mxu0 %v6699
        %v6875 = vpop.f32.mrf.mxu0
        %v6876 = vadd.f32 0.0, %v6875
        %v6877 = vpop.f32.mrf.mxu0
        %6878 = vmatprep.mubr.f32.mxu0 0.0
        %6879 = vmatmul.mubr.f32.gmra.mxu0 %v6702
        %v6880 = vpop.f32.mrf.mxu0
        %v6881 = vadd.f32 0.0, %v6880
        %v6882 = vpop.f32.mrf.mxu0
        %6883 = vmatprep.mubr.f32.mxu0 0.0
        %6884 = vmatmul.mubr.f32.gmra.mxu0 %v6705
        %v6885 = vpop.f32.mrf.mxu0
        %v6886 = vadd.f32 0.0, %v6885
        %v6887 = vpop.f32.mrf.mxu0
        %6888 = vmatprep.mubr.f32.mxu0 0.0
        %6889 = vmatmul.mubr.f32.gmra.mxu0 %v6708
        %v6890 = vpop.f32.mrf.mxu0
        %v6891 = vadd.f32 0.0, %v6890
        %v6892 = vpop.f32.mrf.mxu0
        %6893 = vmatprep.mubr.f32.mxu0 0.0
        %6894 = vmatmul.mubr.f32.gmra.mxu0 %v6711
        %v6895 = vpop.f32.mrf.mxu0
        %v6896 = vadd.f32 0.0, %v6895
        %v6897 = vpop.f32.mrf.mxu0
        %6898 = vmatprep.mubr.f32.mxu0 0.0
        %6899 = vmatmul.mubr.f32.gmra.mxu0 %v6714
        %v6900 = vpop.f32.mrf.mxu0
        %v6901 = vadd.f32 0.0, %v6900
        %v6902 = vpop.f32.mrf.mxu0
        %6903 = vmatprep.mubr.f32.mxu0 0.0
        %6904 = vmatmul.mubr.f32.gmra.mxu0 %v6717
        %v6905 = vpop.f32.mrf.mxu0
        %v6906 = vadd.f32 0.0, %v6905
        %v6907 = vpop.f32.mrf.mxu0
        %6908 = vmatprep.mubr.f32.mxu0 0.0
        %6909 = vmatmul.mubr.f32.gmra.mxu0 %v6720
        %v6910 = vpop.f32.mrf.mxu0
        %v6911 = vadd.f32 0.0, %v6910
        %v6912 = vpop.f32.mrf.mxu0
        %6913 = vmatprep.mubr.f32.mxu0 0.0
        %6914 = vmatmul.mubr.f32.gmra.mxu0 %v6723
        %v6915 = vpop.f32.mrf.mxu0
        %v6916 = vadd.f32 0.0, %v6915
        %v6917 = vpop.f32.mrf.mxu0
        %6918 = vmatprep.mubr.f32.mxu0 0.0
        %6919 = vmatmul.mubr.f32.gmra.mxu0 %v6726
        %v6920 = vpop.f32.mrf.mxu0
        %v6921 = vadd.f32 0.0, %v6920
        %v6922 = vpop.f32.mrf.mxu0
        %6923 = vmatprep.mubr.f32.mxu0 0.0
        %6924 = vmatmul.mubr.f32.gmra.mxu0 %v6729
        %v6925 = vpop.f32.mrf.mxu0
        %v6926 = vadd.f32 0.0, %v6925
        %v6927 = vpop.f32.mrf.mxu0
        %6928 = vmatprep.mubr.f32.mxu0 0.0
        %6929 = vmatmul.mubr.f32.gmra.mxu0 %v6732
        %v6930 = vpop.f32.mrf.mxu0
        %v6931 = vadd.f32 0.0, %v6930
        %v6932 = vpop.f32.mrf.mxu0
        %6933 = vmatprep.mubr.f32.mxu0 0.0
        %6934 = vmatmul.mubr.f32.gmra.mxu0 %v6735
        %v6935 = vpop.f32.mrf.mxu0
        %v6936 = vadd.f32 0.0, %v6935
        %v6937 = vpop.f32.mrf.mxu0
        %6938 = vmatprep.mubr.f32.mxu0 0.0
        %6939 = vmatmul.mubr.f32.gmra.mxu0 %v6738
        %v6940 = vpop.f32.mrf.mxu0
        %v6941 = vadd.f32 0.0, %v6940
        %v6942 = vpop.f32.mrf.mxu0
        %6943 = vmatprep.mubr.f32.mxu0 0.0
        %6944 = vmatmul.mubr.f32.gmra.mxu0 %v6741
        %v6945 = vpop.f32.mrf.mxu0
        %v6946 = vadd.f32 0.0, %v6945
        %v6947 = vpop.f32.mrf.mxu0
        %6948 = vmatprep.mubr.f32.mxu0 0.0
        %6949 = vmatmul.mubr.f32.gmra.mxu0 %v6744
        %v6950 = vpop.f32.mrf.mxu0
        %v6951 = vadd.f32 0.0, %v6950
        %v6952 = vpop.f32.mrf.mxu0
        %6953 = vmatprep.mubr.f32.mxu0 0.0
        %6954 = vmatmul.mubr.f32.gmra.mxu0 %v6747
        %v6955 = vpop.f32.mrf.mxu0
        %v6956 = vadd.f32 0.0, %v6955
        %v6957 = vpop.f32.mrf.mxu0
        %6958 = vmatprep.mubr.f32.mxu0 0.0
        %6959 = vmatmul.mubr.f32.gmra.mxu0 %v6750
        %v6960 = vpop.f32.mrf.mxu0
        %v6961 = vadd.f32 0.0, %v6960
        %v6962 = vpop.f32.mrf.mxu0
        %6963 = vmatprep.mubr.f32.mxu0 0.0
        %6964 = vmatmul.mubr.f32.gmra.mxu0 %v6753
        %v6965 = vpop.f32.mrf.mxu0
        %v6966 = vadd.f32 0.0, %v6965
        %v6967 = vpop.f32.mrf.mxu0
        %6968 = vmatprep.mubr.f32.mxu0 0.0
        %6969 = vmatmul.mubr.f32.gmra.mxu0 %v6756
        %v6970 = vpop.f32.mrf.mxu0
        %v6971 = vadd.f32 0.0, %v6970
        %v6972 = vpop.f32.mrf.mxu0
        %6973 = vmatprep.mubr.f32.mxu0 0.0
        %6974 = vmatmul.mubr.f32.gmra.mxu0 %v6759
        %v6975 = vpop.f32.mrf.mxu0
        %v6976 = vadd.f32 0.0, %v6975
        %v6977 = vpop.f32.mrf.mxu0
        %6978 = vmatprep.mubr.f32.mxu0 0.0
        %6979 = vmatmul.mubr.f32.gmra.mxu0 %v6762
        %v6980 = vpop.f32.mrf.mxu0
        %v6981 = vadd.f32 0.0, %v6980
        %v6982 = vpop.f32.mrf.mxu0
        %6983 = vmatprep.mubr.f32.mxu0 0.0
        %6984 = vmatmul.mubr.f32.gmra.mxu0 %v6765
        %v6985 = vpop.f32.mrf.mxu0
        %v6986 = vadd.f32 0.0, %v6985
        %v6987 = vpop.f32.mrf.mxu0
        %6988 = vmatprep.mubr.f32.mxu0 0.0
        %6989 = vmatmul.mubr.f32.gmra.mxu0 %v6768
        %v6990 = vpop.f32.mrf.mxu0
        %v6991 = vadd.f32 0.0, %v6990
        %v6992 = vpop.f32.mrf.mxu0
        %6993 = vmatprep.mubr.f32.mxu0 0.0
        %6994 = vmatmul.mubr.f32.gmra.mxu0 %v6771
        %v6995 = vpop.f32.mrf.mxu0
        %v6996 = vadd.f32 0.0, %v6995
        %v6997 = vpop.f32.mrf.mxu0
        %6998 = vmatprep.mubr.f32.mxu0 0.0
        %6999 = vmatmul.mubr.f32.gmra.mxu0 %v6774
        %v7000 = vpop.f32.mrf.mxu0
        %v7001 = vadd.f32 0.0, %v7000
        %v7002 = vpop.f32.mrf.mxu0
        %7003 = vmatprep.mubr.f32.mxu0 0.0
        %7004 = vmatmul.mubr.f32.gmra.mxu0 %v6777
        %v7005 = vpop.f32.mrf.mxu0
        %v7006 = vadd.f32 0.0, %v7005
        %v7007 = vpop.f32.mrf.mxu0
        %7008 = vmatprep.mubr.f32.mxu0 0.0
        %7009 = vmatmul.mubr.f32.gmra.mxu0 %v6780
        %v7010 = vpop.f32.mrf.mxu0
        %v7011 = vadd.f32 0.0, %v7010
        %v7012 = vpop.f32.mrf.mxu0
        %7013 = vmatprep.mubr.f32.mxu0 0.0
        %7014 = vmatmul.mubr.f32.gmra.mxu0 %v6783
        %v7015 = vpop.f32.mrf.mxu0
        %v7016 = vadd.f32 0.0, %v7015
        %v7017 = vpop.f32.mrf.mxu0
        %7018 = vmatprep.mubr.f32.mxu0 0.0
        %7019 = vmatmul.mubr.f32.gmra.mxu0 %v6786
        %v7020 = vpop.f32.mrf.mxu0
        %v7021 = vadd.f32 0.0, %v7020
        %v7022 = vpop.f32.mrf.mxu0
        %7023 = vmatprep.mubr.f32.mxu0 0.0
        %7024 = vmatmul.mubr.f32.gmra.mxu0 %v6789
        %v7025 = vpop.f32.mrf.mxu0
        %v7026 = vadd.f32 0.0, %v7025
        %v7027 = vpop.f32.mrf.mxu0
        %7028 = vmatprep.mubr.f32.mxu0 0.0
        %7029 = vmatmul.mubr.f32.gmra.mxu0 %v6792
        %v7030 = vpop.f32.mrf.mxu0
        %v7031 = vadd.f32 0.0, %v7030
        %v7032 = vpop.f32.mrf.mxu0
        %7033 = vmatprep.mubr.f32.mxu0 0.0
        %7034 = vmatmul.mubr.f32.gmra.mxu0 %v6795
        %v7035 = vpop.f32.mrf.mxu0
        %v7036 = vadd.f32 0.0, %v7035
        %v7037 = vpop.f32.mrf.mxu0
        %7038 = vmatprep.mubr.f32.mxu0 0.0
        %7039 = vmatmul.mubr.f32.gmra.mxu0 %v6798
        %v7040 = vpop.f32.mrf.mxu0
        %v7041 = vadd.f32 0.0, %v7040
        %v7042 = vpop.f32.mrf.mxu0
        %7043 = vmatprep.mubr.f32.mxu0 0.0
        %7044 = vmatmul.mubr.f32.gmra.mxu0 %v6801
        %v7045 = vpop.f32.mrf.mxu0
        %v7046 = vadd.f32 0.0, %v7045
        %v7047 = vpop.f32.mrf.mxu0
        %7048 = vmatprep.mubr.f32.mxu0 0.0
        %7049 = vmatmul.mubr.f32.gmra.mxu0 %v6804
        %v7050 = vpop.f32.mrf.mxu0
        %v7051 = vadd.f32 0.0, %v7050
        %v7052 = vpop.f32.mrf.mxu0
        %7053 = vdwg.mxu0
        %v7054 = vadd.f32 %v6626, %v6876
        %v7055 = vadd.f32 %v6627, %v6881
        %v7056 = vadd.f32 %v6628, %v6886
        %v7057 = vadd.f32 %v6629, %v6891
        %v7058 = vadd.f32 %v6630, %v6896
        %v7059 = vadd.f32 %v6631, %v6901
        %v7060 = vadd.f32 %v6632, %v6906
        %v7061 = vadd.f32 %v6633, %v6911
        %v7062 = vadd.f32 %v6634, %v6916
        %v7063 = vadd.f32 %v6635, %v6921
        %v7064 = vadd.f32 %v6636, %v6926
        %v7065 = vadd.f32 %v6637, %v6931
        %v7066 = vadd.f32 %v6638, %v6936
        %v7067 = vadd.f32 %v6639, %v6941
        %v7068 = vadd.f32 %v6640, %v6946
        %v7069 = vadd.f32 %v6641, %v6951
        %v7070 = vadd.f32 %v6642, %v6956
        %v7071 = vadd.f32 %v6643, %v6961
        %v7072 = vadd.f32 %v6644, %v6966
        %v7073 = vadd.f32 %v6645, %v6971
        %v7074 = vadd.f32 %v6646, %v6976
        %v7075 = vadd.f32 %v6647, %v6981
        %v7076 = vadd.f32 %v6648, %v6986
        %v7077 = vadd.f32 %v6649, %v6991
        %v7078 = vadd.f32 %v6650, %v6996
        %v7079 = vadd.f32 %v6651, %v7001
        %v7080 = vadd.f32 %v6652, %v7006
        %v7081 = vadd.f32 %v6653, %v7011
        %v7082 = vadd.f32 %v6654, %v7016
        %v7083 = vadd.f32 %v6655, %v7021
        %v7084 = vadd.f32 %v6656, %v7026
        %v7085 = vadd.f32 %v6657, %v7031
        %v7086 = vadd.f32 %v6658, %v7036
        %v7087 = vadd.f32 %v6659, %v7041
        %v7088 = vadd.f32 %v6660, %v7046
        %v7089 = vadd.f32 %v6661, %v7051
        %v7090 = vld [vmem:[#allocation2 + $0x14] sm:$0xff]
        %v7091 = vld [vmem:[#allocation2 + $0x1c] sm:$0xff]
        %v7092 = vld [vmem:[#allocation2 + $0x24] sm:$0xff]
        %v7093 = vld [vmem:[#allocation2 + $0x2c] sm:$0xff]
        %v7094 = vld [vmem:[#allocation2 + $0x34] sm:$0xff]
        %v7095 = vld [vmem:[#allocation2 + $0x3c] sm:$0xff]
        %v7096 = vld [vmem:[#allocation2 + $0x44] sm:$0xff]
        %v7097 = vld [vmem:[#allocation2 + $0x4c] sm:$0xff]
        %v7098 = vld [vmem:[#allocation2 + $0x54] sm:$0xff]
        %v7099 = vld [vmem:[#allocation2 + $0x5c] sm:$0xff]
        %v7100 = vld [vmem:[#allocation2 + $0x64] sm:$0xff]
        %v7101 = vld [vmem:[#allocation2 + $0x6c] sm:$0xff]
        %v7102 = vld [vmem:[#allocation2 + $0x74] sm:$0xff]
        %v7103 = vld [vmem:[#allocation2 + $0x7c] sm:$0xff]
        %v7104 = vld [vmem:[#allocation2 + $0x84] sm:$0xff]
        %v7105 = vld [vmem:[#allocation2 + $0x8c] sm:$0xff]
        %v7106 = vld [vmem:[#allocation2 + $0x94] sm:$0xff]
        %v7107 = vld [vmem:[#allocation2 + $0x9c] sm:$0xff]
        %v7108 = vld [vmem:[#allocation2 + $0xa4] sm:$0xff]
        %v7109 = vld [vmem:[#allocation2 + $0xac] sm:$0xff]
        %v7110 = vld [vmem:[#allocation2 + $0xb4] sm:$0xff]
        %v7111 = vld [vmem:[#allocation2 + $0xbc] sm:$0xff]
        %v7112 = vld [vmem:[#allocation2 + $0xc4] sm:$0xff]
        %v7113 = vld [vmem:[#allocation2 + $0xcc] sm:$0xff]
        %v7114 = vld [vmem:[#allocation2 + $0xd4] sm:$0xff]
        %v7115 = vld [vmem:[#allocation2 + $0xdc] sm:$0xff]
        %v7116 = vld [vmem:[#allocation2 + $0xe4] sm:$0xff]
        %v7117 = vld [vmem:[#allocation2 + $0xec] sm:$0xff]
        %v7118 = vld [vmem:[#allocation2 + $0xf4] sm:$0xff]
        %v7119 = vld [vmem:[#allocation2 + $0xfc] sm:$0xff]
        %v7120 = vld [vmem:[#allocation2 + $0x104] sm:$0xff]
        %v7121 = vld [vmem:[#allocation2 + $0x10c] sm:$0xff]
        %v7122 = vld [vmem:[#allocation2 + $0x114] sm:$0xff]
        %v7123 = vld [vmem:[#allocation2 + $0x11c] sm:$0xff]
        %v7124 = vld [vmem:[#allocation2 + $0x124] sm:$0xff]
        %v7125 = vld [vmem:[#allocation2 + $0x12c] sm:$0xff]
        %v7127 = vsel %vm1036, %v7090, 0
        %v7130 = vsel %vm1036, %v7091, 0
        %v7133 = vsel %vm1036, %v7092, 0
        %v7136 = vsel %vm1036, %v7093, 0
        %v7139 = vsel %vm1036, %v7094, 0
        %v7142 = vsel %vm1036, %v7095, 0
        %v7145 = vsel %vm1036, %v7096, 0
        %v7148 = vsel %vm1036, %v7097, 0
        %v7151 = vsel %vm1036, %v7098, 0
        %v7154 = vsel %vm1036, %v7099, 0
        %v7157 = vsel %vm1036, %v7100, 0
        %v7160 = vsel %vm1036, %v7101, 0
        %v7163 = vsel %vm1036, %v7102, 0
        %v7166 = vsel %vm1036, %v7103, 0
        %v7169 = vsel %vm1036, %v7104, 0
        %v7172 = vsel %vm1036, %v7105, 0
        %v7175 = vsel %vm1036, %v7106, 0
        %v7178 = vsel %vm1036, %v7107, 0
        %v7181 = vsel %vm1036, %v7108, 0
        %v7184 = vsel %vm1036, %v7109, 0
        %v7187 = vsel %vm1036, %v7110, 0
        %v7190 = vsel %vm1036, %v7111, 0
        %v7193 = vsel %vm1036, %v7112, 0
        %v7196 = vsel %vm1036, %v7113, 0
        %v7199 = vsel %vm1036, %v7114, 0
        %v7202 = vsel %vm1036, %v7115, 0
        %v7205 = vsel %vm1036, %v7116, 0
        %v7208 = vsel %vm1036, %v7117, 0
        %v7211 = vsel %vm1036, %v7118, 0
        %v7214 = vsel %vm1036, %v7119, 0
        %v7217 = vsel %vm1036, %v7120, 0
        %v7220 = vsel %vm1036, %v7121, 0
        %v7223 = vsel %vm1036, %v7122, 0
        %v7226 = vsel %vm1036, %v7123, 0
        %v7229 = vsel %vm1036, %v7124, 0
        %v7232 = vsel %vm1036, %v7125, 0
        %v7235 = vsel %vm1145, %v5017, 0
        %7237 = vmatprep.subr.mxu0 0.0
        %7238 = vmatpush1.msra.mxu0 0.0
        %7239 = vmatprep.subr.mxu0 0.0
        %7240 = vmatpush1.msra.mxu0 0.0
        %7241 = vmatprep.subr.mxu0 0.0
        %7242 = vmatpush1.msra.mxu0 0.0
        %7243 = vmatprep.subr.mxu0 0.0
        %7244 = vmatpush1.msra.mxu0 0.0
        %7245 = vmatprep.subr.mxu0 0.0
        %7246 = vmatpush1.msra.mxu0 0.0
        %7247 = vmatprep.subr.mxu0 0.0
        %7248 = vmatpush1.msra.mxu0 0.0
        %7249 = vmatprep.subr.mxu0 0.0
        %7250 = vmatpush1.msra.mxu0 0.0
        %7251 = vmatprep.subr.mxu0 0.0
        %7252 = vmatpush1.msra.mxu0 0.0
        %7253 = vmatprep.subr.mxu0 0.0
        %7254 = vmatpush1.msra.mxu0 0.0
        %7255 = vmatprep.subr.mxu0 0.0
        %7256 = vmatpush1.msra.mxu0 0.0
        %7257 = vmatprep.subr.mxu0 0.0
        %7258 = vmatpush1.msra.mxu0 0.0
        %7259 = vmatprep.subr.mxu0 0.0
        %7260 = vmatpush1.msra.mxu0 0.0
        %7261 = vmatprep.subr.mxu0 0.0
        %7262 = vmatpush1.msra.mxu0 0.0
        %7263 = vmatprep.subr.mxu0 0.0
        %7264 = vmatpush1.msra.mxu0 0.0
        %7265 = vmatprep.subr.mxu0 0.0
        %7266 = vmatpush1.msra.mxu0 0.0
        %7267 = vmatprep.subr.mxu0 0.0
        %7268 = vmatpush1.msra.mxu0 %v7235
        %7269 = vmatprep.subr.mxu0 0.0
        %7270 = vmatpush2.msra.mxu0 0.0
        %7271 = vmatprep.subr.mxu0 0.0
        %7272 = vmatpush2.msra.mxu0 0.0
        %7273 = vmatprep.subr.mxu0 0.0
        %7274 = vmatpush2.msra.mxu0 0.0
        %7275 = vmatprep.subr.mxu0 0.0
        %7276 = vmatpush2.msra.mxu0 0.0
        %7277 = vmatprep.subr.mxu0 0.0
        %7278 = vmatpush2.msra.mxu0 0.0
        %7279 = vmatprep.subr.mxu0 0.0
        %7280 = vmatpush2.msra.mxu0 0.0
        %7281 = vmatprep.subr.mxu0 0.0
        %7282 = vmatpush2.msra.mxu0 0.0
        %7283 = vmatprep.subr.mxu0 0.0
        %7284 = vmatpush2.msra.mxu0 0.0
        %7285 = vmatprep.subr.mxu0 0.0
        %7286 = vmatpush2.msra.mxu0 0.0
        %7287 = vmatprep.subr.mxu0 0.0
        %7288 = vmatpush2.msra.mxu0 0.0
        %7289 = vmatprep.subr.mxu0 0.0
        %7290 = vmatpush2.msra.mxu0 0.0
        %7291 = vmatprep.subr.mxu0 0.0
        %7292 = vmatpush2.msra.mxu0 0.0
        %7293 = vmatprep.subr.mxu0 0.0
        %7294 = vmatpush2.msra.mxu0 0.0
        %7295 = vmatprep.subr.mxu0 0.0
        %7296 = vmatpush2.msra.mxu0 0.0
        %7297 = vmatprep.subr.mxu0 0.0
        %7298 = vmatpush2.msra.mxu0 0.0
        %7299 = vmatprep.subr.mxu0 0.0
        %7300 = vmatpush2.msra.mxu0 0.0
        %7301 = vmatprep.mubr.f32.mxu0 0.0
        %7302 = vmatmul.mubr.f32.gmra.mxu0 %v7127
        %v7303 = vpop.f32.mrf.mxu0
        %v7304 = vadd.f32 0.0, %v7303
        %v7305 = vpop.f32.mrf.mxu0
        %7306 = vmatprep.mubr.f32.mxu0 0.0
        %7307 = vmatmul.mubr.f32.gmra.mxu0 %v7130
        %v7308 = vpop.f32.mrf.mxu0
        %v7309 = vadd.f32 0.0, %v7308
        %v7310 = vpop.f32.mrf.mxu0
        %7311 = vmatprep.mubr.f32.mxu0 0.0
        %7312 = vmatmul.mubr.f32.gmra.mxu0 %v7133
        %v7313 = vpop.f32.mrf.mxu0
        %v7314 = vadd.f32 0.0, %v7313
        %v7315 = vpop.f32.mrf.mxu0
        %7316 = vmatprep.mubr.f32.mxu0 0.0
        %7317 = vmatmul.mubr.f32.gmra.mxu0 %v7136
        %v7318 = vpop.f32.mrf.mxu0
        %v7319 = vadd.f32 0.0, %v7318
        %v7320 = vpop.f32.mrf.mxu0
        %7321 = vmatprep.mubr.f32.mxu0 0.0
        %7322 = vmatmul.mubr.f32.gmra.mxu0 %v7139
        %v7323 = vpop.f32.mrf.mxu0
        %v7324 = vadd.f32 0.0, %v7323
        %v7325 = vpop.f32.mrf.mxu0
        %7326 = vmatprep.mubr.f32.mxu0 0.0
        %7327 = vmatmul.mubr.f32.gmra.mxu0 %v7142
        %v7328 = vpop.f32.mrf.mxu0
        %v7329 = vadd.f32 0.0, %v7328
        %v7330 = vpop.f32.mrf.mxu0
        %7331 = vmatprep.mubr.f32.mxu0 0.0
        %7332 = vmatmul.mubr.f32.gmra.mxu0 %v7145
        %v7333 = vpop.f32.mrf.mxu0
        %v7334 = vadd.f32 0.0, %v7333
        %v7335 = vpop.f32.mrf.mxu0
        %7336 = vmatprep.mubr.f32.mxu0 0.0
        %7337 = vmatmul.mubr.f32.gmra.mxu0 %v7148
        %v7338 = vpop.f32.mrf.mxu0
        %v7339 = vadd.f32 0.0, %v7338
        %v7340 = vpop.f32.mrf.mxu0
        %7341 = vmatprep.mubr.f32.mxu0 0.0
        %7342 = vmatmul.mubr.f32.gmra.mxu0 %v7151
        %v7343 = vpop.f32.mrf.mxu0
        %v7344 = vadd.f32 0.0, %v7343
        %v7345 = vpop.f32.mrf.mxu0
        %7346 = vmatprep.mubr.f32.mxu0 0.0
        %7347 = vmatmul.mubr.f32.gmra.mxu0 %v7154
        %v7348 = vpop.f32.mrf.mxu0
        %v7349 = vadd.f32 0.0, %v7348
        %v7350 = vpop.f32.mrf.mxu0
        %7351 = vmatprep.mubr.f32.mxu0 0.0
        %7352 = vmatmul.mubr.f32.gmra.mxu0 %v7157
        %v7353 = vpop.f32.mrf.mxu0
        %v7354 = vadd.f32 0.0, %v7353
        %v7355 = vpop.f32.mrf.mxu0
        %7356 = vmatprep.mubr.f32.mxu0 0.0
        %7357 = vmatmul.mubr.f32.gmra.mxu0 %v7160
        %v7358 = vpop.f32.mrf.mxu0
        %v7359 = vadd.f32 0.0, %v7358
        %v7360 = vpop.f32.mrf.mxu0
        %7361 = vmatprep.mubr.f32.mxu0 0.0
        %7362 = vmatmul.mubr.f32.gmra.mxu0 %v7163
        %v7363 = vpop.f32.mrf.mxu0
        %v7364 = vadd.f32 0.0, %v7363
        %v7365 = vpop.f32.mrf.mxu0
        %7366 = vmatprep.mubr.f32.mxu0 0.0
        %7367 = vmatmul.mubr.f32.gmra.mxu0 %v7166
        %v7368 = vpop.f32.mrf.mxu0
        %v7369 = vadd.f32 0.0, %v7368
        %v7370 = vpop.f32.mrf.mxu0
        %7371 = vmatprep.mubr.f32.mxu0 0.0
        %7372 = vmatmul.mubr.f32.gmra.mxu0 %v7169
        %v7373 = vpop.f32.mrf.mxu0
        %v7374 = vadd.f32 0.0, %v7373
        %v7375 = vpop.f32.mrf.mxu0
        %7376 = vmatprep.mubr.f32.mxu0 0.0
        %7377 = vmatmul.mubr.f32.gmra.mxu0 %v7172
        %v7378 = vpop.f32.mrf.mxu0
        %v7379 = vadd.f32 0.0, %v7378
        %v7380 = vpop.f32.mrf.mxu0
        %7381 = vmatprep.mubr.f32.mxu0 0.0
        %7382 = vmatmul.mubr.f32.gmra.mxu0 %v7175
        %v7383 = vpop.f32.mrf.mxu0
        %v7384 = vadd.f32 0.0, %v7383
        %v7385 = vpop.f32.mrf.mxu0
        %7386 = vmatprep.mubr.f32.mxu0 0.0
        %7387 = vmatmul.mubr.f32.gmra.mxu0 %v7178
        %v7388 = vpop.f32.mrf.mxu0
        %v7389 = vadd.f32 0.0, %v7388
        %v7390 = vpop.f32.mrf.mxu0
        %7391 = vmatprep.mubr.f32.mxu0 0.0
        %7392 = vmatmul.mubr.f32.gmra.mxu0 %v7181
        %v7393 = vpop.f32.mrf.mxu0
        %v7394 = vadd.f32 0.0, %v7393
        %v7395 = vpop.f32.mrf.mxu0
        %7396 = vmatprep.mubr.f32.mxu0 0.0
        %7397 = vmatmul.mubr.f32.gmra.mxu0 %v7184
        %v7398 = vpop.f32.mrf.mxu0
        %v7399 = vadd.f32 0.0, %v7398
        %v7400 = vpop.f32.mrf.mxu0
        %7401 = vmatprep.mubr.f32.mxu0 0.0
        %7402 = vmatmul.mubr.f32.gmra.mxu0 %v7187
        %v7403 = vpop.f32.mrf.mxu0
        %v7404 = vadd.f32 0.0, %v7403
        %v7405 = vpop.f32.mrf.mxu0
        %7406 = vmatprep.mubr.f32.mxu0 0.0
        %7407 = vmatmul.mubr.f32.gmra.mxu0 %v7190
        %v7408 = vpop.f32.mrf.mxu0
        %v7409 = vadd.f32 0.0, %v7408
        %v7410 = vpop.f32.mrf.mxu0
        %7411 = vmatprep.mubr.f32.mxu0 0.0
        %7412 = vmatmul.mubr.f32.gmra.mxu0 %v7193
        %v7413 = vpop.f32.mrf.mxu0
        %v7414 = vadd.f32 0.0, %v7413
        %v7415 = vpop.f32.mrf.mxu0
        %7416 = vmatprep.mubr.f32.mxu0 0.0
        %7417 = vmatmul.mubr.f32.gmra.mxu0 %v7196
        %v7418 = vpop.f32.mrf.mxu0
        %v7419 = vadd.f32 0.0, %v7418
        %v7420 = vpop.f32.mrf.mxu0
        %7421 = vmatprep.mubr.f32.mxu0 0.0
        %7422 = vmatmul.mubr.f32.gmra.mxu0 %v7199
        %v7423 = vpop.f32.mrf.mxu0
        %v7424 = vadd.f32 0.0, %v7423
        %v7425 = vpop.f32.mrf.mxu0
        %7426 = vmatprep.mubr.f32.mxu0 0.0
        %7427 = vmatmul.mubr.f32.gmra.mxu0 %v7202
        %v7428 = vpop.f32.mrf.mxu0
        %v7429 = vadd.f32 0.0, %v7428
        %v7430 = vpop.f32.mrf.mxu0
        %7431 = vmatprep.mubr.f32.mxu0 0.0
        %7432 = vmatmul.mubr.f32.gmra.mxu0 %v7205
        %v7433 = vpop.f32.mrf.mxu0
        %v7434 = vadd.f32 0.0, %v7433
        %v7435 = vpop.f32.mrf.mxu0
        %7436 = vmatprep.mubr.f32.mxu0 0.0
        %7437 = vmatmul.mubr.f32.gmra.mxu0 %v7208
        %v7438 = vpop.f32.mrf.mxu0
        %v7439 = vadd.f32 0.0, %v7438
        %v7440 = vpop.f32.mrf.mxu0
        %7441 = vmatprep.mubr.f32.mxu0 0.0
        %7442 = vmatmul.mubr.f32.gmra.mxu0 %v7211
        %v7443 = vpop.f32.mrf.mxu0
        %v7444 = vadd.f32 0.0, %v7443
        %v7445 = vpop.f32.mrf.mxu0
        %7446 = vmatprep.mubr.f32.mxu0 0.0
        %7447 = vmatmul.mubr.f32.gmra.mxu0 %v7214
        %v7448 = vpop.f32.mrf.mxu0
        %v7449 = vadd.f32 0.0, %v7448
        %v7450 = vpop.f32.mrf.mxu0
        %7451 = vmatprep.mubr.f32.mxu0 0.0
        %7452 = vmatmul.mubr.f32.gmra.mxu0 %v7217
        %v7453 = vpop.f32.mrf.mxu0
        %v7454 = vadd.f32 0.0, %v7453
        %v7455 = vpop.f32.mrf.mxu0
        %7456 = vmatprep.mubr.f32.mxu0 0.0
        %7457 = vmatmul.mubr.f32.gmra.mxu0 %v7220
        %v7458 = vpop.f32.mrf.mxu0
        %v7459 = vadd.f32 0.0, %v7458
        %v7460 = vpop.f32.mrf.mxu0
        %7461 = vmatprep.mubr.f32.mxu0 0.0
        %7462 = vmatmul.mubr.f32.gmra.mxu0 %v7223
        %v7463 = vpop.f32.mrf.mxu0
        %v7464 = vadd.f32 0.0, %v7463
        %v7465 = vpop.f32.mrf.mxu0
        %7466 = vmatprep.mubr.f32.mxu0 0.0
        %7467 = vmatmul.mubr.f32.gmra.mxu0 %v7226
        %v7468 = vpop.f32.mrf.mxu0
        %v7469 = vadd.f32 0.0, %v7468
        %v7470 = vpop.f32.mrf.mxu0
        %7471 = vmatprep.mubr.f32.mxu0 0.0
        %7472 = vmatmul.mubr.f32.gmra.mxu0 %v7229
        %v7473 = vpop.f32.mrf.mxu0
        %v7474 = vadd.f32 0.0, %v7473
        %v7475 = vpop.f32.mrf.mxu0
        %7476 = vmatprep.mubr.f32.mxu0 0.0
        %7477 = vmatmul.mubr.f32.gmra.mxu0 %v7232
        %v7478 = vpop.f32.mrf.mxu0
        %v7479 = vadd.f32 0.0, %v7478
        %v7480 = vpop.f32.mrf.mxu0
        %7481 = vdwg.mxu0
        %v7482 = vadd.f32 %v7054, %v7304
        %v7483 = vadd.f32 %v7055, %v7309
        %v7484 = vadd.f32 %v7056, %v7314
        %v7485 = vadd.f32 %v7057, %v7319
        %v7486 = vadd.f32 %v7058, %v7324
        %v7487 = vadd.f32 %v7059, %v7329
        %v7488 = vadd.f32 %v7060, %v7334
        %v7489 = vadd.f32 %v7061, %v7339
        %v7490 = vadd.f32 %v7062, %v7344
        %v7491 = vadd.f32 %v7063, %v7349
        %v7492 = vadd.f32 %v7064, %v7354
        %v7493 = vadd.f32 %v7065, %v7359
        %v7494 = vadd.f32 %v7066, %v7364
        %v7495 = vadd.f32 %v7067, %v7369
        %v7496 = vadd.f32 %v7068, %v7374
        %v7497 = vadd.f32 %v7069, %v7379
        %v7498 = vadd.f32 %v7070, %v7384
        %v7499 = vadd.f32 %v7071, %v7389
        %v7500 = vadd.f32 %v7072, %v7394
        %v7501 = vadd.f32 %v7073, %v7399
        %v7502 = vadd.f32 %v7074, %v7404
        %v7503 = vadd.f32 %v7075, %v7409
        %v7504 = vadd.f32 %v7076, %v7414
        %v7505 = vadd.f32 %v7077, %v7419
        %v7506 = vadd.f32 %v7078, %v7424
        %v7507 = vadd.f32 %v7079, %v7429
        %v7508 = vadd.f32 %v7080, %v7434
        %v7509 = vadd.f32 %v7081, %v7439
        %v7510 = vadd.f32 %v7082, %v7444
        %v7511 = vadd.f32 %v7083, %v7449
        %v7512 = vadd.f32 %v7084, %v7454
        %v7513 = vadd.f32 %v7085, %v7459
        %v7514 = vadd.f32 %v7086, %v7464
        %v7515 = vadd.f32 %v7087, %v7469
        %v7516 = vadd.f32 %v7088, %v7474
        %v7517 = vadd.f32 %v7089, %v7479
        %v7518 = vld [vmem:[#allocation2 + $0x24] sm:$0xff]
        %v7519 = vld [vmem:[#allocation2 + $0x2c] sm:$0xff]
        %v7520 = vld [vmem:[#allocation2 + $0x34] sm:$0xff]
        %v7521 = vld [vmem:[#allocation2 + $0x3c] sm:$0xff]
        %v7522 = vld [vmem:[#allocation2 + $0x44] sm:$0xff]
        %v7523 = vld [vmem:[#allocation2 + $0x4c] sm:$0xff]
        %v7524 = vld [vmem:[#allocation2 + $0x54] sm:$0xff]
        %v7525 = vld [vmem:[#allocation2 + $0x5c] sm:$0xff]
        %v7526 = vld [vmem:[#allocation2 + $0x64] sm:$0xff]
        %v7527 = vld [vmem:[#allocation2 + $0x6c] sm:$0xff]
        %v7528 = vld [vmem:[#allocation2 + $0x74] sm:$0xff]
        %v7529 = vld [vmem:[#allocation2 + $0x7c] sm:$0xff]
        %v7530 = vld [vmem:[#allocation2 + $0x84] sm:$0xff]
        %v7531 = vld [vmem:[#allocation2 + $0x8c] sm:$0xff]
        %v7532 = vld [vmem:[#allocation2 + $0x94] sm:$0xff]
        %v7533 = vld [vmem:[#allocation2 + $0x9c] sm:$0xff]
        %v7534 = vld [vmem:[#allocation2 + $0xa4] sm:$0xff]
        %v7535 = vld [vmem:[#allocation2 + $0xac] sm:$0xff]
        %v7536 = vld [vmem:[#allocation2 + $0xb4] sm:$0xff]
        %v7537 = vld [vmem:[#allocation2 + $0xbc] sm:$0xff]
        %v7538 = vld [vmem:[#allocation2 + $0xc4] sm:$0xff]
        %v7539 = vld [vmem:[#allocation2 + $0xcc] sm:$0xff]
        %v7540 = vld [vmem:[#allocation2 + $0xd4] sm:$0xff]
        %v7541 = vld [vmem:[#allocation2 + $0xdc] sm:$0xff]
        %v7542 = vld [vmem:[#allocation2 + $0xe4] sm:$0xff]
        %v7543 = vld [vmem:[#allocation2 + $0xec] sm:$0xff]
        %v7544 = vld [vmem:[#allocation2 + $0xf4] sm:$0xff]
        %v7545 = vld [vmem:[#allocation2 + $0xfc] sm:$0xff]
        %v7546 = vld [vmem:[#allocation2 + $0x104] sm:$0xff]
        %v7547 = vld [vmem:[#allocation2 + $0x10c] sm:$0xff]
        %v7548 = vld [vmem:[#allocation2 + $0x114] sm:$0xff]
        %v7549 = vld [vmem:[#allocation2 + $0x11c] sm:$0xff]
        %v7550 = vld [vmem:[#allocation2 + $0x124] sm:$0xff]
        %v7551 = vld [vmem:[#allocation2 + $0x12c] sm:$0xff]
        %v7552 = vld [vmem:[#allocation2 + $0x134] sm:$0xff]
        %v7553 = vld [vmem:[#allocation2 + $0x13c] sm:$0xff]
        %v7555 = vsel %vm1036, %v7518, 0
        %v7558 = vsel %vm1036, %v7519, 0
        %v7561 = vsel %vm1036, %v7520, 0
        %v7564 = vsel %vm1036, %v7521, 0
        %v7567 = vsel %vm1036, %v7522, 0
        %v7570 = vsel %vm1036, %v7523, 0
        %v7573 = vsel %vm1036, %v7524, 0
        %v7576 = vsel %vm1036, %v7525, 0
        %v7579 = vsel %vm1036, %v7526, 0
        %v7582 = vsel %vm1036, %v7527, 0
        %v7585 = vsel %vm1036, %v7528, 0
        %v7588 = vsel %vm1036, %v7529, 0
        %v7591 = vsel %vm1036, %v7530, 0
        %v7594 = vsel %vm1036, %v7531, 0
        %v7597 = vsel %vm1036, %v7532, 0
        %v7600 = vsel %vm1036, %v7533, 0
        %v7603 = vsel %vm1036, %v7534, 0
        %v7606 = vsel %vm1036, %v7535, 0
        %v7609 = vsel %vm1036, %v7536, 0
        %v7612 = vsel %vm1036, %v7537, 0
        %v7615 = vsel %vm1036, %v7538, 0
        %v7618 = vsel %vm1036, %v7539, 0
        %v7621 = vsel %vm1036, %v7540, 0
        %v7624 = vsel %vm1036, %v7541, 0
        %v7627 = vsel %vm1036, %v7542, 0
        %v7630 = vsel %vm1036, %v7543, 0
        %v7633 = vsel %vm1036, %v7544, 0
        %v7636 = vsel %vm1036, %v7545, 0
        %v7639 = vsel %vm1036, %v7546, 0
        %v7642 = vsel %vm1036, %v7547, 0
        %v7645 = vsel %vm1036, %v7548, 0
        %v7648 = vsel %vm1036, %v7549, 0
        %v7651 = vsel %vm1036, %v7550, 0
        %v7654 = vsel %vm1036, %v7551, 0
        %v7657 = vsel %vm1036, %v7552, 0
        %v7660 = vsel %vm1036, %v7553, 0
        %v7663 = vsel %vm1145, %v5018, 0
        %7665 = vmatprep.subr.mxu0 0.0
        %7666 = vmatpush1.msra.mxu0 0.0
        %7667 = vmatprep.subr.mxu0 0.0
        %7668 = vmatpush1.msra.mxu0 0.0
        %7669 = vmatprep.subr.mxu0 0.0
        %7670 = vmatpush1.msra.mxu0 0.0
        %7671 = vmatprep.subr.mxu0 0.0
        %7672 = vmatpush1.msra.mxu0 0.0
        %7673 = vmatprep.subr.mxu0 0.0
        %7674 = vmatpush1.msra.mxu0 0.0
        %7675 = vmatprep.subr.mxu0 0.0
        %7676 = vmatpush1.msra.mxu0 0.0
        %7677 = vmatprep.subr.mxu0 0.0
        %7678 = vmatpush1.msra.mxu0 0.0
        %7679 = vmatprep.subr.mxu0 0.0
        %7680 = vmatpush1.msra.mxu0 0.0
        %7681 = vmatprep.subr.mxu0 0.0
        %7682 = vmatpush1.msra.mxu0 0.0
        %7683 = vmatprep.subr.mxu0 0.0
        %7684 = vmatpush1.msra.mxu0 0.0
        %7685 = vmatprep.subr.mxu0 0.0
        %7686 = vmatpush1.msra.mxu0 0.0
        %7687 = vmatprep.subr.mxu0 0.0
        %7688 = vmatpush1.msra.mxu0 0.0
        %7689 = vmatprep.subr.mxu0 0.0
        %7690 = vmatpush1.msra.mxu0 0.0
        %7691 = vmatprep.subr.mxu0 0.0
        %7692 = vmatpush1.msra.mxu0 0.0
        %7693 = vmatprep.subr.mxu0 0.0
        %7694 = vmatpush1.msra.mxu0 0.0
        %7695 = vmatprep.subr.mxu0 0.0
        %7696 = vmatpush1.msra.mxu0 %v7663
        %7697 = vmatprep.subr.mxu0 0.0
        %7698 = vmatpush2.msra.mxu0 0.0
        %7699 = vmatprep.subr.mxu0 0.0
        %7700 = vmatpush2.msra.mxu0 0.0
        %7701 = vmatprep.subr.mxu0 0.0
        %7702 = vmatpush2.msra.mxu0 0.0
        %7703 = vmatprep.subr.mxu0 0.0
        %7704 = vmatpush2.msra.mxu0 0.0
        %7705 = vmatprep.subr.mxu0 0.0
        %7706 = vmatpush2.msra.mxu0 0.0
        %7707 = vmatprep.subr.mxu0 0.0
        %7708 = vmatpush2.msra.mxu0 0.0
        %7709 = vmatprep.subr.mxu0 0.0
        %7710 = vmatpush2.msra.mxu0 0.0
        %7711 = vmatprep.subr.mxu0 0.0
        %7712 = vmatpush2.msra.mxu0 0.0
        %7713 = vmatprep.subr.mxu0 0.0
        %7714 = vmatpush2.msra.mxu0 0.0
        %7715 = vmatprep.subr.mxu0 0.0
        %7716 = vmatpush2.msra.mxu0 0.0
        %7717 = vmatprep.subr.mxu0 0.0
        %7718 = vmatpush2.msra.mxu0 0.0
        %7719 = vmatprep.subr.mxu0 0.0
        %7720 = vmatpush2.msra.mxu0 0.0
        %7721 = vmatprep.subr.mxu0 0.0
        %7722 = vmatpush2.msra.mxu0 0.0
        %7723 = vmatprep.subr.mxu0 0.0
        %7724 = vmatpush2.msra.mxu0 0.0
        %7725 = vmatprep.subr.mxu0 0.0
        %7726 = vmatpush2.msra.mxu0 0.0
        %7727 = vmatprep.subr.mxu0 0.0
        %7728 = vmatpush2.msra.mxu0 0.0
        %7729 = vmatprep.mubr.f32.mxu0 0.0
        %7730 = vmatmul.mubr.f32.gmra.mxu0 %v7555
        %v7731 = vpop.f32.mrf.mxu0
        %v7732 = vadd.f32 0.0, %v7731
        %v7733 = vpop.f32.mrf.mxu0
        %7734 = vmatprep.mubr.f32.mxu0 0.0
        %7735 = vmatmul.mubr.f32.gmra.mxu0 %v7558
        %v7736 = vpop.f32.mrf.mxu0
        %v7737 = vadd.f32 0.0, %v7736
        %v7738 = vpop.f32.mrf.mxu0
        %7739 = vmatprep.mubr.f32.mxu0 0.0
        %7740 = vmatmul.mubr.f32.gmra.mxu0 %v7561
        %v7741 = vpop.f32.mrf.mxu0
        %v7742 = vadd.f32 0.0, %v7741
        %v7743 = vpop.f32.mrf.mxu0
        %7744 = vmatprep.mubr.f32.mxu0 0.0
        %7745 = vmatmul.mubr.f32.gmra.mxu0 %v7564
        %v7746 = vpop.f32.mrf.mxu0
        %v7747 = vadd.f32 0.0, %v7746
        %v7748 = vpop.f32.mrf.mxu0
        %7749 = vmatprep.mubr.f32.mxu0 0.0
        %7750 = vmatmul.mubr.f32.gmra.mxu0 %v7567
        %v7751 = vpop.f32.mrf.mxu0
        %v7752 = vadd.f32 0.0, %v7751
        %v7753 = vpop.f32.mrf.mxu0
        %7754 = vmatprep.mubr.f32.mxu0 0.0
        %7755 = vmatmul.mubr.f32.gmra.mxu0 %v7570
        %v7756 = vpop.f32.mrf.mxu0
        %v7757 = vadd.f32 0.0, %v7756
        %v7758 = vpop.f32.mrf.mxu0
        %7759 = vmatprep.mubr.f32.mxu0 0.0
        %7760 = vmatmul.mubr.f32.gmra.mxu0 %v7573
        %v7761 = vpop.f32.mrf.mxu0
        %v7762 = vadd.f32 0.0, %v7761
        %v7763 = vpop.f32.mrf.mxu0
        %7764 = vmatprep.mubr.f32.mxu0 0.0
        %7765 = vmatmul.mubr.f32.gmra.mxu0 %v7576
        %v7766 = vpop.f32.mrf.mxu0
        %v7767 = vadd.f32 0.0, %v7766
        %v7768 = vpop.f32.mrf.mxu0
        %7769 = vmatprep.mubr.f32.mxu0 0.0
        %7770 = vmatmul.mubr.f32.gmra.mxu0 %v7579
        %v7771 = vpop.f32.mrf.mxu0
        %v7772 = vadd.f32 0.0, %v7771
        %v7773 = vpop.f32.mrf.mxu0
        %7774 = vmatprep.mubr.f32.mxu0 0.0
        %7775 = vmatmul.mubr.f32.gmra.mxu0 %v7582
        %v7776 = vpop.f32.mrf.mxu0
        %v7777 = vadd.f32 0.0, %v7776
        %v7778 = vpop.f32.mrf.mxu0
        %7779 = vmatprep.mubr.f32.mxu0 0.0
        %7780 = vmatmul.mubr.f32.gmra.mxu0 %v7585
        %v7781 = vpop.f32.mrf.mxu0
        %v7782 = vadd.f32 0.0, %v7781
        %v7783 = vpop.f32.mrf.mxu0
        %7784 = vmatprep.mubr.f32.mxu0 0.0
        %7785 = vmatmul.mubr.f32.gmra.mxu0 %v7588
        %v7786 = vpop.f32.mrf.mxu0
        %v7787 = vadd.f32 0.0, %v7786
        %v7788 = vpop.f32.mrf.mxu0
        %7789 = vmatprep.mubr.f32.mxu0 0.0
        %7790 = vmatmul.mubr.f32.gmra.mxu0 %v7591
        %v7791 = vpop.f32.mrf.mxu0
        %v7792 = vadd.f32 0.0, %v7791
        %v7793 = vpop.f32.mrf.mxu0
        %7794 = vmatprep.mubr.f32.mxu0 0.0
        %7795 = vmatmul.mubr.f32.gmra.mxu0 %v7594
        %v7796 = vpop.f32.mrf.mxu0
        %v7797 = vadd.f32 0.0, %v7796
        %v7798 = vpop.f32.mrf.mxu0
        %7799 = vmatprep.mubr.f32.mxu0 0.0
        %7800 = vmatmul.mubr.f32.gmra.mxu0 %v7597
        %v7801 = vpop.f32.mrf.mxu0
        %v7802 = vadd.f32 0.0, %v7801
        %v7803 = vpop.f32.mrf.mxu0
        %7804 = vmatprep.mubr.f32.mxu0 0.0
        %7805 = vmatmul.mubr.f32.gmra.mxu0 %v7600
        %v7806 = vpop.f32.mrf.mxu0
        %v7807 = vadd.f32 0.0, %v7806
        %v7808 = vpop.f32.mrf.mxu0
        %7809 = vmatprep.mubr.f32.mxu0 0.0
        %7810 = vmatmul.mubr.f32.gmra.mxu0 %v7603
        %v7811 = vpop.f32.mrf.mxu0
        %v7812 = vadd.f32 0.0, %v7811
        %v7813 = vpop.f32.mrf.mxu0
        %7814 = vmatprep.mubr.f32.mxu0 0.0
        %7815 = vmatmul.mubr.f32.gmra.mxu0 %v7606
        %v7816 = vpop.f32.mrf.mxu0
        %v7817 = vadd.f32 0.0, %v7816
        %v7818 = vpop.f32.mrf.mxu0
        %7819 = vmatprep.mubr.f32.mxu0 0.0
        %7820 = vmatmul.mubr.f32.gmra.mxu0 %v7609
        %v7821 = vpop.f32.mrf.mxu0
        %v7822 = vadd.f32 0.0, %v7821
        %v7823 = vpop.f32.mrf.mxu0
        %7824 = vmatprep.mubr.f32.mxu0 0.0
        %7825 = vmatmul.mubr.f32.gmra.mxu0 %v7612
        %v7826 = vpop.f32.mrf.mxu0
        %v7827 = vadd.f32 0.0, %v7826
        %v7828 = vpop.f32.mrf.mxu0
        %7829 = vmatprep.mubr.f32.mxu0 0.0
        %7830 = vmatmul.mubr.f32.gmra.mxu0 %v7615
        %v7831 = vpop.f32.mrf.mxu0
        %v7832 = vadd.f32 0.0, %v7831
        %v7833 = vpop.f32.mrf.mxu0
        %7834 = vmatprep.mubr.f32.mxu0 0.0
        %7835 = vmatmul.mubr.f32.gmra.mxu0 %v7618
        %v7836 = vpop.f32.mrf.mxu0
        %v7837 = vadd.f32 0.0, %v7836
        %v7838 = vpop.f32.mrf.mxu0
        %7839 = vmatprep.mubr.f32.mxu0 0.0
        %7840 = vmatmul.mubr.f32.gmra.mxu0 %v7621
        %v7841 = vpop.f32.mrf.mxu0
        %v7842 = vadd.f32 0.0, %v7841
        %v7843 = vpop.f32.mrf.mxu0
        %7844 = vmatprep.mubr.f32.mxu0 0.0
        %7845 = vmatmul.mubr.f32.gmra.mxu0 %v7624
        %v7846 = vpop.f32.mrf.mxu0
        %v7847 = vadd.f32 0.0, %v7846
        %v7848 = vpop.f32.mrf.mxu0
        %7849 = vmatprep.mubr.f32.mxu0 0.0
        %7850 = vmatmul.mubr.f32.gmra.mxu0 %v7627
        %v7851 = vpop.f32.mrf.mxu0
        %v7852 = vadd.f32 0.0, %v7851
        %v7853 = vpop.f32.mrf.mxu0
        %7854 = vmatprep.mubr.f32.mxu0 0.0
        %7855 = vmatmul.mubr.f32.gmra.mxu0 %v7630
        %v7856 = vpop.f32.mrf.mxu0
        %v7857 = vadd.f32 0.0, %v7856
        %v7858 = vpop.f32.mrf.mxu0
        %7859 = vmatprep.mubr.f32.mxu0 0.0
        %7860 = vmatmul.mubr.f32.gmra.mxu0 %v7633
        %v7861 = vpop.f32.mrf.mxu0
        %v7862 = vadd.f32 0.0, %v7861
        %v7863 = vpop.f32.mrf.mxu0
        %7864 = vmatprep.mubr.f32.mxu0 0.0
        %7865 = vmatmul.mubr.f32.gmra.mxu0 %v7636
        %v7866 = vpop.f32.mrf.mxu0
        %v7867 = vadd.f32 0.0, %v7866
        %v7868 = vpop.f32.mrf.mxu0
        %7869 = vmatprep.mubr.f32.mxu0 0.0
        %7870 = vmatmul.mubr.f32.gmra.mxu0 %v7639
        %v7871 = vpop.f32.mrf.mxu0
        %v7872 = vadd.f32 0.0, %v7871
        %v7873 = vpop.f32.mrf.mxu0
        %7874 = vmatprep.mubr.f32.mxu0 0.0
        %7875 = vmatmul.mubr.f32.gmra.mxu0 %v7642
        %v7876 = vpop.f32.mrf.mxu0
        %v7877 = vadd.f32 0.0, %v7876
        %v7878 = vpop.f32.mrf.mxu0
        %7879 = vmatprep.mubr.f32.mxu0 0.0
        %7880 = vmatmul.mubr.f32.gmra.mxu0 %v7645
        %v7881 = vpop.f32.mrf.mxu0
        %v7882 = vadd.f32 0.0, %v7881
        %v7883 = vpop.f32.mrf.mxu0
        %7884 = vmatprep.mubr.f32.mxu0 0.0
        %7885 = vmatmul.mubr.f32.gmra.mxu0 %v7648
        %v7886 = vpop.f32.mrf.mxu0
        %v7887 = vadd.f32 0.0, %v7886
        %v7888 = vpop.f32.mrf.mxu0
        %7889 = vmatprep.mubr.f32.mxu0 0.0
        %7890 = vmatmul.mubr.f32.gmra.mxu0 %v7651
        %v7891 = vpop.f32.mrf.mxu0
        %v7892 = vadd.f32 0.0, %v7891
        %v7893 = vpop.f32.mrf.mxu0
        %7894 = vmatprep.mubr.f32.mxu0 0.0
        %7895 = vmatmul.mubr.f32.gmra.mxu0 %v7654
        %v7896 = vpop.f32.mrf.mxu0
        %v7897 = vadd.f32 0.0, %v7896
        %v7898 = vpop.f32.mrf.mxu0
        %7899 = vmatprep.mubr.f32.mxu0 0.0
        %7900 = vmatmul.mubr.f32.gmra.mxu0 %v7657
        %v7901 = vpop.f32.mrf.mxu0
        %v7902 = vadd.f32 0.0, %v7901
        %v7903 = vpop.f32.mrf.mxu0
        %7904 = vmatprep.mubr.f32.mxu0 0.0
        %7905 = vmatmul.mubr.f32.gmra.mxu0 %v7660
        %v7906 = vpop.f32.mrf.mxu0
        %v7907 = vadd.f32 0.0, %v7906
        %v7908 = vpop.f32.mrf.mxu0
        %7909 = vdwg.mxu0
        %v7910 = vadd.f32 %v7482, %v7732
        %v7911 = vadd.f32 %v7483, %v7737
        %v7912 = vadd.f32 %v7484, %v7742
        %v7913 = vadd.f32 %v7485, %v7747
        %v7914 = vadd.f32 %v7486, %v7752
        %v7915 = vadd.f32 %v7487, %v7757
        %v7916 = vadd.f32 %v7488, %v7762
        %v7917 = vadd.f32 %v7489, %v7767
        %v7918 = vadd.f32 %v7490, %v7772
        %v7919 = vadd.f32 %v7491, %v7777
        %v7920 = vadd.f32 %v7492, %v7782
        %v7921 = vadd.f32 %v7493, %v7787
        %v7922 = vadd.f32 %v7494, %v7792
        %v7923 = vadd.f32 %v7495, %v7797
        %v7924 = vadd.f32 %v7496, %v7802
        %v7925 = vadd.f32 %v7497, %v7807
        %v7926 = vadd.f32 %v7498, %v7812
        %v7927 = vadd.f32 %v7499, %v7817
        %v7928 = vadd.f32 %v7500, %v7822
        %v7929 = vadd.f32 %v7501, %v7827
        %v7930 = vadd.f32 %v7502, %v7832
        %v7931 = vadd.f32 %v7503, %v7837
        %v7932 = vadd.f32 %v7504, %v7842
        %v7933 = vadd.f32 %v7505, %v7847
        %v7934 = vadd.f32 %v7506, %v7852
        %v7935 = vadd.f32 %v7507, %v7857
        %v7936 = vadd.f32 %v7508, %v7862
        %v7937 = vadd.f32 %v7509, %v7867
        %v7938 = vadd.f32 %v7510, %v7872
        %v7939 = vadd.f32 %v7511, %v7877
        %v7940 = vadd.f32 %v7512, %v7882
        %v7941 = vadd.f32 %v7513, %v7887
        %v7942 = vadd.f32 %v7514, %v7892
        %v7943 = vadd.f32 %v7515, %v7897
        %v7944 = vadd.f32 %v7516, %v7902
        %v7945 = vadd.f32 %v7517, %v7907
        %v7946 = vld [vmem:[#allocation2 + $0x25] sm:$0xff]
        %v7947 = vld [vmem:[#allocation2 + $0x2d] sm:$0xff]
        %v7948 = vld [vmem:[#allocation2 + $0x35] sm:$0xff]
        %v7949 = vld [vmem:[#allocation2 + $0x3d] sm:$0xff]
        %v7950 = vld [vmem:[#allocation2 + $0x45] sm:$0xff]
        %v7951 = vld [vmem:[#allocation2 + $0x4d] sm:$0xff]
        %v7952 = vld [vmem:[#allocation2 + $0x55] sm:$0xff]
        %v7953 = vld [vmem:[#allocation2 + $0x5d] sm:$0xff]
        %v7954 = vld [vmem:[#allocation2 + $0x65] sm:$0xff]
        %v7955 = vld [vmem:[#allocation2 + $0x6d] sm:$0xff]
        %v7956 = vld [vmem:[#allocation2 + $0x75] sm:$0xff]
        %v7957 = vld [vmem:[#allocation2 + $0x7d] sm:$0xff]
        %v7958 = vld [vmem:[#allocation2 + $0x85] sm:$0xff]
        %v7959 = vld [vmem:[#allocation2 + $0x8d] sm:$0xff]
        %v7960 = vld [vmem:[#allocation2 + $0x95] sm:$0xff]
        %v7961 = vld [vmem:[#allocation2 + $0x9d] sm:$0xff]
        %v7962 = vld [vmem:[#allocation2 + $0xa5] sm:$0xff]
        %v7963 = vld [vmem:[#allocation2 + $0xad] sm:$0xff]
        %v7964 = vld [vmem:[#allocation2 + $0xb5] sm:$0xff]
        %v7965 = vld [vmem:[#allocation2 + $0xbd] sm:$0xff]
        %v7966 = vld [vmem:[#allocation2 + $0xc5] sm:$0xff]
        %v7967 = vld [vmem:[#allocation2 + $0xcd] sm:$0xff]
        %v7968 = vld [vmem:[#allocation2 + $0xd5] sm:$0xff]
        %v7969 = vld [vmem:[#allocation2 + $0xdd] sm:$0xff]
        %v7970 = vld [vmem:[#allocation2 + $0xe5] sm:$0xff]
        %v7971 = vld [vmem:[#allocation2 + $0xed] sm:$0xff]
        %v7972 = vld [vmem:[#allocation2 + $0xf5] sm:$0xff]
        %v7973 = vld [vmem:[#allocation2 + $0xfd] sm:$0xff]
        %v7974 = vld [vmem:[#allocation2 + $0x105] sm:$0xff]
        %v7975 = vld [vmem:[#allocation2 + $0x10d] sm:$0xff]
        %v7976 = vld [vmem:[#allocation2 + $0x115] sm:$0xff]
        %v7977 = vld [vmem:[#allocation2 + $0x11d] sm:$0xff]
        %v7978 = vld [vmem:[#allocation2 + $0x125] sm:$0xff]
        %v7979 = vld [vmem:[#allocation2 + $0x12d] sm:$0xff]
        %v7980 = vld [vmem:[#allocation2 + $0x135] sm:$0xff]
        %v7981 = vld [vmem:[#allocation2 + $0x13d] sm:$0xff]
        %v7983 = vsel %vm1036, %v7946, 0
        %v7986 = vsel %vm1036, %v7947, 0
        %v7989 = vsel %vm1036, %v7948, 0
        %v7992 = vsel %vm1036, %v7949, 0
        %v7995 = vsel %vm1036, %v7950, 0
        %v7998 = vsel %vm1036, %v7951, 0
        %v8001 = vsel %vm1036, %v7952, 0
        %v8004 = vsel %vm1036, %v7953, 0
        %v8007 = vsel %vm1036, %v7954, 0
        %v8010 = vsel %vm1036, %v7955, 0
        %v8013 = vsel %vm1036, %v7956, 0
        %v8016 = vsel %vm1036, %v7957, 0
        %v8019 = vsel %vm1036, %v7958, 0
        %v8022 = vsel %vm1036, %v7959, 0
        %v8025 = vsel %vm1036, %v7960, 0
        %v8028 = vsel %vm1036, %v7961, 0
        %v8031 = vsel %vm1036, %v7962, 0
        %v8034 = vsel %vm1036, %v7963, 0
        %v8037 = vsel %vm1036, %v7964, 0
        %v8040 = vsel %vm1036, %v7965, 0
        %v8043 = vsel %vm1036, %v7966, 0
        %v8046 = vsel %vm1036, %v7967, 0
        %v8049 = vsel %vm1036, %v7968, 0
        %v8052 = vsel %vm1036, %v7969, 0
        %v8055 = vsel %vm1036, %v7970, 0
        %v8058 = vsel %vm1036, %v7971, 0
        %v8061 = vsel %vm1036, %v7972, 0
        %v8064 = vsel %vm1036, %v7973, 0
        %v8067 = vsel %vm1036, %v7974, 0
        %v8070 = vsel %vm1036, %v7975, 0
        %v8073 = vsel %vm1036, %v7976, 0
        %v8076 = vsel %vm1036, %v7977, 0
        %v8079 = vsel %vm1036, %v7978, 0
        %v8082 = vsel %vm1036, %v7979, 0
        %v8085 = vsel %vm1036, %v7980, 0
        %v8088 = vsel %vm1036, %v7981, 0
        %v8091 = vsel %vm1145, %v5019, 0
        %8093 = vmatprep.subr.mxu0 0.0
        %8094 = vmatpush1.msra.mxu0 0.0
        %8095 = vmatprep.subr.mxu0 0.0
        %8096 = vmatpush1.msra.mxu0 0.0
        %8097 = vmatprep.subr.mxu0 0.0
        %8098 = vmatpush1.msra.mxu0 0.0
        %8099 = vmatprep.subr.mxu0 0.0
        %8100 = vmatpush1.msra.mxu0 0.0
        %8101 = vmatprep.subr.mxu0 0.0
        %8102 = vmatpush1.msra.mxu0 0.0
        %8103 = vmatprep.subr.mxu0 0.0
        %8104 = vmatpush1.msra.mxu0 0.0
        %8105 = vmatprep.subr.mxu0 0.0
        %8106 = vmatpush1.msra.mxu0 0.0
        %8107 = vmatprep.subr.mxu0 0.0
        %8108 = vmatpush1.msra.mxu0 0.0
        %8109 = vmatprep.subr.mxu0 0.0
        %8110 = vmatpush1.msra.mxu0 0.0
        %8111 = vmatprep.subr.mxu0 0.0
        %8112 = vmatpush1.msra.mxu0 0.0
        %8113 = vmatprep.subr.mxu0 0.0
        %8114 = vmatpush1.msra.mxu0 0.0
        %8115 = vmatprep.subr.mxu0 0.0
        %8116 = vmatpush1.msra.mxu0 0.0
        %8117 = vmatprep.subr.mxu0 0.0
        %8118 = vmatpush1.msra.mxu0 0.0
        %8119 = vmatprep.subr.mxu0 0.0
        %8120 = vmatpush1.msra.mxu0 0.0
        %8121 = vmatprep.subr.mxu0 0.0
        %8122 = vmatpush1.msra.mxu0 0.0
        %8123 = vmatprep.subr.mxu0 0.0
        %8124 = vmatpush1.msra.mxu0 %v8091
        %8125 = vmatprep.subr.mxu0 0.0
        %8126 = vmatpush2.msra.mxu0 0.0
        %8127 = vmatprep.subr.mxu0 0.0
        %8128 = vmatpush2.msra.mxu0 0.0
        %8129 = vmatprep.subr.mxu0 0.0
        %8130 = vmatpush2.msra.mxu0 0.0
        %8131 = vmatprep.subr.mxu0 0.0
        %8132 = vmatpush2.msra.mxu0 0.0
        %8133 = vmatprep.subr.mxu0 0.0
        %8134 = vmatpush2.msra.mxu0 0.0
        %8135 = vmatprep.subr.mxu0 0.0
        %8136 = vmatpush2.msra.mxu0 0.0
        %8137 = vmatprep.subr.mxu0 0.0
        %8138 = vmatpush2.msra.mxu0 0.0
        %8139 = vmatprep.subr.mxu0 0.0
        %8140 = vmatpush2.msra.mxu0 0.0
        %8141 = vmatprep.subr.mxu0 0.0
        %8142 = vmatpush2.msra.mxu0 0.0
        %8143 = vmatprep.subr.mxu0 0.0
        %8144 = vmatpush2.msra.mxu0 0.0
        %8145 = vmatprep.subr.mxu0 0.0
        %8146 = vmatpush2.msra.mxu0 0.0
        %8147 = vmatprep.subr.mxu0 0.0
        %8148 = vmatpush2.msra.mxu0 0.0
        %8149 = vmatprep.subr.mxu0 0.0
        %8150 = vmatpush2.msra.mxu0 0.0
        %8151 = vmatprep.subr.mxu0 0.0
        %8152 = vmatpush2.msra.mxu0 0.0
        %8153 = vmatprep.subr.mxu0 0.0
        %8154 = vmatpush2.msra.mxu0 0.0
        %8155 = vmatprep.subr.mxu0 0.0
        %8156 = vmatpush2.msra.mxu0 0.0
        %8157 = vmatprep.mubr.f32.mxu0 0.0
        %8158 = vmatmul.mubr.f32.gmra.mxu0 %v7983
        %v8159 = vpop.f32.mrf.mxu0
        %v8160 = vadd.f32 0.0, %v8159
        %v8161 = vpop.f32.mrf.mxu0
        %8162 = vmatprep.mubr.f32.mxu0 0.0
        %8163 = vmatmul.mubr.f32.gmra.mxu0 %v7986
        %v8164 = vpop.f32.mrf.mxu0
        %v8165 = vadd.f32 0.0, %v8164
        %v8166 = vpop.f32.mrf.mxu0
        %8167 = vmatprep.mubr.f32.mxu0 0.0
        %8168 = vmatmul.mubr.f32.gmra.mxu0 %v7989
        %v8169 = vpop.f32.mrf.mxu0
        %v8170 = vadd.f32 0.0, %v8169
        %v8171 = vpop.f32.mrf.mxu0
        %8172 = vmatprep.mubr.f32.mxu0 0.0
        %8173 = vmatmul.mubr.f32.gmra.mxu0 %v7992
        %v8174 = vpop.f32.mrf.mxu0
        %v8175 = vadd.f32 0.0, %v8174
        %v8176 = vpop.f32.mrf.mxu0
        %8177 = vmatprep.mubr.f32.mxu0 0.0
        %8178 = vmatmul.mubr.f32.gmra.mxu0 %v7995
        %v8179 = vpop.f32.mrf.mxu0
        %v8180 = vadd.f32 0.0, %v8179
        %v8181 = vpop.f32.mrf.mxu0
        %8182 = vmatprep.mubr.f32.mxu0 0.0
        %8183 = vmatmul.mubr.f32.gmra.mxu0 %v7998
        %v8184 = vpop.f32.mrf.mxu0
        %v8185 = vadd.f32 0.0, %v8184
        %v8186 = vpop.f32.mrf.mxu0
        %8187 = vmatprep.mubr.f32.mxu0 0.0
        %8188 = vmatmul.mubr.f32.gmra.mxu0 %v8001
        %v8189 = vpop.f32.mrf.mxu0
        %v8190 = vadd.f32 0.0, %v8189
        %v8191 = vpop.f32.mrf.mxu0
        %8192 = vmatprep.mubr.f32.mxu0 0.0
        %8193 = vmatmul.mubr.f32.gmra.mxu0 %v8004
        %v8194 = vpop.f32.mrf.mxu0
        %v8195 = vadd.f32 0.0, %v8194
        %v8196 = vpop.f32.mrf.mxu0
        %8197 = vmatprep.mubr.f32.mxu0 0.0
        %8198 = vmatmul.mubr.f32.gmra.mxu0 %v8007
        %v8199 = vpop.f32.mrf.mxu0
        %v8200 = vadd.f32 0.0, %v8199
        %v8201 = vpop.f32.mrf.mxu0
        %8202 = vmatprep.mubr.f32.mxu0 0.0
        %8203 = vmatmul.mubr.f32.gmra.mxu0 %v8010
        %v8204 = vpop.f32.mrf.mxu0
        %v8205 = vadd.f32 0.0, %v8204
        %v8206 = vpop.f32.mrf.mxu0
        %8207 = vmatprep.mubr.f32.mxu0 0.0
        %8208 = vmatmul.mubr.f32.gmra.mxu0 %v8013
        %v8209 = vpop.f32.mrf.mxu0
        %v8210 = vadd.f32 0.0, %v8209
        %v8211 = vpop.f32.mrf.mxu0
        %8212 = vmatprep.mubr.f32.mxu0 0.0
        %8213 = vmatmul.mubr.f32.gmra.mxu0 %v8016
        %v8214 = vpop.f32.mrf.mxu0
        %v8215 = vadd.f32 0.0, %v8214
        %v8216 = vpop.f32.mrf.mxu0
        %8217 = vmatprep.mubr.f32.mxu0 0.0
        %8218 = vmatmul.mubr.f32.gmra.mxu0 %v8019
        %v8219 = vpop.f32.mrf.mxu0
        %v8220 = vadd.f32 0.0, %v8219
        %v8221 = vpop.f32.mrf.mxu0
        %8222 = vmatprep.mubr.f32.mxu0 0.0
        %8223 = vmatmul.mubr.f32.gmra.mxu0 %v8022
        %v8224 = vpop.f32.mrf.mxu0
        %v8225 = vadd.f32 0.0, %v8224
        %v8226 = vpop.f32.mrf.mxu0
        %8227 = vmatprep.mubr.f32.mxu0 0.0
        %8228 = vmatmul.mubr.f32.gmra.mxu0 %v8025
        %v8229 = vpop.f32.mrf.mxu0
        %v8230 = vadd.f32 0.0, %v8229
        %v8231 = vpop.f32.mrf.mxu0
        %8232 = vmatprep.mubr.f32.mxu0 0.0
        %8233 = vmatmul.mubr.f32.gmra.mxu0 %v8028
        %v8234 = vpop.f32.mrf.mxu0
        %v8235 = vadd.f32 0.0, %v8234
        %v8236 = vpop.f32.mrf.mxu0
        %8237 = vmatprep.mubr.f32.mxu0 0.0
        %8238 = vmatmul.mubr.f32.gmra.mxu0 %v8031
        %v8239 = vpop.f32.mrf.mxu0
        %v8240 = vadd.f32 0.0, %v8239
        %v8241 = vpop.f32.mrf.mxu0
        %8242 = vmatprep.mubr.f32.mxu0 0.0
        %8243 = vmatmul.mubr.f32.gmra.mxu0 %v8034
        %v8244 = vpop.f32.mrf.mxu0
        %v8245 = vadd.f32 0.0, %v8244
        %v8246 = vpop.f32.mrf.mxu0
        %8247 = vmatprep.mubr.f32.mxu0 0.0
        %8248 = vmatmul.mubr.f32.gmra.mxu0 %v8037
        %v8249 = vpop.f32.mrf.mxu0
        %v8250 = vadd.f32 0.0, %v8249
        %v8251 = vpop.f32.mrf.mxu0
        %8252 = vmatprep.mubr.f32.mxu0 0.0
        %8253 = vmatmul.mubr.f32.gmra.mxu0 %v8040
        %v8254 = vpop.f32.mrf.mxu0
        %v8255 = vadd.f32 0.0, %v8254
        %v8256 = vpop.f32.mrf.mxu0
        %8257 = vmatprep.mubr.f32.mxu0 0.0
        %8258 = vmatmul.mubr.f32.gmra.mxu0 %v8043
        %v8259 = vpop.f32.mrf.mxu0
        %v8260 = vadd.f32 0.0, %v8259
        %v8261 = vpop.f32.mrf.mxu0
        %8262 = vmatprep.mubr.f32.mxu0 0.0
        %8263 = vmatmul.mubr.f32.gmra.mxu0 %v8046
        %v8264 = vpop.f32.mrf.mxu0
        %v8265 = vadd.f32 0.0, %v8264
        %v8266 = vpop.f32.mrf.mxu0
        %8267 = vmatprep.mubr.f32.mxu0 0.0
        %8268 = vmatmul.mubr.f32.gmra.mxu0 %v8049
        %v8269 = vpop.f32.mrf.mxu0
        %v8270 = vadd.f32 0.0, %v8269
        %v8271 = vpop.f32.mrf.mxu0
        %8272 = vmatprep.mubr.f32.mxu0 0.0
        %8273 = vmatmul.mubr.f32.gmra.mxu0 %v8052
        %v8274 = vpop.f32.mrf.mxu0
        %v8275 = vadd.f32 0.0, %v8274
        %v8276 = vpop.f32.mrf.mxu0
        %8277 = vmatprep.mubr.f32.mxu0 0.0
        %8278 = vmatmul.mubr.f32.gmra.mxu0 %v8055
        %v8279 = vpop.f32.mrf.mxu0
        %v8280 = vadd.f32 0.0, %v8279
        %v8281 = vpop.f32.mrf.mxu0
        %8282 = vmatprep.mubr.f32.mxu0 0.0
        %8283 = vmatmul.mubr.f32.gmra.mxu0 %v8058
        %v8284 = vpop.f32.mrf.mxu0
        %v8285 = vadd.f32 0.0, %v8284
        %v8286 = vpop.f32.mrf.mxu0
        %8287 = vmatprep.mubr.f32.mxu0 0.0
        %8288 = vmatmul.mubr.f32.gmra.mxu0 %v8061
        %v8289 = vpop.f32.mrf.mxu0
        %v8290 = vadd.f32 0.0, %v8289
        %v8291 = vpop.f32.mrf.mxu0
        %8292 = vmatprep.mubr.f32.mxu0 0.0
        %8293 = vmatmul.mubr.f32.gmra.mxu0 %v8064
        %v8294 = vpop.f32.mrf.mxu0
        %v8295 = vadd.f32 0.0, %v8294
        %v8296 = vpop.f32.mrf.mxu0
        %8297 = vmatprep.mubr.f32.mxu0 0.0
        %8298 = vmatmul.mubr.f32.gmra.mxu0 %v8067
        %v8299 = vpop.f32.mrf.mxu0
        %v8300 = vadd.f32 0.0, %v8299
        %v8301 = vpop.f32.mrf.mxu0
        %8302 = vmatprep.mubr.f32.mxu0 0.0
        %8303 = vmatmul.mubr.f32.gmra.mxu0 %v8070
        %v8304 = vpop.f32.mrf.mxu0
        %v8305 = vadd.f32 0.0, %v8304
        %v8306 = vpop.f32.mrf.mxu0
        %8307 = vmatprep.mubr.f32.mxu0 0.0
        %8308 = vmatmul.mubr.f32.gmra.mxu0 %v8073
        %v8309 = vpop.f32.mrf.mxu0
        %v8310 = vadd.f32 0.0, %v8309
        %v8311 = vpop.f32.mrf.mxu0
        %8312 = vmatprep.mubr.f32.mxu0 0.0
        %8313 = vmatmul.mubr.f32.gmra.mxu0 %v8076
        %v8314 = vpop.f32.mrf.mxu0
        %v8315 = vadd.f32 0.0, %v8314
        %v8316 = vpop.f32.mrf.mxu0
        %8317 = vmatprep.mubr.f32.mxu0 0.0
        %8318 = vmatmul.mubr.f32.gmra.mxu0 %v8079
        %v8319 = vpop.f32.mrf.mxu0
        %v8320 = vadd.f32 0.0, %v8319
        %v8321 = vpop.f32.mrf.mxu0
        %8322 = vmatprep.mubr.f32.mxu0 0.0
        %8323 = vmatmul.mubr.f32.gmra.mxu0 %v8082
        %v8324 = vpop.f32.mrf.mxu0
        %v8325 = vadd.f32 0.0, %v8324
        %v8326 = vpop.f32.mrf.mxu0
        %8327 = vmatprep.mubr.f32.mxu0 0.0
        %8328 = vmatmul.mubr.f32.gmra.mxu0 %v8085
        %v8329 = vpop.f32.mrf.mxu0
        %v8330 = vadd.f32 0.0, %v8329
        %v8331 = vpop.f32.mrf.mxu0
        %8332 = vmatprep.mubr.f32.mxu0 0.0
        %8333 = vmatmul.mubr.f32.gmra.mxu0 %v8088
        %v8334 = vpop.f32.mrf.mxu0
        %v8335 = vadd.f32 0.0, %v8334
        %v8336 = vpop.f32.mrf.mxu0
        %8337 = vdwg.mxu0
        %v8338 = vadd.f32 %v7910, %v8160
        %v8339 = vadd.f32 %v7911, %v8165
        %v8340 = vadd.f32 %v7912, %v8170
        %v8341 = vadd.f32 %v7913, %v8175
        %v8342 = vadd.f32 %v7914, %v8180
        %v8343 = vadd.f32 %v7915, %v8185
        %v8344 = vadd.f32 %v7916, %v8190
        %v8345 = vadd.f32 %v7917, %v8195
        %v8346 = vadd.f32 %v7918, %v8200
        %v8347 = vadd.f32 %v7919, %v8205
        %v8348 = vadd.f32 %v7920, %v8210
        %v8349 = vadd.f32 %v7921, %v8215
        %v8350 = vadd.f32 %v7922, %v8220
        %v8351 = vadd.f32 %v7923, %v8225
        %v8352 = vadd.f32 %v7924, %v8230
        %v8353 = vadd.f32 %v7925, %v8235
        %v8354 = vadd.f32 %v7926, %v8240
        %v8355 = vadd.f32 %v7927, %v8245
        %v8356 = vadd.f32 %v7928, %v8250
        %v8357 = vadd.f32 %v7929, %v8255
        %v8358 = vadd.f32 %v7930, %v8260
        %v8359 = vadd.f32 %v7931, %v8265
        %v8360 = vadd.f32 %v7932, %v8270
        %v8361 = vadd.f32 %v7933, %v8275
        %v8362 = vadd.f32 %v7934, %v8280
        %v8363 = vadd.f32 %v7935, %v8285
        %v8364 = vadd.f32 %v7936, %v8290
        %v8365 = vadd.f32 %v7937, %v8295
        %v8366 = vadd.f32 %v7938, %v8300
        %v8367 = vadd.f32 %v7939, %v8305
        %v8368 = vadd.f32 %v7940, %v8310
        %v8369 = vadd.f32 %v7941, %v8315
        %v8370 = vadd.f32 %v7942, %v8320
        %v8371 = vadd.f32 %v7943, %v8325
        %v8372 = vadd.f32 %v7944, %v8330
        %v8373 = vadd.f32 %v7945, %v8335
        %v8374 = vld [vmem:[#allocation2 + $0x26] sm:$0xff]
        %v8375 = vld [vmem:[#allocation2 + $0x2e] sm:$0xff]
        %v8376 = vld [vmem:[#allocation2 + $0x36] sm:$0xff]
        %v8377 = vld [vmem:[#allocation2 + $0x3e] sm:$0xff]
        %v8378 = vld [vmem:[#allocation2 + $0x46] sm:$0xff]
        %v8379 = vld [vmem:[#allocation2 + $0x4e] sm:$0xff]
        %v8380 = vld [vmem:[#allocation2 + $0x56] sm:$0xff]
        %v8381 = vld [vmem:[#allocation2 + $0x5e] sm:$0xff]
        %v8382 = vld [vmem:[#allocation2 + $0x66] sm:$0xff]
        %v8383 = vld [vmem:[#allocation2 + $0x6e] sm:$0xff]
        %v8384 = vld [vmem:[#allocation2 + $0x76] sm:$0xff]
        %v8385 = vld [vmem:[#allocation2 + $0x7e] sm:$0xff]
        %v8386 = vld [vmem:[#allocation2 + $0x86] sm:$0xff]
        %v8387 = vld [vmem:[#allocation2 + $0x8e] sm:$0xff]
        %v8388 = vld [vmem:[#allocation2 + $0x96] sm:$0xff]
        %v8389 = vld [vmem:[#allocation2 + $0x9e] sm:$0xff]
        %v8390 = vld [vmem:[#allocation2 + $0xa6] sm:$0xff]
        %v8391 = vld [vmem:[#allocation2 + $0xae] sm:$0xff]
        %v8392 = vld [vmem:[#allocation2 + $0xb6] sm:$0xff]
        %v8393 = vld [vmem:[#allocation2 + $0xbe] sm:$0xff]
        %v8394 = vld [vmem:[#allocation2 + $0xc6] sm:$0xff]
        %v8395 = vld [vmem:[#allocation2 + $0xce] sm:$0xff]
        %v8396 = vld [vmem:[#allocation2 + $0xd6] sm:$0xff]
        %v8397 = vld [vmem:[#allocation2 + $0xde] sm:$0xff]
        %v8398 = vld [vmem:[#allocation2 + $0xe6] sm:$0xff]
        %v8399 = vld [vmem:[#allocation2 + $0xee] sm:$0xff]
        %v8400 = vld [vmem:[#allocation2 + $0xf6] sm:$0xff]
        %v8401 = vld [vmem:[#allocation2 + $0xfe] sm:$0xff]
        %v8402 = vld [vmem:[#allocation2 + $0x106] sm:$0xff]
        %v8403 = vld [vmem:[#allocation2 + $0x10e] sm:$0xff]
        %v8404 = vld [vmem:[#allocation2 + $0x116] sm:$0xff]
        %v8405 = vld [vmem:[#allocation2 + $0x11e] sm:$0xff]
        %v8406 = vld [vmem:[#allocation2 + $0x126] sm:$0xff]
        %v8407 = vld [vmem:[#allocation2 + $0x12e] sm:$0xff]
        %v8408 = vld [vmem:[#allocation2 + $0x136] sm:$0xff]
        %v8409 = vld [vmem:[#allocation2 + $0x13e] sm:$0xff]
        %v8411 = vsel %vm1036, %v8374, 0
        %v8414 = vsel %vm1036, %v8375, 0
        %v8417 = vsel %vm1036, %v8376, 0
        %v8420 = vsel %vm1036, %v8377, 0
        %v8423 = vsel %vm1036, %v8378, 0
        %v8426 = vsel %vm1036, %v8379, 0
        %v8429 = vsel %vm1036, %v8380, 0
        %v8432 = vsel %vm1036, %v8381, 0
        %v8435 = vsel %vm1036, %v8382, 0
        %v8438 = vsel %vm1036, %v8383, 0
        %v8441 = vsel %vm1036, %v8384, 0
        %v8444 = vsel %vm1036, %v8385, 0
        %v8447 = vsel %vm1036, %v8386, 0
        %v8450 = vsel %vm1036, %v8387, 0
        %v8453 = vsel %vm1036, %v8388, 0
        %v8456 = vsel %vm1036, %v8389, 0
        %v8459 = vsel %vm1036, %v8390, 0
        %v8462 = vsel %vm1036, %v8391, 0
        %v8465 = vsel %vm1036, %v8392, 0
        %v8468 = vsel %vm1036, %v8393, 0
        %v8471 = vsel %vm1036, %v8394, 0
        %v8474 = vsel %vm1036, %v8395, 0
        %v8477 = vsel %vm1036, %v8396, 0
        %v8480 = vsel %vm1036, %v8397, 0
        %v8483 = vsel %vm1036, %v8398, 0
        %v8486 = vsel %vm1036, %v8399, 0
        %v8489 = vsel %vm1036, %v8400, 0
        %v8492 = vsel %vm1036, %v8401, 0
        %v8495 = vsel %vm1036, %v8402, 0
        %v8498 = vsel %vm1036, %v8403, 0
        %v8501 = vsel %vm1036, %v8404, 0
        %v8504 = vsel %vm1036, %v8405, 0
        %v8507 = vsel %vm1036, %v8406, 0
        %v8510 = vsel %vm1036, %v8407, 0
        %v8513 = vsel %vm1036, %v8408, 0
        %v8516 = vsel %vm1036, %v8409, 0
        %v8519 = vsel %vm1145, %v5020, 0
        %8521 = vmatprep.subr.mxu0 0.0
        %8522 = vmatpush1.msra.mxu0 0.0
        %8523 = vmatprep.subr.mxu0 0.0
        %8524 = vmatpush1.msra.mxu0 0.0
        %8525 = vmatprep.subr.mxu0 0.0
        %8526 = vmatpush1.msra.mxu0 0.0
        %8527 = vmatprep.subr.mxu0 0.0
        %8528 = vmatpush1.msra.mxu0 0.0
        %8529 = vmatprep.subr.mxu0 0.0
        %8530 = vmatpush1.msra.mxu0 0.0
        %8531 = vmatprep.subr.mxu0 0.0
        %8532 = vmatpush1.msra.mxu0 0.0
        %8533 = vmatprep.subr.mxu0 0.0
        %8534 = vmatpush1.msra.mxu0 0.0
        %8535 = vmatprep.subr.mxu0 0.0
        %8536 = vmatpush1.msra.mxu0 0.0
        %8537 = vmatprep.subr.mxu0 0.0
        %8538 = vmatpush1.msra.mxu0 0.0
        %8539 = vmatprep.subr.mxu0 0.0
        %8540 = vmatpush1.msra.mxu0 0.0
        %8541 = vmatprep.subr.mxu0 0.0
        %8542 = vmatpush1.msra.mxu0 0.0
        %8543 = vmatprep.subr.mxu0 0.0
        %8544 = vmatpush1.msra.mxu0 0.0
        %8545 = vmatprep.subr.mxu0 0.0
        %8546 = vmatpush1.msra.mxu0 0.0
        %8547 = vmatprep.subr.mxu0 0.0
        %8548 = vmatpush1.msra.mxu0 0.0
        %8549 = vmatprep.subr.mxu0 0.0
        %8550 = vmatpush1.msra.mxu0 0.0
        %8551 = vmatprep.subr.mxu0 0.0
        %8552 = vmatpush1.msra.mxu0 %v8519
        %8553 = vmatprep.subr.mxu0 0.0
        %8554 = vmatpush2.msra.mxu0 0.0
        %8555 = vmatprep.subr.mxu0 0.0
        %8556 = vmatpush2.msra.mxu0 0.0
        %8557 = vmatprep.subr.mxu0 0.0
        %8558 = vmatpush2.msra.mxu0 0.0
        %8559 = vmatprep.subr.mxu0 0.0
        %8560 = vmatpush2.msra.mxu0 0.0
        %8561 = vmatprep.subr.mxu0 0.0
        %8562 = vmatpush2.msra.mxu0 0.0
        %8563 = vmatprep.subr.mxu0 0.0
        %8564 = vmatpush2.msra.mxu0 0.0
        %8565 = vmatprep.subr.mxu0 0.0
        %8566 = vmatpush2.msra.mxu0 0.0
        %8567 = vmatprep.subr.mxu0 0.0
        %8568 = vmatpush2.msra.mxu0 0.0
        %8569 = vmatprep.subr.mxu0 0.0
        %8570 = vmatpush2.msra.mxu0 0.0
        %8571 = vmatprep.subr.mxu0 0.0
        %8572 = vmatpush2.msra.mxu0 0.0
        %8573 = vmatprep.subr.mxu0 0.0
        %8574 = vmatpush2.msra.mxu0 0.0
        %8575 = vmatprep.subr.mxu0 0.0
        %8576 = vmatpush2.msra.mxu0 0.0
        %8577 = vmatprep.subr.mxu0 0.0
        %8578 = vmatpush2.msra.mxu0 0.0
        %8579 = vmatprep.subr.mxu0 0.0
        %8580 = vmatpush2.msra.mxu0 0.0
        %8581 = vmatprep.subr.mxu0 0.0
        %8582 = vmatpush2.msra.mxu0 0.0
        %8583 = vmatprep.subr.mxu0 0.0
        %8584 = vmatpush2.msra.mxu0 0.0
        %8585 = vmatprep.mubr.f32.mxu0 0.0
        %8586 = vmatmul.mubr.f32.gmra.mxu0 %v8411
        %v8587 = vpop.f32.mrf.mxu0
        %v8588 = vadd.f32 0.0, %v8587
        %v8589 = vpop.f32.mrf.mxu0
        %8590 = vmatprep.mubr.f32.mxu0 0.0
        %8591 = vmatmul.mubr.f32.gmra.mxu0 %v8414
        %v8592 = vpop.f32.mrf.mxu0
        %v8593 = vadd.f32 0.0, %v8592
        %v8594 = vpop.f32.mrf.mxu0
        %8595 = vmatprep.mubr.f32.mxu0 0.0
        %8596 = vmatmul.mubr.f32.gmra.mxu0 %v8417
        %v8597 = vpop.f32.mrf.mxu0
        %v8598 = vadd.f32 0.0, %v8597
        %v8599 = vpop.f32.mrf.mxu0
        %8600 = vmatprep.mubr.f32.mxu0 0.0
        %8601 = vmatmul.mubr.f32.gmra.mxu0 %v8420
        %v8602 = vpop.f32.mrf.mxu0
        %v8603 = vadd.f32 0.0, %v8602
        %v8604 = vpop.f32.mrf.mxu0
        %8605 = vmatprep.mubr.f32.mxu0 0.0
        %8606 = vmatmul.mubr.f32.gmra.mxu0 %v8423
        %v8607 = vpop.f32.mrf.mxu0
        %v8608 = vadd.f32 0.0, %v8607
        %v8609 = vpop.f32.mrf.mxu0
        %8610 = vmatprep.mubr.f32.mxu0 0.0
        %8611 = vmatmul.mubr.f32.gmra.mxu0 %v8426
        %v8612 = vpop.f32.mrf.mxu0
        %v8613 = vadd.f32 0.0, %v8612
        %v8614 = vpop.f32.mrf.mxu0
        %8615 = vmatprep.mubr.f32.mxu0 0.0
        %8616 = vmatmul.mubr.f32.gmra.mxu0 %v8429
        %v8617 = vpop.f32.mrf.mxu0
        %v8618 = vadd.f32 0.0, %v8617
        %v8619 = vpop.f32.mrf.mxu0
        %8620 = vmatprep.mubr.f32.mxu0 0.0
        %8621 = vmatmul.mubr.f32.gmra.mxu0 %v8432
        %v8622 = vpop.f32.mrf.mxu0
        %v8623 = vadd.f32 0.0, %v8622
        %v8624 = vpop.f32.mrf.mxu0
        %8625 = vmatprep.mubr.f32.mxu0 0.0
        %8626 = vmatmul.mubr.f32.gmra.mxu0 %v8435
        %v8627 = vpop.f32.mrf.mxu0
        %v8628 = vadd.f32 0.0, %v8627
        %v8629 = vpop.f32.mrf.mxu0
        %8630 = vmatprep.mubr.f32.mxu0 0.0
        %8631 = vmatmul.mubr.f32.gmra.mxu0 %v8438
        %v8632 = vpop.f32.mrf.mxu0
        %v8633 = vadd.f32 0.0, %v8632
        %v8634 = vpop.f32.mrf.mxu0
        %8635 = vmatprep.mubr.f32.mxu0 0.0
        %8636 = vmatmul.mubr.f32.gmra.mxu0 %v8441
        %v8637 = vpop.f32.mrf.mxu0
        %v8638 = vadd.f32 0.0, %v8637
        %v8639 = vpop.f32.mrf.mxu0
        %8640 = vmatprep.mubr.f32.mxu0 0.0
        %8641 = vmatmul.mubr.f32.gmra.mxu0 %v8444
        %v8642 = vpop.f32.mrf.mxu0
        %v8643 = vadd.f32 0.0, %v8642
        %v8644 = vpop.f32.mrf.mxu0
        %8645 = vmatprep.mubr.f32.mxu0 0.0
        %8646 = vmatmul.mubr.f32.gmra.mxu0 %v8447
        %v8647 = vpop.f32.mrf.mxu0
        %v8648 = vadd.f32 0.0, %v8647
        %v8649 = vpop.f32.mrf.mxu0
        %8650 = vmatprep.mubr.f32.mxu0 0.0
        %8651 = vmatmul.mubr.f32.gmra.mxu0 %v8450
        %v8652 = vpop.f32.mrf.mxu0
        %v8653 = vadd.f32 0.0, %v8652
        %v8654 = vpop.f32.mrf.mxu0
        %8655 = vmatprep.mubr.f32.mxu0 0.0
        %8656 = vmatmul.mubr.f32.gmra.mxu0 %v8453
        %v8657 = vpop.f32.mrf.mxu0
        %v8658 = vadd.f32 0.0, %v8657
        %v8659 = vpop.f32.mrf.mxu0
        %8660 = vmatprep.mubr.f32.mxu0 0.0
        %8661 = vmatmul.mubr.f32.gmra.mxu0 %v8456
        %v8662 = vpop.f32.mrf.mxu0
        %v8663 = vadd.f32 0.0, %v8662
        %v8664 = vpop.f32.mrf.mxu0
        %8665 = vmatprep.mubr.f32.mxu0 0.0
        %8666 = vmatmul.mubr.f32.gmra.mxu0 %v8459
        %v8667 = vpop.f32.mrf.mxu0
        %v8668 = vadd.f32 0.0, %v8667
        %v8669 = vpop.f32.mrf.mxu0
        %8670 = vmatprep.mubr.f32.mxu0 0.0
        %8671 = vmatmul.mubr.f32.gmra.mxu0 %v8462
        %v8672 = vpop.f32.mrf.mxu0
        %v8673 = vadd.f32 0.0, %v8672
        %v8674 = vpop.f32.mrf.mxu0
        %8675 = vmatprep.mubr.f32.mxu0 0.0
        %8676 = vmatmul.mubr.f32.gmra.mxu0 %v8465
        %v8677 = vpop.f32.mrf.mxu0
        %v8678 = vadd.f32 0.0, %v8677
        %v8679 = vpop.f32.mrf.mxu0
        %8680 = vmatprep.mubr.f32.mxu0 0.0
        %8681 = vmatmul.mubr.f32.gmra.mxu0 %v8468
        %v8682 = vpop.f32.mrf.mxu0
        %v8683 = vadd.f32 0.0, %v8682
        %v8684 = vpop.f32.mrf.mxu0
        %8685 = vmatprep.mubr.f32.mxu0 0.0
        %8686 = vmatmul.mubr.f32.gmra.mxu0 %v8471
        %v8687 = vpop.f32.mrf.mxu0
        %v8688 = vadd.f32 0.0, %v8687
        %v8689 = vpop.f32.mrf.mxu0
        %8690 = vmatprep.mubr.f32.mxu0 0.0
        %8691 = vmatmul.mubr.f32.gmra.mxu0 %v8474
        %v8692 = vpop.f32.mrf.mxu0
        %v8693 = vadd.f32 0.0, %v8692
        %v8694 = vpop.f32.mrf.mxu0
        %8695 = vmatprep.mubr.f32.mxu0 0.0
        %8696 = vmatmul.mubr.f32.gmra.mxu0 %v8477
        %v8697 = vpop.f32.mrf.mxu0
        %v8698 = vadd.f32 0.0, %v8697
        %v8699 = vpop.f32.mrf.mxu0
        %8700 = vmatprep.mubr.f32.mxu0 0.0
        %8701 = vmatmul.mubr.f32.gmra.mxu0 %v8480
        %v8702 = vpop.f32.mrf.mxu0
        %v8703 = vadd.f32 0.0, %v8702
        %v8704 = vpop.f32.mrf.mxu0
        %8705 = vmatprep.mubr.f32.mxu0 0.0
        %8706 = vmatmul.mubr.f32.gmra.mxu0 %v8483
        %v8707 = vpop.f32.mrf.mxu0
        %v8708 = vadd.f32 0.0, %v8707
        %v8709 = vpop.f32.mrf.mxu0
        %8710 = vmatprep.mubr.f32.mxu0 0.0
        %8711 = vmatmul.mubr.f32.gmra.mxu0 %v8486
        %v8712 = vpop.f32.mrf.mxu0
        %v8713 = vadd.f32 0.0, %v8712
        %v8714 = vpop.f32.mrf.mxu0
        %8715 = vmatprep.mubr.f32.mxu0 0.0
        %8716 = vmatmul.mubr.f32.gmra.mxu0 %v8489
        %v8717 = vpop.f32.mrf.mxu0
        %v8718 = vadd.f32 0.0, %v8717
        %v8719 = vpop.f32.mrf.mxu0
        %8720 = vmatprep.mubr.f32.mxu0 0.0
        %8721 = vmatmul.mubr.f32.gmra.mxu0 %v8492
        %v8722 = vpop.f32.mrf.mxu0
        %v8723 = vadd.f32 0.0, %v8722
        %v8724 = vpop.f32.mrf.mxu0
        %8725 = vmatprep.mubr.f32.mxu0 0.0
        %8726 = vmatmul.mubr.f32.gmra.mxu0 %v8495
        %v8727 = vpop.f32.mrf.mxu0
        %v8728 = vadd.f32 0.0, %v8727
        %v8729 = vpop.f32.mrf.mxu0
        %8730 = vmatprep.mubr.f32.mxu0 0.0
        %8731 = vmatmul.mubr.f32.gmra.mxu0 %v8498
        %v8732 = vpop.f32.mrf.mxu0
        %v8733 = vadd.f32 0.0, %v8732
        %v8734 = vpop.f32.mrf.mxu0
        %8735 = vmatprep.mubr.f32.mxu0 0.0
        %8736 = vmatmul.mubr.f32.gmra.mxu0 %v8501
        %v8737 = vpop.f32.mrf.mxu0
        %v8738 = vadd.f32 0.0, %v8737
        %v8739 = vpop.f32.mrf.mxu0
        %8740 = vmatprep.mubr.f32.mxu0 0.0
        %8741 = vmatmul.mubr.f32.gmra.mxu0 %v8504
        %v8742 = vpop.f32.mrf.mxu0
        %v8743 = vadd.f32 0.0, %v8742
        %v8744 = vpop.f32.mrf.mxu0
        %8745 = vmatprep.mubr.f32.mxu0 0.0
        %8746 = vmatmul.mubr.f32.gmra.mxu0 %v8507
        %v8747 = vpop.f32.mrf.mxu0
        %v8748 = vadd.f32 0.0, %v8747
        %v8749 = vpop.f32.mrf.mxu0
        %8750 = vmatprep.mubr.f32.mxu0 0.0
        %8751 = vmatmul.mubr.f32.gmra.mxu0 %v8510
        %v8752 = vpop.f32.mrf.mxu0
        %v8753 = vadd.f32 0.0, %v8752
        %v8754 = vpop.f32.mrf.mxu0
        %8755 = vmatprep.mubr.f32.mxu0 0.0
        %8756 = vmatmul.mubr.f32.gmra.mxu0 %v8513
        %v8757 = vpop.f32.mrf.mxu0
        %v8758 = vadd.f32 0.0, %v8757
        %v8759 = vpop.f32.mrf.mxu0
        %8760 = vmatprep.mubr.f32.mxu0 0.0
        %8761 = vmatmul.mubr.f32.gmra.mxu0 %v8516
        %v8762 = vpop.f32.mrf.mxu0
        %v8763 = vadd.f32 0.0, %v8762
        %v8764 = vpop.f32.mrf.mxu0
        %8765 = vdwg.mxu0
        %v8766 = vadd.f32 %v8338, %v8588
        %v8767 = vadd.f32 %v8339, %v8593
        %v8768 = vadd.f32 %v8340, %v8598
        %v8769 = vadd.f32 %v8341, %v8603
        %v8770 = vadd.f32 %v8342, %v8608
        %v8771 = vadd.f32 %v8343, %v8613
        %v8772 = vadd.f32 %v8344, %v8618
        %v8773 = vadd.f32 %v8345, %v8623
        %v8774 = vadd.f32 %v8346, %v8628
        %v8775 = vadd.f32 %v8347, %v8633
        %v8776 = vadd.f32 %v8348, %v8638
        %v8777 = vadd.f32 %v8349, %v8643
        %v8778 = vadd.f32 %v8350, %v8648
        %v8779 = vadd.f32 %v8351, %v8653
        %v8780 = vadd.f32 %v8352, %v8658
        %v8781 = vadd.f32 %v8353, %v8663
        %v8782 = vadd.f32 %v8354, %v8668
        %v8783 = vadd.f32 %v8355, %v8673
        %v8784 = vadd.f32 %v8356, %v8678
        %v8785 = vadd.f32 %v8357, %v8683
        %v8786 = vadd.f32 %v8358, %v8688
        %v8787 = vadd.f32 %v8359, %v8693
        %v8788 = vadd.f32 %v8360, %v8698
        %v8789 = vadd.f32 %v8361, %v8703
        %v8790 = vadd.f32 %v8362, %v8708
        %v8791 = vadd.f32 %v8363, %v8713
        %v8792 = vadd.f32 %v8364, %v8718
        %v8793 = vadd.f32 %v8365, %v8723
        %v8794 = vadd.f32 %v8366, %v8728
        %v8795 = vadd.f32 %v8367, %v8733
        %v8796 = vadd.f32 %v8368, %v8738
        %v8797 = vadd.f32 %v8369, %v8743
        %v8798 = vadd.f32 %v8370, %v8748
        %v8799 = vadd.f32 %v8371, %v8753
        %v8800 = vadd.f32 %v8372, %v8758
        %v8801 = vadd.f32 %v8373, %v8763
        %v8803 = vlaneseq
        %v8804 = vshrl.u32 %v8803, 7
        %v8805 = vsub.s32 0, %v8804
        %v8806 = vrot.slane %v5021, %v8805
        %v8808 = vadd.f32 %v8766, %v8806
        %v8809 = vadd.f32 %v8767, %v8806
        %v8810 = vadd.f32 %v8768, %v8806
        %v8811 = vadd.f32 %v8769, %v8806
        %v8812 = vadd.f32 %v8770, %v8806
        %v8813 = vadd.f32 %v8771, %v8806
        %v8814 = vadd.f32 %v8772, %v8806
        %v8815 = vadd.f32 %v8773, %v8806
        %v8816 = vadd.f32 %v8774, %v8806
        %v8817 = vadd.f32 %v8775, %v8806
        %v8818 = vadd.f32 %v8776, %v8806
        %v8819 = vadd.f32 %v8777, %v8806
        %v8820 = vadd.f32 %v8778, %v8806
        %v8821 = vadd.f32 %v8779, %v8806
        %v8822 = vadd.f32 %v8780, %v8806
        %v8823 = vadd.f32 %v8781, %v8806
        %v8824 = vadd.f32 %v8782, %v8806
        %v8825 = vadd.f32 %v8783, %v8806
        %v8826 = vadd.f32 %v8784, %v8806
        %v8827 = vadd.f32 %v8785, %v8806
        %v8828 = vadd.f32 %v8786, %v8806
        %v8829 = vadd.f32 %v8787, %v8806
        %v8830 = vadd.f32 %v8788, %v8806
        %v8831 = vadd.f32 %v8789, %v8806
        %v8832 = vadd.f32 %v8790, %v8806
        %v8833 = vadd.f32 %v8791, %v8806
        %v8834 = vadd.f32 %v8792, %v8806
        %v8835 = vadd.f32 %v8793, %v8806
        %v8836 = vadd.f32 %v8794, %v8806
        %v8837 = vadd.f32 %v8795, %v8806
        %v8838 = vadd.f32 %v8796, %v8806
        %v8839 = vadd.f32 %v8797, %v8806
        %v8840 = vadd.f32 %v8798, %v8806
        %v8841 = vadd.f32 %v8799, %v8806
        %v8842 = vadd.f32 %v8800, %v8806
        %v8843 = vadd.f32 %v8801, %v8806
        %v8844 = vmax.f32 %v8808, 0.0
        %v8845 = vmax.f32 %v8809, 0.0
        %v8846 = vmax.f32 %v8810, 0.0
        %v8847 = vmax.f32 %v8811, 0.0
        %v8848 = vmax.f32 %v8812, 0.0
        %v8849 = vmax.f32 %v8813, 0.0
        %v8850 = vmax.f32 %v8814, 0.0
        %v8851 = vmax.f32 %v8815, 0.0
        %v8852 = vmax.f32 %v8816, 0.0
        %v8853 = vmax.f32 %v8817, 0.0
        %v8854 = vmax.f32 %v8818, 0.0
        %v8855 = vmax.f32 %v8819, 0.0
        %v8856 = vmax.f32 %v8820, 0.0
        %v8857 = vmax.f32 %v8821, 0.0
        %v8858 = vmax.f32 %v8822, 0.0
        %v8859 = vmax.f32 %v8823, 0.0
        %v8860 = vmax.f32 %v8824, 0.0
        %v8861 = vmax.f32 %v8825, 0.0
        %v8862 = vmax.f32 %v8826, 0.0
        %v8863 = vmax.f32 %v8827, 0.0
        %v8864 = vmax.f32 %v8828, 0.0
        %v8865 = vmax.f32 %v8829, 0.0
        %v8866 = vmax.f32 %v8830, 0.0
        %v8867 = vmax.f32 %v8831, 0.0
        %v8868 = vmax.f32 %v8832, 0.0
        %v8869 = vmax.f32 %v8833, 0.0
        %v8870 = vmax.f32 %v8834, 0.0
        %v8871 = vmax.f32 %v8835, 0.0
        %v8872 = vmax.f32 %v8836, 0.0
        %v8873 = vmax.f32 %v8837, 0.0
        %v8874 = vmax.f32 %v8838, 0.0
        %v8875 = vmax.f32 %v8839, 0.0
        %v8876 = vmax.f32 %v8840, 0.0
        %v8877 = vmax.f32 %v8841, 0.0
        %v8878 = vmax.f32 %v8842, 0.0
        %v8879 = vmax.f32 %v8843, 0.0
        %v8880 = vld [vmem:[%s5] sm:$0xff]
        %v8881 = vld [vmem:[%s6] sm:$0x1]
        %v8883 = vlaneseq
        %v8884 = vshrl.u32 %v8883, 7
        %v8885 = vsub.s32 0, %v8884
        %v8886 = vrot.slane %v8881, %v8885
        %vm8888 = vcmask 64512
        %v8890 = vsel %vm8888, %v8844, 0
        %v8893 = vsel %vm8888, %v8845, 0
        %v8896 = vsel %vm8888, %v8846, 0
        %v8899 = vsel %vm8888, %v8847, 0
        %v8902 = vsel %vm8888, %v8848, 0
        %v8905 = vsel %vm8888, %v8849, 0
        %v8908 = vsel %vm8888, %v8850, 0
        %v8911 = vsel %vm8888, %v8851, 0
        %v8914 = vsel %vm8888, %v8852, 0
        %v8917 = vsel %vm8888, %v8853, 0
        %v8920 = vsel %vm8888, %v8854, 0
        %v8923 = vsel %vm8888, %v8855, 0
        %v8926 = vsel %vm8888, %v8856, 0
        %v8929 = vsel %vm8888, %v8857, 0
        %v8932 = vsel %vm8888, %v8858, 0
        %v8935 = vsel %vm8888, %v8859, 0
        %v8938 = vsel %vm8888, %v8860, 0
        %v8941 = vsel %vm8888, %v8861, 0
        %v8944 = vsel %vm8888, %v8862, 0
        %v8947 = vsel %vm8888, %v8863, 0
        %v8950 = vsel %vm8888, %v8864, 0
        %v8953 = vsel %vm8888, %v8865, 0
        %v8956 = vsel %vm8888, %v8866, 0
        %v8959 = vsel %vm8888, %v8867, 0
        %v8962 = vsel %vm8888, %v8868, 0
        %v8965 = vsel %vm8888, %v8869, 0
        %v8968 = vsel %vm8888, %v8870, 0
        %v8971 = vsel %vm8888, %v8871, 0
        %v8974 = vsel %vm8888, %v8872, 0
        %v8977 = vsel %vm8888, %v8873, 0
        %v8980 = vsel %vm8888, %v8874, 0
        %v8983 = vsel %vm8888, %v8875, 0
        %v8986 = vsel %vm8888, %v8876, 0
        %v8989 = vsel %vm8888, %v8877, 0
        %v8992 = vsel %vm8888, %v8878, 0
        %v8995 = vsel %vm8888, %v8879, 0
        %8997 = vmatprep.subr.mxu0 0.0
        %8998 = vmatpush1.msra.mxu0 0.0
        %8999 = vmatprep.subr.mxu0 0.0
        %9000 = vmatpush1.msra.mxu0 0.0
        %9001 = vmatprep.subr.mxu0 0.0
        %9002 = vmatpush1.msra.mxu0 0.0
        %9003 = vmatprep.subr.mxu0 0.0
        %9004 = vmatpush1.msra.mxu0 0.0
        %9005 = vmatprep.subr.mxu0 0.0
        %9006 = vmatpush1.msra.mxu0 0.0
        %9007 = vmatprep.subr.mxu0 0.0
        %9008 = vmatpush1.msra.mxu0 0.0
        %9009 = vmatprep.subr.mxu0 0.0
        %9010 = vmatpush1.msra.mxu0 0.0
        %9011 = vmatprep.subr.mxu0 0.0
        %9012 = vmatpush1.msra.mxu0 0.0
        %9013 = vmatprep.subr.mxu0 0.0
        %9014 = vmatpush1.msra.mxu0 0.0
        %9015 = vmatprep.subr.mxu0 0.0
        %9016 = vmatpush1.msra.mxu0 0.0
        %9017 = vmatprep.subr.mxu0 0.0
        %9018 = vmatpush1.msra.mxu0 0.0
        %9019 = vmatprep.subr.mxu0 0.0
        %9020 = vmatpush1.msra.mxu0 0.0
        %9021 = vmatprep.subr.mxu0 0.0
        %9022 = vmatpush1.msra.mxu0 0.0
        %9023 = vmatprep.subr.mxu0 0.0
        %9024 = vmatpush1.msra.mxu0 0.0
        %9025 = vmatprep.subr.mxu0 0.0
        %9026 = vmatpush1.msra.mxu0 0.0
        %9027 = vmatprep.subr.mxu0 0.0
        %9028 = vmatpush1.msra.mxu0 %v8880
        %9029 = vmatprep.subr.mxu0 0.0
        %9030 = vmatpush2.msra.mxu0 0.0
        %9031 = vmatprep.subr.mxu0 0.0
        %9032 = vmatpush2.msra.mxu0 0.0
        %9033 = vmatprep.subr.mxu0 0.0
        %9034 = vmatpush2.msra.mxu0 0.0
        %9035 = vmatprep.subr.mxu0 0.0
        %9036 = vmatpush2.msra.mxu0 0.0
        %9037 = vmatprep.subr.mxu0 0.0
        %9038 = vmatpush2.msra.mxu0 0.0
        %9039 = vmatprep.subr.mxu0 0.0
        %9040 = vmatpush2.msra.mxu0 0.0
        %9041 = vmatprep.subr.mxu0 0.0
        %9042 = vmatpush2.msra.mxu0 0.0
        %9043 = vmatprep.subr.mxu0 0.0
        %9044 = vmatpush2.msra.mxu0 0.0
        %9045 = vmatprep.subr.mxu0 0.0
        %9046 = vmatpush2.msra.mxu0 0.0
        %9047 = vmatprep.subr.mxu0 0.0
        %9048 = vmatpush2.msra.mxu0 0.0
        %9049 = vmatprep.subr.mxu0 0.0
        %9050 = vmatpush2.msra.mxu0 0.0
        %9051 = vmatprep.subr.mxu0 0.0
        %9052 = vmatpush2.msra.mxu0 0.0
        %9053 = vmatprep.subr.mxu0 0.0
        %9054 = vmatpush2.msra.mxu0 0.0
        %9055 = vmatprep.subr.mxu0 0.0
        %9056 = vmatpush2.msra.mxu0 0.0
        %9057 = vmatprep.subr.mxu0 0.0
        %9058 = vmatpush2.msra.mxu0 0.0
        %9059 = vmatprep.subr.mxu0 0.0
        %9060 = vmatpush2.msra.mxu0 0.0
        %9061 = vmatprep.mubr.f32.mxu0 0.0
        %9062 = vmatmul.mubr.f32.gmra.mxu0 %v8890
        %v9063 = vpop.f32.mrf.mxu0
        %v9064 = vadd.f32 %v8886, %v9063
        %v9065 = vpop.f32.mrf.mxu0
        %9066 = vmatprep.mubr.f32.mxu0 0.0
        %9067 = vmatmul.mubr.f32.gmra.mxu0 %v8893
        %v9068 = vpop.f32.mrf.mxu0
        %v9069 = vadd.f32 %v8886, %v9068
        %v9070 = vpop.f32.mrf.mxu0
        %9071 = vmatprep.mubr.f32.mxu0 0.0
        %9072 = vmatmul.mubr.f32.gmra.mxu0 %v8896
        %v9073 = vpop.f32.mrf.mxu0
        %v9074 = vadd.f32 %v8886, %v9073
        %v9075 = vpop.f32.mrf.mxu0
        %9076 = vmatprep.mubr.f32.mxu0 0.0
        %9077 = vmatmul.mubr.f32.gmra.mxu0 %v8899
        %v9078 = vpop.f32.mrf.mxu0
        %v9079 = vadd.f32 %v8886, %v9078
        %v9080 = vpop.f32.mrf.mxu0
        %9081 = vmatprep.mubr.f32.mxu0 0.0
        %9082 = vmatmul.mubr.f32.gmra.mxu0 %v8902
        %v9083 = vpop.f32.mrf.mxu0
        %v9084 = vadd.f32 %v8886, %v9083
        %v9085 = vpop.f32.mrf.mxu0
        %9086 = vmatprep.mubr.f32.mxu0 0.0
        %9087 = vmatmul.mubr.f32.gmra.mxu0 %v8905
        %v9088 = vpop.f32.mrf.mxu0
        %v9089 = vadd.f32 %v8886, %v9088
        %v9090 = vpop.f32.mrf.mxu0
        %9091 = vmatprep.mubr.f32.mxu0 0.0
        %9092 = vmatmul.mubr.f32.gmra.mxu0 %v8908
        %v9093 = vpop.f32.mrf.mxu0
        %v9094 = vadd.f32 %v8886, %v9093
        %v9095 = vpop.f32.mrf.mxu0
        %9096 = vmatprep.mubr.f32.mxu0 0.0
        %9097 = vmatmul.mubr.f32.gmra.mxu0 %v8911
        %v9098 = vpop.f32.mrf.mxu0
        %v9099 = vadd.f32 %v8886, %v9098
        %v9100 = vpop.f32.mrf.mxu0
        %9101 = vmatprep.mubr.f32.mxu0 0.0
        %9102 = vmatmul.mubr.f32.gmra.mxu0 %v8914
        %v9103 = vpop.f32.mrf.mxu0
        %v9104 = vadd.f32 %v8886, %v9103
        %v9105 = vpop.f32.mrf.mxu0
        %9106 = vmatprep.mubr.f32.mxu0 0.0
        %9107 = vmatmul.mubr.f32.gmra.mxu0 %v8917
        %v9108 = vpop.f32.mrf.mxu0
        %v9109 = vadd.f32 %v8886, %v9108
        %v9110 = vpop.f32.mrf.mxu0
        %9111 = vmatprep.mubr.f32.mxu0 0.0
        %9112 = vmatmul.mubr.f32.gmra.mxu0 %v8920
        %v9113 = vpop.f32.mrf.mxu0
        %v9114 = vadd.f32 %v8886, %v9113
        %v9115 = vpop.f32.mrf.mxu0
        %9116 = vmatprep.mubr.f32.mxu0 0.0
        %9117 = vmatmul.mubr.f32.gmra.mxu0 %v8923
        %v9118 = vpop.f32.mrf.mxu0
        %v9119 = vadd.f32 %v8886, %v9118
        %v9120 = vpop.f32.mrf.mxu0
        %9121 = vmatprep.mubr.f32.mxu0 0.0
        %9122 = vmatmul.mubr.f32.gmra.mxu0 %v8926
        %v9123 = vpop.f32.mrf.mxu0
        %v9124 = vadd.f32 %v8886, %v9123
        %v9125 = vpop.f32.mrf.mxu0
        %9126 = vmatprep.mubr.f32.mxu0 0.0
        %9127 = vmatmul.mubr.f32.gmra.mxu0 %v8929
        %v9128 = vpop.f32.mrf.mxu0
        %v9129 = vadd.f32 %v8886, %v9128
        %v9130 = vpop.f32.mrf.mxu0
        %9131 = vmatprep.mubr.f32.mxu0 0.0
        %9132 = vmatmul.mubr.f32.gmra.mxu0 %v8932
        %v9133 = vpop.f32.mrf.mxu0
        %v9134 = vadd.f32 %v8886, %v9133
        %v9135 = vpop.f32.mrf.mxu0
        %9136 = vmatprep.mubr.f32.mxu0 0.0
        %9137 = vmatmul.mubr.f32.gmra.mxu0 %v8935
        %v9138 = vpop.f32.mrf.mxu0
        %v9139 = vadd.f32 %v8886, %v9138
        %v9140 = vpop.f32.mrf.mxu0
        %9141 = vmatprep.mubr.f32.mxu0 0.0
        %9142 = vmatmul.mubr.f32.gmra.mxu0 %v8938
        %v9143 = vpop.f32.mrf.mxu0
        %v9144 = vadd.f32 %v8886, %v9143
        %v9145 = vpop.f32.mrf.mxu0
        %9146 = vmatprep.mubr.f32.mxu0 0.0
        %9147 = vmatmul.mubr.f32.gmra.mxu0 %v8941
        %v9148 = vpop.f32.mrf.mxu0
        %v9149 = vadd.f32 %v8886, %v9148
        %v9150 = vpop.f32.mrf.mxu0
        %9151 = vmatprep.mubr.f32.mxu0 0.0
        %9152 = vmatmul.mubr.f32.gmra.mxu0 %v8944
        %v9153 = vpop.f32.mrf.mxu0
        %v9154 = vadd.f32 %v8886, %v9153
        %v9155 = vpop.f32.mrf.mxu0
        %9156 = vmatprep.mubr.f32.mxu0 0.0
        %9157 = vmatmul.mubr.f32.gmra.mxu0 %v8947
        %v9158 = vpop.f32.mrf.mxu0
        %v9159 = vadd.f32 %v8886, %v9158
        %v9160 = vpop.f32.mrf.mxu0
        %9161 = vmatprep.mubr.f32.mxu0 0.0
        %9162 = vmatmul.mubr.f32.gmra.mxu0 %v8950
        %v9163 = vpop.f32.mrf.mxu0
        %v9164 = vadd.f32 %v8886, %v9163
        %v9165 = vpop.f32.mrf.mxu0
        %9166 = vmatprep.mubr.f32.mxu0 0.0
        %9167 = vmatmul.mubr.f32.gmra.mxu0 %v8953
        %v9168 = vpop.f32.mrf.mxu0
        %v9169 = vadd.f32 %v8886, %v9168
        %v9170 = vpop.f32.mrf.mxu0
        %9171 = vmatprep.mubr.f32.mxu0 0.0
        %9172 = vmatmul.mubr.f32.gmra.mxu0 %v8956
        %v9173 = vpop.f32.mrf.mxu0
        %v9174 = vadd.f32 %v8886, %v9173
        %v9175 = vpop.f32.mrf.mxu0
        %9176 = vmatprep.mubr.f32.mxu0 0.0
        %9177 = vmatmul.mubr.f32.gmra.mxu0 %v8959
        %v9178 = vpop.f32.mrf.mxu0
        %v9179 = vadd.f32 %v8886, %v9178
        %v9180 = vpop.f32.mrf.mxu0
        %9181 = vmatprep.mubr.f32.mxu0 0.0
        %9182 = vmatmul.mubr.f32.gmra.mxu0 %v8962
        %v9183 = vpop.f32.mrf.mxu0
        %v9184 = vadd.f32 %v8886, %v9183
        %v9185 = vpop.f32.mrf.mxu0
        %9186 = vmatprep.mubr.f32.mxu0 0.0
        %9187 = vmatmul.mubr.f32.gmra.mxu0 %v8965
        %v9188 = vpop.f32.mrf.mxu0
        %v9189 = vadd.f32 %v8886, %v9188
        %v9190 = vpop.f32.mrf.mxu0
        %9191 = vmatprep.mubr.f32.mxu0 0.0
        %9192 = vmatmul.mubr.f32.gmra.mxu0 %v8968
        %v9193 = vpop.f32.mrf.mxu0
        %v9194 = vadd.f32 %v8886, %v9193
        %v9195 = vpop.f32.mrf.mxu0
        %9196 = vmatprep.mubr.f32.mxu0 0.0
        %9197 = vmatmul.mubr.f32.gmra.mxu0 %v8971
        %v9198 = vpop.f32.mrf.mxu0
        %v9199 = vadd.f32 %v8886, %v9198
        %v9200 = vpop.f32.mrf.mxu0
        %9201 = vmatprep.mubr.f32.mxu0 0.0
        %9202 = vmatmul.mubr.f32.gmra.mxu0 %v8974
        %v9203 = vpop.f32.mrf.mxu0
        %v9204 = vadd.f32 %v8886, %v9203
        %v9205 = vpop.f32.mrf.mxu0
        %9206 = vmatprep.mubr.f32.mxu0 0.0
        %9207 = vmatmul.mubr.f32.gmra.mxu0 %v8977
        %v9208 = vpop.f32.mrf.mxu0
        %v9209 = vadd.f32 %v8886, %v9208
        %v9210 = vpop.f32.mrf.mxu0
        %9211 = vmatprep.mubr.f32.mxu0 0.0
        %9212 = vmatmul.mubr.f32.gmra.mxu0 %v8980
        %v9213 = vpop.f32.mrf.mxu0
        %v9214 = vadd.f32 %v8886, %v9213
        %v9215 = vpop.f32.mrf.mxu0
        %9216 = vmatprep.mubr.f32.mxu0 0.0
        %9217 = vmatmul.mubr.f32.gmra.mxu0 %v8983
        %v9218 = vpop.f32.mrf.mxu0
        %v9219 = vadd.f32 %v8886, %v9218
        %v9220 = vpop.f32.mrf.mxu0
        %9221 = vmatprep.mubr.f32.mxu0 0.0
        %9222 = vmatmul.mubr.f32.gmra.mxu0 %v8986
        %v9223 = vpop.f32.mrf.mxu0
        %v9224 = vadd.f32 %v8886, %v9223
        %v9225 = vpop.f32.mrf.mxu0
        %9226 = vmatprep.mubr.f32.mxu0 0.0
        %9227 = vmatmul.mubr.f32.gmra.mxu0 %v8989
        %v9228 = vpop.f32.mrf.mxu0
        %v9229 = vadd.f32 %v8886, %v9228
        %v9230 = vpop.f32.mrf.mxu0
        %9231 = vmatprep.mubr.f32.mxu0 0.0
        %9232 = vmatmul.mubr.f32.gmra.mxu0 %v8992
        %v9233 = vpop.f32.mrf.mxu0
        %v9234 = vadd.f32 %v8886, %v9233
        %v9235 = vpop.f32.mrf.mxu0
        %9236 = vmatprep.mubr.f32.mxu0 0.0
        %9237 = vmatmul.mubr.f32.gmra.mxu0 %v8995
        %v9238 = vpop.f32.mrf.mxu0
        %v9239 = vadd.f32 %v8886, %v9238
        %v9240 = vpop.f32.mrf.mxu0
        %9241 = vdwg.mxu0
        %vm9242 = vcmask 244736
        %9243 = vst.msk [vmem:[%s304] sm:$0xff] %vm9242, %v9064
        %9244 = vst.msk [vmem:[%s304 + $0x8] sm:$0xff] %vm9242, %v9069
        %9245 = vst.msk [vmem:[%s304 + $0x10] sm:$0xff] %vm9242, %v9074
        %9246 = vst.msk [vmem:[%s304 + $0x18] sm:$0xff] %vm9242, %v9079
        %9247 = vst.msk [vmem:[%s304 + $0x20] sm:$0xff] %vm9242, %v9084
        %9248 = vst.msk [vmem:[%s304 + $0x28] sm:$0xff] %vm9242, %v9089
        %9249 = vst.msk [vmem:[%s304 + $0x30] sm:$0xff] %vm9242, %v9094
        %9250 = vst.msk [vmem:[%s304 + $0x38] sm:$0xff] %vm9242, %v9099
        %9251 = vst.msk [vmem:[%s304 + $0x40] sm:$0xff] %vm9242, %v9104
        %9252 = vst.msk [vmem:[%s304 + $0x48] sm:$0xff] %vm9242, %v9109
        %9253 = vst.msk [vmem:[%s304 + $0x50] sm:$0xff] %vm9242, %v9114
        %9254 = vst.msk [vmem:[%s304 + $0x58] sm:$0xff] %vm9242, %v9119
        %9255 = vst.msk [vmem:[%s304 + $0x60] sm:$0xff] %vm9242, %v9124
        %9256 = vst.msk [vmem:[%s304 + $0x68] sm:$0xff] %vm9242, %v9129
        %9257 = vst.msk [vmem:[%s304 + $0x70] sm:$0xff] %vm9242, %v9134
        %9258 = vst.msk [vmem:[%s304 + $0x78] sm:$0xff] %vm9242, %v9139
        %9259 = vst.msk [vmem:[%s304 + $0x80] sm:$0xff] %vm9242, %v9144
        %9260 = vst.msk [vmem:[%s304 + $0x88] sm:$0xff] %vm9242, %v9149
        %9261 = vst.msk [vmem:[%s304 + $0x90] sm:$0xff] %vm9242, %v9154
        %9262 = vst.msk [vmem:[%s304 + $0x98] sm:$0xff] %vm9242, %v9159
        %9263 = vst.msk [vmem:[%s304 + $0xa0] sm:$0xff] %vm9242, %v9164
        %9264 = vst.msk [vmem:[%s304 + $0xa8] sm:$0xff] %vm9242, %v9169
        %9265 = vst.msk [vmem:[%s304 + $0xb0] sm:$0xff] %vm9242, %v9174
        %9266 = vst.msk [vmem:[%s304 + $0xb8] sm:$0xff] %vm9242, %v9179
        %9267 = vst.msk [vmem:[%s304 + $0xc0] sm:$0xff] %vm9242, %v9184
        %9268 = vst.msk [vmem:[%s304 + $0xc8] sm:$0xff] %vm9242, %v9189
        %9269 = vst.msk [vmem:[%s304 + $0xd0] sm:$0xff] %vm9242, %v9194
        %9270 = vst.msk [vmem:[%s304 + $0xd8] sm:$0xff] %vm9242, %v9199
        %9271 = vst.msk [vmem:[%s304 + $0xe0] sm:$0xff] %vm9242, %v9204
        %9272 = vst.msk [vmem:[%s304 + $0xe8] sm:$0xff] %vm9242, %v9209
        %9273 = vst.msk [vmem:[%s304 + $0xf0] sm:$0xff] %vm9242, %v9214
        %9274 = vst.msk [vmem:[%s304 + $0xf8] sm:$0xff] %vm9242, %v9219
        %9275 = vst.msk [vmem:[%s304 + $0x100] sm:$0xff] %vm9242, %v9224
        %9276 = vst.msk [vmem:[%s304 + $0x108] sm:$0xff] %vm9242, %v9229
        %9277 = vst.msk [vmem:[%s304 + $0x110] sm:$0xff] %vm9242, %v9234
        %9278 = vst.msk [vmem:[%s304 + $0x118] sm:$0xff] %vm9242, %v9239
        %p9279 = scmp.lt.s32.totalorder %s20, 1
        %s9280 = scalar_select %p9279, %s20, 1
        %s9281 = smul.addr %s9280, 36
        %s9282 = smul.addr %s9281, 8
        %s9283 = scalar_lea.vmem %s7, %s9282
        // Predicated region
        $region57: #{rpn_forward.2} parent=47 // pred_check
          %p9284 = pneg %p190
        $region58: #{rpn_forward.2} parent=47 // pred_check_branch
          %9286 = sbr.rel (%p9284) target = $region60
        $region59: #{rpn_forward.2} parent=47 // pred_region
          _
        $region60: #{rpn_forward.2} parent=47 // pred_fallthru
          _
      $region48: #{rpn_forward.2} parent=5 // pred_fallthru
        _
      %p9287 = scmp.le.s32.totalorder 2, %s15
      // Predicated region
      $region61: #{rpn_forward.2} parent=5 // pred_check
        %p9288 = pneg %p9287
      $region62: #{rpn_forward.2} parent=5 // pred_check_branch
        %9290 = sbr.rel (%p9288) target = $region64
      $region63: #{rpn_forward.2} parent=5 // pred_region
        %s9291 = ssub.s32 %s15, 2
        // Predicated region
        $region65: #{rpn_forward.2} parent=63 // pred_check
          %p9292 = pneg %p196
        $region66: #{rpn_forward.2} parent=63 // pred_check_branch
          %9294 = sbr.rel (%p9292) target = $region68
        $region67: #{rpn_forward.2} parent=63 // pred_region
          %p9295 = scmp.lt.s32.totalorder %s21, 1
          %s9296 = scalar_select %p9295, %s21, 1
          %s9297 = smul.addr %s9296, 36
          %s9298 = smul.addr %s9297, 8
          %s9299 = scalar_lea.vmem %s7, %s9298
        $region68: #{rpn_forward.2} parent=63 // pred_fallthru
          _
      $region64: #{rpn_forward.2} parent=5 // pred_fallthru
        _
    $region6: #{rpn_forward.2} parent=1 // loop_footer
      %s19 = sadd.s32 1, %s15
    $region7: #{rpn_forward.2} parent=1 // loop_footer_branch
      %14 = sbr.rel target = $region3
    $region8: #{rpn_forward.2} parent=1 // loop_exit
      _
    %9300 = vsyncpa [#allocation4], 1
    %s9301 = scalar_lea.sflag [#allocation4], 1
    %9302 = vsyncpa %s9301, 1
    %9303 = vsyncpa [#allocation6], 1

// kernel: rpn_forward.3
$region0: #{rpn_forward.3}
  #allocation0 [shape = 'u32[]', space=smem, size = 0x4, offset = 0x4, fixed_abs, tag = 'smem constant byte address 0x4 - core index']
  #allocation1 [shape = 'u32[144,128]{1,0:T(1,128)}', space=vmem, size = 0x12000, scoped, tag = 'internal scratch']
  #allocation2 [shape = 'f32[128,128]{1,0:T(8,128)}', space=vmem, size = 0x10000, scoped, tag = 'scratch operand']
  %s0 = inlined_call_operand.vmem [shape: f32[2,4,128], index: 0, kind: input, shape index: {}]
  %s1 = inlined_call_operand.vmem [shape: f32[2,4,128], index: 1, kind: input, shape index: {}]
  %s2 = inlined_call_operand.vmem [shape: f32[2,128,4], index: 2, kind: input, shape index: {}]
  %s3 = inlined_call_operand.vmem [shape: f32[2,128,4], index: 3, kind: input, shape index: {}]
  %s4 = inlined_call_operand.vmem [shape: f32[2,1,128], index: 4, kind: input, shape index: {}]
  %s5 = inlined_call_operand.vmem [shape: f32[2,4,128], index: 5, kind: output, shape index: {0}]
  %s6 = inlined_call_operand.vmem [shape: f32[2,1,128], index: 6, kind: output, shape index: {1}]
  %s7 = inlined_call_operand.vmem [shape: f32[2,1,128], index: 7, kind: output, shape index: {2}]
  %8 = xla_tuple %s5, %s6, %s7
  %s9 = sld [smem:[#allocation0]]
  $region76: #{rpn_forward.3} parent=0
    _
  %s11 = ssub.s32 1, %s9
  %s12 = scalar_select 0, %s11, %s9
  loop: start=0, step=1, limit=4
  $region2: #{rpn_forward.3} parent=0 // loop_pre_header
    _
  $region3: #{rpn_forward.3} parent=0 // loop_header
    %s14 = sphi 0, %s18
    %p15 = scmp.ge.s32.totalorder %s14, 4
    %s24 = sphi 0, %s26
    %s27 = sphi 0, %s24
    %s28 = sphi 0, %s27
    %s44 = sphi 0, %s28
    %s50 = sphi 0, %s52
    %s53 = sphi 0, %s50
    %s54 = sphi 0, %s53
    %s70 = sphi 0, %s54
    %s76 = sphi 0, %s78
    %s79 = sphi 0, %s76
    %s80 = sphi 0, %s79
    %s96 = sphi 0, %s80
    %s102 = sphi 0, %s104
    %s105 = sphi 0, %s102
    %s106 = sphi 0, %s105
    %s122 = sphi 0, %s106
    %s128 = sphi 0, %s130
    %s131 = sphi 0, %s128
    %s132 = sphi 0, %s131
    %s148 = sphi 0, %s132
    %s154 = sphi 0, %s156
    %s157 = sphi 0, %s154
    %s158 = sphi 0, %s157
    %s174 = sphi 0, %s158
    %s180 = sphi 0, %s182
    %s183 = sphi 0, %s180
    %s184 = sphi 0, %s183
    %s200 = sphi 0, %s184
    %s206 = sphi 0, %s208
    %s209 = sphi 0, %s206
    %s210 = sphi 0, %s209
    %s226 = sphi 0, %s210
  $region4: #{rpn_forward.3} parent=0 // loop_header_branch
    %17 = sbr.rel (%p15) target = $region8
  $region5: #{rpn_forward.3} parent=0 // loop_body
    %s19 = ssub.s32 %s14, 1
    %s20 = ssub.s32 %s14, 2
    %s21 = sadd.s32 %s14, 1
    %s22 = ssub.s32 %s14, %s21
    %p23 = scmp.eq.s32.totalorder %s22, 0
    %s25 = sadd.s32 %s24, 1
    %s26 = scalar_select %p23, %s24, %s25
    %p29 = pneg %p23
    %p30 = scmp.eq.s32.totalorder %s14, 1
    %p31 = por %p29, %p30
    %p32 = scmp.ne.s32.totalorder %s24, %s27
    %p33 = scmp.eq.s32.totalorder %s14, 0
    %p34 = por %p32, %p33
    %p35 = scmp.ne.s32.totalorder %s24, %s27
    %p36 = scmp.eq.s32.totalorder %s19, 1
    %p37 = por %p35, %p36
    %p38 = scmp.ne.s32.totalorder %s27, %s28
    %p39 = scmp.eq.s32.totalorder %s19, 0
    %p40 = por %p38, %p39
    %p41 = scmp.ne.s32.totalorder %s27, %s28
    %p42 = scmp.eq.s32.totalorder %s20, 1
    %p43 = por %p41, %p42
    %p45 = scmp.ne.s32.totalorder %s28, %s44
    %p46 = scmp.eq.s32.totalorder %s20, 0
    %p47 = por %p45, %p46
    %s48 = ssub.s32 %s14, %s21
    %p49 = scmp.eq.s32.totalorder %s48, 0
    %s51 = sadd.s32 %s50, 1
    %s52 = scalar_select %p49, %s50, %s51
    %p55 = pneg %p49
    %p56 = scmp.eq.s32.totalorder %s14, 1
    %p57 = por %p55, %p56
    %p58 = scmp.ne.s32.totalorder %s50, %s53
    %p59 = scmp.eq.s32.totalorder %s14, 0
    %p60 = por %p58, %p59
    %p61 = scmp.ne.s32.totalorder %s50, %s53
    %p62 = scmp.eq.s32.totalorder %s19, 1
    %p63 = por %p61, %p62
    %p64 = scmp.ne.s32.totalorder %s53, %s54
    %p65 = scmp.eq.s32.totalorder %s19, 0
    %p66 = por %p64, %p65
    %p67 = scmp.ne.s32.totalorder %s53, %s54
    %p68 = scmp.eq.s32.totalorder %s20, 1
    %p69 = por %p67, %p68
    %p71 = scmp.ne.s32.totalorder %s54, %s70
    %p72 = scmp.eq.s32.totalorder %s20, 0
    %p73 = por %p71, %p72
    %s74 = ssub.s32 %s14, %s21
    %p75 = scmp.eq.s32.totalorder %s74, 0
    %s77 = sadd.s32 %s76, 1
    %s78 = scalar_select %p75, %s76, %s77
    %p81 = pneg %p75
    %p82 = scmp.eq.s32.totalorder %s14, 1
    %p83 = por %p81, %p82
    %p84 = scmp.ne.s32.totalorder %s76, %s79
    %p85 = scmp.eq.s32.totalorder %s14, 0
    %p86 = por %p84, %p85
    %p87 = scmp.ne.s32.totalorder %s76, %s79
    %p88 = scmp.eq.s32.totalorder %s19, 1
    %p89 = por %p87, %p88
    %p90 = scmp.ne.s32.totalorder %s79, %s80
    %p91 = scmp.eq.s32.totalorder %s19, 0
    %p92 = por %p90, %p91
    %p93 = scmp.ne.s32.totalorder %s79, %s80
    %p94 = scmp.eq.s32.totalorder %s20, 1
    %p95 = por %p93, %p94
    %p97 = scmp.ne.s32.totalorder %s80, %s96
    %p98 = scmp.eq.s32.totalorder %s20, 0
    %p99 = por %p97, %p98
    %s100 = ssub.s32 %s14, %s21
    %p101 = scmp.eq.s32.totalorder %s100, 0
    %s103 = sadd.s32 %s102, 1
    %s104 = scalar_select %p101, %s102, %s103
    %p107 = pneg %p101
    %p108 = scmp.eq.s32.totalorder %s14, 1
    %p109 = por %p107, %p108
    %p110 = scmp.ne.s32.totalorder %s102, %s105
    %p111 = scmp.eq.s32.totalorder %s14, 0
    %p112 = por %p110, %p111
    %p113 = scmp.ne.s32.totalorder %s102, %s105
    %p114 = scmp.eq.s32.totalorder %s19, 1
    %p115 = por %p113, %p114
    %p116 = scmp.ne.s32.totalorder %s105, %s106
    %p117 = scmp.eq.s32.totalorder %s19, 0
    %p118 = por %p116, %p117
    %p119 = scmp.ne.s32.totalorder %s105, %s106
    %p120 = scmp.eq.s32.totalorder %s20, 1
    %p121 = por %p119, %p120
    %p123 = scmp.ne.s32.totalorder %s106, %s122
    %p124 = scmp.eq.s32.totalorder %s20, 0
    %p125 = por %p123, %p124
    %s126 = ssub.s32 %s14, %s21
    %p127 = scmp.eq.s32.totalorder %s126, 0
    %s129 = sadd.s32 %s128, 1
    %s130 = scalar_select %p127, %s128, %s129
    %p133 = pneg %p127
    %p134 = scmp.eq.s32.totalorder %s14, 1
    %p135 = por %p133, %p134
    %p136 = scmp.ne.s32.totalorder %s128, %s131
    %p137 = scmp.eq.s32.totalorder %s14, 0
    %p138 = por %p136, %p137
    %p139 = scmp.ne.s32.totalorder %s128, %s131
    %p140 = scmp.eq.s32.totalorder %s19, 1
    %p141 = por %p139, %p140
    %p142 = scmp.ne.s32.totalorder %s131, %s132
    %p143 = scmp.eq.s32.totalorder %s19, 0
    %p144 = por %p142, %p143
    %p145 = scmp.ne.s32.totalorder %s131, %s132
    %p146 = scmp.eq.s32.totalorder %s20, 1
    %p147 = por %p145, %p146
    %p149 = scmp.ne.s32.totalorder %s132, %s148
    %p150 = scmp.eq.s32.totalorder %s20, 0
    %p151 = por %p149, %p150
    %s152 = ssub.s32 %s14, %s21
    %p153 = scmp.eq.s32.totalorder %s152, 0
    %s155 = sadd.s32 %s154, 1
    %s156 = scalar_select %p153, %s154, %s155
    %p159 = pneg %p153
    %p160 = scmp.eq.s32.totalorder %s14, 1
    %p161 = por %p159, %p160
    %p162 = scmp.ne.s32.totalorder %s154, %s157
    %p163 = scmp.eq.s32.totalorder %s14, 0
    %p164 = por %p162, %p163
    %p165 = scmp.ne.s32.totalorder %s154, %s157
    %p166 = scmp.eq.s32.totalorder %s19, 1
    %p167 = por %p165, %p166
    %p168 = scmp.ne.s32.totalorder %s157, %s158
    %p169 = scmp.eq.s32.totalorder %s19, 0
    %p170 = por %p168, %p169
    %p171 = scmp.ne.s32.totalorder %s157, %s158
    %p172 = scmp.eq.s32.totalorder %s20, 1
    %p173 = por %p171, %p172
    %p175 = scmp.ne.s32.totalorder %s158, %s174
    %p176 = scmp.eq.s32.totalorder %s20, 0
    %p177 = por %p175, %p176
    %s178 = ssub.s32 %s14, %s21
    %p179 = scmp.eq.s32.totalorder %s178, 0
    %s181 = sadd.s32 %s180, 1
    %s182 = scalar_select %p179, %s180, %s181
    %p185 = pneg %p179
    %p186 = scmp.eq.s32.totalorder %s14, 1
    %p187 = por %p185, %p186
    %p188 = scmp.ne.s32.totalorder %s180, %s183
    %p189 = scmp.eq.s32.totalorder %s14, 0
    %p190 = por %p188, %p189
    %p191 = scmp.ne.s32.totalorder %s180, %s183
    %p192 = scmp.eq.s32.totalorder %s19, 1
    %p193 = por %p191, %p192
    %p194 = scmp.ne.s32.totalorder %s183, %s184
    %p195 = scmp.eq.s32.totalorder %s19, 0
    %p196 = por %p194, %p195
    %p197 = scmp.ne.s32.totalorder %s183, %s184
    %p198 = scmp.eq.s32.totalorder %s20, 1
    %p199 = por %p197, %p198
    %p201 = scmp.ne.s32.totalorder %s184, %s200
    %p202 = scmp.eq.s32.totalorder %s20, 0
    %p203 = por %p201, %p202
    %s204 = ssub.s32 %s14, %s21
    %p205 = scmp.eq.s32.totalorder %s204, 0
    %s207 = sadd.s32 %s206, 1
    %s208 = scalar_select %p205, %s206, %s207
    %p211 = pneg %p205
    %p212 = scmp.eq.s32.totalorder %s14, 1
    %p213 = por %p211, %p212
    %p214 = scmp.ne.s32.totalorder %s206, %s209
    %p215 = scmp.eq.s32.totalorder %s14, 0
    %p216 = por %p214, %p215
    %p217 = scmp.ne.s32.totalorder %s206, %s209
    %p218 = scmp.eq.s32.totalorder %s19, 1
    %p219 = por %p217, %p218
    %p220 = scmp.ne.s32.totalorder %s209, %s210
    %p221 = scmp.eq.s32.totalorder %s19, 0
    %p222 = por %p220, %p221
    %p223 = scmp.ne.s32.totalorder %s209, %s210
    %p224 = scmp.eq.s32.totalorder %s20, 1
    %p225 = por %p223, %p224
    %p227 = scmp.ne.s32.totalorder %s210, %s226
    %p228 = scmp.eq.s32.totalorder %s20, 0
    %p229 = por %p227, %p228
    %p230 = scmp.le.s32.totalorder 1, %s14
    %p231 = scmp.lt.s32.totalorder %s14, 3
    %p232 = pnand %p230, %p231
    %p233 = pneg %p232
    // Predicated region
    $region9: #{rpn_forward.3} parent=5 // pred_check
      _
    $region10: #{rpn_forward.3} parent=5 // pred_check_branch
      %235 = sbr.rel (%p232) target = $region12
    $region11: #{rpn_forward.3} parent=5 // pred_region
      %s236 = ssub.s32 %s14, 1
    $region12: #{rpn_forward.3} parent=5 // pred_fallthru
      _
    %p237 = scmp.lt.s32.totalorder %s14, 2
    // Predicated region
    $region13: #{rpn_forward.3} parent=5 // pred_check
      %p238 = pneg %p237
    $region14: #{rpn_forward.3} parent=5 // pred_check_branch
      %240 = sbr.rel (%p238) target = $region16
    $region15: #{rpn_forward.3} parent=5 // pred_region
      // Predicated region
      $region17: #{rpn_forward.3} parent=15 // pred_check
        %p241 = pneg %p34
      $region18: #{rpn_forward.3} parent=15 // pred_check_branch
        %243 = sbr.rel (%p241) target = $region20
      $region19: #{rpn_forward.3} parent=15 // pred_region
        %p244 = scmp.lt.s32.totalorder %s14, 1
        %s245 = scalar_select %p244, %s14, 1
        %s246 = smul.addr %s245, 4
        %s247 = scalar_lea.vmem %s0, %s246
      $region20: #{rpn_forward.3} parent=15 // pred_fallthru
        _
      // Predicated region
      $region21: #{rpn_forward.3} parent=15 // pred_check
        %p248 = pneg %p60
      $region22: #{rpn_forward.3} parent=15 // pred_check_branch
        %250 = sbr.rel (%p248) target = $region24
      $region23: #{rpn_forward.3} parent=15 // pred_region
        %p251 = scmp.lt.s32.totalorder %s14, 1
        %s252 = scalar_select %p251, %s14, 1
        %s253 = smul.addr %s252, 4
        %s254 = scalar_lea.vmem %s1, %s253
      $region24: #{rpn_forward.3} parent=15 // pred_fallthru
        _
      // Predicated region
      $region25: #{rpn_forward.3} parent=15 // pred_check
        %p255 = pneg %p86
      $region26: #{rpn_forward.3} parent=15 // pred_check_branch
        %257 = sbr.rel (%p255) target = $region28
      $region27: #{rpn_forward.3} parent=15 // pred_region
        %p258 = scmp.lt.s32.totalorder %s14, 1
        %s259 = scalar_select %p258, %s14, 1
        %s260 = smul.addr %s259, 16
        %s261 = smul.addr %s260, 8
        %s262 = scalar_lea.vmem %s2, %s261
      $region28: #{rpn_forward.3} parent=15 // pred_fallthru
        _
      // Predicated region
      $region29: #{rpn_forward.3} parent=15 // pred_check
        %p263 = pneg %p112
      $region30: #{rpn_forward.3} parent=15 // pred_check_branch
        %265 = sbr.rel (%p263) target = $region32
      $region31: #{rpn_forward.3} parent=15 // pred_region
        %p266 = scmp.lt.s32.totalorder %s14, 1
        %s267 = scalar_select %p266, %s14, 1
        %s268 = smul.addr %s267, 16
        %s269 = smul.addr %s268, 8
        %s270 = scalar_lea.vmem %s3, %s269
      $region32: #{rpn_forward.3} parent=15 // pred_fallthru
        _
      // Predicated region
      $region33: #{rpn_forward.3} parent=15 // pred_check
        %p271 = pneg %p138
      $region34: #{rpn_forward.3} parent=15 // pred_check_branch
        %273 = sbr.rel (%p271) target = $region36
      $region35: #{rpn_forward.3} parent=15 // pred_region
        %p274 = scmp.lt.s32.totalorder %s14, 1
        %s275 = scalar_select %p274, %s14, 1
        %s276 = scalar_lea.vmem %s4, %s275
      $region36: #{rpn_forward.3} parent=15 // pred_fallthru
        _
    $region16: #{rpn_forward.3} parent=5 // pred_fallthru
      _
    %p277 = scmp.le.s32.totalorder 1, %s14
    %p278 = scmp.lt.s32.totalorder %s14, 3
    %p279 = pnand %p277, %p278
    %p280 = pneg %p279
    // Predicated region
    $region37: #{rpn_forward.3} parent=5 // pred_check
      _
    $region38: #{rpn_forward.3} parent=5 // pred_check_branch
      %282 = sbr.rel (%p279) target = $region40
    $region39: #{rpn_forward.3} parent=5 // pred_region
      %s283 = ssub.s32 %s14, 1
      %p284 = scmp.lt.s32.totalorder %s19, 1
      %s285 = scalar_select %p284, %s19, 1
      %s286 = smul.addr %s285, 4
      %s287 = scalar_lea.vmem %s0, %s286
      %p288 = pneg %p40
      %p289 = pneg %p37
      %p290 = scmp.lt.s32.totalorder %s19, 1
      %s291 = scalar_select %p290, %s19, 1
      %s292 = smul.addr %s291, 4
      %s293 = scalar_lea.vmem %s1, %s292
      %p294 = pneg %p66
      %p295 = pneg %p63
      %p296 = scmp.lt.s32.totalorder %s19, 1
      %s297 = scalar_select %p296, %s19, 1
      %s298 = smul.addr %s297, 16
      %s299 = smul.addr %s298, 8
      %s300 = scalar_lea.vmem %s2, %s299
      %p301 = pneg %p92
      %p302 = pneg %p89
      %p303 = scmp.lt.s32.totalorder %s19, 1
      %s304 = scalar_select %p303, %s19, 1
      %s305 = smul.addr %s304, 16
      %s306 = smul.addr %s305, 8
      %s307 = scalar_lea.vmem %s3, %s306
      %p308 = pneg %p118
      %p309 = pneg %p115
      %p310 = scmp.lt.s32.totalorder %s19, 1
      %s311 = scalar_select %p310, %s19, 1
      %s312 = scalar_lea.vmem %s4, %s311
      %p313 = pneg %p144
      %p314 = pneg %p141
      %p315 = pneg %p170
      %p316 = pneg %p167
      %p317 = scmp.lt.s32.totalorder %s19, 1
      %s318 = scalar_select %p317, %s19, 1
      %s319 = smul.addr %s318, 4
      %s320 = scalar_lea.vmem %s5, %s319
      %p321 = pneg %p196
      %p322 = pneg %p193
      %p323 = scmp.lt.s32.totalorder %s19, 1
      %s324 = scalar_select %p323, %s19, 1
      %s325 = scalar_lea.vmem %s6, %s324
      %p326 = pneg %p222
      %p327 = pneg %p219
      %p328 = scmp.lt.s32.totalorder %s19, 1
      %s329 = scalar_select %p328, %s19, 1
      %s330 = scalar_lea.vmem %s7, %s329
      %p331 = scmp.lt.s32.totalorder %s19, 1
      %s332 = scalar_select %p331, %s19, 1
      %s333 = smul.addr %s332, 4
      %s334 = scalar_lea.vmem %s0, %s333
      %p335 = scmp.lt.s32.totalorder %s19, 1
      %s336 = scalar_select %p335, %s19, 1
      %s337 = smul.addr %s336, 4
      %s338 = scalar_lea.vmem %s1, %s337
      %p339 = scmp.lt.s32.totalorder %s19, 1
      %s340 = scalar_select %p339, %s19, 1
      %s341 = smul.addr %s340, 16
      %s342 = smul.addr %s341, 8
      %s343 = scalar_lea.vmem %s2, %s342
      %p344 = scmp.lt.s32.totalorder %s19, 1
      %s345 = scalar_select %p344, %s19, 1
      %s346 = smul.addr %s345, 16
      %s347 = smul.addr %s346, 8
      %s348 = scalar_lea.vmem %s3, %s347
      %p349 = scmp.lt.s32.totalorder %s19, 1
      %s350 = scalar_select %p349, %s19, 1
      %s351 = scalar_lea.vmem %s4, %s350
      %p352 = scmp.lt.s32.totalorder %s19, 1
      %s353 = scalar_select %p352, %s19, 1
      %s354 = smul.addr %s353, 4
      %s355 = scalar_lea.vmem %s5, %s354
      %p356 = scmp.lt.s32.totalorder %s19, 1
      %s357 = scalar_select %p356, %s19, 1
      %s358 = scalar_lea.vmem %s6, %s357
      %p359 = scmp.lt.s32.totalorder %s19, 1
      %s360 = scalar_select %p359, %s19, 1
      %s361 = scalar_lea.vmem %s7, %s360
      %v362 = vld [vmem:[%s338] sm:$0xf]
      %v363 = vld [vmem:[%s334] sm:$0xf]
      %v365 = vrot.slane %v362, 6
      %v367 = vsub.f32 %v362, %v365
      %v368 = vmul.f32 %v367, 0.5
      %v370 = vrot.slane %v368, 2
      %v372 = vadd.f32 %v362, %v370
      %v373 = vmin.f32 %v363, 4.1351666
      %v375 = vrot.slane %v367, 2
      %v377 = vmul.f32 %v363, %v375
      %v378 = vadd.f32 %v377, %v372
      %v379 = vmul.f32 %v373, 1.442695
      %v380 = vpow.pop %v379
      %v381 = vmul.f32 %v380, %v367
      %v382 = vmul.f32 %v381, 0.5
      %v384 = vrot.slane %v382, 2
      %v386 = vsub.f32 %v378, %v384
      %v387 = vmax.f32 %v386, 0.0
      %v388 = vmin.f32 %v387, 16.0
      %v389 = vadd.f32 %v378, %v384
      %v390 = vmax.f32 %v389, 0.0
      %v391 = vmin.f32 %v390, 16.0
      %v393 = vrot.slane %v391, 6
      %vm395 = vcmask 1040384
      %vm396 = vcmask 1041408
      %v397 = vsel %vm396, %v388, %v393
      %vm398 = vcmask 1042432
      %v399 = vsel %vm398, %v397, %v393
      %400 = vst [vmem:[%s355] sm:$0xf] %v399
      %v401 = vld [vmem:[%s351] sm:$0x1]
      %v402 = vxor.u32 %v401, 2147483648
      %v403 = vmul.f32 %v402, 1.442695
      %v404 = vpow.pop %v403
      %v405 = vadd.f32 %v404, 1.0
      %v406 = vrcp.pop %v405
      %v407 = vmul.f32 1.0, %v406
      %408 = vst [vmem:[%s358] sm:$0x1] %v407
      %v409 = vsub.f32 %v391, %v388
      %vm410 = vcmp.ge.f32.partialorder %v409, 0.001
      %v411 = vsel %vm410, 1, 0
      %v412 = vrot.slane %v411, 1
      %vm413 = vcmp.ne.s32.totalorder %v412, 0
      %vm414 = vmand %vm410, %vm413
      %vm415 = vcmp.ge.f32.partialorder %v407, 0.0
      %vm416 = vmand %vm414, %vm415
      %v417 = vld [vmem:[%s348] sm:$0xff]
      %v418 = vld [vmem:[%s348 + $0x8] sm:$0xff]
      %v419 = vld [vmem:[%s348 + $0x10] sm:$0xff]
      %v420 = vld [vmem:[%s348 + $0x18] sm:$0xff]
      %v421 = vld [vmem:[%s348 + $0x20] sm:$0xff]
      %v422 = vld [vmem:[%s348 + $0x28] sm:$0xff]
      %v423 = vld [vmem:[%s348 + $0x30] sm:$0xff]
      %v424 = vld [vmem:[%s348 + $0x38] sm:$0xff]
      %v425 = vld [vmem:[%s348 + $0x40] sm:$0xff]
      %v426 = vld [vmem:[%s348 + $0x48] sm:$0xff]
      %v427 = vld [vmem:[%s348 + $0x50] sm:$0xff]
      %v428 = vld [vmem:[%s348 + $0x58] sm:$0xff]
      %v429 = vld [vmem:[%s348 + $0x60] sm:$0xff]
      %v430 = vld [vmem:[%s348 + $0x68] sm:$0xff]
      %v431 = vld [vmem:[%s348 + $0x70] sm:$0xff]
      %v432 = vld [vmem:[%s348 + $0x78] sm:$0xff]
      %v433 = vld [vmem:[%s343] sm:$0xff]
      %v434 = vld [vmem:[%s343 + $0x8] sm:$0xff]
      %v435 = vld [vmem:[%s343 + $0x10] sm:$0xff]
      %v436 = vld [vmem:[%s343 + $0x18] sm:$0xff]
      %v437 = vld [vmem:[%s343 + $0x20] sm:$0xff]
      %v438 = vld [vmem:[%s343 + $0x28] sm:$0xff]
      %v439 = vld [vmem:[%s343 + $0x30] sm:$0xff]
      %v440 = vld [vmem:[%s343 + $0x38] sm:$0xff]
      %v441 = vld [vmem:[%s343 + $0x40] sm:$0xff]
      %v442 = vld [vmem:[%s343 + $0x48] sm:$0xff]
      %v443 = vld [vmem:[%s343 + $0x50] sm:$0xff]
      %v444 = vld [vmem:[%s343 + $0x58] sm:$0xff]
      %v445 = vld [vmem:[%s343 + $0x60] sm:$0xff]
      %v446 = vld [vmem:[%s343 + $0x68] sm:$0xff]
      %v447 = vld [vmem:[%s343 + $0x70] sm:$0xff]
      %v448 = vld [vmem:[%s343 + $0x78] sm:$0xff]
      %465 = vrot.lane.b32.xlu0 %v417, 2
      %v466 = vpop.permute.xlu0 %465
      %467 = vrot.lane.b32.xlu0 %v418, 2
      %v468 = vpop.permute.xlu0 %467
      %469 = vrot.lane.b32.xlu0 %v419, 2
      %v470 = vpop.permute.xlu0 %469
      %471 = vrot.lane.b32.xlu0 %v420, 2
      %v472 = vpop.permute.xlu0 %471
      %473 = vrot.lane.b32.xlu0 %v421, 2
      %v474 = vpop.permute.xlu0 %473
      %475 = vrot.lane.b32.xlu0 %v422, 2
      %v476 = vpop.permute.xlu0 %475
      %477 = vrot.lane.b32.xlu0 %v423, 2
      %v478 = vpop.permute.xlu0 %477
      %479 = vrot.lane.b32.xlu0 %v424, 2
      %v480 = vpop.permute.xlu0 %479
      %481 = vrot.lane.b32.xlu0 %v425, 2
      %v482 = vpop.permute.xlu0 %481
      %483 = vrot.lane.b32.xlu0 %v426, 2
      %v484 = vpop.permute.xlu0 %483
      %485 = vrot.lane.b32.xlu0 %v427, 2
      %v486 = vpop.permute.xlu0 %485
      %487 = vrot.lane.b32.xlu0 %v428, 2
      %v488 = vpop.permute.xlu0 %487
      %489 = vrot.lane.b32.xlu0 %v429, 2
      %v490 = vpop.permute.xlu0 %489
      %491 = vrot.lane.b32.xlu0 %v430, 2
      %v492 = vpop.permute.xlu0 %491
      %493 = vrot.lane.b32.xlu0 %v431, 2
      %v494 = vpop.permute.xlu0 %493
      %495 = vrot.lane.b32.xlu0 %v432, 2
      %v496 = vpop.permute.xlu0 %495
      %v513 = vsub.f32 %v417, %v466
      %v514 = vsub.f32 %v418, %v468
      %v515 = vsub.f32 %v419, %v470
      %v516 = vsub.f32 %v420, %v472
      %v517 = vsub.f32 %v421, %v474
      %v518 = vsub.f32 %v422, %v476
      %v519 = vsub.f32 %v423, %v478
      %v520 = vsub.f32 %v424, %v480
      %v521 = vsub.f32 %v425, %v482
      %v522 = vsub.f32 %v426, %v484
      %v523 = vsub.f32 %v427, %v486
      %v524 = vsub.f32 %v428, %v488
      %v525 = vsub.f32 %v429, %v490
      %v526 = vsub.f32 %v430, %v492
      %v527 = vsub.f32 %v431, %v494
      %v528 = vsub.f32 %v432, %v496
      %v529 = vmul.f32 %v513, 0.5
      %v530 = vmul.f32 %v514, 0.5
      %v531 = vmul.f32 %v515, 0.5
      %v532 = vmul.f32 %v516, 0.5
      %v533 = vmul.f32 %v517, 0.5
      %v534 = vmul.f32 %v518, 0.5
      %v535 = vmul.f32 %v519, 0.5
      %v536 = vmul.f32 %v520, 0.5
      %v537 = vmul.f32 %v521, 0.5
      %v538 = vmul.f32 %v522, 0.5
      %v539 = vmul.f32 %v523, 0.5
      %v540 = vmul.f32 %v524, 0.5
      %v541 = vmul.f32 %v525, 0.5
      %v542 = vmul.f32 %v526, 0.5
      %v543 = vmul.f32 %v527, 0.5
      %v544 = vmul.f32 %v528, 0.5
      %561 = vrot.lane.b32.xlu0 %v529, 126
      %v562 = vpop.permute.xlu0 %561
      %563 = vrot.lane.b32.xlu0 %v530, 126
      %v564 = vpop.permute.xlu0 %563
      %565 = vrot.lane.b32.xlu0 %v531, 126
      %v566 = vpop.permute.xlu0 %565
      %567 = vrot.lane.b32.xlu0 %v532, 126
      %v568 = vpop.permute.xlu0 %567
      %569 = vrot.lane.b32.xlu0 %v533, 126
      %v570 = vpop.permute.xlu0 %569
      %571 = vrot.lane.b32.xlu0 %v534, 126
      %v572 = vpop.permute.xlu0 %571
      %573 = vrot.lane.b32.xlu0 %v535, 126
      %v574 = vpop.permute.xlu0 %573
      %575 = vrot.lane.b32.xlu0 %v536, 126
      %v576 = vpop.permute.xlu0 %575
      %577 = vrot.lane.b32.xlu0 %v537, 126
      %v578 = vpop.permute.xlu0 %577
      %579 = vrot.lane.b32.xlu0 %v538, 126
      %v580 = vpop.permute.xlu0 %579
      %581 = vrot.lane.b32.xlu0 %v539, 126
      %v582 = vpop.permute.xlu0 %581
      %583 = vrot.lane.b32.xlu0 %v540, 126
      %v584 = vpop.permute.xlu0 %583
      %585 = vrot.lane.b32.xlu0 %v541, 126
      %v586 = vpop.permute.xlu0 %585
      %587 = vrot.lane.b32.xlu0 %v542, 126
      %v588 = vpop.permute.xlu0 %587
      %589 = vrot.lane.b32.xlu0 %v543, 126
      %v590 = vpop.permute.xlu0 %589
      %591 = vrot.lane.b32.xlu0 %v544, 126
      %v592 = vpop.permute.xlu0 %591
      %v609 = vadd.f32 %v417, %v562
      %v610 = vadd.f32 %v418, %v564
      %v611 = vadd.f32 %v419, %v566
      %v612 = vadd.f32 %v420, %v568
      %v613 = vadd.f32 %v421, %v570
      %v614 = vadd.f32 %v422, %v572
      %v615 = vadd.f32 %v423, %v574
      %v616 = vadd.f32 %v424, %v576
      %v617 = vadd.f32 %v425, %v578
      %v618 = vadd.f32 %v426, %v580
      %v619 = vadd.f32 %v427, %v582
      %v620 = vadd.f32 %v428, %v584
      %v621 = vadd.f32 %v429, %v586
      %v622 = vadd.f32 %v430, %v588
      %v623 = vadd.f32 %v431, %v590
      %v624 = vadd.f32 %v432, %v592
      %v625 = vmin.f32 %v433, 4.1351666
      %v626 = vmin.f32 %v434, 4.1351666
      %v627 = vmin.f32 %v435, 4.1351666
      %v628 = vmin.f32 %v436, 4.1351666
      %v629 = vmin.f32 %v437, 4.1351666
      %v630 = vmin.f32 %v438, 4.1351666
      %v631 = vmin.f32 %v439, 4.1351666
      %v632 = vmin.f32 %v440, 4.1351666
      %v633 = vmin.f32 %v441, 4.1351666
      %v634 = vmin.f32 %v442, 4.1351666
      %v635 = vmin.f32 %v443, 4.1351666
      %v636 = vmin.f32 %v444, 4.1351666
      %v637 = vmin.f32 %v445, 4.1351666
      %v638 = vmin.f32 %v446, 4.1351666
      %v639 = vmin.f32 %v447, 4.1351666
      %v640 = vmin.f32 %v448, 4.1351666
      %657 = vrot.lane.b32.xlu0 %v513, 126
      %v658 = vpop.permute.xlu0 %657
      %659 = vrot.lane.b32.xlu0 %v514, 126
      %v660 = vpop.permute.xlu0 %659
      %661 = vrot.lane.b32.xlu0 %v515, 126
      %v662 = vpop.permute.xlu0 %661
      %663 = vrot.lane.b32.xlu0 %v516, 126
      %v664 = vpop.permute.xlu0 %663
      %665 = vrot.lane.b32.xlu0 %v517, 126
      %v666 = vpop.permute.xlu0 %665
      %667 = vrot.lane.b32.xlu0 %v518, 126
      %v668 = vpop.permute.xlu0 %667
      %669 = vrot.lane.b32.xlu0 %v519, 126
      %v670 = vpop.permute.xlu0 %669
      %671 = vrot.lane.b32.xlu0 %v520, 126
      %v672 = vpop.permute.xlu0 %671
      %673 = vrot.lane.b32.xlu0 %v521, 126
      %v674 = vpop.permute.xlu0 %673
      %675 = vrot.lane.b32.xlu0 %v522, 126
      %v676 = vpop.permute.xlu0 %675
      %677 = vrot.lane.b32.xlu0 %v523, 126
      %v678 = vpop.permute.xlu0 %677
      %679 = vrot.lane.b32.xlu0 %v524, 126
      %v680 = vpop.permute.xlu0 %679
      %681 = vrot.lane.b32.xlu0 %v525, 126
      %v682 = vpop.permute.xlu0 %681
      %683 = vrot.lane.b32.xlu0 %v526, 126
      %v684 = vpop.permute.xlu0 %683
      %685 = vrot.lane.b32.xlu0 %v527, 126
      %v686 = vpop.permute.xlu0 %685
      %687 = vrot.lane.b32.xlu0 %v528, 126
      %v688 = vpop.permute.xlu0 %687
      %v705 = vmul.f32 %v433, %v658
      %v706 = vmul.f32 %v434, %v660
      %v707 = vmul.f32 %v435, %v662
      %v708 = vmul.f32 %v436, %v664
      %v709 = vmul.f32 %v437, %v666
      %v710 = vmul.f32 %v438, %v668
      %v711 = vmul.f32 %v439, %v670
      %v712 = vmul.f32 %v440, %v672
      %v713 = vmul.f32 %v441, %v674
      %v714 = vmul.f32 %v442, %v676
      %v715 = vmul.f32 %v443, %v678
      %v716 = vmul.f32 %v444, %v680
      %v717 = vmul.f32 %v445, %v682
      %v718 = vmul.f32 %v446, %v684
      %v719 = vmul.f32 %v447, %v686
      %v720 = vmul.f32 %v448, %v688
      %v721 = vadd.f32 %v705, %v609
      %v722 = vadd.f32 %v706, %v610
      %v723 = vadd.f32 %v707, %v611
      %v724 = vadd.f32 %v708, %v612
      %v725 = vadd.f32 %v709, %v613
      %v726 = vadd.f32 %v710, %v614
      %v727 = vadd.f32 %v711, %v615
      %v728 = vadd.f32 %v712, %v616
      %v729 = vadd.f32 %v713, %v617
      %v730 = vadd.f32 %v714, %v618
      %v731 = vadd.f32 %v715, %v619
      %v732 = vadd.f32 %v716, %v620
      %v733 = vadd.f32 %v717, %v621
      %v734 = vadd.f32 %v718, %v622
      %v735 = vadd.f32 %v719, %v623
      %v736 = vadd.f32 %v720, %v624
      %v737 = vmul.f32 %v625, 1.442695
      %v738 = vpow.pop %v737
      %v739 = vmul.f32 %v626, 1.442695
      %v740 = vpow.pop %v739
      %v741 = vmul.f32 %v627, 1.442695
      %v742 = vpow.pop %v741
      %v743 = vmul.f32 %v628, 1.442695
      %v744 = vpow.pop %v743
      %v745 = vmul.f32 %v629, 1.442695
      %v746 = vpow.pop %v745
      %v747 = vmul.f32 %v630, 1.442695
      %v748 = vpow.pop %v747
      %v749 = vmul.f32 %v631, 1.442695
      %v750 = vpow.pop %v749
      %v751 = vmul.f32 %v632, 1.442695
      %v752 = vpow.pop %v751
      %v753 = vmul.f32 %v633, 1.442695
      %v754 = vpow.pop %v753
      %v755 = vmul.f32 %v634, 1.442695
      %v756 = vpow.pop %v755
      %v757 = vmul.f32 %v635, 1.442695
      %v758 = vpow.pop %v757
      %v759 = vmul.f32 %v636, 1.442695
      %v760 = vpow.pop %v759
      %v761 = vmul.f32 %v637, 1.442695
      %v762 = vpow.pop %v761
      %v763 = vmul.f32 %v638, 1.442695
      %v764 = vpow.pop %v763
      %v765 = vmul.f32 %v639, 1.442695
      %v766 = vpow.pop %v765
      %v767 = vmul.f32 %v640, 1.442695
      %v768 = vpow.pop %v767
      %v769 = vmul.f32 %v738, %v513
      %v770 = vmul.f32 %v740, %v514
      %v771 = vmul.f32 %v742, %v515
      %v772 = vmul.f32 %v744, %v516
      %v773 = vmul.f32 %v746, %v517
      %v774 = vmul.f32 %v748, %v518
      %v775 = vmul.f32 %v750, %v519
      %v776 = vmul.f32 %v752, %v520
      %v777 = vmul.f32 %v754, %v521
      %v778 = vmul.f32 %v756, %v522
      %v779 = vmul.f32 %v758, %v523
      %v780 = vmul.f32 %v760, %v524
      %v781 = vmul.f32 %v762, %v525
      %v782 = vmul.f32 %v764, %v526
      %v783 = vmul.f32 %v766, %v527
      %v784 = vmul.f32 %v768, %v528
      %v785 = vmul.f32 %v769, 0.5
      %v786 = vmul.f32 %v770, 0.5
      %v787 = vmul.f32 %v771, 0.5
      %v788 = vmul.f32 %v772, 0.5
      %v789 = vmul.f32 %v773, 0.5
      %v790 = vmul.f32 %v774, 0.5
      %v791 = vmul.f32 %v775, 0.5
      %v792 = vmul.f32 %v776, 0.5
      %v793 = vmul.f32 %v777, 0.5
      %v794 = vmul.f32 %v778, 0.5
      %v795 = vmul.f32 %v779, 0.5
      %v796 = vmul.f32 %v780, 0.5
      %v797 = vmul.f32 %v781, 0.5
      %v798 = vmul.f32 %v782, 0.5
      %v799 = vmul.f32 %v783, 0.5
      %v800 = vmul.f32 %v784, 0.5
      %817 = vrot.lane.b32.xlu0 %v785, 126
      %v818 = vpop.permute.xlu0 %817
      %819 = vrot.lane.b32.xlu0 %v786, 126
      %v820 = vpop.permute.xlu0 %819
      %821 = vrot.lane.b32.xlu0 %v787, 126
      %v822 = vpop.permute.xlu0 %821
      %823 = vrot.lane.b32.xlu0 %v788, 126
      %v824 = vpop.permute.xlu0 %823
      %825 = vrot.lane.b32.xlu0 %v789, 126
      %v826 = vpop.permute.xlu0 %825
      %827 = vrot.lane.b32.xlu0 %v790, 126
      %v828 = vpop.permute.xlu0 %827
      %829 = vrot.lane.b32.xlu0 %v791, 126
      %v830 = vpop.permute.xlu0 %829
      %831 = vrot.lane.b32.xlu0 %v792, 126
      %v832 = vpop.permute.xlu0 %831
      %833 = vrot.lane.b32.xlu0 %v793, 126
      %v834 = vpop.permute.xlu0 %833
      %835 = vrot.lane.b32.xlu0 %v794, 126
      %v836 = vpop.permute.xlu0 %835
      %837 = vrot.lane.b32.xlu0 %v795, 126
      %v838 = vpop.permute.xlu0 %837
      %839 = vrot.lane.b32.xlu0 %v796, 126
      %v840 = vpop.permute.xlu0 %839
      %841 = vrot.lane.b32.xlu0 %v797, 126
      %v842 = vpop.permute.xlu0 %841
      %843 = vrot.lane.b32.xlu0 %v798, 126
      %v844 = vpop.permute.xlu0 %843
      %845 = vrot.lane.b32.xlu0 %v799, 126
      %v846 = vpop.permute.xlu0 %845
      %847 = vrot.lane.b32.xlu0 %v800, 126
      %v848 = vpop.permute.xlu0 %847
      %v865 = vsub.f32 %v721, %v818
      %v866 = vsub.f32 %v722, %v820
      %v867 = vsub.f32 %v723, %v822
      %v868 = vsub.f32 %v724, %v824
      %v869 = vsub.f32 %v725, %v826
      %v870 = vsub.f32 %v726, %v828
      %v871 = vsub.f32 %v727, %v830
      %v872 = vsub.f32 %v728, %v832
      %v873 = vsub.f32 %v729, %v834
      %v874 = vsub.f32 %v730, %v836
      %v875 = vsub.f32 %v731, %v838
      %v876 = vsub.f32 %v732, %v840
      %v877 = vsub.f32 %v733, %v842
      %v878 = vsub.f32 %v734, %v844
      %v879 = vsub.f32 %v735, %v846
      %v880 = vsub.f32 %v736, %v848
      %v881 = vmax.f32 %v865, 0.0
      %v882 = vmax.f32 %v866, 0.0
      %v883 = vmax.f32 %v867, 0.0
      %v884 = vmax.f32 %v868, 0.0
      %v885 = vmax.f32 %v869, 0.0
      %v886 = vmax.f32 %v870, 0.0
      %v887 = vmax.f32 %v871, 0.0
      %v888 = vmax.f32 %v872, 0.0
      %v889 = vmax.f32 %v873, 0.0
      %v890 = vmax.f32 %v874, 0.0
      %v891 = vmax.f32 %v875, 0.0
      %v892 = vmax.f32 %v876, 0.0
      %v893 = vmax.f32 %v877, 0.0
      %v894 = vmax.f32 %v878, 0.0
      %v895 = vmax.f32 %v879, 0.0
      %v896 = vmax.f32 %v880, 0.0
      %v897 = vmin.f32 %v881, 16.0
      %v898 = vmin.f32 %v882, 16.0
      %v899 = vmin.f32 %v883, 16.0
      %v900 = vmin.f32 %v884, 16.0
      %v901 = vmin.f32 %v885, 16.0
      %v902 = vmin.f32 %v886, 16.0
      %v903 = vmin.f32 %v887, 16.0
      %v904 = vmin.f32 %v888, 16.0
      %v905 = vmin.f32 %v889, 16.0
      %v906 = vmin.f32 %v890, 16.0
      %v907 = vmin.f32 %v891, 16.0
      %v908 = vmin.f32 %v892, 16.0
      %v909 = vmin.f32 %v893, 16.0
      %v910 = vmin.f32 %v894, 16.0
      %v911 = vmin.f32 %v895, 16.0
      %v912 = vmin.f32 %v896, 16.0
      %v913 = vadd.f32 %v721, %v818
      %v914 = vadd.f32 %v722, %v820
      %v915 = vadd.f32 %v723, %v822
      %v916 = vadd.f32 %v724, %v824
      %v917 = vadd.f32 %v725, %v826
      %v918 = vadd.f32 %v726, %v828
      %v919 = vadd.f32 %v727, %v830
      %v920 = vadd.f32 %v728, %v832
      %v921 = vadd.f32 %v729, %v834
      %v922 = vadd.f32 %v730, %v836
      %v923 = vadd.f32 %v731, %v838
      %v924 = vadd.f32 %v732, %v840
      %v925 = vadd.f32 %v733, %v842
      %v926 = vadd.f32 %v734, %v844
      %v927 = vadd.f32 %v735, %v846
      %v928 = vadd.f32 %v736, %v848
      %v929 = vmax.f32 %v913, 0.0
      %v930 = vmax.f32 %v914, 0.0
      %v931 = vmax.f32 %v915, 0.0
      %v932 = vmax.f32 %v916, 0.0
      %v933 = vmax.f32 %v917, 0.0
      %v934 = vmax.f32 %v918, 0.0
      %v935 = vmax.f32 %v919, 0.0
      %v936 = vmax.f32 %v920, 0.0
      %v937 = vmax.f32 %v921, 0.0
      %v938 = vmax.f32 %v922, 0.0
      %v939 = vmax.f32 %v923, 0.0
      %v940 = vmax.f32 %v924, 0.0
      %v941 = vmax.f32 %v925, 0.0
      %v942 = vmax.f32 %v926, 0.0
      %v943 = vmax.f32 %v927, 0.0
      %v944 = vmax.f32 %v928, 0.0
      %v945 = vmin.f32 %v929, 16.0
      %v946 = vmin.f32 %v930, 16.0
      %v947 = vmin.f32 %v931, 16.0
      %v948 = vmin.f32 %v932, 16.0
      %v949 = vmin.f32 %v933, 16.0
      %v950 = vmin.f32 %v934, 16.0
      %v951 = vmin.f32 %v935, 16.0
      %v952 = vmin.f32 %v936, 16.0
      %v953 = vmin.f32 %v937, 16.0
      %v954 = vmin.f32 %v938, 16.0
      %v955 = vmin.f32 %v939, 16.0
      %v956 = vmin.f32 %v940, 16.0
      %v957 = vmin.f32 %v941, 16.0
      %v958 = vmin.f32 %v942, 16.0
      %v959 = vmin.f32 %v943, 16.0
      %v960 = vmin.f32 %v944, 16.0
      %v962 = vrot.slane %v409, 1
      %v964 = vmul.f32 %v409, %v962
      %v965 = vsub.f32 %v945, %v897
      %v966 = vsub.f32 %v946, %v898
      %v967 = vsub.f32 %v947, %v899
      %v968 = vsub.f32 %v948, %v900
      %v969 = vsub.f32 %v949, %v901
      %v970 = vsub.f32 %v950, %v902
      %v971 = vsub.f32 %v951, %v903
      %v972 = vsub.f32 %v952, %v904
      %v973 = vsub.f32 %v953, %v905
      %v974 = vsub.f32 %v954, %v906
      %v975 = vsub.f32 %v955, %v907
      %v976 = vsub.f32 %v956, %v908
      %v977 = vsub.f32 %v957, %v909
      %v978 = vsub.f32 %v958, %v910
      %v979 = vsub.f32 %v959, %v911
      %v980 = vsub.f32 %v960, %v912
      %997 = vrot.lane.b32.xlu0 %v965, 127
      %v998 = vpop.permute.xlu0 %997
      %999 = vrot.lane.b32.xlu0 %v966, 127
      %v1000 = vpop.permute.xlu0 %999
      %1001 = vrot.lane.b32.xlu0 %v967, 127
      %v1002 = vpop.permute.xlu0 %1001
      %1003 = vrot.lane.b32.xlu0 %v968, 127
      %v1004 = vpop.permute.xlu0 %1003
      %1005 = vrot.lane.b32.xlu0 %v969, 127
      %v1006 = vpop.permute.xlu0 %1005
      %1007 = vrot.lane.b32.xlu0 %v970, 127
      %v1008 = vpop.permute.xlu0 %1007
      %1009 = vrot.lane.b32.xlu0 %v971, 127
      %v1010 = vpop.permute.xlu0 %1009
      %1011 = vrot.lane.b32.xlu0 %v972, 127
      %v1012 = vpop.permute.xlu0 %1011
      %1013 = vrot.lane.b32.xlu0 %v973, 127
      %v1014 = vpop.permute.xlu0 %1013
      %1015 = vrot.lane.b32.xlu0 %v974, 127
      %v1016 = vpop.permute.xlu0 %1015
      %1017 = vrot.lane.b32.xlu0 %v975, 127
      %v1018 = vpop.permute.xlu0 %1017
      %1019 = vrot.lane.b32.xlu0 %v976, 127
      %v1020 = vpop.permute.xlu0 %1019
      %1021 = vrot.lane.b32.xlu0 %v977, 127
      %v1022 = vpop.permute.xlu0 %1021
      %1023 = vrot.lane.b32.xlu0 %v978, 127
      %v1024 = vpop.permute.xlu0 %1023
      %1025 = vrot.lane.b32.xlu0 %v979, 127
      %v1026 = vpop.permute.xlu0 %1025
      %1027 = vrot.lane.b32.xlu0 %v980, 127
      %v1028 = vpop.permute.xlu0 %1027
      %v1045 = vmul.f32 %v965, %v998
      %v1046 = vmul.f32 %v966, %v1000
      %v1047 = vmul.f32 %v967, %v1002
      %v1048 = vmul.f32 %v968, %v1004
      %v1049 = vmul.f32 %v969, %v1006
      %v1050 = vmul.f32 %v970, %v1008
      %v1051 = vmul.f32 %v971, %v1010
      %v1052 = vmul.f32 %v972, %v1012
      %v1053 = vmul.f32 %v973, %v1014
      %v1054 = vmul.f32 %v974, %v1016
      %v1055 = vmul.f32 %v975, %v1018
      %v1056 = vmul.f32 %v976, %v1020
      %v1057 = vmul.f32 %v977, %v1022
      %v1058 = vmul.f32 %v978, %v1024
      %v1059 = vmul.f32 %v979, %v1026
      %v1060 = vmul.f32 %v980, %v1028
      %1062 = vset.pattern.permute.xlu0 0
      %1063 = vperm.xlu0 %1062, %v945
      %v1064 = vpop.permute.xlu0 %1063
      %1067 = vset.pattern.permute.xlu0 0
      %1068 = vperm.xlu0 %1067, %v946
      %v1069 = vpop.permute.xlu0 %1068
      %1072 = vset.pattern.permute.xlu0 0
      %1073 = vperm.xlu0 %1072, %v947
      %v1074 = vpop.permute.xlu0 %1073
      %1077 = vset.pattern.permute.xlu0 0
      %1078 = vperm.xlu0 %1077, %v948
      %v1079 = vpop.permute.xlu0 %1078
      %1082 = vset.pattern.permute.xlu0 0
      %1083 = vperm.xlu0 %1082, %v949
      %v1084 = vpop.permute.xlu0 %1083
      %1087 = vset.pattern.permute.xlu0 0
      %1088 = vperm.xlu0 %1087, %v950
      %v1089 = vpop.permute.xlu0 %1088
      %1092 = vset.pattern.permute.xlu0 0
      %1093 = vperm.xlu0 %1092, %v951
      %v1094 = vpop.permute.xlu0 %1093
      %1097 = vset.pattern.permute.xlu0 0
      %1098 = vperm.xlu0 %1097, %v952
      %v1099 = vpop.permute.xlu0 %1098
      %1102 = vset.pattern.permute.xlu0 0
      %1103 = vperm.xlu0 %1102, %v953
      %v1104 = vpop.permute.xlu0 %1103
      %1107 = vset.pattern.permute.xlu0 0
      %1108 = vperm.xlu0 %1107, %v954
      %v1109 = vpop.permute.xlu0 %1108
      %1112 = vset.pattern.permute.xlu0 0
      %1113 = vperm.xlu0 %1112, %v955
      %v1114 = vpop.permute.xlu0 %1113
      %1117 = vset.pattern.permute.xlu0 0
      %1118 = vperm.xlu0 %1117, %v956
      %v1119 = vpop.permute.xlu0 %1118
      %1122 = vset.pattern.permute.xlu0 0
      %1123 = vperm.xlu0 %1122, %v957
      %v1124 = vpop.permute.xlu0 %1123
      %1127 = vset.pattern.permute.xlu0 0
      %1128 = vperm.xlu0 %1127, %v958
      %v1129 = vpop.permute.xlu0 %1128
      %1132 = vset.pattern.permute.xlu0 0
      %1133 = vperm.xlu0 %1132, %v959
      %v1134 = vpop.permute.xlu0 %1133
      %1137 = vset.pattern.permute.xlu0 0
      %1138 = vperm.xlu0 %1137, %v960
      %v1139 = vpop.permute.xlu0 %1138
      %v1141 = vlaneseq
      %v1142 = vshrl.u32 %v1141, 7
      %v1143 = vsub.s32 0, %v1142
      %v1144 = vrot.slane %v391, %v1143
      %v1145 = vmin.f32 %v1064, %v1144
      %v1146 = vmin.f32 %v1069, %v1144
      %v1147 = vmin.f32 %v1074, %v1144
      %v1148 = vmin.f32 %v1079, %v1144
      %v1149 = vmin.f32 %v1084, %v1144
      %v1150 = vmin.f32 %v1089, %v1144
      %v1151 = vmin.f32 %v1094, %v1144
      %v1152 = vmin.f32 %v1099, %v1144
      %v1153 = vmin.f32 %v1104, %v1144
      %v1154 = vmin.f32 %v1109, %v1144
      %v1155 = vmin.f32 %v1114, %v1144
      %v1156 = vmin.f32 %v1119, %v1144
      %v1157 = vmin.f32 %v1124, %v1144
      %v1158 = vmin.f32 %v1129, %v1144
      %v1159 = vmin.f32 %v1134, %v1144
      %v1160 = vmin.f32 %v1139, %v1144
      %1162 = vset.pattern.permute.xlu0 0
      %1163 = vperm.xlu0 %1162, %v897
      %v1164 = vpop.permute.xlu0 %1163
      %1167 = vset.pattern.permute.xlu0 0
      %1168 = vperm.xlu0 %1167, %v898
      %v1169 = vpop.permute.xlu0 %1168
      %1172 = vset.pattern.permute.xlu0 0
      %1173 = vperm.xlu0 %1172, %v899
      %v1174 = vpop.permute.xlu0 %1173
      %1177 = vset.pattern.permute.xlu0 0
      %1178 = vperm.xlu0 %1177, %v900
      %v1179 = vpop.permute.xlu0 %1178
      %1182 = vset.pattern.permute.xlu0 0
      %1183 = vperm.xlu0 %1182, %v901
      %v1184 = vpop.permute.xlu0 %1183
      %1187 = vset.pattern.permute.xlu0 0
      %1188 = vperm.xlu0 %1187, %v902
      %v1189 = vpop.permute.xlu0 %1188
      %1192 = vset.pattern.permute.xlu0 0
      %1193 = vperm.xlu0 %1192, %v903
      %v1194 = vpop.permute.xlu0 %1193
      %1197 = vset.pattern.permute.xlu0 0
      %1198 = vperm.xlu0 %1197, %v904
      %v1199 = vpop.permute.xlu0 %1198
      %1202 = vset.pattern.permute.xlu0 0
      %1203 = vperm.xlu0 %1202, %v905
      %v1204 = vpop.permute.xlu0 %1203
      %1207 = vset.pattern.permute.xlu0 0
      %1208 = vperm.xlu0 %1207, %v906
      %v1209 = vpop.permute.xlu0 %1208
      %1212 = vset.pattern.permute.xlu0 0
      %1213 = vperm.xlu0 %1212, %v907
      %v1214 = vpop.permute.xlu0 %1213
      %1217 = vset.pattern.permute.xlu0 0
      %1218 = vperm.xlu0 %1217, %v908
      %v1219 = vpop.permute.xlu0 %1218
      %1222 = vset.pattern.permute.xlu0 0
      %1223 = vperm.xlu0 %1222, %v909
      %v1224 = vpop.permute.xlu0 %1223
      %1227 = vset.pattern.permute.xlu0 0
      %1228 = vperm.xlu0 %1227, %v910
      %v1229 = vpop.permute.xlu0 %1228
      %1232 = vset.pattern.permute.xlu0 0
      %1233 = vperm.xlu0 %1232, %v911
      %v1234 = vpop.permute.xlu0 %1233
      %1237 = vset.pattern.permute.xlu0 0
      %1238 = vperm.xlu0 %1237, %v912
      %v1239 = vpop.permute.xlu0 %1238
      %v1241 = vlaneseq
      %v1242 = vshrl.u32 %v1241, 7
      %v1243 = vsub.s32 0, %v1242
      %v1244 = vrot.slane %v388, %v1243
      %v1245 = vmax.f32 %v1164, %v1244
      %v1246 = vmax.f32 %v1169, %v1244
      %v1247 = vmax.f32 %v1174, %v1244
      %v1248 = vmax.f32 %v1179, %v1244
      %v1249 = vmax.f32 %v1184, %v1244
      %v1250 = vmax.f32 %v1189, %v1244
      %v1251 = vmax.f32 %v1194, %v1244
      %v1252 = vmax.f32 %v1199, %v1244
      %v1253 = vmax.f32 %v1204, %v1244
      %v1254 = vmax.f32 %v1209, %v1244
      %v1255 = vmax.f32 %v1214, %v1244
      %v1256 = vmax.f32 %v1219, %v1244
      %v1257 = vmax.f32 %v1224, %v1244
      %v1258 = vmax.f32 %v1229, %v1244
      %v1259 = vmax.f32 %v1234, %v1244
      %v1260 = vmax.f32 %v1239, %v1244
      %v1261 = vsub.f32 %v1145, %v1245
      %v1262 = vsub.f32 %v1146, %v1246
      %v1263 = vsub.f32 %v1147, %v1247
      %v1264 = vsub.f32 %v1148, %v1248
      %v1265 = vsub.f32 %v1149, %v1249
      %v1266 = vsub.f32 %v1150, %v1250
      %v1267 = vsub.f32 %v1151, %v1251
      %v1268 = vsub.f32 %v1152, %v1252
      %v1269 = vsub.f32 %v1153, %v1253
      %v1270 = vsub.f32 %v1154, %v1254
      %v1271 = vsub.f32 %v1155, %v1255
      %v1272 = vsub.f32 %v1156, %v1256
      %v1273 = vsub.f32 %v1157, %v1257
      %v1274 = vsub.f32 %v1158, %v1258
      %v1275 = vsub.f32 %v1159, %v1259
      %v1276 = vsub.f32 %v1160, %v1260
      %v1277 = vmax.f32 %v1261, 0.0
      %v1278 = vmax.f32 %v1262, 0.0
      %v1279 = vmax.f32 %v1263, 0.0
      %v1280 = vmax.f32 %v1264, 0.0
      %v1281 = vmax.f32 %v1265, 0.0
      %v1282 = vmax.f32 %v1266, 0.0
      %v1283 = vmax.f32 %v1267, 0.0
      %v1284 = vmax.f32 %v1268, 0.0
      %v1285 = vmax.f32 %v1269, 0.0
      %v1286 = vmax.f32 %v1270, 0.0
      %v1287 = vmax.f32 %v1271, 0.0
      %v1288 = vmax.f32 %v1272, 0.0
      %v1289 = vmax.f32 %v1273, 0.0
      %v1290 = vmax.f32 %v1274, 0.0
      %v1291 = vmax.f32 %v1275, 0.0
      %v1292 = vmax.f32 %v1276, 0.0
      %1293 = vset.pattern.permute.xlu0 1
      %1294 = vperm.xlu0 %1293, %v945
      %v1295 = vpop.permute.xlu0 %1294
      %1297 = vset.pattern.permute.xlu0 1
      %1298 = vperm.xlu0 %1297, %v946
      %v1299 = vpop.permute.xlu0 %1298
      %1301 = vset.pattern.permute.xlu0 1
      %1302 = vperm.xlu0 %1301, %v947
      %v1303 = vpop.permute.xlu0 %1302
      %1305 = vset.pattern.permute.xlu0 1
      %1306 = vperm.xlu0 %1305, %v948
      %v1307 = vpop.permute.xlu0 %1306
      %1309 = vset.pattern.permute.xlu0 1
      %1310 = vperm.xlu0 %1309, %v949
      %v1311 = vpop.permute.xlu0 %1310
      %1313 = vset.pattern.permute.xlu0 1
      %1314 = vperm.xlu0 %1313, %v950
      %v1315 = vpop.permute.xlu0 %1314
      %1317 = vset.pattern.permute.xlu0 1
      %1318 = vperm.xlu0 %1317, %v951
      %v1319 = vpop.permute.xlu0 %1318
      %1321 = vset.pattern.permute.xlu0 1
      %1322 = vperm.xlu0 %1321, %v952
      %v1323 = vpop.permute.xlu0 %1322
      %1325 = vset.pattern.permute.xlu0 1
      %1326 = vperm.xlu0 %1325, %v953
      %v1327 = vpop.permute.xlu0 %1326
      %1329 = vset.pattern.permute.xlu0 1
      %1330 = vperm.xlu0 %1329, %v954
      %v1331 = vpop.permute.xlu0 %1330
      %1333 = vset.pattern.permute.xlu0 1
      %1334 = vperm.xlu0 %1333, %v955
      %v1335 = vpop.permute.xlu0 %1334
      %1337 = vset.pattern.permute.xlu0 1
      %1338 = vperm.xlu0 %1337, %v956
      %v1339 = vpop.permute.xlu0 %1338
      %1341 = vset.pattern.permute.xlu0 1
      %1342 = vperm.xlu0 %1341, %v957
      %v1343 = vpop.permute.xlu0 %1342
      %1345 = vset.pattern.permute.xlu0 1
      %1346 = vperm.xlu0 %1345, %v958
      %v1347 = vpop.permute.xlu0 %1346
      %1349 = vset.pattern.permute.xlu0 1
      %1350 = vperm.xlu0 %1349, %v959
      %v1351 = vpop.permute.xlu0 %1350
      %1353 = vset.pattern.permute.xlu0 1
      %1354 = vperm.xlu0 %1353, %v960
      %v1355 = vpop.permute.xlu0 %1354
      %v1357 = vlaneseq
      %v1358 = vshrl.u32 %v1357, 7
      %v1359 = vsub.s32 1, %v1358
      %v1360 = vrot.slane %v391, %v1359
      %v1361 = vmin.f32 %v1295, %v1360
      %v1362 = vmin.f32 %v1299, %v1360
      %v1363 = vmin.f32 %v1303, %v1360
      %v1364 = vmin.f32 %v1307, %v1360
      %v1365 = vmin.f32 %v1311, %v1360
      %v1366 = vmin.f32 %v1315, %v1360
      %v1367 = vmin.f32 %v1319, %v1360
      %v1368 = vmin.f32 %v1323, %v1360
      %v1369 = vmin.f32 %v1327, %v1360
      %v1370 = vmin.f32 %v1331, %v1360
      %v1371 = vmin.f32 %v1335, %v1360
      %v1372 = vmin.f32 %v1339, %v1360
      %v1373 = vmin.f32 %v1343, %v1360
      %v1374 = vmin.f32 %v1347, %v1360
      %v1375 = vmin.f32 %v1351, %v1360
      %v1376 = vmin.f32 %v1355, %v1360
      %1377 = vset.pattern.permute.xlu0 1
      %1378 = vperm.xlu0 %1377, %v897
      %v1379 = vpop.permute.xlu0 %1378
      %1381 = vset.pattern.permute.xlu0 1
      %1382 = vperm.xlu0 %1381, %v898
      %v1383 = vpop.permute.xlu0 %1382
      %1385 = vset.pattern.permute.xlu0 1
      %1386 = vperm.xlu0 %1385, %v899
      %v1387 = vpop.permute.xlu0 %1386
      %1389 = vset.pattern.permute.xlu0 1
      %1390 = vperm.xlu0 %1389, %v900
      %v1391 = vpop.permute.xlu0 %1390
      %1393 = vset.pattern.permute.xlu0 1
      %1394 = vperm.xlu0 %1393, %v901
      %v1395 = vpop.permute.xlu0 %1394
      %1397 = vset.pattern.permute.xlu0 1
      %1398 = vperm.xlu0 %1397, %v902
      %v1399 = vpop.permute.xlu0 %1398
      %1401 = vset.pattern.permute.xlu0 1
      %1402 = vperm.xlu0 %1401, %v903
      %v1403 = vpop.permute.xlu0 %1402
      %1405 = vset.pattern.permute.xlu0 1
      %1406 = vperm.xlu0 %1405, %v904
      %v1407 = vpop.permute.xlu0 %1406
      %1409 = vset.pattern.permute.xlu0 1
      %1410 = vperm.xlu0 %1409, %v905
      %v1411 = vpop.permute.xlu0 %1410
      %1413 = vset.pattern.permute.xlu0 1
      %1414 = vperm.xlu0 %1413, %v906
      %v1415 = vpop.permute.xlu0 %1414
      %1417 = vset.pattern.permute.xlu0 1
      %1418 = vperm.xlu0 %1417, %v907
      %v1419 = vpop.permute.xlu0 %1418
      %1421 = vset.pattern.permute.xlu0 1
      %1422 = vperm.xlu0 %1421, %v908
      %v1423 = vpop.permute.xlu0 %1422
      %1425 = vset.pattern.permute.xlu0 1
      %1426 = vperm.xlu0 %1425, %v909
      %v1427 = vpop.permute.xlu0 %1426
      %1429 = vset.pattern.permute.xlu0 1
      %1430 = vperm.xlu0 %1429, %v910
      %v1431 = vpop.permute.xlu0 %1430
      %1433 = vset.pattern.permute.xlu0 1
      %1434 = vperm.xlu0 %1433, %v911
      %v1435 = vpop.permute.xlu0 %1434
      %1437 = vset.pattern.permute.xlu0 1
      %1438 = vperm.xlu0 %1437, %v912
      %v1439 = vpop.permute.xlu0 %1438
      %v1441 = vlaneseq
      %v1442 = vshrl.u32 %v1441, 7
      %v1443 = vsub.s32 1, %v1442
      %v1444 = vrot.slane %v388, %v1443
      %v1445 = vmax.f32 %v1379, %v1444
      %v1446 = vmax.f32 %v1383, %v1444
      %v1447 = vmax.f32 %v1387, %v1444
      %v1448 = vmax.f32 %v1391, %v1444
      %v1449 = vmax.f32 %v1395, %v1444
      %v1450 = vmax.f32 %v1399, %v1444
      %v1451 = vmax.f32 %v1403, %v1444
      %v1452 = vmax.f32 %v1407, %v1444
      %v1453 = vmax.f32 %v1411, %v1444
      %v1454 = vmax.f32 %v1415, %v1444
      %v1455 = vmax.f32 %v1419, %v1444
      %v1456 = vmax.f32 %v1423, %v1444
      %v1457 = vmax.f32 %v1427, %v1444
      %v1458 = vmax.f32 %v1431, %v1444
      %v1459 = vmax.f32 %v1435, %v1444
      %v1460 = vmax.f32 %v1439, %v1444
      %v1461 = vsub.f32 %v1361, %v1445
      %v1462 = vsub.f32 %v1362, %v1446
      %v1463 = vsub.f32 %v1363, %v1447
      %v1464 = vsub.f32 %v1364, %v1448
      %v1465 = vsub.f32 %v1365, %v1449
      %v1466 = vsub.f32 %v1366, %v1450
      %v1467 = vsub.f32 %v1367, %v1451
      %v1468 = vsub.f32 %v1368, %v1452
      %v1469 = vsub.f32 %v1369, %v1453
      %v1470 = vsub.f32 %v1370, %v1454
      %v1471 = vsub.f32 %v1371, %v1455
      %v1472 = vsub.f32 %v1372, %v1456
      %v1473 = vsub.f32 %v1373, %v1457
      %v1474 = vsub.f32 %v1374, %v1458
      %v1475 = vsub.f32 %v1375, %v1459
      %v1476 = vsub.f32 %v1376, %v1460
      %v1477 = vmax.f32 %v1461, 0.0
      %v1478 = vmax.f32 %v1462, 0.0
      %v1479 = vmax.f32 %v1463, 0.0
      %v1480 = vmax.f32 %v1464, 0.0
      %v1481 = vmax.f32 %v1465, 0.0
      %v1482 = vmax.f32 %v1466, 0.0
      %v1483 = vmax.f32 %v1467, 0.0
      %v1484 = vmax.f32 %v1468, 0.0
      %v1485 = vmax.f32 %v1469, 0.0
      %v1486 = vmax.f32 %v1470, 0.0
      %v1487 = vmax.f32 %v1471, 0.0
      %v1488 = vmax.f32 %v1472, 0.0
      %v1489 = vmax.f32 %v1473, 0.0
      %v1490 = vmax.f32 %v1474, 0.0
      %v1491 = vmax.f32 %v1475, 0.0
      %v1492 = vmax.f32 %v1476, 0.0
      %v1493 = vmul.f32 %v1277, %v1477
      %v1494 = vmul.f32 %v1278, %v1478
      %v1495 = vmul.f32 %v1279, %v1479
      %v1496 = vmul.f32 %v1280, %v1480
      %v1497 = vmul.f32 %v1281, %v1481
      %v1498 = vmul.f32 %v1282, %v1482
      %v1499 = vmul.f32 %v1283, %v1483
      %v1500 = vmul.f32 %v1284, %v1484
      %v1501 = vmul.f32 %v1285, %v1485
      %v1502 = vmul.f32 %v1286, %v1486
      %v1503 = vmul.f32 %v1287, %v1487
      %v1504 = vmul.f32 %v1288, %v1488
      %v1505 = vmul.f32 %v1289, %v1489
      %v1506 = vmul.f32 %v1290, %v1490
      %v1507 = vmul.f32 %v1291, %v1491
      %v1508 = vmul.f32 %v1292, %v1492
      %1510 = vset.pattern.permute.xlu0 0
      %1511 = vperm.xlu0 %1510, %v1045
      %v1512 = vpop.permute.xlu0 %1511
      %1515 = vset.pattern.permute.xlu0 0
      %1516 = vperm.xlu0 %1515, %v1046
      %v1517 = vpop.permute.xlu0 %1516
      %1520 = vset.pattern.permute.xlu0 0
      %1521 = vperm.xlu0 %1520, %v1047
      %v1522 = vpop.permute.xlu0 %1521
      %1525 = vset.pattern.permute.xlu0 0
      %1526 = vperm.xlu0 %1525, %v1048
      %v1527 = vpop.permute.xlu0 %1526
      %1530 = vset.pattern.permute.xlu0 0
      %1531 = vperm.xlu0 %1530, %v1049
      %v1532 = vpop.permute.xlu0 %1531
      %1535 = vset.pattern.permute.xlu0 0
      %1536 = vperm.xlu0 %1535, %v1050
      %v1537 = vpop.permute.xlu0 %1536
      %1540 = vset.pattern.permute.xlu0 0
      %1541 = vperm.xlu0 %1540, %v1051
      %v1542 = vpop.permute.xlu0 %1541
      %1545 = vset.pattern.permute.xlu0 0
      %1546 = vperm.xlu0 %1545, %v1052
      %v1547 = vpop.permute.xlu0 %1546
      %1550 = vset.pattern.permute.xlu0 0
      %1551 = vperm.xlu0 %1550, %v1053
      %v1552 = vpop.permute.xlu0 %1551
      %1555 = vset.pattern.permute.xlu0 0
      %1556 = vperm.xlu0 %1555, %v1054
      %v1557 = vpop.permute.xlu0 %1556
      %1560 = vset.pattern.permute.xlu0 0
      %1561 = vperm.xlu0 %1560, %v1055
      %v1562 = vpop.permute.xlu0 %1561
      %1565 = vset.pattern.permute.xlu0 0
      %1566 = vperm.xlu0 %1565, %v1056
      %v1567 = vpop.permute.xlu0 %1566
      %1570 = vset.pattern.permute.xlu0 0
      %1571 = vperm.xlu0 %1570, %v1057
      %v1572 = vpop.permute.xlu0 %1571
      %1575 = vset.pattern.permute.xlu0 0
      %1576 = vperm.xlu0 %1575, %v1058
      %v1577 = vpop.permute.xlu0 %1576
      %1580 = vset.pattern.permute.xlu0 0
      %1581 = vperm.xlu0 %1580, %v1059
      %v1582 = vpop.permute.xlu0 %1581
      %1585 = vset.pattern.permute.xlu0 0
      %1586 = vperm.xlu0 %1585, %v1060
      %v1587 = vpop.permute.xlu0 %1586
      %v1589 = vlaneseq
      %v1590 = vshrl.u32 %v1589, 7
      %v1591 = vsub.s32 0, %v1590
      %v1592 = vrot.slane %v964, %v1591
      %v1593 = vadd.f32 %v1512, %v1592
      %v1594 = vadd.f32 %v1517, %v1592
      %v1595 = vadd.f32 %v1522, %v1592
      %v1596 = vadd.f32 %v1527, %v1592
      %v1597 = vadd.f32 %v1532, %v1592
      %v1598 = vadd.f32 %v1537, %v1592
      %v1599 = vadd.f32 %v1542, %v1592
      %v1600 = vadd.f32 %v1547, %v1592
      %v1601 = vadd.f32 %v1552, %v1592
      %v1602 = vadd.f32 %v1557, %v1592
      %v1603 = vadd.f32 %v1562, %v1592
      %v1604 = vadd.f32 %v1567, %v1592
      %v1605 = vadd.f32 %v1572, %v1592
      %v1606 = vadd.f32 %v1577, %v1592
      %v1607 = vadd.f32 %v1582, %v1592
      %v1608 = vadd.f32 %v1587, %v1592
      %v1609 = vsub.f32 %v1593, %v1493
      %v1610 = vsub.f32 %v1594, %v1494
      %v1611 = vsub.f32 %v1595, %v1495
      %v1612 = vsub.f32 %v1596, %v1496
      %v1613 = vsub.f32 %v1597, %v1497
      %v1614 = vsub.f32 %v1598, %v1498
      %v1615 = vsub.f32 %v1599, %v1499
      %v1616 = vsub.f32 %v1600, %v1500
      %v1617 = vsub.f32 %v1601, %v1501
      %v1618 = vsub.f32 %v1602, %v1502
      %v1619 = vsub.f32 %v1603, %v1503
      %v1620 = vsub.f32 %v1604, %v1504
      %v1621 = vsub.f32 %v1605, %v1505
      %v1622 = vsub.f32 %v1606, %v1506
      %v1623 = vsub.f32 %v1607, %v1507
      %v1624 = vsub.f32 %v1608, %v1508
      %vm1625 = vcmp.gt.f32.partialorder %v1609, 0.0
      %vm1626 = vcmp.gt.f32.partialorder %v1610, 0.0
      %vm1627 = vcmp.gt.f32.partialorder %v1611, 0.0
      %vm1628 = vcmp.gt.f32.partialorder %v1612, 0.0
      %vm1629 = vcmp.gt.f32.partialorder %v1613, 0.0
      %vm1630 = vcmp.gt.f32.partialorder %v1614, 0.0
      %vm1631 = vcmp.gt.f32.partialorder %v1615, 0.0
      %vm1632 = vcmp.gt.f32.partialorder %v1616, 0.0
      %vm1633 = vcmp.gt.f32.partialorder %v1617, 0.0
      %vm1634 = vcmp.gt.f32.partialorder %v1618, 0.0
      %vm1635 = vcmp.gt.f32.partialorder %v1619, 0.0
      %vm1636 = vcmp.gt.f32.partialorder %v1620, 0.0
      %vm1637 = vcmp.gt.f32.partialorder %v1621, 0.0
      %vm1638 = vcmp.gt.f32.partialorder %v1622, 0.0
      %vm1639 = vcmp.gt.f32.partialorder %v1623, 0.0
      %vm1640 = vcmp.gt.f32.partialorder %v1624, 0.0
      %v1641 = vrcp.pop %v1609
      %v1642 = vmul.f32 %v1493, %v1641
      %v1643 = vrcp.pop %v1610
      %v1644 = vmul.f32 %v1494, %v1643
      %v1645 = vrcp.pop %v1611
      %v1646 = vmul.f32 %v1495, %v1645
      %v1647 = vrcp.pop %v1612
      %v1648 = vmul.f32 %v1496, %v1647
      %v1649 = vrcp.pop %v1613
      %v1650 = vmul.f32 %v1497, %v1649
      %v1651 = vrcp.pop %v1614
      %v1652 = vmul.f32 %v1498, %v1651
      %v1653 = vrcp.pop %v1615
      %v1654 = vmul.f32 %v1499, %v1653
      %v1655 = vrcp.pop %v1616
      %v1656 = vmul.f32 %v1500, %v1655
      %v1657 = vrcp.pop %v1617
      %v1658 = vmul.f32 %v1501, %v1657
      %v1659 = vrcp.pop %v1618
      %v1660 = vmul.f32 %v1502, %v1659
      %v1661 = vrcp.pop %v1619
      %v1662 = vmul.f32 %v1503, %v1661
      %v1663 = vrcp.pop %v1620
      %v1664 = vmul.f32 %v1504, %v1663
      %v1665 = vrcp.pop %v1621
      %v1666 = vmul.f32 %v1505, %v1665
      %v1667 = vrcp.pop %v1622
      %v1668 = vmul.f32 %v1506, %v1667
      %v1669 = vrcp.pop %v1623
      %v1670 = vmul.f32 %v1507, %v1669
      %v1671 = vrcp.pop %v1624
      %v1672 = vmul.f32 %v1508, %v1671
      %v1673 = vsel %vm1625, %v1642, 0.0
      %v1674 = vsel %vm1626, %v1644, 0.0
      %v1675 = vsel %vm1627, %v1646, 0.0
      %v1676 = vsel %vm1628, %v1648, 0.0
      %v1677 = vsel %vm1629, %v1650, 0.0
      %v1678 = vsel %vm1630, %v1652, 0.0
      %v1679 = vsel %vm1631, %v1654, 0.0
      %v1680 = vsel %vm1632, %v1656, 0.0
      %v1681 = vsel %vm1633, %v1658, 0.0
      %v1682 = vsel %vm1634, %v1660, 0.0
      %v1683 = vsel %vm1635, %v1662, 0.0
      %v1684 = vsel %vm1636, %v1664, 0.0
      %v1685 = vsel %vm1637, %v1666, 0.0
      %v1686 = vsel %vm1638, %v1668, 0.0
      %v1687 = vsel %vm1639, %v1670, 0.0
      %v1688 = vsel %vm1640, %v1672, 0.0
      %1689 = vst [vmem:[#allocation2] sm:$0xff] %v1673
      %1690 = vst [vmem:[#allocation2 + $0x8] sm:$0xff] %v1674
      %1691 = vst [vmem:[#allocation2 + $0x10] sm:$0xff] %v1675
      %1692 = vst [vmem:[#allocation2 + $0x18] sm:$0xff] %v1676
      %1693 = vst [vmem:[#allocation2 + $0x20] sm:$0xff] %v1677
      %1694 = vst [vmem:[#allocation2 + $0x28] sm:$0xff] %v1678
      %1695 = vst [vmem:[#allocation2 + $0x30] sm:$0xff] %v1679
      %1696 = vst [vmem:[#allocation2 + $0x38] sm:$0xff] %v1680
      %1697 = vst [vmem:[#allocation2 + $0x40] sm:$0xff] %v1681
      %1698 = vst [vmem:[#allocation2 + $0x48] sm:$0xff] %v1682
      %1699 = vst [vmem:[#allocation2 + $0x50] sm:$0xff] %v1683
      %1700 = vst [vmem:[#allocation2 + $0x58] sm:$0xff] %v1684
      %1701 = vst [vmem:[#allocation2 + $0x60] sm:$0xff] %v1685
      %1702 = vst [vmem:[#allocation2 + $0x68] sm:$0xff] %v1686
      %1703 = vst [vmem:[#allocation2 + $0x70] sm:$0xff] %v1687
      %1704 = vst [vmem:[#allocation2 + $0x78] sm:$0xff] %v1688
      %v1705 = vlaneseq
      %v1706 = vand.u32 %v1705, 127
      %v1707 = vsel %vm416, 1, 0
      %v1708 = vcvt.s32.f32 %v1707
      loop: start=0, step=1, limit=128
      $region41: #{rpn_forward.3} parent=39 // loop_pre_header
        _
      $region42: #{rpn_forward.3} parent=39 // loop_header
        %s1710 = sphi 0, %s1714
        %p1711 = scmp.ge.s32.totalorder %s1710, 128
        %v1715 = vphi %v1708, %v1731
      $region43: #{rpn_forward.3} parent=39 // loop_header_branch
        %1713 = sbr.rel (%p1711) target = $region47
      $region44: #{rpn_forward.3} parent=39 // loop_body
        %s1716 = scalar_lea.vmem [#allocation2], %s1710
        %v1717 = vld [vmem:[%s1716] sm:$0x1]
        %v1718 = vstv %s1710
        %vm1719 = vcmp.eq.s32.totalorder %v1706, %v1718
        %v1720 = vsel %vm1719, %v1715, 0.0
        %v1721 = vsel %vm395, %v1720, -inf
        %1722 = vmax.xlane.f32.xlu0 %v1721
        %v1723 = vpop.xlane.xlu0 %1722
        %vm1724 = vcmp.gt.f32.partialorder %v1723, 0.5
        %vm1725 = vcmp.gt.f32.partialorder %v1717, 0.7
        %v1726 = vsel %vm1724, 1, 0
        %vm1727 = vcmp.eq.s32.totalorder %v1726, 1
        %vm1728 = vmand %vm1727, %vm1725
        %vm1729 = vcmp.gt.s32.totalorder %v1706, %v1718
        %vm1730 = vmand %vm1728, %vm1729
        %v1731 = vsel %vm1730, 0.0, %v1715
      $region45: #{rpn_forward.3} parent=39 // loop_footer
        %s1714 = sadd.s32 1, %s1710
      $region46: #{rpn_forward.3} parent=39 // loop_footer_branch
        %1709 = sbr.rel target = $region42
      $region47: #{rpn_forward.3} parent=39 // loop_exit
        _
      %1732 = vst [vmem:[%s361] sm:$0x1] %v1715
      %p1733 = scmp.lt.s32.totalorder %s19, 1
      %s1734 = scalar_select %p1733, %s19, 1
      %s1735 = smul.addr %s1734, 4
      %s1736 = scalar_lea.vmem %s5, %s1735
      %p1737 = scmp.lt.s32.totalorder %s19, 1
      %s1738 = scalar_select %p1737, %s19, 1
      %s1739 = scalar_lea.vmem %s6, %s1738
      %p1740 = scmp.lt.s32.totalorder %s19, 1
      %s1741 = scalar_select %p1740, %s19, 1
      %s1742 = scalar_lea.vmem %s7, %s1741
      // Predicated region
      $region48: #{rpn_forward.3} parent=39 // pred_check
        %p1743 = pneg %p167
      $region49: #{rpn_forward.3} parent=39 // pred_check_branch
        %1745 = sbr.rel (%p1743) target = $region51
      $region50: #{rpn_forward.3} parent=39 // pred_region
        _
      $region51: #{rpn_forward.3} parent=39 // pred_fallthru
        _
      // Predicated region
      $region52: #{rpn_forward.3} parent=39 // pred_check
        %p1746 = pneg %p193
      $region53: #{rpn_forward.3} parent=39 // pred_check_branch
        %1748 = sbr.rel (%p1746) target = $region55
      $region54: #{rpn_forward.3} parent=39 // pred_region
        _
      $region55: #{rpn_forward.3} parent=39 // pred_fallthru
        _
      // Predicated region
      $region56: #{rpn_forward.3} parent=39 // pred_check
        %p1749 = pneg %p219
      $region57: #{rpn_forward.3} parent=39 // pred_check_branch
        %1751 = sbr.rel (%p1749) target = $region59
      $region58: #{rpn_forward.3} parent=39 // pred_region
        _
      $region59: #{rpn_forward.3} parent=39 // pred_fallthru
        _
    $region40: #{rpn_forward.3} parent=5 // pred_fallthru
      _
    %p1752 = scmp.le.s32.totalorder 2, %s14
    // Predicated region
    $region60: #{rpn_forward.3} parent=5 // pred_check
      %p1753 = pneg %p1752
    $region61: #{rpn_forward.3} parent=5 // pred_check_branch
      %1755 = sbr.rel (%p1753) target = $region63
    $region62: #{rpn_forward.3} parent=5 // pred_region
      %s1756 = ssub.s32 %s14, 2
      // Predicated region
      $region64: #{rpn_forward.3} parent=62 // pred_check
        %p1757 = pneg %p173
      $region65: #{rpn_forward.3} parent=62 // pred_check_branch
        %1759 = sbr.rel (%p1757) target = $region67
      $region66: #{rpn_forward.3} parent=62 // pred_region
        %p1760 = scmp.lt.s32.totalorder %s20, 1
        %s1761 = scalar_select %p1760, %s20, 1
        %s1762 = smul.addr %s1761, 4
        %s1763 = scalar_lea.vmem %s5, %s1762
      $region67: #{rpn_forward.3} parent=62 // pred_fallthru
        _
      // Predicated region
      $region68: #{rpn_forward.3} parent=62 // pred_check
        %p1764 = pneg %p199
      $region69: #{rpn_forward.3} parent=62 // pred_check_branch
        %1766 = sbr.rel (%p1764) target = $region71
      $region70: #{rpn_forward.3} parent=62 // pred_region
        %p1767 = scmp.lt.s32.totalorder %s20, 1
        %s1768 = scalar_select %p1767, %s20, 1
        %s1769 = scalar_lea.vmem %s6, %s1768
      $region71: #{rpn_forward.3} parent=62 // pred_fallthru
        _
      // Predicated region
      $region72: #{rpn_forward.3} parent=62 // pred_check
        %p1770 = pneg %p225
      $region73: #{rpn_forward.3} parent=62 // pred_check_branch
        %1772 = sbr.rel (%p1770) target = $region75
      $region74: #{rpn_forward.3} parent=62 // pred_region
        %p1773 = scmp.lt.s32.totalorder %s20, 1
        %s1774 = scalar_select %p1773, %s20, 1
        %s1775 = scalar_lea.vmem %s7, %s1774
      $region75: #{rpn_forward.3} parent=62 // pred_fallthru
        _
    $region63: #{rpn_forward.3} parent=5 // pred_fallthru
      _
  $region6: #{rpn_forward.3} parent=0 // loop_footer
    %s18 = sadd.s32 1, %s14
  $region7: #{rpn_forward.3} parent=0 // loop_footer_branch
    %13 = sbr.rel target = $region3
  $region8: #{rpn_forward.3} parent=0 // loop_exit
    _

</llo_original>
